<compile_context>
chip_gen: v7x
topology: tpu7x:2x2x1
jax: 0.10.0
libtpu: 0.0.40
codegen_flags: <defaults>
</compile_context>

<pallas_src>
import jax
import jax.numpy as jnp
from jax import lax
from jax.experimental import pallas as pl
from jax.experimental.pallas import tpu as pltpu

EPS = 1e-5
_ONES_W = 8  # lane width of the ones block used for MXU row-sum reductions


def _row_sum(y, ones_m):
    # y: (C, M) f32, ones_m: (M, _ONES_W) f32 -> (C, 1) f32 row sums.
    # Reduction over the lane axis done on the MXU (no XLU rotate/add trees).
    s = jnp.dot(y, ones_m, preferred_element_type=jnp.float32)
    return s[:, 0:1]


def _fused_kernel(x_ref, r_ref, w1_ref, g1_ref, b1_ref, w2_ref, g2_ref, b2_ref,
                  o_ref):
    # x_ref : (Cin,  M)        f32  resident (constant index map)
    # r_ref : (TC,   M)        f32  residual slab for this Cmid tile
    # w1_ref: (TC,   Cin)      f32  conv2d75 weight slab (native out,in layout)
    # g1/b1 : (TC,   1)        f32  BN1 gamma/beta slab
    # w2_ref: (Cout, TC)       f32  conv2d76 weight slab
    # g2/b2 : (Cout, 1)        f32  BN2 gamma/beta (resident)
    # o_ref : (Cout, M)        f32  resident accumulator / final output
    step = pl.program_id(0)
    last = pl.num_programs(0) - 1

    m = x_ref.shape[1]
    inv_m = 1.0 / m                       # static Python float
    ones_m = jnp.ones((m, _ONES_W), jnp.float32)

    # ---- conv2d75 slab (1x1 conv == channel matmul), bf16 ops / f32 acc ----
    x_bf = x_ref[...].astype(jnp.bfloat16)
    w1_bf = w1_ref[...].astype(jnp.bfloat16)
    y1 = jnp.dot(w1_bf, x_bf, preferred_element_type=jnp.float32)  # (TC, M)

    # ---- batchnorm2d75 (training-mode batch stats, two-pass, MXU sums) -----
    mean1 = _row_sum(y1, ones_m) * inv_m
    z1 = y1 - mean1
    var1 = _row_sum(z1 * z1, ones_m) * inv_m
    scale1 = g1_ref[...] * lax.rsqrt(var1 + EPS)

    # ---- normalize + residual add + ReLU -----------------------------------
    h = jnp.maximum(z1 * scale1 + b1_ref[...] + r_ref[...], 0.0)

    # ---- conv2d76 partial product: accumulate into the resident output -----
    y2_part = jnp.dot(w2_ref[...].astype(jnp.bfloat16), h.astype(jnp.bfloat16),
                      preferred_element_type=jnp.float32)          # (Cout, M)

    @pl.when(step == 0)
    def _init():
        o_ref[...] = jnp.zeros_like(o_ref)

    o_ref[...] += y2_part

    # ---- batchnorm2d76 finalize on the last Cmid step -----------------------
    @pl.when(step == last)
    def _finalize():
        y2 = o_ref[...]
        mean2 = _row_sum(y2, ones_m) * inv_m
        z2 = y2 - mean2
        var2 = _row_sum(z2 * z2, ones_m) * inv_m
        scale2 = g2_ref[...] * lax.rsqrt(var2 + EPS)
        o_ref[...] = z2 * scale2 + b2_ref[...]


def fused_block(x_nchw, r_nchw, w1, g1, b1, w2, g2, b2, *, cmid_tile=512):
    """x_nchw: (N, 512, H, W), r_nchw: (N, 1024, H, W) -> (N, 512, H, W)."""
    N, Cin, H, W = x_nchw.shape
    Cmid = r_nchw.shape[1]
    Cout = w2.shape[0]
    M = N * H * W

    if Cmid % cmid_tile != 0:
        cmid_tile = Cmid
    n_steps = Cmid // cmid_tile

    # NCHW -> (C, M). For N == 1 the transpose is over a size-1 dim -> bitcast.
    x_cm = jnp.transpose(x_nchw, (1, 0, 2, 3)).reshape(Cin, M)
    r_cm = jnp.transpose(r_nchw, (1, 0, 2, 3)).reshape(Cmid, M)

    # Conv weights stay f32 in HBM, native (out, in) layout; cast in-kernel.
    w1_2d = w1.reshape(Cmid, Cin)
    w2_2d = w2.reshape(Cout, Cmid)
    g1c, b1c = g1.reshape(Cmid, 1), b1.reshape(Cmid, 1)
    g2c, b2c = g2.reshape(Cout, 1), b2.reshape(Cout, 1)

    flops = 2 * M * Cin * Cmid + 2 * M * Cmid * Cout
    bytes_accessed = 4 * (x_cm.size + r_cm.size + w1_2d.size + w2_2d.size
                          + 2 * (Cmid + Cout) + Cout * M)

    out_cm = pl.pallas_call(
        _fused_kernel,
        out_shape=jax.ShapeDtypeStruct((Cout, M), jnp.float32),
        grid=(n_steps,),
        in_specs=[
            pl.BlockSpec((Cin, M), lambda i: (0, 0)),          # x (resident)
            pl.BlockSpec((cmid_tile, M), lambda i: (i, 0)),    # residual slab
            pl.BlockSpec((cmid_tile, Cin), lambda i: (i, 0)),  # w1 slab
            pl.BlockSpec((cmid_tile, 1), lambda i: (i, 0)),    # g1 slab
            pl.BlockSpec((cmid_tile, 1), lambda i: (i, 0)),    # b1 slab
            pl.BlockSpec((Cout, cmid_tile), lambda i: (0, i)), # w2 slab
            pl.BlockSpec((Cout, 1), lambda i: (0, 0)),         # g2 (resident)
            pl.BlockSpec((Cout, 1), lambda i: (0, 0)),         # b2 (resident)
        ],
        out_specs=pl.BlockSpec((Cout, M), lambda i: (0, 0)),   # resident acc
        compiler_params=pltpu.CompilerParams(
            dimension_semantics=("arbitrary",),
            vmem_limit_bytes=32 * 1024 * 1024),
        cost_estimate=pl.CostEstimate(
            flops=flops, transcendentals=Cmid + Cout,
            bytes_accessed=bytes_accessed),
    )(x_cm, r_cm, w1_2d, g1c, b1c, w2_2d, g2c, b2c)

    # (Cout, M) -> NCHW (again free for N == 1).
    return jnp.transpose(out_cm.reshape(Cout, N, H, W), (1, 0, 2, 3))


def reference(x_nchw, r_nchw, w1, g1, b1, w2, g2, b2):
    """Plain-JAX reference mirroring the PyTorch training-mode forward, using
    the same bf16-operand / f32-accumulation matmul numerics as the kernel
    (all BatchNorm statistics and normalization in f32)."""
    N, Cin, H, W = x_nchw.shape
    Cmid = r_nchw.shape[1]
    Cout = w2.shape[0]
    x2d = jnp.transpose(x_nchw, (0, 2, 3, 1)).reshape(-1, Cin)
    r2d = jnp.transpose(r_nchw, (0, 2, 3, 1)).reshape(-1, Cmid)

    y1 = jnp.dot(x2d.astype(jnp.bfloat16),
                 w1.reshape(Cmid, Cin).T.astype(jnp.bfloat16),
                 preferred_element_type=jnp.float32)
    m1 = y1.mean(0)
    v1 = ((y1 - m1) ** 2).mean(0)
    y1n = (y1 - m1) * lax.rsqrt(v1 + EPS) * g1 + b1
    h = jnp.maximum(y1n + r2d, 0.0)

    y2 = jnp.dot(h.astype(jnp.bfloat16),
                 w2.reshape(Cout, Cmid).T.astype(jnp.bfloat16),
                 preferred_element_type=jnp.float32)
    m2 = y2.mean(0)
    v2 = ((y2 - m2) ** 2).mean(0)
    y2n = (y2 - m2) * lax.rsqrt(v2 + EPS) * g2 + b2
    return jnp.transpose(y2n.reshape(N, H, W, Cout), (0, 3, 1, 2))


if __name__ == "__main__":
    key = jax.random.PRNGKey(0)
    k_x, k_r, k_w1, k_w2, k_g1, k_b1, k_g2, k_b2 = jax.random.split(key, 8)

    # Shapes fixed by the module: channels 512 -> 1024 -> 512; batch=1, 14x14.
    N, H, W = 1, 14, 14
    Cin, Cmid, Cout = 512, 1024, 512

    x246 = jax.random.normal(k_x, (N, Cin, H, W), jnp.float32)
    x240 = jax.random.normal(k_r, (N, Cmid, H, W), jnp.float32)

    w1 = jax.random.normal(k_w1, (Cmid, Cin, 1, 1), jnp.float32) * 0.05
    w2 = jax.random.normal(k_w2, (Cout, Cmid, 1, 1), jnp.float32) * 0.05
    g1 = 1.0 + 0.1 * jax.random.normal(k_g1, (Cmid,), jnp.float32)
    b1 = 0.1 * jax.random.normal(k_b1, (Cmid,), jnp.float32)
    g2 = 1.0 + 0.1 * jax.random.normal(k_g2, (Cout,), jnp.float32)
    b2 = 0.1 * jax.random.normal(k_b2, (Cout,), jnp.float32)

    fused = jax.jit(fused_block)
    out = fused(x246, x240, w1, g1, b1, w2, g2, b2)
    out = jax.block_until_ready(out)

    ref = reference(x246, x240, w1, g1, b1, w2, g2, b2)
    assert out.shape == (N, Cout, H, W)
    max_err = float(jnp.max(jnp.abs(out - ref)))
    assert jnp.allclose(out, ref, atol=1e-2, rtol=1e-2), max_err

    print("KERNEL_OK")
</pallas_src>

<mosaic_0001>
module attributes {stable_mosaic.version = 11 : i64} {
  func.func @_fused_kernel(%arg0: i32, %arg1: memref<512x196xf32, #tpu.memory_space<vmem>>, %arg2: memref<512x196xf32, #tpu.memory_space<vmem>>, %arg3: memref<512x512xf32, #tpu.memory_space<vmem>>, %arg4: memref<512x1xf32, #tpu.memory_space<vmem>>, %arg5: memref<512x1xf32, #tpu.memory_space<vmem>>, %arg6: memref<512x512xf32, #tpu.memory_space<vmem>>, %arg7: memref<512x1xf32, #tpu.memory_space<vmem>>, %arg8: memref<512x1xf32, #tpu.memory_space<vmem>>, %arg9: memref<512x196xf32, #tpu.memory_space<vmem>>) attributes {dimension_semantics = [#tpu.dimension_semantics<arbitrary>], iteration_bounds = array<i64: 2>, scalar_prefetch = 0 : i64, scratch_operands = 0 : i64, tpu.core_type = #tpu.core_type<tc>, window_params = [{pipeline_mode = #tpu.pipeline_mode<synchronous>, transform_indices = @transform_0, window_bounds = array<i64: 512, 196>}, {transform_indices = @transform_1, window_bounds = array<i64: 512, 196>}, {transform_indices = @transform_2, window_bounds = array<i64: 512, 512>}, {transform_indices = @transform_3, window_bounds = array<i64: 512, 1>}, {transform_indices = @transform_4, window_bounds = array<i64: 512, 1>}, {transform_indices = @transform_5, window_bounds = array<i64: 512, 512>}, {pipeline_mode = #tpu.pipeline_mode<synchronous>, transform_indices = @transform_6, window_bounds = array<i64: 512, 1>}, {pipeline_mode = #tpu.pipeline_mode<synchronous>, transform_indices = @transform_7, window_bounds = array<i64: 512, 1>}, {pipeline_mode = #tpu.pipeline_mode<synchronous>, transform_indices = @transform_8, window_bounds = array<i64: 512, 196>}]} {
    %cst = arith.constant 1.000000e+00 : f32
    %0 = vector.broadcast %cst : f32 to vector<196x8xf32>
    %c0 = arith.constant 0 : index
    %c0_0 = arith.constant 0 : index
    %1 = vector.load %arg1[%c0, %c0_0] : memref<512x196xf32, #tpu.memory_space<vmem>>, vector<512x196xf32>
    %2 = arith.truncf %1 : vector<512x196xf32> to vector<512x196xbf16>
    %c0_1 = arith.constant 0 : index
    %c0_2 = arith.constant 0 : index
    %3 = vector.load %arg3[%c0_1, %c0_2] : memref<512x512xf32, #tpu.memory_space<vmem>>, vector<512x512xf32>
    %4 = arith.truncf %3 : vector<512x512xf32> to vector<512x512xbf16>
    %cst_3 = arith.constant dense<0.000000e+00> : vector<512x196xf32>
    %5 = tpu.matmul %4, %2, %cst_3 {dimension_numbers = #tpu.dot_dimension_numbers<[1], [0], [0], [1], [0, 0, 1, 1], [], []>} : vector<512x512xbf16>, vector<512x196xbf16>, vector<512x196xf32> -> vector<512x196xf32>
    %cst_4 = arith.constant dense<0.000000e+00> : vector<512x8xf32>
    %6 = tpu.matmul %5, %0, %cst_4 {dimension_numbers = #tpu.dot_dimension_numbers<[1], [0], [0], [1], [0, 0, 1, 1], [], []>} : vector<512x196xf32>, vector<196x8xf32>, vector<512x8xf32> -> vector<512x8xf32>
    %7 = vector.extract_strided_slice %6 {offsets = [0, 0], sizes = [512, 1], strides = [1, 1]} : vector<512x8xf32> to vector<512x1xf32>
    %cst_5 = arith.constant 0.00510204071 : f32
    %8 = vector.broadcast %cst_5 : f32 to vector<512x1xf32>
    %9 = arith.mulf %7, %8 : vector<512x1xf32>
    %10 = vector.broadcast %9 : vector<512x1xf32> to vector<512x196xf32>
    %11 = arith.subf %5, %10 : vector<512x196xf32>
    %12 = arith.mulf %11, %11 : vector<512x196xf32>
    %cst_6 = arith.constant dense<0.000000e+00> : vector<512x8xf32>
    %13 = tpu.matmul %12, %0, %cst_6 {dimension_numbers = #tpu.dot_dimension_numbers<[1], [0], [0], [1], [0, 0, 1, 1], [], []>} : vector<512x196xf32>, vector<196x8xf32>, vector<512x8xf32> -> vector<512x8xf32>
    %14 = vector.extract_strided_slice %13 {offsets = [0, 0], sizes = [512, 1], strides = [1, 1]} : vector<512x8xf32> to vector<512x1xf32>
    %cst_7 = arith.constant 0.00510204071 : f32
    %15 = vector.broadcast %cst_7 : f32 to vector<512x1xf32>
    %16 = arith.mulf %14, %15 : vector<512x1xf32>
    %c0_8 = arith.constant 0 : index
    %c0_9 = arith.constant 0 : index
    %17 = vector.load %arg4[%c0_8, %c0_9] : memref<512x1xf32, #tpu.memory_space<vmem>>, vector<512x1xf32>
    %cst_10 = arith.constant 9.99999974E-6 : f32
    %18 = vector.broadcast %cst_10 : f32 to vector<512x1xf32>
    %19 = arith.addf %16, %18 : vector<512x1xf32>
    %20 = math.rsqrt %19 : vector<512x1xf32>
    %21 = arith.mulf %17, %20 : vector<512x1xf32>
    %22 = vector.broadcast %21 : vector<512x1xf32> to vector<512x196xf32>
    %23 = arith.mulf %11, %22 : vector<512x196xf32>
    %c0_11 = arith.constant 0 : index
    %c0_12 = arith.constant 0 : index
    %24 = vector.load %arg5[%c0_11, %c0_12] : memref<512x1xf32, #tpu.memory_space<vmem>>, vector<512x1xf32>
    %25 = vector.broadcast %24 : vector<512x1xf32> to vector<512x196xf32>
    %26 = arith.addf %23, %25 : vector<512x196xf32>
    %c0_13 = arith.constant 0 : index
    %c0_14 = arith.constant 0 : index
    %27 = vector.load %arg2[%c0_13, %c0_14] : memref<512x196xf32, #tpu.memory_space<vmem>>, vector<512x196xf32>
    %28 = arith.addf %26, %27 : vector<512x196xf32>
    %cst_15 = arith.constant 0.000000e+00 : f32
    %29 = vector.broadcast %cst_15 : f32 to vector<512x196xf32>
    %30 = arith.maximumf %28, %29 : vector<512x196xf32>
    %c0_16 = arith.constant 0 : index
    %c0_17 = arith.constant 0 : index
    %31 = vector.load %arg6[%c0_16, %c0_17] : memref<512x512xf32, #tpu.memory_space<vmem>>, vector<512x512xf32>
    %32 = arith.truncf %31 : vector<512x512xf32> to vector<512x512xbf16>
    %33 = arith.truncf %30 : vector<512x196xf32> to vector<512x196xbf16>
    %cst_18 = arith.constant dense<0.000000e+00> : vector<512x196xf32>
    %34 = tpu.matmul %32, %33, %cst_18 {dimension_numbers = #tpu.dot_dimension_numbers<[1], [0], [0], [1], [0, 0, 1, 1], [], []>} : vector<512x512xbf16>, vector<512x196xbf16>, vector<512x196xf32> -> vector<512x196xf32>
    %c0_i32 = arith.constant 0 : i32
    %35 = arith.cmpi eq, %arg0, %c0_i32 : i32
    %36 = arith.extui %35 : i1 to i32
    %c0_i32_19 = arith.constant 0 : i32
    %37 = arith.cmpi ne, %36, %c0_i32_19 : i32
    scf.if %37 {
      %cst_25 = arith.constant 0.000000e+00 : f32
      %44 = vector.broadcast %cst_25 : f32 to vector<512x196xf32>
      %c0_26 = arith.constant 0 : index
      %c0_27 = arith.constant 0 : index
      %45 = vector.load %arg9[%c0_26, %c0_27] : memref<512x196xf32, #tpu.memory_space<vmem>>, vector<512x196xf32>
      tpu.vector_store %arg9[%c0_26, %c0_27], %44 {strides = array<i32>} : memref<512x196xf32, #tpu.memory_space<vmem>>, vector<512x196xf32>,
    } else {
    }
    %c0_20 = arith.constant 0 : index
    %c0_21 = arith.constant 0 : index
    %38 = vector.load %arg9[%c0_20, %c0_21] : memref<512x196xf32, #tpu.memory_space<vmem>>, vector<512x196xf32>
    %39 = arith.addf %38, %34 : vector<512x196xf32>
    %c0_22 = arith.constant 0 : index
    %c0_23 = arith.constant 0 : index
    %40 = vector.load %arg9[%c0_22, %c0_23] : memref<512x196xf32, #tpu.memory_space<vmem>>, vector<512x196xf32>
    tpu.vector_store %arg9[%c0_22, %c0_23], %39 {strides = array<i32>} : memref<512x196xf32, #tpu.memory_space<vmem>>, vector<512x196xf32>,
    %c1_i32 = arith.constant 1 : i32
    %41 = arith.cmpi eq, %arg0, %c1_i32 : i32
    %42 = arith.extui %41 : i1 to i32
    %c0_i32_24 = arith.constant 0 : i32
    %43 = arith.cmpi ne, %42, %c0_i32_24 : i32
    scf.if %43 {
      %c0_25 = arith.constant 0 : index
      %c0_26 = arith.constant 0 : index
      %44 = vector.load %arg9[%c0_25, %c0_26] : memref<512x196xf32, #tpu.memory_space<vmem>>, vector<512x196xf32>
      %cst_27 = arith.constant dense<0.000000e+00> : vector<512x8xf32>
      %45 = tpu.matmul %44, %0, %cst_27 {dimension_numbers = #tpu.dot_dimension_numbers<[1], [0], [0], [1], [0, 0, 1, 1], [], []>} : vector<512x196xf32>, vector<196x8xf32>, vector<512x8xf32> -> vector<512x8xf32>
      %46 = vector.extract_strided_slice %45 {offsets = [0, 0], sizes = [512, 1], strides = [1, 1]} : vector<512x8xf32> to vector<512x1xf32>
      %cst_28 = arith.constant 0.00510204071 : f32
      %47 = vector.broadcast %cst_28 : f32 to vector<512x1xf32>
      %48 = arith.mulf %46, %47 : vector<512x1xf32>
      %49 = vector.broadcast %48 : vector<512x1xf32> to vector<512x196xf32>
      %50 = arith.subf %44, %49 : vector<512x196xf32>
      %51 = arith.mulf %50, %50 : vector<512x196xf32>
      %cst_29 = arith.constant dense<0.000000e+00> : vector<512x8xf32>
      %52 = tpu.matmul %51, %0, %cst_29 {dimension_numbers = #tpu.dot_dimension_numbers<[1], [0], [0], [1], [0, 0, 1, 1], [], []>} : vector<512x196xf32>, vector<196x8xf32>, vector<512x8xf32> -> vector<512x8xf32>
      %53 = vector.extract_strided_slice %52 {offsets = [0, 0], sizes = [512, 1], strides = [1, 1]} : vector<512x8xf32> to vector<512x1xf32>
      %cst_30 = arith.constant 0.00510204071 : f32
      %54 = vector.broadcast %cst_30 : f32 to vector<512x1xf32>
      %55 = arith.mulf %53, %54 : vector<512x1xf32>
      %c0_31 = arith.constant 0 : index
      %c0_32 = arith.constant 0 : index
      %56 = vector.load %arg7[%c0_31, %c0_32] : memref<512x1xf32, #tpu.memory_space<vmem>>, vector<512x1xf32>
      %cst_33 = arith.constant 9.99999974E-6 : f32
      %57 = vector.broadcast %cst_33 : f32 to vector<512x1xf32>
      %58 = arith.addf %55, %57 : vector<512x1xf32>
      %59 = math.rsqrt %58 : vector<512x1xf32>
      %60 = arith.mulf %56, %59 : vector<512x1xf32>
      %61 = vector.broadcast %60 : vector<512x1xf32> to vector<512x196xf32>
      %62 = arith.mulf %50, %61 : vector<512x196xf32>
      %c0_34 = arith.constant 0 : index
      %c0_35 = arith.constant 0 : index
      %63 = vector.load %arg8[%c0_34, %c0_35] : memref<512x1xf32, #tpu.memory_space<vmem>>, vector<512x1xf32>
      %64 = vector.broadcast %63 : vector<512x1xf32> to vector<512x196xf32>
      %65 = arith.addf %62, %64 : vector<512x196xf32>
      %c0_36 = arith.constant 0 : index
      %c0_37 = arith.constant 0 : index
      %66 = vector.load %arg9[%c0_36, %c0_37] : memref<512x196xf32, #tpu.memory_space<vmem>>, vector<512x196xf32>
      tpu.vector_store %arg9[%c0_36, %c0_37], %65 {strides = array<i32>} : memref<512x196xf32, #tpu.memory_space<vmem>>, vector<512x196xf32>,
    } else {
    }
    return
  }
  func.func @transform_0(%arg0: i32) -> (i32, i32) {
    %c0_i32 = arith.constant 0 : i32
    %c0_i32_0 = arith.constant 0 : i32
    %c0_i32_1 = arith.constant 0 : i32
    return %c0_i32, %c0_i32_0 : i32, i32
  }
  func.func @transform_1(%arg0: i32) -> (i32, i32) {
    %c0_i32 = arith.constant 0 : i32
    %c0_i32_0 = arith.constant 0 : i32
    return %arg0, %c0_i32 : i32, i32
  }
  func.func @transform_2(%arg0: i32) -> (i32, i32) {
    %c0_i32 = arith.constant 0 : i32
    %c0_i32_0 = arith.constant 0 : i32
    return %arg0, %c0_i32 : i32, i32
  }
  func.func @transform_3(%arg0: i32) -> (i32, i32) {
    %c0_i32 = arith.constant 0 : i32
    %c0_i32_0 = arith.constant 0 : i32
    return %arg0, %c0_i32 : i32, i32
  }
  func.func @transform_4(%arg0: i32) -> (i32, i32) {
    %c0_i32 = arith.constant 0 : i32
    %c0_i32_0 = arith.constant 0 : i32
    return %arg0, %c0_i32 : i32, i32
  }
  func.func @transform_5(%arg0: i32) -> (i32, i32) {
    %c0_i32 = arith.constant 0 : i32
    %c0_i32_0 = arith.constant 0 : i32
    return %c0_i32, %arg0 : i32, i32
  }
  func.func @transform_6(%arg0: i32) -> (i32, i32) {
    %c0_i32 = arith.constant 0 : i32
    %c0_i32_0 = arith.constant 0 : i32
    %c0_i32_1 = arith.constant 0 : i32
    return %c0_i32, %c0_i32_0 : i32, i32
  }
  func.func @transform_7(%arg0: i32) -> (i32, i32) {
    %c0_i32 = arith.constant 0 : i32
    %c0_i32_0 = arith.constant 0 : i32
    %c0_i32_1 = arith.constant 0 : i32
    return %c0_i32, %c0_i32_0 : i32, i32
  }
  func.func @transform_8(%arg0: i32) -> (i32, i32) {
    %c0_i32 = arith.constant 0 : i32
    %c0_i32_0 = arith.constant 0 : i32
    %c0_i32_1 = arith.constant 0 : i32
    return %c0_i32, %c0_i32_0 : i32, i32
  }
}

</mosaic_0001>

<llo_original>
// kernel: fused_block.1
$region0: #{fused_block.1}
  #allocation0 [shape = 'u32[]', space=smem, size = 0x4, offset = 0x4, fixed_abs, tag = 'smem constant byte address 0x4 - core index']
  #allocation1 [shape = 'u32[144,128]{1,0:T(1,128)}', space=vmem, size = 0x12000, scoped, tag = 'internal scratch']
  %s0 = inlined_call_operand.vmem [shape: f32[512,196], index: 0, kind: input, shape index: {}]
  %s1 = inlined_call_operand.vmem [shape: f32[1024,196], index: 1, kind: input, shape index: {}]
  %s2 = inlined_call_operand.vmem [shape: f32[1024,512], index: 2, kind: input, shape index: {}]
  %s3 = inlined_call_operand.vmem [shape: f32[1024,1], index: 3, kind: input, shape index: {}]
  %s4 = inlined_call_operand.vmem [shape: f32[1024,1], index: 4, kind: input, shape index: {}]
  %s5 = inlined_call_operand.vmem [shape: f32[512,1024], index: 5, kind: input, shape index: {}]
  %s6 = inlined_call_operand.vmem [shape: f32[512,1], index: 6, kind: input, shape index: {}]
  %s7 = inlined_call_operand.vmem [shape: f32[512,1], index: 7, kind: input, shape index: {}]
  %s8 = inlined_call_operand.vmem [shape: f32[512,196], index: 8, kind: output, shape index: {}]
  %s9 = sld [smem:[#allocation0]]
  $region96: #{fused_block.1} parent=0
    _
  %s11 = ssub.s32 1, %s9
  %s12 = scalar_select 0, %s11, %s9
  $region1: #{fused_block.1} parent=0
    #allocation2 [shape = 'u8[2097152]{0}', space=vmem, size = 0x200000, scoped, tag = 'input window, operand 5']
    loop: start=0, step=1, limit=4
    $region2: #{fused_block.1} parent=1 // loop_pre_header
      _
    $region3: #{fused_block.1} parent=1 // loop_header
      %s14 = sphi 0, %s18
      %p15 = scmp.ge.s32.totalorder %s14, 4
      %s22 = sphi 0, %s22
      %s24 = sphi 0, %s22
      %s25 = sphi 0, %s24
      %s39 = sphi 0, %s25
      %s45 = sphi 0, %s47
      %s48 = sphi 0, %s45
      %s49 = sphi 0, %s48
      %s65 = sphi 0, %s49
      %s71 = sphi 0, %s73
      %s74 = sphi 0, %s71
      %s75 = sphi 0, %s74
      %s91 = sphi 0, %s75
      %s97 = sphi 0, %s99
      %s100 = sphi 0, %s97
      %s101 = sphi 0, %s100
      %s117 = sphi 0, %s101
      %s123 = sphi 0, %s125
      %s126 = sphi 0, %s123
      %s127 = sphi 0, %s126
      %s143 = sphi 0, %s127
      %s149 = sphi 0, %s151
      %s152 = sphi 0, %s149
      %s153 = sphi 0, %s152
      %s169 = sphi 0, %s153
      %s173 = sphi 0, %s173
      %s175 = sphi 0, %s173
      %s176 = sphi 0, %s175
      %s190 = sphi 0, %s176
      %s194 = sphi 0, %s194
      %s196 = sphi 0, %s194
      %s197 = sphi 0, %s196
      %s211 = sphi 0, %s197
      %s215 = sphi 0, %s215
      %s217 = sphi 0, %s215
      %s218 = sphi 0, %s217
      %s232 = sphi 0, %s218
    $region4: #{fused_block.1} parent=1 // loop_header_branch
      %17 = sbr.rel (%p15) target = $region8
    $region5: #{fused_block.1} parent=1 // loop_body
      %s19 = ssub.s32 %s14, 1
      %s20 = ssub.s32 %s14, 2
      %s21 = sadd.s32 %s14, 1
      %s23 = sadd.s32 %s22, 1
      %p26 = scmp.eq.s32.totalorder %s14, 1
      %p27 = scmp.ne.s32.totalorder %s22, %s24
      %p28 = scmp.eq.s32.totalorder %s14, 0
      %p29 = por %p27, %p28
      %p30 = scmp.ne.s32.totalorder %s22, %s24
      %p31 = scmp.eq.s32.totalorder %s19, 1
      %p32 = por %p30, %p31
      %p33 = scmp.ne.s32.totalorder %s24, %s25
      %p34 = scmp.eq.s32.totalorder %s19, 0
      %p35 = por %p33, %p34
      %p36 = scmp.ne.s32.totalorder %s24, %s25
      %p37 = scmp.eq.s32.totalorder %s20, 1
      %p38 = por %p36, %p37
      %p40 = scmp.ne.s32.totalorder %s25, %s39
      %p41 = scmp.eq.s32.totalorder %s20, 0
      %p42 = por %p40, %p41
      %s43 = ssub.s32 %s14, %s21
      %p44 = scmp.eq.s32.totalorder %s43, 0
      %s46 = sadd.s32 %s45, 1
      %s47 = scalar_select %p44, %s45, %s46
      %p50 = pneg %p44
      %p51 = scmp.eq.s32.totalorder %s14, 1
      %p52 = por %p50, %p51
      %p53 = scmp.ne.s32.totalorder %s45, %s48
      %p54 = scmp.eq.s32.totalorder %s14, 0
      %p55 = por %p53, %p54
      %p56 = scmp.ne.s32.totalorder %s45, %s48
      %p57 = scmp.eq.s32.totalorder %s19, 1
      %p58 = por %p56, %p57
      %p59 = scmp.ne.s32.totalorder %s48, %s49
      %p60 = scmp.eq.s32.totalorder %s19, 0
      %p61 = por %p59, %p60
      %p62 = scmp.ne.s32.totalorder %s48, %s49
      %p63 = scmp.eq.s32.totalorder %s20, 1
      %p64 = por %p62, %p63
      %p66 = scmp.ne.s32.totalorder %s49, %s65
      %p67 = scmp.eq.s32.totalorder %s20, 0
      %p68 = por %p66, %p67
      %s69 = ssub.s32 %s14, %s21
      %p70 = scmp.eq.s32.totalorder %s69, 0
      %s72 = sadd.s32 %s71, 1
      %s73 = scalar_select %p70, %s71, %s72
      %p76 = pneg %p70
      %p77 = scmp.eq.s32.totalorder %s14, 1
      %p78 = por %p76, %p77
      %p79 = scmp.ne.s32.totalorder %s71, %s74
      %p80 = scmp.eq.s32.totalorder %s14, 0
      %p81 = por %p79, %p80
      %p82 = scmp.ne.s32.totalorder %s71, %s74
      %p83 = scmp.eq.s32.totalorder %s19, 1
      %p84 = por %p82, %p83
      %p85 = scmp.ne.s32.totalorder %s74, %s75
      %p86 = scmp.eq.s32.totalorder %s19, 0
      %p87 = por %p85, %p86
      %p88 = scmp.ne.s32.totalorder %s74, %s75
      %p89 = scmp.eq.s32.totalorder %s20, 1
      %p90 = por %p88, %p89
      %p92 = scmp.ne.s32.totalorder %s75, %s91
      %p93 = scmp.eq.s32.totalorder %s20, 0
      %p94 = por %p92, %p93
      %s95 = ssub.s32 %s14, %s21
      %p96 = scmp.eq.s32.totalorder %s95, 0
      %s98 = sadd.s32 %s97, 1
      %s99 = scalar_select %p96, %s97, %s98
      %p102 = pneg %p96
      %p103 = scmp.eq.s32.totalorder %s14, 1
      %p104 = por %p102, %p103
      %p105 = scmp.ne.s32.totalorder %s97, %s100
      %p106 = scmp.eq.s32.totalorder %s14, 0
      %p107 = por %p105, %p106
      %p108 = scmp.ne.s32.totalorder %s97, %s100
      %p109 = scmp.eq.s32.totalorder %s19, 1
      %p110 = por %p108, %p109
      %p111 = scmp.ne.s32.totalorder %s100, %s101
      %p112 = scmp.eq.s32.totalorder %s19, 0
      %p113 = por %p111, %p112
      %p114 = scmp.ne.s32.totalorder %s100, %s101
      %p115 = scmp.eq.s32.totalorder %s20, 1
      %p116 = por %p114, %p115
      %p118 = scmp.ne.s32.totalorder %s101, %s117
      %p119 = scmp.eq.s32.totalorder %s20, 0
      %p120 = por %p118, %p119
      %s121 = ssub.s32 %s14, %s21
      %p122 = scmp.eq.s32.totalorder %s121, 0
      %s124 = sadd.s32 %s123, 1
      %s125 = scalar_select %p122, %s123, %s124
      %p128 = pneg %p122
      %p129 = scmp.eq.s32.totalorder %s14, 1
      %p130 = por %p128, %p129
      %p131 = scmp.ne.s32.totalorder %s123, %s126
      %p132 = scmp.eq.s32.totalorder %s14, 0
      %p133 = por %p131, %p132
      %p134 = scmp.ne.s32.totalorder %s123, %s126
      %p135 = scmp.eq.s32.totalorder %s19, 1
      %p136 = por %p134, %p135
      %p137 = scmp.ne.s32.totalorder %s126, %s127
      %p138 = scmp.eq.s32.totalorder %s19, 0
      %p139 = por %p137, %p138
      %p140 = scmp.ne.s32.totalorder %s126, %s127
      %p141 = scmp.eq.s32.totalorder %s20, 1
      %p142 = por %p140, %p141
      %p144 = scmp.ne.s32.totalorder %s127, %s143
      %p145 = scmp.eq.s32.totalorder %s20, 0
      %p146 = por %p144, %p145
      %s147 = ssub.s32 %s14, %s21
      %p148 = scmp.eq.s32.totalorder %s147, 0
      %s150 = sadd.s32 %s149, 1
      %s151 = scalar_select %p148, %s149, %s150
      %p154 = pneg %p148
      %p155 = scmp.eq.s32.totalorder %s14, 1
      %p156 = por %p154, %p155
      %p157 = scmp.ne.s32.totalorder %s149, %s152
      %p158 = scmp.eq.s32.totalorder %s14, 0
      %p159 = por %p157, %p158
      %p160 = scmp.ne.s32.totalorder %s149, %s152
      %p161 = scmp.eq.s32.totalorder %s19, 1
      %p162 = por %p160, %p161
      %p163 = scmp.ne.s32.totalorder %s152, %s153
      %p164 = scmp.eq.s32.totalorder %s19, 0
      %p165 = por %p163, %p164
      %p166 = scmp.ne.s32.totalorder %s152, %s153
      %p167 = scmp.eq.s32.totalorder %s20, 1
      %p168 = por %p166, %p167
      %p170 = scmp.ne.s32.totalorder %s153, %s169
      %p171 = scmp.eq.s32.totalorder %s20, 0
      %p172 = por %p170, %p171
      %s174 = sadd.s32 %s173, 1
      %p177 = scmp.eq.s32.totalorder %s14, 1
      %p178 = scmp.ne.s32.totalorder %s173, %s175
      %p179 = scmp.eq.s32.totalorder %s14, 0
      %p180 = por %p178, %p179
      %p181 = scmp.ne.s32.totalorder %s173, %s175
      %p182 = scmp.eq.s32.totalorder %s19, 1
      %p183 = por %p181, %p182
      %p184 = scmp.ne.s32.totalorder %s175, %s176
      %p185 = scmp.eq.s32.totalorder %s19, 0
      %p186 = por %p184, %p185
      %p187 = scmp.ne.s32.totalorder %s175, %s176
      %p188 = scmp.eq.s32.totalorder %s20, 1
      %p189 = por %p187, %p188
      %p191 = scmp.ne.s32.totalorder %s176, %s190
      %p192 = scmp.eq.s32.totalorder %s20, 0
      %p193 = por %p191, %p192
      %s195 = sadd.s32 %s194, 1
      %p198 = scmp.eq.s32.totalorder %s14, 1
      %p199 = scmp.ne.s32.totalorder %s194, %s196
      %p200 = scmp.eq.s32.totalorder %s14, 0
      %p201 = por %p199, %p200
      %p202 = scmp.ne.s32.totalorder %s194, %s196
      %p203 = scmp.eq.s32.totalorder %s19, 1
      %p204 = por %p202, %p203
      %p205 = scmp.ne.s32.totalorder %s196, %s197
      %p206 = scmp.eq.s32.totalorder %s19, 0
      %p207 = por %p205, %p206
      %p208 = scmp.ne.s32.totalorder %s196, %s197
      %p209 = scmp.eq.s32.totalorder %s20, 1
      %p210 = por %p208, %p209
      %p212 = scmp.ne.s32.totalorder %s197, %s211
      %p213 = scmp.eq.s32.totalorder %s20, 0
      %p214 = por %p212, %p213
      %s216 = sadd.s32 %s215, 1
      %p219 = scmp.eq.s32.totalorder %s14, 1
      %p220 = scmp.ne.s32.totalorder %s215, %s217
      %p221 = scmp.eq.s32.totalorder %s14, 0
      %p222 = por %p220, %p221
      %p223 = scmp.ne.s32.totalorder %s215, %s217
      %p224 = scmp.eq.s32.totalorder %s19, 1
      %p225 = por %p223, %p224
      %p226 = scmp.ne.s32.totalorder %s217, %s218
      %p227 = scmp.eq.s32.totalorder %s19, 0
      %p228 = por %p226, %p227
      %p229 = scmp.ne.s32.totalorder %s217, %s218
      %p230 = scmp.eq.s32.totalorder %s20, 1
      %p231 = por %p229, %p230
      %p233 = scmp.ne.s32.totalorder %s218, %s232
      %p234 = scmp.eq.s32.totalorder %s20, 0
      %p235 = por %p233, %p234
      %p236 = scmp.le.s32.totalorder 1, %s14
      %p237 = scmp.lt.s32.totalorder %s14, 3
      %p238 = pnand %p236, %p237
      %p239 = pneg %p238
      // Predicated region
      $region9: #{fused_block.1} parent=5 // pred_check
        _
      $region10: #{fused_block.1} parent=5 // pred_check_branch
        %241 = sbr.rel (%p238) target = $region12
      $region11: #{fused_block.1} parent=5 // pred_region
        %s242 = ssub.s32 %s14, 1
        // Predicated region
        $region13: #{fused_block.1} parent=11 // pred_check
          %p243 = pneg %p35
        $region14: #{fused_block.1} parent=11 // pred_check_branch
          %245 = sbr.rel (%p243) target = $region16
        $region15: #{fused_block.1} parent=11 // pred_region
          _
        $region16: #{fused_block.1} parent=11 // pred_fallthru
          _
        // Predicated region
        $region17: #{fused_block.1} parent=11 // pred_check
          %p246 = pneg %p186
        $region18: #{fused_block.1} parent=11 // pred_check_branch
          %248 = sbr.rel (%p246) target = $region20
        $region19: #{fused_block.1} parent=11 // pred_region
          _
        $region20: #{fused_block.1} parent=11 // pred_fallthru
          _
        // Predicated region
        $region21: #{fused_block.1} parent=11 // pred_check
          %p249 = pneg %p207
        $region22: #{fused_block.1} parent=11 // pred_check_branch
          %251 = sbr.rel (%p249) target = $region24
        $region23: #{fused_block.1} parent=11 // pred_region
          _
        $region24: #{fused_block.1} parent=11 // pred_fallthru
          _
      $region12: #{fused_block.1} parent=5 // pred_fallthru
        _
      %p252 = scmp.lt.s32.totalorder %s14, 2
      // Predicated region
      $region25: #{fused_block.1} parent=5 // pred_check
        %p253 = pneg %p252
      $region26: #{fused_block.1} parent=5 // pred_check_branch
        %255 = sbr.rel (%p253) target = $region28
      $region27: #{fused_block.1} parent=5 // pred_region
        // Predicated region
        $region29: #{fused_block.1} parent=27 // pred_check
          %p256 = pneg %p55
        $region30: #{fused_block.1} parent=27 // pred_check_branch
          %258 = sbr.rel (%p256) target = $region32
        $region31: #{fused_block.1} parent=27 // pred_region
          %s259 = smul.u32 64, %s14
          %p260 = scmp.lt.s32.totalorder %s259, 127
          %s261 = scalar_select %p260, %s259, 127
          %s262 = smul.addr %s261, 2
          %s263 = smul.addr %s262, 8
          %s264 = scalar_lea.vmem %s1, %s263
          %s265 = smul.u32 64, %s14
        $region32: #{fused_block.1} parent=27 // pred_fallthru
          _
        // Predicated region
        $region33: #{fused_block.1} parent=27 // pred_check
          %p266 = pneg %p81
        $region34: #{fused_block.1} parent=27 // pred_check_branch
          %268 = sbr.rel (%p266) target = $region36
        $region35: #{fused_block.1} parent=27 // pred_region
          %s269 = smul.u32 64, %s14
          %p270 = scmp.lt.s32.totalorder %s269, 127
          %s271 = scalar_select %p270, %s269, 127
          %s272 = smul.addr %s271, 4
          %s273 = smul.addr %s272, 8
          %s274 = scalar_lea.vmem %s2, %s273
          %s275 = smul.u32 64, %s14
        $region36: #{fused_block.1} parent=27 // pred_fallthru
          _
        // Predicated region
        $region37: #{fused_block.1} parent=27 // pred_check
          %p276 = pneg %p107
        $region38: #{fused_block.1} parent=27 // pred_check_branch
          %278 = sbr.rel (%p276) target = $region40
        $region39: #{fused_block.1} parent=27 // pred_region
          %s279 = smul.u32 64, %s14
          %p280 = scmp.lt.s32.totalorder %s279, 127
          %s281 = scalar_select %p280, %s279, 127
          %s282 = smul.addr %s281, 8
          %s283 = scalar_lea.vmem %s3, %s282
          %s284 = smul.u32 64, %s14
        $region40: #{fused_block.1} parent=27 // pred_fallthru
          _
        // Predicated region
        $region41: #{fused_block.1} parent=27 // pred_check
          %p285 = pneg %p133
        $region42: #{fused_block.1} parent=27 // pred_check_branch
          %287 = sbr.rel (%p285) target = $region44
        $region43: #{fused_block.1} parent=27 // pred_region
          %s288 = smul.u32 64, %s14
          %p289 = scmp.lt.s32.totalorder %s288, 127
          %s290 = scalar_select %p289, %s288, 127
          %s291 = smul.addr %s290, 8
          %s292 = scalar_lea.vmem %s4, %s291
          %s293 = smul.u32 64, %s14
        $region44: #{fused_block.1} parent=27 // pred_fallthru
          _
        // Predicated region
        $region45: #{fused_block.1} parent=27 // pred_check
          %p294 = pneg %p159
        $region46: #{fused_block.1} parent=27 // pred_check_branch
          %296 = sbr.rel (%p294) target = $region48
        $region47: #{fused_block.1} parent=27 // pred_region
          %s297 = sand.u32 %s149, 1
          %s298 = sand.u32 %s149, 1
          %s299 = smul.addr %s298, 2048
          %s300 = scalar_lea.vmem [#allocation2], %s299
          %s301 = smul.u32 4, %s14
          %s302 = smul.addr %s301, 8
          %s303 = scalar_lea.vmem %s5, %s302
          // Predicated region
          $region49: #{fused_block.1} parent=47 // pred_check
            _
          $region50: #{fused_block.1} parent=47 // pred_check_branch
            %305 = sbr.rel (0) target = $region52
          $region51: #{fused_block.1} parent=47 // pred_region
            // Predicated region
            $region53: #{fused_block.1} parent=51 // pred_check
              _
            $region54: #{fused_block.1} parent=51 // pred_check_branch
              %307 = sbr.rel (0) target = $region56
            $region55: #{fused_block.1} parent=51 // pred_region
              loop: start=0, step=1, limit=1
              $region57: #{fused_block.1} parent=55 // loop_pre_header
                _
              $region58: #{fused_block.1} parent=55 // loop_header
                %s309 = sphi 0, %s313
                %p310 = scmp.ge.s32.totalorder %s309, 1
                %s314 = sphi %s303, %s303
                %s315 = sphi %s300, %s300
              $region59: #{fused_block.1} parent=55 // loop_header_branch
                %312 = sbr.rel (%p310) target = $region63
              $region60: #{fused_block.1} parent=55 // loop_body
                %v316 = vld [vmem:[%s314] sm:$0xff]
                %317 = vst [vmem:[%s315] sm:$0xff] %v316
                %v318 = vld [vmem:[%s314 + $0x8] sm:$0xff]
                %319 = vst [vmem:[%s315 + $0x8] sm:$0xff] %v318
                %v320 = vld [vmem:[%s314 + $0x10] sm:$0xff]
                %321 = vst [vmem:[%s315 + $0x10] sm:$0xff] %v320
                %v322 = vld [vmem:[%s314 + $0x18] sm:$0xff]
                %323 = vst [vmem:[%s315 + $0x18] sm:$0xff] %v322
                %v324 = vld [vmem:[%s314 + $0x40] sm:$0xff]
                %325 = vst [vmem:[%s315 + $0x20] sm:$0xff] %v324
                %v326 = vld [vmem:[%s314 + $0x48] sm:$0xff]
                %327 = vst [vmem:[%s315 + $0x28] sm:$0xff] %v326
                %v328 = vld [vmem:[%s314 + $0x50] sm:$0xff]
                %329 = vst [vmem:[%s315 + $0x30] sm:$0xff] %v328
                %v330 = vld [vmem:[%s314 + $0x58] sm:$0xff]
                %331 = vst [vmem:[%s315 + $0x38] sm:$0xff] %v330
                %v332 = vld [vmem:[%s314 + $0x80] sm:$0xff]
                %333 = vst [vmem:[%s315 + $0x40] sm:$0xff] %v332
                %v334 = vld [vmem:[%s314 + $0x88] sm:$0xff]
                %335 = vst [vmem:[%s315 + $0x48] sm:$0xff] %v334
                %v336 = vld [vmem:[%s314 + $0x90] sm:$0xff]
                %337 = vst [vmem:[%s315 + $0x50] sm:$0xff] %v336
                %v338 = vld [vmem:[%s314 + $0x98] sm:$0xff]
                %339 = vst [vmem:[%s315 + $0x58] sm:$0xff] %v338
                %v340 = vld [vmem:[%s314 + $0xc0] sm:$0xff]
                %341 = vst [vmem:[%s315 + $0x60] sm:$0xff] %v340
                %v342 = vld [vmem:[%s314 + $0xc8] sm:$0xff]
                %343 = vst [vmem:[%s315 + $0x68] sm:$0xff] %v342
                %v344 = vld [vmem:[%s314 + $0xd0] sm:$0xff]
                %345 = vst [vmem:[%s315 + $0x70] sm:$0xff] %v344
                %v346 = vld [vmem:[%s314 + $0xd8] sm:$0xff]
                %347 = vst [vmem:[%s315 + $0x78] sm:$0xff] %v346
                %v348 = vld [vmem:[%s314 + $0x100] sm:$0xff]
                %349 = vst [vmem:[%s315 + $0x80] sm:$0xff] %v348
                %v350 = vld [vmem:[%s314 + $0x108] sm:$0xff]
                %351 = vst [vmem:[%s315 + $0x88] sm:$0xff] %v350
                %v352 = vld [vmem:[%s314 + $0x110] sm:$0xff]
                %353 = vst [vmem:[%s315 + $0x90] sm:$0xff] %v352
                %v354 = vld [vmem:[%s314 + $0x118] sm:$0xff]
                %355 = vst [vmem:[%s315 + $0x98] sm:$0xff] %v354
                %v356 = vld [vmem:[%s314 + $0x140] sm:$0xff]
                %357 = vst [vmem:[%s315 + $0xa0] sm:$0xff] %v356
                %v358 = vld [vmem:[%s314 + $0x148] sm:$0xff]
                %359 = vst [vmem:[%s315 + $0xa8] sm:$0xff] %v358
                %v360 = vld [vmem:[%s314 + $0x150] sm:$0xff]
                %361 = vst [vmem:[%s315 + $0xb0] sm:$0xff] %v360
                %v362 = vld [vmem:[%s314 + $0x158] sm:$0xff]
                %363 = vst [vmem:[%s315 + $0xb8] sm:$0xff] %v362
                %v364 = vld [vmem:[%s314 + $0x180] sm:$0xff]
                %365 = vst [vmem:[%s315 + $0xc0] sm:$0xff] %v364
                %v366 = vld [vmem:[%s314 + $0x188] sm:$0xff]
                %367 = vst [vmem:[%s315 + $0xc8] sm:$0xff] %v366
                %v368 = vld [vmem:[%s314 + $0x190] sm:$0xff]
                %369 = vst [vmem:[%s315 + $0xd0] sm:$0xff] %v368
                %v370 = vld [vmem:[%s314 + $0x198] sm:$0xff]
                %371 = vst [vmem:[%s315 + $0xd8] sm:$0xff] %v370
                %v372 = vld [vmem:[%s314 + $0x1c0] sm:$0xff]
                %373 = vst [vmem:[%s315 + $0xe0] sm:$0xff] %v372
                %v374 = vld [vmem:[%s314 + $0x1c8] sm:$0xff]
                %375 = vst [vmem:[%s315 + $0xe8] sm:$0xff] %v374
                %v376 = vld [vmem:[%s314 + $0x1d0] sm:$0xff]
                %377 = vst [vmem:[%s315 + $0xf0] sm:$0xff] %v376
                %v378 = vld [vmem:[%s314 + $0x1d8] sm:$0xff]
                %379 = vst [vmem:[%s315 + $0xf8] sm:$0xff] %v378
                %v380 = vld [vmem:[%s314 + $0x200] sm:$0xff]
                %381 = vst [vmem:[%s315 + $0x100] sm:$0xff] %v380
                %v382 = vld [vmem:[%s314 + $0x208] sm:$0xff]
                %383 = vst [vmem:[%s315 + $0x108] sm:$0xff] %v382
                %v384 = vld [vmem:[%s314 + $0x210] sm:$0xff]
                %385 = vst [vmem:[%s315 + $0x110] sm:$0xff] %v384
                %v386 = vld [vmem:[%s314 + $0x218] sm:$0xff]
                %387 = vst [vmem:[%s315 + $0x118] sm:$0xff] %v386
                %v388 = vld [vmem:[%s314 + $0x240] sm:$0xff]
                %389 = vst [vmem:[%s315 + $0x120] sm:$0xff] %v388
                %v390 = vld [vmem:[%s314 + $0x248] sm:$0xff]
                %391 = vst [vmem:[%s315 + $0x128] sm:$0xff] %v390
                %v392 = vld [vmem:[%s314 + $0x250] sm:$0xff]
                %393 = vst [vmem:[%s315 + $0x130] sm:$0xff] %v392
                %v394 = vld [vmem:[%s314 + $0x258] sm:$0xff]
                %395 = vst [vmem:[%s315 + $0x138] sm:$0xff] %v394
                %v396 = vld [vmem:[%s314 + $0x280] sm:$0xff]
                %397 = vst [vmem:[%s315 + $0x140] sm:$0xff] %v396
                %v398 = vld [vmem:[%s314 + $0x288] sm:$0xff]
                %399 = vst [vmem:[%s315 + $0x148] sm:$0xff] %v398
                %v400 = vld [vmem:[%s314 + $0x290] sm:$0xff]
                %401 = vst [vmem:[%s315 + $0x150] sm:$0xff] %v400
                %v402 = vld [vmem:[%s314 + $0x298] sm:$0xff]
                %403 = vst [vmem:[%s315 + $0x158] sm:$0xff] %v402
                %v404 = vld [vmem:[%s314 + $0x2c0] sm:$0xff]
                %405 = vst [vmem:[%s315 + $0x160] sm:$0xff] %v404
                %v406 = vld [vmem:[%s314 + $0x2c8] sm:$0xff]
                %407 = vst [vmem:[%s315 + $0x168] sm:$0xff] %v406
                %v408 = vld [vmem:[%s314 + $0x2d0] sm:$0xff]
                %409 = vst [vmem:[%s315 + $0x170] sm:$0xff] %v408
                %v410 = vld [vmem:[%s314 + $0x2d8] sm:$0xff]
                %411 = vst [vmem:[%s315 + $0x178] sm:$0xff] %v410
                %v412 = vld [vmem:[%s314 + $0x300] sm:$0xff]
                %413 = vst [vmem:[%s315 + $0x180] sm:$0xff] %v412
                %v414 = vld [vmem:[%s314 + $0x308] sm:$0xff]
                %415 = vst [vmem:[%s315 + $0x188] sm:$0xff] %v414
                %v416 = vld [vmem:[%s314 + $0x310] sm:$0xff]
                %417 = vst [vmem:[%s315 + $0x190] sm:$0xff] %v416
                %v418 = vld [vmem:[%s314 + $0x318] sm:$0xff]
                %419 = vst [vmem:[%s315 + $0x198] sm:$0xff] %v418
                %v420 = vld [vmem:[%s314 + $0x340] sm:$0xff]
                %421 = vst [vmem:[%s315 + $0x1a0] sm:$0xff] %v420
                %v422 = vld [vmem:[%s314 + $0x348] sm:$0xff]
                %423 = vst [vmem:[%s315 + $0x1a8] sm:$0xff] %v422
                %v424 = vld [vmem:[%s314 + $0x350] sm:$0xff]
                %425 = vst [vmem:[%s315 + $0x1b0] sm:$0xff] %v424
                %v426 = vld [vmem:[%s314 + $0x358] sm:$0xff]
                %427 = vst [vmem:[%s315 + $0x1b8] sm:$0xff] %v426
                %v428 = vld [vmem:[%s314 + $0x380] sm:$0xff]
                %429 = vst [vmem:[%s315 + $0x1c0] sm:$0xff] %v428
                %v430 = vld [vmem:[%s314 + $0x388] sm:$0xff]
                %431 = vst [vmem:[%s315 + $0x1c8] sm:$0xff] %v430
                %v432 = vld [vmem:[%s314 + $0x390] sm:$0xff]
                %433 = vst [vmem:[%s315 + $0x1d0] sm:$0xff] %v432
                %v434 = vld [vmem:[%s314 + $0x398] sm:$0xff]
                %435 = vst [vmem:[%s315 + $0x1d8] sm:$0xff] %v434
                %v436 = vld [vmem:[%s314 + $0x3c0] sm:$0xff]
                %437 = vst [vmem:[%s315 + $0x1e0] sm:$0xff] %v436
                %v438 = vld [vmem:[%s314 + $0x3c8] sm:$0xff]
                %439 = vst [vmem:[%s315 + $0x1e8] sm:$0xff] %v438
                %v440 = vld [vmem:[%s314 + $0x3d0] sm:$0xff]
                %441 = vst [vmem:[%s315 + $0x1f0] sm:$0xff] %v440
                %v442 = vld [vmem:[%s314 + $0x3d8] sm:$0xff]
                %443 = vst [vmem:[%s315 + $0x1f8] sm:$0xff] %v442
                %v444 = vld [vmem:[%s314 + $0x400] sm:$0xff]
                %445 = vst [vmem:[%s315 + $0x200] sm:$0xff] %v444
                %v446 = vld [vmem:[%s314 + $0x408] sm:$0xff]
                %447 = vst [vmem:[%s315 + $0x208] sm:$0xff] %v446
                %v448 = vld [vmem:[%s314 + $0x410] sm:$0xff]
                %449 = vst [vmem:[%s315 + $0x210] sm:$0xff] %v448
                %v450 = vld [vmem:[%s314 + $0x418] sm:$0xff]
                %451 = vst [vmem:[%s315 + $0x218] sm:$0xff] %v450
                %v452 = vld [vmem:[%s314 + $0x440] sm:$0xff]
                %453 = vst [vmem:[%s315 + $0x220] sm:$0xff] %v452
                %v454 = vld [vmem:[%s314 + $0x448] sm:$0xff]
                %455 = vst [vmem:[%s315 + $0x228] sm:$0xff] %v454
                %v456 = vld [vmem:[%s314 + $0x450] sm:$0xff]
                %457 = vst [vmem:[%s315 + $0x230] sm:$0xff] %v456
                %v458 = vld [vmem:[%s314 + $0x458] sm:$0xff]
                %459 = vst [vmem:[%s315 + $0x238] sm:$0xff] %v458
                %v460 = vld [vmem:[%s314 + $0x480] sm:$0xff]
                %461 = vst [vmem:[%s315 + $0x240] sm:$0xff] %v460
                %v462 = vld [vmem:[%s314 + $0x488] sm:$0xff]
                %463 = vst [vmem:[%s315 + $0x248] sm:$0xff] %v462
                %v464 = vld [vmem:[%s314 + $0x490] sm:$0xff]
                %465 = vst [vmem:[%s315 + $0x250] sm:$0xff] %v464
                %v466 = vld [vmem:[%s314 + $0x498] sm:$0xff]
                %467 = vst [vmem:[%s315 + $0x258] sm:$0xff] %v466
                %v468 = vld [vmem:[%s314 + $0x4c0] sm:$0xff]
                %469 = vst [vmem:[%s315 + $0x260] sm:$0xff] %v468
                %v470 = vld [vmem:[%s314 + $0x4c8] sm:$0xff]
                %471 = vst [vmem:[%s315 + $0x268] sm:$0xff] %v470
                %v472 = vld [vmem:[%s314 + $0x4d0] sm:$0xff]
                %473 = vst [vmem:[%s315 + $0x270] sm:$0xff] %v472
                %v474 = vld [vmem:[%s314 + $0x4d8] sm:$0xff]
                %475 = vst [vmem:[%s315 + $0x278] sm:$0xff] %v474
                %v476 = vld [vmem:[%s314 + $0x500] sm:$0xff]
                %477 = vst [vmem:[%s315 + $0x280] sm:$0xff] %v476
                %v478 = vld [vmem:[%s314 + $0x508] sm:$0xff]
                %479 = vst [vmem:[%s315 + $0x288] sm:$0xff] %v478
                %v480 = vld [vmem:[%s314 + $0x510] sm:$0xff]
                %481 = vst [vmem:[%s315 + $0x290] sm:$0xff] %v480
                %v482 = vld [vmem:[%s314 + $0x518] sm:$0xff]
                %483 = vst [vmem:[%s315 + $0x298] sm:$0xff] %v482
                %v484 = vld [vmem:[%s314 + $0x540] sm:$0xff]
                %485 = vst [vmem:[%s315 + $0x2a0] sm:$0xff] %v484
                %v486 = vld [vmem:[%s314 + $0x548] sm:$0xff]
                %487 = vst [vmem:[%s315 + $0x2a8] sm:$0xff] %v486
                %v488 = vld [vmem:[%s314 + $0x550] sm:$0xff]
                %489 = vst [vmem:[%s315 + $0x2b0] sm:$0xff] %v488
                %v490 = vld [vmem:[%s314 + $0x558] sm:$0xff]
                %491 = vst [vmem:[%s315 + $0x2b8] sm:$0xff] %v490
                %v492 = vld [vmem:[%s314 + $0x580] sm:$0xff]
                %493 = vst [vmem:[%s315 + $0x2c0] sm:$0xff] %v492
                %v494 = vld [vmem:[%s314 + $0x588] sm:$0xff]
                %495 = vst [vmem:[%s315 + $0x2c8] sm:$0xff] %v494
                %v496 = vld [vmem:[%s314 + $0x590] sm:$0xff]
                %497 = vst [vmem:[%s315 + $0x2d0] sm:$0xff] %v496
                %v498 = vld [vmem:[%s314 + $0x598] sm:$0xff]
                %499 = vst [vmem:[%s315 + $0x2d8] sm:$0xff] %v498
                %v500 = vld [vmem:[%s314 + $0x5c0] sm:$0xff]
                %501 = vst [vmem:[%s315 + $0x2e0] sm:$0xff] %v500
                %v502 = vld [vmem:[%s314 + $0x5c8] sm:$0xff]
                %503 = vst [vmem:[%s315 + $0x2e8] sm:$0xff] %v502
                %v504 = vld [vmem:[%s314 + $0x5d0] sm:$0xff]
                %505 = vst [vmem:[%s315 + $0x2f0] sm:$0xff] %v504
                %v506 = vld [vmem:[%s314 + $0x5d8] sm:$0xff]
                %507 = vst [vmem:[%s315 + $0x2f8] sm:$0xff] %v506
                %v508 = vld [vmem:[%s314 + $0x600] sm:$0xff]
                %509 = vst [vmem:[%s315 + $0x300] sm:$0xff] %v508
                %v510 = vld [vmem:[%s314 + $0x608] sm:$0xff]
                %511 = vst [vmem:[%s315 + $0x308] sm:$0xff] %v510
                %v512 = vld [vmem:[%s314 + $0x610] sm:$0xff]
                %513 = vst [vmem:[%s315 + $0x310] sm:$0xff] %v512
                %v514 = vld [vmem:[%s314 + $0x618] sm:$0xff]
                %515 = vst [vmem:[%s315 + $0x318] sm:$0xff] %v514
                %v516 = vld [vmem:[%s314 + $0x640] sm:$0xff]
                %517 = vst [vmem:[%s315 + $0x320] sm:$0xff] %v516
                %v518 = vld [vmem:[%s314 + $0x648] sm:$0xff]
                %519 = vst [vmem:[%s315 + $0x328] sm:$0xff] %v518
                %v520 = vld [vmem:[%s314 + $0x650] sm:$0xff]
                %521 = vst [vmem:[%s315 + $0x330] sm:$0xff] %v520
                %v522 = vld [vmem:[%s314 + $0x658] sm:$0xff]
                %523 = vst [vmem:[%s315 + $0x338] sm:$0xff] %v522
                %v524 = vld [vmem:[%s314 + $0x680] sm:$0xff]
                %525 = vst [vmem:[%s315 + $0x340] sm:$0xff] %v524
                %v526 = vld [vmem:[%s314 + $0x688] sm:$0xff]
                %527 = vst [vmem:[%s315 + $0x348] sm:$0xff] %v526
                %v528 = vld [vmem:[%s314 + $0x690] sm:$0xff]
                %529 = vst [vmem:[%s315 + $0x350] sm:$0xff] %v528
                %v530 = vld [vmem:[%s314 + $0x698] sm:$0xff]
                %531 = vst [vmem:[%s315 + $0x358] sm:$0xff] %v530
                %v532 = vld [vmem:[%s314 + $0x6c0] sm:$0xff]
                %533 = vst [vmem:[%s315 + $0x360] sm:$0xff] %v532
                %v534 = vld [vmem:[%s314 + $0x6c8] sm:$0xff]
                %535 = vst [vmem:[%s315 + $0x368] sm:$0xff] %v534
                %v536 = vld [vmem:[%s314 + $0x6d0] sm:$0xff]
                %537 = vst [vmem:[%s315 + $0x370] sm:$0xff] %v536
                %v538 = vld [vmem:[%s314 + $0x6d8] sm:$0xff]
                %539 = vst [vmem:[%s315 + $0x378] sm:$0xff] %v538
                %v540 = vld [vmem:[%s314 + $0x700] sm:$0xff]
                %541 = vst [vmem:[%s315 + $0x380] sm:$0xff] %v540
                %v542 = vld [vmem:[%s314 + $0x708] sm:$0xff]
                %543 = vst [vmem:[%s315 + $0x388] sm:$0xff] %v542
                %v544 = vld [vmem:[%s314 + $0x710] sm:$0xff]
                %545 = vst [vmem:[%s315 + $0x390] sm:$0xff] %v544
                %v546 = vld [vmem:[%s314 + $0x718] sm:$0xff]
                %547 = vst [vmem:[%s315 + $0x398] sm:$0xff] %v546
                %v548 = vld [vmem:[%s314 + $0x740] sm:$0xff]
                %549 = vst [vmem:[%s315 + $0x3a0] sm:$0xff] %v548
                %v550 = vld [vmem:[%s314 + $0x748] sm:$0xff]
                %551 = vst [vmem:[%s315 + $0x3a8] sm:$0xff] %v550
                %v552 = vld [vmem:[%s314 + $0x750] sm:$0xff]
                %553 = vst [vmem:[%s315 + $0x3b0] sm:$0xff] %v552
                %v554 = vld [vmem:[%s314 + $0x758] sm:$0xff]
                %555 = vst [vmem:[%s315 + $0x3b8] sm:$0xff] %v554
                %v556 = vld [vmem:[%s314 + $0x780] sm:$0xff]
                %557 = vst [vmem:[%s315 + $0x3c0] sm:$0xff] %v556
                %v558 = vld [vmem:[%s314 + $0x788] sm:$0xff]
                %559 = vst [vmem:[%s315 + $0x3c8] sm:$0xff] %v558
                %v560 = vld [vmem:[%s314 + $0x790] sm:$0xff]
                %561 = vst [vmem:[%s315 + $0x3d0] sm:$0xff] %v560
                %v562 = vld [vmem:[%s314 + $0x798] sm:$0xff]
                %563 = vst [vmem:[%s315 + $0x3d8] sm:$0xff] %v562
                %v564 = vld [vmem:[%s314 + $0x7c0] sm:$0xff]
                %565 = vst [vmem:[%s315 + $0x3e0] sm:$0xff] %v564
                %v566 = vld [vmem:[%s314 + $0x7c8] sm:$0xff]
                %567 = vst [vmem:[%s315 + $0x3e8] sm:$0xff] %v566
                %v568 = vld [vmem:[%s314 + $0x7d0] sm:$0xff]
                %569 = vst [vmem:[%s315 + $0x3f0] sm:$0xff] %v568
                %v570 = vld [vmem:[%s314 + $0x7d8] sm:$0xff]
                %571 = vst [vmem:[%s315 + $0x3f8] sm:$0xff] %v570
                %v572 = vld [vmem:[%s314 + $0x800] sm:$0xff]
                %573 = vst [vmem:[%s315 + $0x400] sm:$0xff] %v572
                %v574 = vld [vmem:[%s314 + $0x808] sm:$0xff]
                %575 = vst [vmem:[%s315 + $0x408] sm:$0xff] %v574
                %v576 = vld [vmem:[%s314 + $0x810] sm:$0xff]
                %577 = vst [vmem:[%s315 + $0x410] sm:$0xff] %v576
                %v578 = vld [vmem:[%s314 + $0x818] sm:$0xff]
                %579 = vst [vmem:[%s315 + $0x418] sm:$0xff] %v578
                %v580 = vld [vmem:[%s314 + $0x840] sm:$0xff]
                %581 = vst [vmem:[%s315 + $0x420] sm:$0xff] %v580
                %v582 = vld [vmem:[%s314 + $0x848] sm:$0xff]
                %583 = vst [vmem:[%s315 + $0x428] sm:$0xff] %v582
                %v584 = vld [vmem:[%s314 + $0x850] sm:$0xff]
                %585 = vst [vmem:[%s315 + $0x430] sm:$0xff] %v584
                %v586 = vld [vmem:[%s314 + $0x858] sm:$0xff]
                %587 = vst [vmem:[%s315 + $0x438] sm:$0xff] %v586
                %v588 = vld [vmem:[%s314 + $0x880] sm:$0xff]
                %589 = vst [vmem:[%s315 + $0x440] sm:$0xff] %v588
                %v590 = vld [vmem:[%s314 + $0x888] sm:$0xff]
                %591 = vst [vmem:[%s315 + $0x448] sm:$0xff] %v590
                %v592 = vld [vmem:[%s314 + $0x890] sm:$0xff]
                %593 = vst [vmem:[%s315 + $0x450] sm:$0xff] %v592
                %v594 = vld [vmem:[%s314 + $0x898] sm:$0xff]
                %595 = vst [vmem:[%s315 + $0x458] sm:$0xff] %v594
                %v596 = vld [vmem:[%s314 + $0x8c0] sm:$0xff]
                %597 = vst [vmem:[%s315 + $0x460] sm:$0xff] %v596
                %v598 = vld [vmem:[%s314 + $0x8c8] sm:$0xff]
                %599 = vst [vmem:[%s315 + $0x468] sm:$0xff] %v598
                %v600 = vld [vmem:[%s314 + $0x8d0] sm:$0xff]
                %601 = vst [vmem:[%s315 + $0x470] sm:$0xff] %v600
                %v602 = vld [vmem:[%s314 + $0x8d8] sm:$0xff]
                %603 = vst [vmem:[%s315 + $0x478] sm:$0xff] %v602
                %v604 = vld [vmem:[%s314 + $0x900] sm:$0xff]
                %605 = vst [vmem:[%s315 + $0x480] sm:$0xff] %v604
                %v606 = vld [vmem:[%s314 + $0x908] sm:$0xff]
                %607 = vst [vmem:[%s315 + $0x488] sm:$0xff] %v606
                %v608 = vld [vmem:[%s314 + $0x910] sm:$0xff]
                %609 = vst [vmem:[%s315 + $0x490] sm:$0xff] %v608
                %v610 = vld [vmem:[%s314 + $0x918] sm:$0xff]
                %611 = vst [vmem:[%s315 + $0x498] sm:$0xff] %v610
                %v612 = vld [vmem:[%s314 + $0x940] sm:$0xff]
                %613 = vst [vmem:[%s315 + $0x4a0] sm:$0xff] %v612
                %v614 = vld [vmem:[%s314 + $0x948] sm:$0xff]
                %615 = vst [vmem:[%s315 + $0x4a8] sm:$0xff] %v614
                %v616 = vld [vmem:[%s314 + $0x950] sm:$0xff]
                %617 = vst [vmem:[%s315 + $0x4b0] sm:$0xff] %v616
                %v618 = vld [vmem:[%s314 + $0x958] sm:$0xff]
                %619 = vst [vmem:[%s315 + $0x4b8] sm:$0xff] %v618
                %v620 = vld [vmem:[%s314 + $0x980] sm:$0xff]
                %621 = vst [vmem:[%s315 + $0x4c0] sm:$0xff] %v620
                %v622 = vld [vmem:[%s314 + $0x988] sm:$0xff]
                %623 = vst [vmem:[%s315 + $0x4c8] sm:$0xff] %v622
                %v624 = vld [vmem:[%s314 + $0x990] sm:$0xff]
                %625 = vst [vmem:[%s315 + $0x4d0] sm:$0xff] %v624
                %v626 = vld [vmem:[%s314 + $0x998] sm:$0xff]
                %627 = vst [vmem:[%s315 + $0x4d8] sm:$0xff] %v626
                %v628 = vld [vmem:[%s314 + $0x9c0] sm:$0xff]
                %629 = vst [vmem:[%s315 + $0x4e0] sm:$0xff] %v628
                %v630 = vld [vmem:[%s314 + $0x9c8] sm:$0xff]
                %631 = vst [vmem:[%s315 + $0x4e8] sm:$0xff] %v630
                %v632 = vld [vmem:[%s314 + $0x9d0] sm:$0xff]
                %633 = vst [vmem:[%s315 + $0x4f0] sm:$0xff] %v632
                %v634 = vld [vmem:[%s314 + $0x9d8] sm:$0xff]
                %635 = vst [vmem:[%s315 + $0x4f8] sm:$0xff] %v634
                %v636 = vld [vmem:[%s314 + $0xa00] sm:$0xff]
                %637 = vst [vmem:[%s315 + $0x500] sm:$0xff] %v636
                %v638 = vld [vmem:[%s314 + $0xa08] sm:$0xff]
                %639 = vst [vmem:[%s315 + $0x508] sm:$0xff] %v638
                %v640 = vld [vmem:[%s314 + $0xa10] sm:$0xff]
                %641 = vst [vmem:[%s315 + $0x510] sm:$0xff] %v640
                %v642 = vld [vmem:[%s314 + $0xa18] sm:$0xff]
                %643 = vst [vmem:[%s315 + $0x518] sm:$0xff] %v642
                %v644 = vld [vmem:[%s314 + $0xa40] sm:$0xff]
                %645 = vst [vmem:[%s315 + $0x520] sm:$0xff] %v644
                %v646 = vld [vmem:[%s314 + $0xa48] sm:$0xff]
                %647 = vst [vmem:[%s315 + $0x528] sm:$0xff] %v646
                %v648 = vld [vmem:[%s314 + $0xa50] sm:$0xff]
                %649 = vst [vmem:[%s315 + $0x530] sm:$0xff] %v648
                %v650 = vld [vmem:[%s314 + $0xa58] sm:$0xff]
                %651 = vst [vmem:[%s315 + $0x538] sm:$0xff] %v650
                %v652 = vld [vmem:[%s314 + $0xa80] sm:$0xff]
                %653 = vst [vmem:[%s315 + $0x540] sm:$0xff] %v652
                %v654 = vld [vmem:[%s314 + $0xa88] sm:$0xff]
                %655 = vst [vmem:[%s315 + $0x548] sm:$0xff] %v654
                %v656 = vld [vmem:[%s314 + $0xa90] sm:$0xff]
                %657 = vst [vmem:[%s315 + $0x550] sm:$0xff] %v656
                %v658 = vld [vmem:[%s314 + $0xa98] sm:$0xff]
                %659 = vst [vmem:[%s315 + $0x558] sm:$0xff] %v658
                %v660 = vld [vmem:[%s314 + $0xac0] sm:$0xff]
                %661 = vst [vmem:[%s315 + $0x560] sm:$0xff] %v660
                %v662 = vld [vmem:[%s314 + $0xac8] sm:$0xff]
                %663 = vst [vmem:[%s315 + $0x568] sm:$0xff] %v662
                %v664 = vld [vmem:[%s314 + $0xad0] sm:$0xff]
                %665 = vst [vmem:[%s315 + $0x570] sm:$0xff] %v664
                %v666 = vld [vmem:[%s314 + $0xad8] sm:$0xff]
                %667 = vst [vmem:[%s315 + $0x578] sm:$0xff] %v666
                %v668 = vld [vmem:[%s314 + $0xb00] sm:$0xff]
                %669 = vst [vmem:[%s315 + $0x580] sm:$0xff] %v668
                %v670 = vld [vmem:[%s314 + $0xb08] sm:$0xff]
                %671 = vst [vmem:[%s315 + $0x588] sm:$0xff] %v670
                %v672 = vld [vmem:[%s314 + $0xb10] sm:$0xff]
                %673 = vst [vmem:[%s315 + $0x590] sm:$0xff] %v672
                %v674 = vld [vmem:[%s314 + $0xb18] sm:$0xff]
                %675 = vst [vmem:[%s315 + $0x598] sm:$0xff] %v674
                %v676 = vld [vmem:[%s314 + $0xb40] sm:$0xff]
                %677 = vst [vmem:[%s315 + $0x5a0] sm:$0xff] %v676
                %v678 = vld [vmem:[%s314 + $0xb48] sm:$0xff]
                %679 = vst [vmem:[%s315 + $0x5a8] sm:$0xff] %v678
                %v680 = vld [vmem:[%s314 + $0xb50] sm:$0xff]
                %681 = vst [vmem:[%s315 + $0x5b0] sm:$0xff] %v680
                %v682 = vld [vmem:[%s314 + $0xb58] sm:$0xff]
                %683 = vst [vmem:[%s315 + $0x5b8] sm:$0xff] %v682
                %v684 = vld [vmem:[%s314 + $0xb80] sm:$0xff]
                %685 = vst [vmem:[%s315 + $0x5c0] sm:$0xff] %v684
                %v686 = vld [vmem:[%s314 + $0xb88] sm:$0xff]
                %687 = vst [vmem:[%s315 + $0x5c8] sm:$0xff] %v686
                %v688 = vld [vmem:[%s314 + $0xb90] sm:$0xff]
                %689 = vst [vmem:[%s315 + $0x5d0] sm:$0xff] %v688
                %v690 = vld [vmem:[%s314 + $0xb98] sm:$0xff]
                %691 = vst [vmem:[%s315 + $0x5d8] sm:$0xff] %v690
                %v692 = vld [vmem:[%s314 + $0xbc0] sm:$0xff]
                %693 = vst [vmem:[%s315 + $0x5e0] sm:$0xff] %v692
                %v694 = vld [vmem:[%s314 + $0xbc8] sm:$0xff]
                %695 = vst [vmem:[%s315 + $0x5e8] sm:$0xff] %v694
                %v696 = vld [vmem:[%s314 + $0xbd0] sm:$0xff]
                %697 = vst [vmem:[%s315 + $0x5f0] sm:$0xff] %v696
                %v698 = vld [vmem:[%s314 + $0xbd8] sm:$0xff]
                %699 = vst [vmem:[%s315 + $0x5f8] sm:$0xff] %v698
                %v700 = vld [vmem:[%s314 + $0xc00] sm:$0xff]
                %701 = vst [vmem:[%s315 + $0x600] sm:$0xff] %v700
                %v702 = vld [vmem:[%s314 + $0xc08] sm:$0xff]
                %703 = vst [vmem:[%s315 + $0x608] sm:$0xff] %v702
                %v704 = vld [vmem:[%s314 + $0xc10] sm:$0xff]
                %705 = vst [vmem:[%s315 + $0x610] sm:$0xff] %v704
                %v706 = vld [vmem:[%s314 + $0xc18] sm:$0xff]
                %707 = vst [vmem:[%s315 + $0x618] sm:$0xff] %v706
                %v708 = vld [vmem:[%s314 + $0xc40] sm:$0xff]
                %709 = vst [vmem:[%s315 + $0x620] sm:$0xff] %v708
                %v710 = vld [vmem:[%s314 + $0xc48] sm:$0xff]
                %711 = vst [vmem:[%s315 + $0x628] sm:$0xff] %v710
                %v712 = vld [vmem:[%s314 + $0xc50] sm:$0xff]
                %713 = vst [vmem:[%s315 + $0x630] sm:$0xff] %v712
                %v714 = vld [vmem:[%s314 + $0xc58] sm:$0xff]
                %715 = vst [vmem:[%s315 + $0x638] sm:$0xff] %v714
                %v716 = vld [vmem:[%s314 + $0xc80] sm:$0xff]
                %717 = vst [vmem:[%s315 + $0x640] sm:$0xff] %v716
                %v718 = vld [vmem:[%s314 + $0xc88] sm:$0xff]
                %719 = vst [vmem:[%s315 + $0x648] sm:$0xff] %v718
                %v720 = vld [vmem:[%s314 + $0xc90] sm:$0xff]
                %721 = vst [vmem:[%s315 + $0x650] sm:$0xff] %v720
                %v722 = vld [vmem:[%s314 + $0xc98] sm:$0xff]
                %723 = vst [vmem:[%s315 + $0x658] sm:$0xff] %v722
                %v724 = vld [vmem:[%s314 + $0xcc0] sm:$0xff]
                %725 = vst [vmem:[%s315 + $0x660] sm:$0xff] %v724
                %v726 = vld [vmem:[%s314 + $0xcc8] sm:$0xff]
                %727 = vst [vmem:[%s315 + $0x668] sm:$0xff] %v726
                %v728 = vld [vmem:[%s314 + $0xcd0] sm:$0xff]
                %729 = vst [vmem:[%s315 + $0x670] sm:$0xff] %v728
                %v730 = vld [vmem:[%s314 + $0xcd8] sm:$0xff]
                %731 = vst [vmem:[%s315 + $0x678] sm:$0xff] %v730
                %v732 = vld [vmem:[%s314 + $0xd00] sm:$0xff]
                %733 = vst [vmem:[%s315 + $0x680] sm:$0xff] %v732
                %v734 = vld [vmem:[%s314 + $0xd08] sm:$0xff]
                %735 = vst [vmem:[%s315 + $0x688] sm:$0xff] %v734
                %v736 = vld [vmem:[%s314 + $0xd10] sm:$0xff]
                %737 = vst [vmem:[%s315 + $0x690] sm:$0xff] %v736
                %v738 = vld [vmem:[%s314 + $0xd18] sm:$0xff]
                %739 = vst [vmem:[%s315 + $0x698] sm:$0xff] %v738
                %v740 = vld [vmem:[%s314 + $0xd40] sm:$0xff]
                %741 = vst [vmem:[%s315 + $0x6a0] sm:$0xff] %v740
                %v742 = vld [vmem:[%s314 + $0xd48] sm:$0xff]
                %743 = vst [vmem:[%s315 + $0x6a8] sm:$0xff] %v742
                %v744 = vld [vmem:[%s314 + $0xd50] sm:$0xff]
                %745 = vst [vmem:[%s315 + $0x6b0] sm:$0xff] %v744
                %v746 = vld [vmem:[%s314 + $0xd58] sm:$0xff]
                %747 = vst [vmem:[%s315 + $0x6b8] sm:$0xff] %v746
                %v748 = vld [vmem:[%s314 + $0xd80] sm:$0xff]
                %749 = vst [vmem:[%s315 + $0x6c0] sm:$0xff] %v748
                %v750 = vld [vmem:[%s314 + $0xd88] sm:$0xff]
                %751 = vst [vmem:[%s315 + $0x6c8] sm:$0xff] %v750
                %v752 = vld [vmem:[%s314 + $0xd90] sm:$0xff]
                %753 = vst [vmem:[%s315 + $0x6d0] sm:$0xff] %v752
                %v754 = vld [vmem:[%s314 + $0xd98] sm:$0xff]
                %755 = vst [vmem:[%s315 + $0x6d8] sm:$0xff] %v754
                %v756 = vld [vmem:[%s314 + $0xdc0] sm:$0xff]
                %757 = vst [vmem:[%s315 + $0x6e0] sm:$0xff] %v756
                %v758 = vld [vmem:[%s314 + $0xdc8] sm:$0xff]
                %759 = vst [vmem:[%s315 + $0x6e8] sm:$0xff] %v758
                %v760 = vld [vmem:[%s314 + $0xdd0] sm:$0xff]
                %761 = vst [vmem:[%s315 + $0x6f0] sm:$0xff] %v760
                %v762 = vld [vmem:[%s314 + $0xdd8] sm:$0xff]
                %763 = vst [vmem:[%s315 + $0x6f8] sm:$0xff] %v762
                %v764 = vld [vmem:[%s314 + $0xe00] sm:$0xff]
                %765 = vst [vmem:[%s315 + $0x700] sm:$0xff] %v764
                %v766 = vld [vmem:[%s314 + $0xe08] sm:$0xff]
                %767 = vst [vmem:[%s315 + $0x708] sm:$0xff] %v766
                %v768 = vld [vmem:[%s314 + $0xe10] sm:$0xff]
                %769 = vst [vmem:[%s315 + $0x710] sm:$0xff] %v768
                %v770 = vld [vmem:[%s314 + $0xe18] sm:$0xff]
                %771 = vst [vmem:[%s315 + $0x718] sm:$0xff] %v770
                %v772 = vld [vmem:[%s314 + $0xe40] sm:$0xff]
                %773 = vst [vmem:[%s315 + $0x720] sm:$0xff] %v772
                %v774 = vld [vmem:[%s314 + $0xe48] sm:$0xff]
                %775 = vst [vmem:[%s315 + $0x728] sm:$0xff] %v774
                %v776 = vld [vmem:[%s314 + $0xe50] sm:$0xff]
                %777 = vst [vmem:[%s315 + $0x730] sm:$0xff] %v776
                %v778 = vld [vmem:[%s314 + $0xe58] sm:$0xff]
                %779 = vst [vmem:[%s315 + $0x738] sm:$0xff] %v778
                %v780 = vld [vmem:[%s314 + $0xe80] sm:$0xff]
                %781 = vst [vmem:[%s315 + $0x740] sm:$0xff] %v780
                %v782 = vld [vmem:[%s314 + $0xe88] sm:$0xff]
                %783 = vst [vmem:[%s315 + $0x748] sm:$0xff] %v782
                %v784 = vld [vmem:[%s314 + $0xe90] sm:$0xff]
                %785 = vst [vmem:[%s315 + $0x750] sm:$0xff] %v784
                %v786 = vld [vmem:[%s314 + $0xe98] sm:$0xff]
                %787 = vst [vmem:[%s315 + $0x758] sm:$0xff] %v786
                %v788 = vld [vmem:[%s314 + $0xec0] sm:$0xff]
                %789 = vst [vmem:[%s315 + $0x760] sm:$0xff] %v788
                %v790 = vld [vmem:[%s314 + $0xec8] sm:$0xff]
                %791 = vst [vmem:[%s315 + $0x768] sm:$0xff] %v790
                %v792 = vld [vmem:[%s314 + $0xed0] sm:$0xff]
                %793 = vst [vmem:[%s315 + $0x770] sm:$0xff] %v792
                %v794 = vld [vmem:[%s314 + $0xed8] sm:$0xff]
                %795 = vst [vmem:[%s315 + $0x778] sm:$0xff] %v794
                %v796 = vld [vmem:[%s314 + $0xf00] sm:$0xff]
                %797 = vst [vmem:[%s315 + $0x780] sm:$0xff] %v796
                %v798 = vld [vmem:[%s314 + $0xf08] sm:$0xff]
                %799 = vst [vmem:[%s315 + $0x788] sm:$0xff] %v798
                %v800 = vld [vmem:[%s314 + $0xf10] sm:$0xff]
                %801 = vst [vmem:[%s315 + $0x790] sm:$0xff] %v800
                %v802 = vld [vmem:[%s314 + $0xf18] sm:$0xff]
                %803 = vst [vmem:[%s315 + $0x798] sm:$0xff] %v802
                %v804 = vld [vmem:[%s314 + $0xf40] sm:$0xff]
                %805 = vst [vmem:[%s315 + $0x7a0] sm:$0xff] %v804
                %v806 = vld [vmem:[%s314 + $0xf48] sm:$0xff]
                %807 = vst [vmem:[%s315 + $0x7a8] sm:$0xff] %v806
                %v808 = vld [vmem:[%s314 + $0xf50] sm:$0xff]
                %809 = vst [vmem:[%s315 + $0x7b0] sm:$0xff] %v808
                %v810 = vld [vmem:[%s314 + $0xf58] sm:$0xff]
                %811 = vst [vmem:[%s315 + $0x7b8] sm:$0xff] %v810
                %v812 = vld [vmem:[%s314 + $0xf80] sm:$0xff]
                %813 = vst [vmem:[%s315 + $0x7c0] sm:$0xff] %v812
                %v814 = vld [vmem:[%s314 + $0xf88] sm:$0xff]
                %815 = vst [vmem:[%s315 + $0x7c8] sm:$0xff] %v814
                %v816 = vld [vmem:[%s314 + $0xf90] sm:$0xff]
                %817 = vst [vmem:[%s315 + $0x7d0] sm:$0xff] %v816
                %v818 = vld [vmem:[%s314 + $0xf98] sm:$0xff]
                %819 = vst [vmem:[%s315 + $0x7d8] sm:$0xff] %v818
                %v820 = vld [vmem:[%s314 + $0xfc0] sm:$0xff]
                %821 = vst [vmem:[%s315 + $0x7e0] sm:$0xff] %v820
                %v822 = vld [vmem:[%s314 + $0xfc8] sm:$0xff]
                %823 = vst [vmem:[%s315 + $0x7e8] sm:$0xff] %v822
                %v824 = vld [vmem:[%s314 + $0xfd0] sm:$0xff]
                %825 = vst [vmem:[%s315 + $0x7f0] sm:$0xff] %v824
                %v826 = vld [vmem:[%s314 + $0xfd8] sm:$0xff]
                %827 = vst [vmem:[%s315 + $0x7f8] sm:$0xff] %v826
              $region61: #{fused_block.1} parent=55 // loop_footer
                %s313 = sadd.s32 1, %s309
              $region62: #{fused_block.1} parent=55 // loop_footer_branch
                %308 = sbr.rel target = $region58
              $region63: #{fused_block.1} parent=55 // loop_exit
                _
            $region56: #{fused_block.1} parent=51 // pred_fallthru
              _
            // Predicated region
            $region64: #{fused_block.1} parent=51 // pred_check
              _
            $region65: #{fused_block.1} parent=51 // pred_check_branch
              %829 = sbr.rel target = $region67
            $region66: #{fused_block.1} parent=51 // pred_region
              _
            $region67: #{fused_block.1} parent=51 // pred_fallthru
              _
          $region52: #{fused_block.1} parent=47 // pred_fallthru
            _
          %830 = vnop
        $region48: #{fused_block.1} parent=27 // pred_fallthru
          _
      $region28: #{fused_block.1} parent=5 // pred_fallthru
        _
      %p831 = scmp.le.s32.totalorder 1, %s14
      %p832 = scmp.lt.s32.totalorder %s14, 3
      %p833 = pnand %p831, %p832
      %p834 = pneg %p833
      // Predicated region
      $region68: #{fused_block.1} parent=5 // pred_check
        _
      $region69: #{fused_block.1} parent=5 // pred_check_branch
        %836 = sbr.rel (%p833) target = $region71
      $region70: #{fused_block.1} parent=5 // pred_region
        %s837 = ssub.s32 %s14, 1
        %s838 = sand.u32 %s152, 1
        %s839 = sand.u32 %s152, 1
        %s840 = smul.addr %s839, 2048
        %s841 = scalar_lea.vmem [#allocation2], %s840
        // Predicated region
        $region72: #{fused_block.1} parent=70 // pred_check
          %p842 = pneg %p165
        $region73: #{fused_block.1} parent=70 // pred_check_branch
          %844 = sbr.rel (%p842) target = $region75
        $region74: #{fused_block.1} parent=70 // pred_region
          _
        $region75: #{fused_block.1} parent=70 // pred_fallthru
          _
        %p845 = pneg %p35
        %p846 = pneg %p32
        %s847 = smul.u32 64, %s19
        %p848 = scmp.lt.s32.totalorder %s847, 127
        %s849 = scalar_select %p848, %s847, 127
        %s850 = smul.addr %s849, 2
        %s851 = smul.addr %s850, 8
        %s852 = scalar_lea.vmem %s1, %s851
        %p853 = pneg %p61
        %p854 = pneg %p58
        %s855 = smul.u32 64, %s19
        %p856 = scmp.lt.s32.totalorder %s855, 127
        %s857 = scalar_select %p856, %s855, 127
        %s858 = smul.addr %s857, 4
        %s859 = smul.addr %s858, 8
        %s860 = scalar_lea.vmem %s2, %s859
        %p861 = pneg %p87
        %p862 = pneg %p84
        %s863 = smul.u32 64, %s19
        %p864 = scmp.lt.s32.totalorder %s863, 127
        %s865 = scalar_select %p864, %s863, 127
        %s866 = smul.addr %s865, 8
        %s867 = scalar_lea.vmem %s3, %s866
        %p868 = pneg %p113
        %p869 = pneg %p110
        %s870 = smul.u32 64, %s19
        %p871 = scmp.lt.s32.totalorder %s870, 127
        %s872 = scalar_select %p871, %s870, 127
        %s873 = smul.addr %s872, 8
        %s874 = scalar_lea.vmem %s4, %s873
        %p875 = pneg %p139
        %p876 = pneg %p136
        %s877 = sand.u32 %s152, 1
        %s878 = sand.u32 %s152, 1
        %s879 = smul.addr %s878, 2048
        %s880 = scalar_lea.vmem [#allocation2], %s879
        %p881 = pneg %p165
        %p882 = pneg %p162
        %p883 = pneg %p186
        %p884 = pneg %p183
        %p885 = pneg %p207
        %p886 = pneg %p204
        %p887 = pneg %p228
        %p888 = pneg %p225
        %s889 = smul.u32 64, %s19
        %p890 = scmp.lt.s32.totalorder %s889, 127
        %s891 = scalar_select %p890, %s889, 127
        %s892 = smul.addr %s891, 2
        %s893 = smul.addr %s892, 8
        %s894 = scalar_lea.vmem %s1, %s893
        %s895 = smul.u32 64, %s19
        %s896 = smul.u32 64, %s19
        %p897 = scmp.lt.s32.totalorder %s896, 127
        %s898 = scalar_select %p897, %s896, 127
        %s899 = smul.addr %s898, 4
        %s900 = smul.addr %s899, 8
        %s901 = scalar_lea.vmem %s2, %s900
        %s902 = smul.u32 64, %s19
        %s903 = smul.u32 64, %s19
        %p904 = scmp.lt.s32.totalorder %s903, 127
        %s905 = scalar_select %p904, %s903, 127
        %s906 = smul.addr %s905, 8
        %s907 = scalar_lea.vmem %s3, %s906
        %s908 = smul.u32 64, %s19
        %s909 = smul.u32 64, %s19
        %p910 = scmp.lt.s32.totalorder %s909, 127
        %s911 = scalar_select %p910, %s909, 127
        %s912 = smul.addr %s911, 8
        %s913 = scalar_lea.vmem %s4, %s912
        %s914 = smul.u32 64, %s19
        %s915 = smul.u32 4, %s19
        %v916 = vld [vmem:[%s0] sm:$0xff]
        %v917 = vld [vmem:[%s0 + $0x8] sm:$0xff]
        %v918 = vld [vmem:[%s0 + $0x10] sm:$0xff]
        %v919 = vld [vmem:[%s0 + $0x18] sm:$0xff]
        %v920 = vld [vmem:[%s0 + $0x20] sm:$0xff]
        %v921 = vld [vmem:[%s0 + $0x28] sm:$0xff]
        %v922 = vld [vmem:[%s0 + $0x30] sm:$0xff]
        %v923 = vld [vmem:[%s0 + $0x38] sm:$0xff]
        %v924 = vld [vmem:[%s0 + $0x40] sm:$0xff]
        %v925 = vld [vmem:[%s0 + $0x48] sm:$0xff]
        %v926 = vld [vmem:[%s0 + $0x50] sm:$0xff]
        %v927 = vld [vmem:[%s0 + $0x58] sm:$0xff]
        %v928 = vld [vmem:[%s0 + $0x60] sm:$0xff]
        %v929 = vld [vmem:[%s0 + $0x68] sm:$0xff]
        %v930 = vld [vmem:[%s0 + $0x70] sm:$0xff]
        %v931 = vld [vmem:[%s0 + $0x78] sm:$0xff]
        %v932 = vld [vmem:[%s0 + $0x80] sm:$0xff]
        %v933 = vld [vmem:[%s0 + $0x88] sm:$0xff]
        %v934 = vld [vmem:[%s0 + $0x90] sm:$0xff]
        %v935 = vld [vmem:[%s0 + $0x98] sm:$0xff]
        %v936 = vld [vmem:[%s0 + $0xa0] sm:$0xff]
        %v937 = vld [vmem:[%s0 + $0xa8] sm:$0xff]
        %v938 = vld [vmem:[%s0 + $0xb0] sm:$0xff]
        %v939 = vld [vmem:[%s0 + $0xb8] sm:$0xff]
        %v940 = vld [vmem:[%s0 + $0xc0] sm:$0xff]
        %v941 = vld [vmem:[%s0 + $0xc8] sm:$0xff]
        %v942 = vld [vmem:[%s0 + $0xd0] sm:$0xff]
        %v943 = vld [vmem:[%s0 + $0xd8] sm:$0xff]
        %v944 = vld [vmem:[%s0 + $0xe0] sm:$0xff]
        %v945 = vld [vmem:[%s0 + $0xe8] sm:$0xff]
        %v946 = vld [vmem:[%s0 + $0xf0] sm:$0xff]
        %v947 = vld [vmem:[%s0 + $0xf8] sm:$0xff]
        %v948 = vld [vmem:[%s0 + $0x100] sm:$0xff]
        %v949 = vld [vmem:[%s0 + $0x108] sm:$0xff]
        %v950 = vld [vmem:[%s0 + $0x110] sm:$0xff]
        %v951 = vld [vmem:[%s0 + $0x118] sm:$0xff]
        %v952 = vld [vmem:[%s0 + $0x120] sm:$0xff]
        %v953 = vld [vmem:[%s0 + $0x128] sm:$0xff]
        %v954 = vld [vmem:[%s0 + $0x130] sm:$0xff]
        %v955 = vld [vmem:[%s0 + $0x138] sm:$0xff]
        %v956 = vld [vmem:[%s0 + $0x140] sm:$0xff]
        %v957 = vld [vmem:[%s0 + $0x148] sm:$0xff]
        %v958 = vld [vmem:[%s0 + $0x150] sm:$0xff]
        %v959 = vld [vmem:[%s0 + $0x158] sm:$0xff]
        %v960 = vld [vmem:[%s0 + $0x160] sm:$0xff]
        %v961 = vld [vmem:[%s0 + $0x168] sm:$0xff]
        %v962 = vld [vmem:[%s0 + $0x170] sm:$0xff]
        %v963 = vld [vmem:[%s0 + $0x178] sm:$0xff]
        %v964 = vld [vmem:[%s0 + $0x180] sm:$0xff]
        %v965 = vld [vmem:[%s0 + $0x188] sm:$0xff]
        %v966 = vld [vmem:[%s0 + $0x190] sm:$0xff]
        %v967 = vld [vmem:[%s0 + $0x198] sm:$0xff]
        %v968 = vld [vmem:[%s0 + $0x1a0] sm:$0xff]
        %v969 = vld [vmem:[%s0 + $0x1a8] sm:$0xff]
        %v970 = vld [vmem:[%s0 + $0x1b0] sm:$0xff]
        %v971 = vld [vmem:[%s0 + $0x1b8] sm:$0xff]
        %v972 = vld [vmem:[%s0 + $0x1c0] sm:$0xff]
        %v973 = vld [vmem:[%s0 + $0x1c8] sm:$0xff]
        %v974 = vld [vmem:[%s0 + $0x1d0] sm:$0xff]
        %v975 = vld [vmem:[%s0 + $0x1d8] sm:$0xff]
        %v976 = vld [vmem:[%s0 + $0x1e0] sm:$0xff]
        %v977 = vld [vmem:[%s0 + $0x1e8] sm:$0xff]
        %v978 = vld [vmem:[%s0 + $0x1f0] sm:$0xff]
        %v979 = vld [vmem:[%s0 + $0x1f8] sm:$0xff]
        %v980 = vld [vmem:[%s0 + $0x200] sm:$0xff]
        %v981 = vld [vmem:[%s0 + $0x208] sm:$0xff]
        %v982 = vld [vmem:[%s0 + $0x210] sm:$0xff]
        %v983 = vld [vmem:[%s0 + $0x218] sm:$0xff]
        %v984 = vld [vmem:[%s0 + $0x220] sm:$0xff]
        %v985 = vld [vmem:[%s0 + $0x228] sm:$0xff]
        %v986 = vld [vmem:[%s0 + $0x230] sm:$0xff]
        %v987 = vld [vmem:[%s0 + $0x238] sm:$0xff]
        %v988 = vld [vmem:[%s0 + $0x240] sm:$0xff]
        %v989 = vld [vmem:[%s0 + $0x248] sm:$0xff]
        %v990 = vld [vmem:[%s0 + $0x250] sm:$0xff]
        %v991 = vld [vmem:[%s0 + $0x258] sm:$0xff]
        %v992 = vld [vmem:[%s0 + $0x260] sm:$0xff]
        %v993 = vld [vmem:[%s0 + $0x268] sm:$0xff]
        %v994 = vld [vmem:[%s0 + $0x270] sm:$0xff]
        %v995 = vld [vmem:[%s0 + $0x278] sm:$0xff]
        %v996 = vld [vmem:[%s0 + $0x280] sm:$0xff]
        %v997 = vld [vmem:[%s0 + $0x288] sm:$0xff]
        %v998 = vld [vmem:[%s0 + $0x290] sm:$0xff]
        %v999 = vld [vmem:[%s0 + $0x298] sm:$0xff]
        %v1000 = vld [vmem:[%s0 + $0x2a0] sm:$0xff]
        %v1001 = vld [vmem:[%s0 + $0x2a8] sm:$0xff]
        %v1002 = vld [vmem:[%s0 + $0x2b0] sm:$0xff]
        %v1003 = vld [vmem:[%s0 + $0x2b8] sm:$0xff]
        %v1004 = vld [vmem:[%s0 + $0x2c0] sm:$0xff]
        %v1005 = vld [vmem:[%s0 + $0x2c8] sm:$0xff]
        %v1006 = vld [vmem:[%s0 + $0x2d0] sm:$0xff]
        %v1007 = vld [vmem:[%s0 + $0x2d8] sm:$0xff]
        %v1008 = vld [vmem:[%s0 + $0x2e0] sm:$0xff]
        %v1009 = vld [vmem:[%s0 + $0x2e8] sm:$0xff]
        %v1010 = vld [vmem:[%s0 + $0x2f0] sm:$0xff]
        %v1011 = vld [vmem:[%s0 + $0x2f8] sm:$0xff]
        %v1012 = vld [vmem:[%s0 + $0x300] sm:$0xff]
        %v1013 = vld [vmem:[%s0 + $0x308] sm:$0xff]
        %v1014 = vld [vmem:[%s0 + $0x310] sm:$0xff]
        %v1015 = vld [vmem:[%s0 + $0x318] sm:$0xff]
        %v1016 = vld [vmem:[%s0 + $0x320] sm:$0xff]
        %v1017 = vld [vmem:[%s0 + $0x328] sm:$0xff]
        %v1018 = vld [vmem:[%s0 + $0x330] sm:$0xff]
        %v1019 = vld [vmem:[%s0 + $0x338] sm:$0xff]
        %v1020 = vld [vmem:[%s0 + $0x340] sm:$0xff]
        %v1021 = vld [vmem:[%s0 + $0x348] sm:$0xff]
        %v1022 = vld [vmem:[%s0 + $0x350] sm:$0xff]
        %v1023 = vld [vmem:[%s0 + $0x358] sm:$0xff]
        %v1024 = vld [vmem:[%s0 + $0x360] sm:$0xff]
        %v1025 = vld [vmem:[%s0 + $0x368] sm:$0xff]
        %v1026 = vld [vmem:[%s0 + $0x370] sm:$0xff]
        %v1027 = vld [vmem:[%s0 + $0x378] sm:$0xff]
        %v1028 = vld [vmem:[%s0 + $0x380] sm:$0xff]
        %v1029 = vld [vmem:[%s0 + $0x388] sm:$0xff]
        %v1030 = vld [vmem:[%s0 + $0x390] sm:$0xff]
        %v1031 = vld [vmem:[%s0 + $0x398] sm:$0xff]
        %v1032 = vld [vmem:[%s0 + $0x3a0] sm:$0xff]
        %v1033 = vld [vmem:[%s0 + $0x3a8] sm:$0xff]
        %v1034 = vld [vmem:[%s0 + $0x3b0] sm:$0xff]
        %v1035 = vld [vmem:[%s0 + $0x3b8] sm:$0xff]
        %v1036 = vld [vmem:[%s0 + $0x3c0] sm:$0xff]
        %v1037 = vld [vmem:[%s0 + $0x3c8] sm:$0xff]
        %v1038 = vld [vmem:[%s0 + $0x3d0] sm:$0xff]
        %v1039 = vld [vmem:[%s0 + $0x3d8] sm:$0xff]
        %v1040 = vld [vmem:[%s0 + $0x3e0] sm:$0xff]
        %v1041 = vld [vmem:[%s0 + $0x3e8] sm:$0xff]
        %v1042 = vld [vmem:[%s0 + $0x3f0] sm:$0xff]
        %v1043 = vld [vmem:[%s0 + $0x3f8] sm:$0xff]
        %v1044 = vpack.c.bf16 %v918, %v916
        %v1045 = vpack.c.bf16 %v919, %v917
        %v1046 = vpack.c.bf16 %v922, %v920
        %v1047 = vpack.c.bf16 %v923, %v921
        %v1048 = vpack.c.bf16 %v926, %v924
        %v1049 = vpack.c.bf16 %v927, %v925
        %v1050 = vpack.c.bf16 %v930, %v928
        %v1051 = vpack.c.bf16 %v931, %v929
        %v1052 = vpack.c.bf16 %v934, %v932
        %v1053 = vpack.c.bf16 %v935, %v933
        %v1054 = vpack.c.bf16 %v938, %v936
        %v1055 = vpack.c.bf16 %v939, %v937
        %v1056 = vpack.c.bf16 %v942, %v940
        %v1057 = vpack.c.bf16 %v943, %v941
        %v1058 = vpack.c.bf16 %v946, %v944
        %v1059 = vpack.c.bf16 %v947, %v945
        %v1060 = vpack.c.bf16 %v950, %v948
        %v1061 = vpack.c.bf16 %v951, %v949
        %v1062 = vpack.c.bf16 %v954, %v952
        %v1063 = vpack.c.bf16 %v955, %v953
        %v1064 = vpack.c.bf16 %v958, %v956
        %v1065 = vpack.c.bf16 %v959, %v957
        %v1066 = vpack.c.bf16 %v962, %v960
        %v1067 = vpack.c.bf16 %v963, %v961
        %v1068 = vpack.c.bf16 %v966, %v964
        %v1069 = vpack.c.bf16 %v967, %v965
        %v1070 = vpack.c.bf16 %v970, %v968
        %v1071 = vpack.c.bf16 %v971, %v969
        %v1072 = vpack.c.bf16 %v974, %v972
        %v1073 = vpack.c.bf16 %v975, %v973
        %v1074 = vpack.c.bf16 %v978, %v976
        %v1075 = vpack.c.bf16 %v979, %v977
        %v1076 = vpack.c.bf16 %v982, %v980
        %v1077 = vpack.c.bf16 %v983, %v981
        %v1078 = vpack.c.bf16 %v986, %v984
        %v1079 = vpack.c.bf16 %v987, %v985
        %v1080 = vpack.c.bf16 %v990, %v988
        %v1081 = vpack.c.bf16 %v991, %v989
        %v1082 = vpack.c.bf16 %v994, %v992
        %v1083 = vpack.c.bf16 %v995, %v993
        %v1084 = vpack.c.bf16 %v998, %v996
        %v1085 = vpack.c.bf16 %v999, %v997
        %v1086 = vpack.c.bf16 %v1002, %v1000
        %v1087 = vpack.c.bf16 %v1003, %v1001
        %v1088 = vpack.c.bf16 %v1006, %v1004
        %v1089 = vpack.c.bf16 %v1007, %v1005
        %v1090 = vpack.c.bf16 %v1010, %v1008
        %v1091 = vpack.c.bf16 %v1011, %v1009
        %v1092 = vpack.c.bf16 %v1014, %v1012
        %v1093 = vpack.c.bf16 %v1015, %v1013
        %v1094 = vpack.c.bf16 %v1018, %v1016
        %v1095 = vpack.c.bf16 %v1019, %v1017
        %v1096 = vpack.c.bf16 %v1022, %v1020
        %v1097 = vpack.c.bf16 %v1023, %v1021
        %v1098 = vpack.c.bf16 %v1026, %v1024
        %v1099 = vpack.c.bf16 %v1027, %v1025
        %v1100 = vpack.c.bf16 %v1030, %v1028
        %v1101 = vpack.c.bf16 %v1031, %v1029
        %v1102 = vpack.c.bf16 %v1034, %v1032
        %v1103 = vpack.c.bf16 %v1035, %v1033
        %v1104 = vpack.c.bf16 %v1038, %v1036
        %v1105 = vpack.c.bf16 %v1039, %v1037
        %v1106 = vpack.c.bf16 %v1042, %v1040
        %v1107 = vpack.c.bf16 %v1043, %v1041
        %v1108 = vld [vmem:[%s901] sm:$0xff]
        %v1109 = vld [vmem:[%s901 + $0x8] sm:$0xff]
        %v1110 = vld [vmem:[%s901 + $0x10] sm:$0xff]
        %v1111 = vld [vmem:[%s901 + $0x18] sm:$0xff]
        %v1112 = vld [vmem:[%s901 + $0x20] sm:$0xff]
        %v1113 = vld [vmem:[%s901 + $0x28] sm:$0xff]
        %v1114 = vld [vmem:[%s901 + $0x30] sm:$0xff]
        %v1115 = vld [vmem:[%s901 + $0x38] sm:$0xff]
        %v1116 = vld [vmem:[%s901 + $0x40] sm:$0xff]
        %v1117 = vld [vmem:[%s901 + $0x48] sm:$0xff]
        %v1118 = vld [vmem:[%s901 + $0x50] sm:$0xff]
        %v1119 = vld [vmem:[%s901 + $0x58] sm:$0xff]
        %v1120 = vld [vmem:[%s901 + $0x60] sm:$0xff]
        %v1121 = vld [vmem:[%s901 + $0x68] sm:$0xff]
        %v1122 = vld [vmem:[%s901 + $0x70] sm:$0xff]
        %v1123 = vld [vmem:[%s901 + $0x78] sm:$0xff]
        %v1124 = vld [vmem:[%s901 + $0x80] sm:$0xff]
        %v1125 = vld [vmem:[%s901 + $0x88] sm:$0xff]
        %v1126 = vld [vmem:[%s901 + $0x90] sm:$0xff]
        %v1127 = vld [vmem:[%s901 + $0x98] sm:$0xff]
        %v1128 = vld [vmem:[%s901 + $0xa0] sm:$0xff]
        %v1129 = vld [vmem:[%s901 + $0xa8] sm:$0xff]
        %v1130 = vld [vmem:[%s901 + $0xb0] sm:$0xff]
        %v1131 = vld [vmem:[%s901 + $0xb8] sm:$0xff]
        %v1132 = vld [vmem:[%s901 + $0xc0] sm:$0xff]
        %v1133 = vld [vmem:[%s901 + $0xc8] sm:$0xff]
        %v1134 = vld [vmem:[%s901 + $0xd0] sm:$0xff]
        %v1135 = vld [vmem:[%s901 + $0xd8] sm:$0xff]
        %v1136 = vld [vmem:[%s901 + $0xe0] sm:$0xff]
        %v1137 = vld [vmem:[%s901 + $0xe8] sm:$0xff]
        %v1138 = vld [vmem:[%s901 + $0xf0] sm:$0xff]
        %v1139 = vld [vmem:[%s901 + $0xf8] sm:$0xff]
        %v1140 = vld [vmem:[%s901 + $0x100] sm:$0xff]
        %v1141 = vld [vmem:[%s901 + $0x108] sm:$0xff]
        %v1142 = vld [vmem:[%s901 + $0x110] sm:$0xff]
        %v1143 = vld [vmem:[%s901 + $0x118] sm:$0xff]
        %v1144 = vld [vmem:[%s901 + $0x120] sm:$0xff]
        %v1145 = vld [vmem:[%s901 + $0x128] sm:$0xff]
        %v1146 = vld [vmem:[%s901 + $0x130] sm:$0xff]
        %v1147 = vld [vmem:[%s901 + $0x138] sm:$0xff]
        %v1148 = vld [vmem:[%s901 + $0x140] sm:$0xff]
        %v1149 = vld [vmem:[%s901 + $0x148] sm:$0xff]
        %v1150 = vld [vmem:[%s901 + $0x150] sm:$0xff]
        %v1151 = vld [vmem:[%s901 + $0x158] sm:$0xff]
        %v1152 = vld [vmem:[%s901 + $0x160] sm:$0xff]
        %v1153 = vld [vmem:[%s901 + $0x168] sm:$0xff]
        %v1154 = vld [vmem:[%s901 + $0x170] sm:$0xff]
        %v1155 = vld [vmem:[%s901 + $0x178] sm:$0xff]
        %v1156 = vld [vmem:[%s901 + $0x180] sm:$0xff]
        %v1157 = vld [vmem:[%s901 + $0x188] sm:$0xff]
        %v1158 = vld [vmem:[%s901 + $0x190] sm:$0xff]
        %v1159 = vld [vmem:[%s901 + $0x198] sm:$0xff]
        %v1160 = vld [vmem:[%s901 + $0x1a0] sm:$0xff]
        %v1161 = vld [vmem:[%s901 + $0x1a8] sm:$0xff]
        %v1162 = vld [vmem:[%s901 + $0x1b0] sm:$0xff]
        %v1163 = vld [vmem:[%s901 + $0x1b8] sm:$0xff]
        %v1164 = vld [vmem:[%s901 + $0x1c0] sm:$0xff]
        %v1165 = vld [vmem:[%s901 + $0x1c8] sm:$0xff]
        %v1166 = vld [vmem:[%s901 + $0x1d0] sm:$0xff]
        %v1167 = vld [vmem:[%s901 + $0x1d8] sm:$0xff]
        %v1168 = vld [vmem:[%s901 + $0x1e0] sm:$0xff]
        %v1169 = vld [vmem:[%s901 + $0x1e8] sm:$0xff]
        %v1170 = vld [vmem:[%s901 + $0x1f0] sm:$0xff]
        %v1171 = vld [vmem:[%s901 + $0x1f8] sm:$0xff]
        %v1172 = vld [vmem:[%s901 + $0x200] sm:$0xff]
        %v1173 = vld [vmem:[%s901 + $0x208] sm:$0xff]
        %v1174 = vld [vmem:[%s901 + $0x210] sm:$0xff]
        %v1175 = vld [vmem:[%s901 + $0x218] sm:$0xff]
        %v1176 = vld [vmem:[%s901 + $0x220] sm:$0xff]
        %v1177 = vld [vmem:[%s901 + $0x228] sm:$0xff]
        %v1178 = vld [vmem:[%s901 + $0x230] sm:$0xff]
        %v1179 = vld [vmem:[%s901 + $0x238] sm:$0xff]
        %v1180 = vld [vmem:[%s901 + $0x240] sm:$0xff]
        %v1181 = vld [vmem:[%s901 + $0x248] sm:$0xff]
        %v1182 = vld [vmem:[%s901 + $0x250] sm:$0xff]
        %v1183 = vld [vmem:[%s901 + $0x258] sm:$0xff]
        %v1184 = vld [vmem:[%s901 + $0x260] sm:$0xff]
        %v1185 = vld [vmem:[%s901 + $0x268] sm:$0xff]
        %v1186 = vld [vmem:[%s901 + $0x270] sm:$0xff]
        %v1187 = vld [vmem:[%s901 + $0x278] sm:$0xff]
        %v1188 = vld [vmem:[%s901 + $0x280] sm:$0xff]
        %v1189 = vld [vmem:[%s901 + $0x288] sm:$0xff]
        %v1190 = vld [vmem:[%s901 + $0x290] sm:$0xff]
        %v1191 = vld [vmem:[%s901 + $0x298] sm:$0xff]
        %v1192 = vld [vmem:[%s901 + $0x2a0] sm:$0xff]
        %v1193 = vld [vmem:[%s901 + $0x2a8] sm:$0xff]
        %v1194 = vld [vmem:[%s901 + $0x2b0] sm:$0xff]
        %v1195 = vld [vmem:[%s901 + $0x2b8] sm:$0xff]
        %v1196 = vld [vmem:[%s901 + $0x2c0] sm:$0xff]
        %v1197 = vld [vmem:[%s901 + $0x2c8] sm:$0xff]
        %v1198 = vld [vmem:[%s901 + $0x2d0] sm:$0xff]
        %v1199 = vld [vmem:[%s901 + $0x2d8] sm:$0xff]
        %v1200 = vld [vmem:[%s901 + $0x2e0] sm:$0xff]
        %v1201 = vld [vmem:[%s901 + $0x2e8] sm:$0xff]
        %v1202 = vld [vmem:[%s901 + $0x2f0] sm:$0xff]
        %v1203 = vld [vmem:[%s901 + $0x2f8] sm:$0xff]
        %v1204 = vld [vmem:[%s901 + $0x300] sm:$0xff]
        %v1205 = vld [vmem:[%s901 + $0x308] sm:$0xff]
        %v1206 = vld [vmem:[%s901 + $0x310] sm:$0xff]
        %v1207 = vld [vmem:[%s901 + $0x318] sm:$0xff]
        %v1208 = vld [vmem:[%s901 + $0x320] sm:$0xff]
        %v1209 = vld [vmem:[%s901 + $0x328] sm:$0xff]
        %v1210 = vld [vmem:[%s901 + $0x330] sm:$0xff]
        %v1211 = vld [vmem:[%s901 + $0x338] sm:$0xff]
        %v1212 = vld [vmem:[%s901 + $0x340] sm:$0xff]
        %v1213 = vld [vmem:[%s901 + $0x348] sm:$0xff]
        %v1214 = vld [vmem:[%s901 + $0x350] sm:$0xff]
        %v1215 = vld [vmem:[%s901 + $0x358] sm:$0xff]
        %v1216 = vld [vmem:[%s901 + $0x360] sm:$0xff]
        %v1217 = vld [vmem:[%s901 + $0x368] sm:$0xff]
        %v1218 = vld [vmem:[%s901 + $0x370] sm:$0xff]
        %v1219 = vld [vmem:[%s901 + $0x378] sm:$0xff]
        %v1220 = vld [vmem:[%s901 + $0x380] sm:$0xff]
        %v1221 = vld [vmem:[%s901 + $0x388] sm:$0xff]
        %v1222 = vld [vmem:[%s901 + $0x390] sm:$0xff]
        %v1223 = vld [vmem:[%s901 + $0x398] sm:$0xff]
        %v1224 = vld [vmem:[%s901 + $0x3a0] sm:$0xff]
        %v1225 = vld [vmem:[%s901 + $0x3a8] sm:$0xff]
        %v1226 = vld [vmem:[%s901 + $0x3b0] sm:$0xff]
        %v1227 = vld [vmem:[%s901 + $0x3b8] sm:$0xff]
        %v1228 = vld [vmem:[%s901 + $0x3c0] sm:$0xff]
        %v1229 = vld [vmem:[%s901 + $0x3c8] sm:$0xff]
        %v1230 = vld [vmem:[%s901 + $0x3d0] sm:$0xff]
        %v1231 = vld [vmem:[%s901 + $0x3d8] sm:$0xff]
        %v1232 = vld [vmem:[%s901 + $0x3e0] sm:$0xff]
        %v1233 = vld [vmem:[%s901 + $0x3e8] sm:$0xff]
        %v1234 = vld [vmem:[%s901 + $0x3f0] sm:$0xff]
        %v1235 = vld [vmem:[%s901 + $0x3f8] sm:$0xff]
        %v1236 = vld [vmem:[%s901 + $0x400] sm:$0xff]
        %v1237 = vld [vmem:[%s901 + $0x408] sm:$0xff]
        %v1238 = vld [vmem:[%s901 + $0x410] sm:$0xff]
        %v1239 = vld [vmem:[%s901 + $0x418] sm:$0xff]
        %v1240 = vld [vmem:[%s901 + $0x420] sm:$0xff]
        %v1241 = vld [vmem:[%s901 + $0x428] sm:$0xff]
        %v1242 = vld [vmem:[%s901 + $0x430] sm:$0xff]
        %v1243 = vld [vmem:[%s901 + $0x438] sm:$0xff]
        %v1244 = vld [vmem:[%s901 + $0x440] sm:$0xff]
        %v1245 = vld [vmem:[%s901 + $0x448] sm:$0xff]
        %v1246 = vld [vmem:[%s901 + $0x450] sm:$0xff]
        %v1247 = vld [vmem:[%s901 + $0x458] sm:$0xff]
        %v1248 = vld [vmem:[%s901 + $0x460] sm:$0xff]
        %v1249 = vld [vmem:[%s901 + $0x468] sm:$0xff]
        %v1250 = vld [vmem:[%s901 + $0x470] sm:$0xff]
        %v1251 = vld [vmem:[%s901 + $0x478] sm:$0xff]
        %v1252 = vld [vmem:[%s901 + $0x480] sm:$0xff]
        %v1253 = vld [vmem:[%s901 + $0x488] sm:$0xff]
        %v1254 = vld [vmem:[%s901 + $0x490] sm:$0xff]
        %v1255 = vld [vmem:[%s901 + $0x498] sm:$0xff]
        %v1256 = vld [vmem:[%s901 + $0x4a0] sm:$0xff]
        %v1257 = vld [vmem:[%s901 + $0x4a8] sm:$0xff]
        %v1258 = vld [vmem:[%s901 + $0x4b0] sm:$0xff]
        %v1259 = vld [vmem:[%s901 + $0x4b8] sm:$0xff]
        %v1260 = vld [vmem:[%s901 + $0x4c0] sm:$0xff]
        %v1261 = vld [vmem:[%s901 + $0x4c8] sm:$0xff]
        %v1262 = vld [vmem:[%s901 + $0x4d0] sm:$0xff]
        %v1263 = vld [vmem:[%s901 + $0x4d8] sm:$0xff]
        %v1264 = vld [vmem:[%s901 + $0x4e0] sm:$0xff]
        %v1265 = vld [vmem:[%s901 + $0x4e8] sm:$0xff]
        %v1266 = vld [vmem:[%s901 + $0x4f0] sm:$0xff]
        %v1267 = vld [vmem:[%s901 + $0x4f8] sm:$0xff]
        %v1268 = vld [vmem:[%s901 + $0x500] sm:$0xff]
        %v1269 = vld [vmem:[%s901 + $0x508] sm:$0xff]
        %v1270 = vld [vmem:[%s901 + $0x510] sm:$0xff]
        %v1271 = vld [vmem:[%s901 + $0x518] sm:$0xff]
        %v1272 = vld [vmem:[%s901 + $0x520] sm:$0xff]
        %v1273 = vld [vmem:[%s901 + $0x528] sm:$0xff]
        %v1274 = vld [vmem:[%s901 + $0x530] sm:$0xff]
        %v1275 = vld [vmem:[%s901 + $0x538] sm:$0xff]
        %v1276 = vld [vmem:[%s901 + $0x540] sm:$0xff]
        %v1277 = vld [vmem:[%s901 + $0x548] sm:$0xff]
        %v1278 = vld [vmem:[%s901 + $0x550] sm:$0xff]
        %v1279 = vld [vmem:[%s901 + $0x558] sm:$0xff]
        %v1280 = vld [vmem:[%s901 + $0x560] sm:$0xff]
        %v1281 = vld [vmem:[%s901 + $0x568] sm:$0xff]
        %v1282 = vld [vmem:[%s901 + $0x570] sm:$0xff]
        %v1283 = vld [vmem:[%s901 + $0x578] sm:$0xff]
        %v1284 = vld [vmem:[%s901 + $0x580] sm:$0xff]
        %v1285 = vld [vmem:[%s901 + $0x588] sm:$0xff]
        %v1286 = vld [vmem:[%s901 + $0x590] sm:$0xff]
        %v1287 = vld [vmem:[%s901 + $0x598] sm:$0xff]
        %v1288 = vld [vmem:[%s901 + $0x5a0] sm:$0xff]
        %v1289 = vld [vmem:[%s901 + $0x5a8] sm:$0xff]
        %v1290 = vld [vmem:[%s901 + $0x5b0] sm:$0xff]
        %v1291 = vld [vmem:[%s901 + $0x5b8] sm:$0xff]
        %v1292 = vld [vmem:[%s901 + $0x5c0] sm:$0xff]
        %v1293 = vld [vmem:[%s901 + $0x5c8] sm:$0xff]
        %v1294 = vld [vmem:[%s901 + $0x5d0] sm:$0xff]
        %v1295 = vld [vmem:[%s901 + $0x5d8] sm:$0xff]
        %v1296 = vld [vmem:[%s901 + $0x5e0] sm:$0xff]
        %v1297 = vld [vmem:[%s901 + $0x5e8] sm:$0xff]
        %v1298 = vld [vmem:[%s901 + $0x5f0] sm:$0xff]
        %v1299 = vld [vmem:[%s901 + $0x5f8] sm:$0xff]
        %v1300 = vld [vmem:[%s901 + $0x600] sm:$0xff]
        %v1301 = vld [vmem:[%s901 + $0x608] sm:$0xff]
        %v1302 = vld [vmem:[%s901 + $0x610] sm:$0xff]
        %v1303 = vld [vmem:[%s901 + $0x618] sm:$0xff]
        %v1304 = vld [vmem:[%s901 + $0x620] sm:$0xff]
        %v1305 = vld [vmem:[%s901 + $0x628] sm:$0xff]
        %v1306 = vld [vmem:[%s901 + $0x630] sm:$0xff]
        %v1307 = vld [vmem:[%s901 + $0x638] sm:$0xff]
        %v1308 = vld [vmem:[%s901 + $0x640] sm:$0xff]
        %v1309 = vld [vmem:[%s901 + $0x648] sm:$0xff]
        %v1310 = vld [vmem:[%s901 + $0x650] sm:$0xff]
        %v1311 = vld [vmem:[%s901 + $0x658] sm:$0xff]
        %v1312 = vld [vmem:[%s901 + $0x660] sm:$0xff]
        %v1313 = vld [vmem:[%s901 + $0x668] sm:$0xff]
        %v1314 = vld [vmem:[%s901 + $0x670] sm:$0xff]
        %v1315 = vld [vmem:[%s901 + $0x678] sm:$0xff]
        %v1316 = vld [vmem:[%s901 + $0x680] sm:$0xff]
        %v1317 = vld [vmem:[%s901 + $0x688] sm:$0xff]
        %v1318 = vld [vmem:[%s901 + $0x690] sm:$0xff]
        %v1319 = vld [vmem:[%s901 + $0x698] sm:$0xff]
        %v1320 = vld [vmem:[%s901 + $0x6a0] sm:$0xff]
        %v1321 = vld [vmem:[%s901 + $0x6a8] sm:$0xff]
        %v1322 = vld [vmem:[%s901 + $0x6b0] sm:$0xff]
        %v1323 = vld [vmem:[%s901 + $0x6b8] sm:$0xff]
        %v1324 = vld [vmem:[%s901 + $0x6c0] sm:$0xff]
        %v1325 = vld [vmem:[%s901 + $0x6c8] sm:$0xff]
        %v1326 = vld [vmem:[%s901 + $0x6d0] sm:$0xff]
        %v1327 = vld [vmem:[%s901 + $0x6d8] sm:$0xff]
        %v1328 = vld [vmem:[%s901 + $0x6e0] sm:$0xff]
        %v1329 = vld [vmem:[%s901 + $0x6e8] sm:$0xff]
        %v1330 = vld [vmem:[%s901 + $0x6f0] sm:$0xff]
        %v1331 = vld [vmem:[%s901 + $0x6f8] sm:$0xff]
        %v1332 = vld [vmem:[%s901 + $0x700] sm:$0xff]
        %v1333 = vld [vmem:[%s901 + $0x708] sm:$0xff]
        %v1334 = vld [vmem:[%s901 + $0x710] sm:$0xff]
        %v1335 = vld [vmem:[%s901 + $0x718] sm:$0xff]
        %v1336 = vld [vmem:[%s901 + $0x720] sm:$0xff]
        %v1337 = vld [vmem:[%s901 + $0x728] sm:$0xff]
        %v1338 = vld [vmem:[%s901 + $0x730] sm:$0xff]
        %v1339 = vld [vmem:[%s901 + $0x738] sm:$0xff]
        %v1340 = vld [vmem:[%s901 + $0x740] sm:$0xff]
        %v1341 = vld [vmem:[%s901 + $0x748] sm:$0xff]
        %v1342 = vld [vmem:[%s901 + $0x750] sm:$0xff]
        %v1343 = vld [vmem:[%s901 + $0x758] sm:$0xff]
        %v1344 = vld [vmem:[%s901 + $0x760] sm:$0xff]
        %v1345 = vld [vmem:[%s901 + $0x768] sm:$0xff]
        %v1346 = vld [vmem:[%s901 + $0x770] sm:$0xff]
        %v1347 = vld [vmem:[%s901 + $0x778] sm:$0xff]
        %v1348 = vld [vmem:[%s901 + $0x780] sm:$0xff]
        %v1349 = vld [vmem:[%s901 + $0x788] sm:$0xff]
        %v1350 = vld [vmem:[%s901 + $0x790] sm:$0xff]
        %v1351 = vld [vmem:[%s901 + $0x798] sm:$0xff]
        %v1352 = vld [vmem:[%s901 + $0x7a0] sm:$0xff]
        %v1353 = vld [vmem:[%s901 + $0x7a8] sm:$0xff]
        %v1354 = vld [vmem:[%s901 + $0x7b0] sm:$0xff]
        %v1355 = vld [vmem:[%s901 + $0x7b8] sm:$0xff]
        %v1356 = vld [vmem:[%s901 + $0x7c0] sm:$0xff]
        %v1357 = vld [vmem:[%s901 + $0x7c8] sm:$0xff]
        %v1358 = vld [vmem:[%s901 + $0x7d0] sm:$0xff]
        %v1359 = vld [vmem:[%s901 + $0x7d8] sm:$0xff]
        %v1360 = vld [vmem:[%s901 + $0x7e0] sm:$0xff]
        %v1361 = vld [vmem:[%s901 + $0x7e8] sm:$0xff]
        %v1362 = vld [vmem:[%s901 + $0x7f0] sm:$0xff]
        %v1363 = vld [vmem:[%s901 + $0x7f8] sm:$0xff]
        %v1364 = vpack.c.bf16 %v1112, %v1108
        %v1365 = vpack.c.bf16 %v1113, %v1109
        %v1366 = vpack.c.bf16 %v1114, %v1110
        %v1367 = vpack.c.bf16 %v1115, %v1111
        %v1368 = vpack.c.bf16 %v1120, %v1116
        %v1369 = vpack.c.bf16 %v1121, %v1117
        %v1370 = vpack.c.bf16 %v1122, %v1118
        %v1371 = vpack.c.bf16 %v1123, %v1119
        %v1372 = vpack.c.bf16 %v1128, %v1124
        %v1373 = vpack.c.bf16 %v1129, %v1125
        %v1374 = vpack.c.bf16 %v1130, %v1126
        %v1375 = vpack.c.bf16 %v1131, %v1127
        %v1376 = vpack.c.bf16 %v1136, %v1132
        %v1377 = vpack.c.bf16 %v1137, %v1133
        %v1378 = vpack.c.bf16 %v1138, %v1134
        %v1379 = vpack.c.bf16 %v1139, %v1135
        %v1380 = vpack.c.bf16 %v1144, %v1140
        %v1381 = vpack.c.bf16 %v1145, %v1141
        %v1382 = vpack.c.bf16 %v1146, %v1142
        %v1383 = vpack.c.bf16 %v1147, %v1143
        %v1384 = vpack.c.bf16 %v1152, %v1148
        %v1385 = vpack.c.bf16 %v1153, %v1149
        %v1386 = vpack.c.bf16 %v1154, %v1150
        %v1387 = vpack.c.bf16 %v1155, %v1151
        %v1388 = vpack.c.bf16 %v1160, %v1156
        %v1389 = vpack.c.bf16 %v1161, %v1157
        %v1390 = vpack.c.bf16 %v1162, %v1158
        %v1391 = vpack.c.bf16 %v1163, %v1159
        %v1392 = vpack.c.bf16 %v1168, %v1164
        %v1393 = vpack.c.bf16 %v1169, %v1165
        %v1394 = vpack.c.bf16 %v1170, %v1166
        %v1395 = vpack.c.bf16 %v1171, %v1167
        %v1396 = vpack.c.bf16 %v1176, %v1172
        %v1397 = vpack.c.bf16 %v1177, %v1173
        %v1398 = vpack.c.bf16 %v1178, %v1174
        %v1399 = vpack.c.bf16 %v1179, %v1175
        %v1400 = vpack.c.bf16 %v1184, %v1180
        %v1401 = vpack.c.bf16 %v1185, %v1181
        %v1402 = vpack.c.bf16 %v1186, %v1182
        %v1403 = vpack.c.bf16 %v1187, %v1183
        %v1404 = vpack.c.bf16 %v1192, %v1188
        %v1405 = vpack.c.bf16 %v1193, %v1189
        %v1406 = vpack.c.bf16 %v1194, %v1190
        %v1407 = vpack.c.bf16 %v1195, %v1191
        %v1408 = vpack.c.bf16 %v1200, %v1196
        %v1409 = vpack.c.bf16 %v1201, %v1197
        %v1410 = vpack.c.bf16 %v1202, %v1198
        %v1411 = vpack.c.bf16 %v1203, %v1199
        %v1412 = vpack.c.bf16 %v1208, %v1204
        %v1413 = vpack.c.bf16 %v1209, %v1205
        %v1414 = vpack.c.bf16 %v1210, %v1206
        %v1415 = vpack.c.bf16 %v1211, %v1207
        %v1416 = vpack.c.bf16 %v1216, %v1212
        %v1417 = vpack.c.bf16 %v1217, %v1213
        %v1418 = vpack.c.bf16 %v1218, %v1214
        %v1419 = vpack.c.bf16 %v1219, %v1215
        %v1420 = vpack.c.bf16 %v1224, %v1220
        %v1421 = vpack.c.bf16 %v1225, %v1221
        %v1422 = vpack.c.bf16 %v1226, %v1222
        %v1423 = vpack.c.bf16 %v1227, %v1223
        %v1424 = vpack.c.bf16 %v1232, %v1228
        %v1425 = vpack.c.bf16 %v1233, %v1229
        %v1426 = vpack.c.bf16 %v1234, %v1230
        %v1427 = vpack.c.bf16 %v1235, %v1231
        %v1428 = vpack.c.bf16 %v1240, %v1236
        %v1429 = vpack.c.bf16 %v1241, %v1237
        %v1430 = vpack.c.bf16 %v1242, %v1238
        %v1431 = vpack.c.bf16 %v1243, %v1239
        %v1432 = vpack.c.bf16 %v1248, %v1244
        %v1433 = vpack.c.bf16 %v1249, %v1245
        %v1434 = vpack.c.bf16 %v1250, %v1246
        %v1435 = vpack.c.bf16 %v1251, %v1247
        %v1436 = vpack.c.bf16 %v1256, %v1252
        %v1437 = vpack.c.bf16 %v1257, %v1253
        %v1438 = vpack.c.bf16 %v1258, %v1254
        %v1439 = vpack.c.bf16 %v1259, %v1255
        %v1440 = vpack.c.bf16 %v1264, %v1260
        %v1441 = vpack.c.bf16 %v1265, %v1261
        %v1442 = vpack.c.bf16 %v1266, %v1262
        %v1443 = vpack.c.bf16 %v1267, %v1263
        %v1444 = vpack.c.bf16 %v1272, %v1268
        %v1445 = vpack.c.bf16 %v1273, %v1269
        %v1446 = vpack.c.bf16 %v1274, %v1270
        %v1447 = vpack.c.bf16 %v1275, %v1271
        %v1448 = vpack.c.bf16 %v1280, %v1276
        %v1449 = vpack.c.bf16 %v1281, %v1277
        %v1450 = vpack.c.bf16 %v1282, %v1278
        %v1451 = vpack.c.bf16 %v1283, %v1279
        %v1452 = vpack.c.bf16 %v1288, %v1284
        %v1453 = vpack.c.bf16 %v1289, %v1285
        %v1454 = vpack.c.bf16 %v1290, %v1286
        %v1455 = vpack.c.bf16 %v1291, %v1287
        %v1456 = vpack.c.bf16 %v1296, %v1292
        %v1457 = vpack.c.bf16 %v1297, %v1293
        %v1458 = vpack.c.bf16 %v1298, %v1294
        %v1459 = vpack.c.bf16 %v1299, %v1295
        %v1460 = vpack.c.bf16 %v1304, %v1300
        %v1461 = vpack.c.bf16 %v1305, %v1301
        %v1462 = vpack.c.bf16 %v1306, %v1302
        %v1463 = vpack.c.bf16 %v1307, %v1303
        %v1464 = vpack.c.bf16 %v1312, %v1308
        %v1465 = vpack.c.bf16 %v1313, %v1309
        %v1466 = vpack.c.bf16 %v1314, %v1310
        %v1467 = vpack.c.bf16 %v1315, %v1311
        %v1468 = vpack.c.bf16 %v1320, %v1316
        %v1469 = vpack.c.bf16 %v1321, %v1317
        %v1470 = vpack.c.bf16 %v1322, %v1318
        %v1471 = vpack.c.bf16 %v1323, %v1319
        %v1472 = vpack.c.bf16 %v1328, %v1324
        %v1473 = vpack.c.bf16 %v1329, %v1325
        %v1474 = vpack.c.bf16 %v1330, %v1326
        %v1475 = vpack.c.bf16 %v1331, %v1327
        %v1476 = vpack.c.bf16 %v1336, %v1332
        %v1477 = vpack.c.bf16 %v1337, %v1333
        %v1478 = vpack.c.bf16 %v1338, %v1334
        %v1479 = vpack.c.bf16 %v1339, %v1335
        %v1480 = vpack.c.bf16 %v1344, %v1340
        %v1481 = vpack.c.bf16 %v1345, %v1341
        %v1482 = vpack.c.bf16 %v1346, %v1342
        %v1483 = vpack.c.bf16 %v1347, %v1343
        %v1484 = vpack.c.bf16 %v1352, %v1348
        %v1485 = vpack.c.bf16 %v1353, %v1349
        %v1486 = vpack.c.bf16 %v1354, %v1350
        %v1487 = vpack.c.bf16 %v1355, %v1351
        %v1488 = vpack.c.bf16 %v1360, %v1356
        %v1489 = vpack.c.bf16 %v1361, %v1357
        %v1490 = vpack.c.bf16 %v1362, %v1358
        %v1491 = vpack.c.bf16 %v1363, %v1359
        %1492 = vmatprep.subr.bf16.mxu0 %v1045
        %1493 = vmatpush1.bf16.msra.mxu0 %v1044
        %1494 = vmatprep.subr.bf16.mxu0 %v1047
        %1495 = vmatpush1.bf16.msra.mxu0 %v1046
        %1496 = vmatprep.subr.bf16.mxu0 %v1049
        %1497 = vmatpush1.bf16.msra.mxu0 %v1048
        %1498 = vmatprep.subr.bf16.mxu0 %v1051
        %1499 = vmatpush1.bf16.msra.mxu0 %v1050
        %1500 = vmatprep.subr.bf16.mxu0 %v1053
        %1501 = vmatpush1.bf16.msra.mxu0 %v1052
        %1502 = vmatprep.subr.bf16.mxu0 %v1055
        %1503 = vmatpush1.bf16.msra.mxu0 %v1054
        %1504 = vmatprep.subr.bf16.mxu0 %v1057
        %1505 = vmatpush1.bf16.msra.mxu0 %v1056
        %1506 = vmatprep.subr.bf16.mxu0 %v1059
        %1507 = vmatpush1.bf16.msra.mxu0 %v1058
        %1508 = vmatprep.subr.bf16.mxu0 %v1061
        %1509 = vmatpush1.bf16.msra.mxu0 %v1060
        %1510 = vmatprep.subr.bf16.mxu0 %v1063
        %1511 = vmatpush1.bf16.msra.mxu0 %v1062
        %1512 = vmatprep.subr.bf16.mxu0 %v1065
        %1513 = vmatpush1.bf16.msra.mxu0 %v1064
        %1514 = vmatprep.subr.bf16.mxu0 %v1067
        %1515 = vmatpush1.bf16.msra.mxu0 %v1066
        %1516 = vmatprep.subr.bf16.mxu0 %v1069
        %1517 = vmatpush1.bf16.msra.mxu0 %v1068
        %1518 = vmatprep.subr.bf16.mxu0 %v1071
        %1519 = vmatpush1.bf16.msra.mxu0 %v1070
        %1520 = vmatprep.subr.bf16.mxu0 %v1073
        %1521 = vmatpush1.bf16.msra.mxu0 %v1072
        %1522 = vmatprep.subr.bf16.mxu0 %v1075
        %1523 = vmatpush1.bf16.msra.mxu0 %v1074
        %1524 = vmatprep.mubr.bf16.mxu0 %v1365
        %1525 = vmatmul.mubr.bf16.gmra.mrb[0].mxu0 %v1364
        %v1526 = vpop.f32.mrb[0].mxu0
        %v1527 = vadd.f32 0.0, %v1526
        %v1528 = vpop.f32.mrb[0].mxu0
        %v1529 = vadd.f32 0.0, %v1528
        %v1530 = vpop.f32.mrb[0].mxu0
        %v1531 = vadd.f32 0.0, %v1530
        %v1532 = vpop.f32.mrb[0].mxu0
        %v1533 = vadd.f32 0.0, %v1532
        %1534 = vmatprep.mubr.bf16.mxu0 %v1369
        %1535 = vmatmul.mubr.bf16.gmra.mrb[0].mxu0 %v1368
        %v1536 = vpop.f32.mrb[0].mxu0
        %v1537 = vadd.f32 0.0, %v1536
        %v1538 = vpop.f32.mrb[0].mxu0
        %v1539 = vadd.f32 0.0, %v1538
        %v1540 = vpop.f32.mrb[0].mxu0
        %v1541 = vadd.f32 0.0, %v1540
        %v1542 = vpop.f32.mrb[0].mxu0
        %v1543 = vadd.f32 0.0, %v1542
        %1544 = vmatprep.mubr.bf16.mxu0 %v1373
        %1545 = vmatmul.mubr.bf16.gmra.mrb[0].mxu0 %v1372
        %v1546 = vpop.f32.mrb[0].mxu0
        %v1547 = vadd.f32 0.0, %v1546
        %v1548 = vpop.f32.mrb[0].mxu0
        %v1549 = vadd.f32 0.0, %v1548
        %v1550 = vpop.f32.mrb[0].mxu0
        %v1551 = vadd.f32 0.0, %v1550
        %v1552 = vpop.f32.mrb[0].mxu0
        %v1553 = vadd.f32 0.0, %v1552
        %1554 = vmatprep.mubr.bf16.mxu0 %v1377
        %1555 = vmatmul.mubr.bf16.gmra.mrb[0].mxu0 %v1376
        %v1556 = vpop.f32.mrb[0].mxu0
        %v1557 = vadd.f32 0.0, %v1556
        %v1558 = vpop.f32.mrb[0].mxu0
        %v1559 = vadd.f32 0.0, %v1558
        %v1560 = vpop.f32.mrb[0].mxu0
        %v1561 = vadd.f32 0.0, %v1560
        %v1562 = vpop.f32.mrb[0].mxu0
        %v1563 = vadd.f32 0.0, %v1562
        %1564 = vmatprep.mubr.bf16.mxu0 %v1381
        %1565 = vmatmul.mubr.bf16.gmra.mrb[0].mxu0 %v1380
        %v1566 = vpop.f32.mrb[0].mxu0
        %v1567 = vadd.f32 0.0, %v1566
        %v1568 = vpop.f32.mrb[0].mxu0
        %v1569 = vadd.f32 0.0, %v1568
        %v1570 = vpop.f32.mrb[0].mxu0
        %v1571 = vadd.f32 0.0, %v1570
        %v1572 = vpop.f32.mrb[0].mxu0
        %v1573 = vadd.f32 0.0, %v1572
        %1574 = vmatprep.mubr.bf16.mxu0 %v1385
        %1575 = vmatmul.mubr.bf16.gmra.mrb[0].mxu0 %v1384
        %v1576 = vpop.f32.mrb[0].mxu0
        %v1577 = vadd.f32 0.0, %v1576
        %v1578 = vpop.f32.mrb[0].mxu0
        %v1579 = vadd.f32 0.0, %v1578
        %v1580 = vpop.f32.mrb[0].mxu0
        %v1581 = vadd.f32 0.0, %v1580
        %v1582 = vpop.f32.mrb[0].mxu0
        %v1583 = vadd.f32 0.0, %v1582
        %1584 = vmatprep.mubr.bf16.mxu0 %v1389
        %1585 = vmatmul.mubr.bf16.gmra.mrb[0].mxu0 %v1388
        %v1586 = vpop.f32.mrb[0].mxu0
        %v1587 = vadd.f32 0.0, %v1586
        %v1588 = vpop.f32.mrb[0].mxu0
        %v1589 = vadd.f32 0.0, %v1588
        %v1590 = vpop.f32.mrb[0].mxu0
        %v1591 = vadd.f32 0.0, %v1590
        %v1592 = vpop.f32.mrb[0].mxu0
        %v1593 = vadd.f32 0.0, %v1592
        %1594 = vmatprep.mubr.bf16.mxu0 %v1393
        %1595 = vmatmul.mubr.bf16.gmra.mrb[0].mxu0 %v1392
        %v1596 = vpop.f32.mrb[0].mxu0
        %v1597 = vadd.f32 0.0, %v1596
        %v1598 = vpop.f32.mrb[0].mxu0
        %v1599 = vadd.f32 0.0, %v1598
        %v1600 = vpop.f32.mrb[0].mxu0
        %v1601 = vadd.f32 0.0, %v1600
        %v1602 = vpop.f32.mrb[0].mxu0
        %v1603 = vadd.f32 0.0, %v1602
        %1604 = vmatprep.mubr.bf16.mxu0 %v1397
        %1605 = vmatmul.mubr.bf16.gmra.mrb[0].mxu0 %v1396
        %v1606 = vpop.f32.mrb[0].mxu0
        %v1607 = vadd.f32 0.0, %v1606
        %v1608 = vpop.f32.mrb[0].mxu0
        %v1609 = vadd.f32 0.0, %v1608
        %v1610 = vpop.f32.mrb[0].mxu0
        %v1611 = vadd.f32 0.0, %v1610
        %v1612 = vpop.f32.mrb[0].mxu0
        %v1613 = vadd.f32 0.0, %v1612
        %1614 = vmatprep.mubr.bf16.mxu0 %v1401
        %1615 = vmatmul.mubr.bf16.gmra.mrb[0].mxu0 %v1400
        %v1616 = vpop.f32.mrb[0].mxu0
        %v1617 = vadd.f32 0.0, %v1616
        %v1618 = vpop.f32.mrb[0].mxu0
        %v1619 = vadd.f32 0.0, %v1618
        %v1620 = vpop.f32.mrb[0].mxu0
        %v1621 = vadd.f32 0.0, %v1620
        %v1622 = vpop.f32.mrb[0].mxu0
        %v1623 = vadd.f32 0.0, %v1622
        %1624 = vmatprep.mubr.bf16.mxu0 %v1405
        %1625 = vmatmul.mubr.bf16.gmra.mrb[0].mxu0 %v1404
        %v1626 = vpop.f32.mrb[0].mxu0
        %v1627 = vadd.f32 0.0, %v1626
        %v1628 = vpop.f32.mrb[0].mxu0
        %v1629 = vadd.f32 0.0, %v1628
        %v1630 = vpop.f32.mrb[0].mxu0
        %v1631 = vadd.f32 0.0, %v1630
        %v1632 = vpop.f32.mrb[0].mxu0
        %v1633 = vadd.f32 0.0, %v1632
        %1634 = vmatprep.mubr.bf16.mxu0 %v1409
        %1635 = vmatmul.mubr.bf16.gmra.mrb[0].mxu0 %v1408
        %v1636 = vpop.f32.mrb[0].mxu0
        %v1637 = vadd.f32 0.0, %v1636
        %v1638 = vpop.f32.mrb[0].mxu0
        %v1639 = vadd.f32 0.0, %v1638
        %v1640 = vpop.f32.mrb[0].mxu0
        %v1641 = vadd.f32 0.0, %v1640
        %v1642 = vpop.f32.mrb[0].mxu0
        %v1643 = vadd.f32 0.0, %v1642
        %1644 = vmatprep.mubr.bf16.mxu0 %v1413
        %1645 = vmatmul.mubr.bf16.gmra.mrb[0].mxu0 %v1412
        %v1646 = vpop.f32.mrb[0].mxu0
        %v1647 = vadd.f32 0.0, %v1646
        %v1648 = vpop.f32.mrb[0].mxu0
        %v1649 = vadd.f32 0.0, %v1648
        %v1650 = vpop.f32.mrb[0].mxu0
        %v1651 = vadd.f32 0.0, %v1650
        %v1652 = vpop.f32.mrb[0].mxu0
        %v1653 = vadd.f32 0.0, %v1652
        %1654 = vmatprep.mubr.bf16.mxu0 %v1417
        %1655 = vmatmul.mubr.bf16.gmra.mrb[0].mxu0 %v1416
        %v1656 = vpop.f32.mrb[0].mxu0
        %v1657 = vadd.f32 0.0, %v1656
        %v1658 = vpop.f32.mrb[0].mxu0
        %v1659 = vadd.f32 0.0, %v1658
        %v1660 = vpop.f32.mrb[0].mxu0
        %v1661 = vadd.f32 0.0, %v1660
        %v1662 = vpop.f32.mrb[0].mxu0
        %v1663 = vadd.f32 0.0, %v1662
        %1664 = vmatprep.mubr.bf16.mxu0 %v1421
        %1665 = vmatmul.mubr.bf16.gmra.mrb[0].mxu0 %v1420
        %v1666 = vpop.f32.mrb[0].mxu0
        %v1667 = vadd.f32 0.0, %v1666
        %v1668 = vpop.f32.mrb[0].mxu0
        %v1669 = vadd.f32 0.0, %v1668
        %v1670 = vpop.f32.mrb[0].mxu0
        %v1671 = vadd.f32 0.0, %v1670
        %v1672 = vpop.f32.mrb[0].mxu0
        %v1673 = vadd.f32 0.0, %v1672
        %1674 = vmatprep.mubr.bf16.mxu0 %v1425
        %1675 = vmatmul.mubr.bf16.gmra.mrb[0].mxu0 %v1424
        %v1676 = vpop.f32.mrb[0].mxu0
        %v1677 = vadd.f32 0.0, %v1676
        %v1678 = vpop.f32.mrb[0].mxu0
        %v1679 = vadd.f32 0.0, %v1678
        %v1680 = vpop.f32.mrb[0].mxu0
        %v1681 = vadd.f32 0.0, %v1680
        %v1682 = vpop.f32.mrb[0].mxu0
        %v1683 = vadd.f32 0.0, %v1682
        %1684 = vmatprep.mubr.bf16.mxu0 %v1429
        %1685 = vmatmul.mubr.bf16.gmra.mrb[0].mxu0 %v1428
        %v1686 = vpop.f32.mrb[0].mxu0
        %v1687 = vadd.f32 0.0, %v1686
        %v1688 = vpop.f32.mrb[0].mxu0
        %v1689 = vadd.f32 0.0, %v1688
        %v1690 = vpop.f32.mrb[0].mxu0
        %v1691 = vadd.f32 0.0, %v1690
        %v1692 = vpop.f32.mrb[0].mxu0
        %v1693 = vadd.f32 0.0, %v1692
        %1694 = vmatprep.mubr.bf16.mxu0 %v1433
        %1695 = vmatmul.mubr.bf16.gmra.mrb[0].mxu0 %v1432
        %v1696 = vpop.f32.mrb[0].mxu0
        %v1697 = vadd.f32 0.0, %v1696
        %v1698 = vpop.f32.mrb[0].mxu0
        %v1699 = vadd.f32 0.0, %v1698
        %v1700 = vpop.f32.mrb[0].mxu0
        %v1701 = vadd.f32 0.0, %v1700
        %v1702 = vpop.f32.mrb[0].mxu0
        %v1703 = vadd.f32 0.0, %v1702
        %1704 = vmatprep.mubr.bf16.mxu0 %v1437
        %1705 = vmatmul.mubr.bf16.gmra.mrb[0].mxu0 %v1436
        %v1706 = vpop.f32.mrb[0].mxu0
        %v1707 = vadd.f32 0.0, %v1706
        %v1708 = vpop.f32.mrb[0].mxu0
        %v1709 = vadd.f32 0.0, %v1708
        %v1710 = vpop.f32.mrb[0].mxu0
        %v1711 = vadd.f32 0.0, %v1710
        %v1712 = vpop.f32.mrb[0].mxu0
        %v1713 = vadd.f32 0.0, %v1712
        %1714 = vmatprep.mubr.bf16.mxu0 %v1441
        %1715 = vmatmul.mubr.bf16.gmra.mrb[0].mxu0 %v1440
        %v1716 = vpop.f32.mrb[0].mxu0
        %v1717 = vadd.f32 0.0, %v1716
        %v1718 = vpop.f32.mrb[0].mxu0
        %v1719 = vadd.f32 0.0, %v1718
        %v1720 = vpop.f32.mrb[0].mxu0
        %v1721 = vadd.f32 0.0, %v1720
        %v1722 = vpop.f32.mrb[0].mxu0
        %v1723 = vadd.f32 0.0, %v1722
        %1724 = vmatprep.mubr.bf16.mxu0 %v1445
        %1725 = vmatmul.mubr.bf16.gmra.mrb[0].mxu0 %v1444
        %v1726 = vpop.f32.mrb[0].mxu0
        %v1727 = vadd.f32 0.0, %v1726
        %v1728 = vpop.f32.mrb[0].mxu0
        %v1729 = vadd.f32 0.0, %v1728
        %v1730 = vpop.f32.mrb[0].mxu0
        %v1731 = vadd.f32 0.0, %v1730
        %v1732 = vpop.f32.mrb[0].mxu0
        %v1733 = vadd.f32 0.0, %v1732
        %1734 = vmatprep.mubr.bf16.mxu0 %v1449
        %1735 = vmatmul.mubr.bf16.gmra.mrb[0].mxu0 %v1448
        %v1736 = vpop.f32.mrb[0].mxu0
        %v1737 = vadd.f32 0.0, %v1736
        %v1738 = vpop.f32.mrb[0].mxu0
        %v1739 = vadd.f32 0.0, %v1738
        %v1740 = vpop.f32.mrb[0].mxu0
        %v1741 = vadd.f32 0.0, %v1740
        %v1742 = vpop.f32.mrb[0].mxu0
        %v1743 = vadd.f32 0.0, %v1742
        %1744 = vmatprep.mubr.bf16.mxu0 %v1453
        %1745 = vmatmul.mubr.bf16.gmra.mrb[0].mxu0 %v1452
        %v1746 = vpop.f32.mrb[0].mxu0
        %v1747 = vadd.f32 0.0, %v1746
        %v1748 = vpop.f32.mrb[0].mxu0
        %v1749 = vadd.f32 0.0, %v1748
        %v1750 = vpop.f32.mrb[0].mxu0
        %v1751 = vadd.f32 0.0, %v1750
        %v1752 = vpop.f32.mrb[0].mxu0
        %v1753 = vadd.f32 0.0, %v1752
        %1754 = vmatprep.mubr.bf16.mxu0 %v1457
        %1755 = vmatmul.mubr.bf16.gmra.mrb[0].mxu0 %v1456
        %v1756 = vpop.f32.mrb[0].mxu0
        %v1757 = vadd.f32 0.0, %v1756
        %v1758 = vpop.f32.mrb[0].mxu0
        %v1759 = vadd.f32 0.0, %v1758
        %v1760 = vpop.f32.mrb[0].mxu0
        %v1761 = vadd.f32 0.0, %v1760
        %v1762 = vpop.f32.mrb[0].mxu0
        %v1763 = vadd.f32 0.0, %v1762
        %1764 = vmatprep.mubr.bf16.mxu0 %v1461
        %1765 = vmatmul.mubr.bf16.gmra.mrb[0].mxu0 %v1460
        %v1766 = vpop.f32.mrb[0].mxu0
        %v1767 = vadd.f32 0.0, %v1766
        %v1768 = vpop.f32.mrb[0].mxu0
        %v1769 = vadd.f32 0.0, %v1768
        %v1770 = vpop.f32.mrb[0].mxu0
        %v1771 = vadd.f32 0.0, %v1770
        %v1772 = vpop.f32.mrb[0].mxu0
        %v1773 = vadd.f32 0.0, %v1772
        %1774 = vmatprep.mubr.bf16.mxu0 %v1465
        %1775 = vmatmul.mubr.bf16.gmra.mrb[0].mxu0 %v1464
        %v1776 = vpop.f32.mrb[0].mxu0
        %v1777 = vadd.f32 0.0, %v1776
        %v1778 = vpop.f32.mrb[0].mxu0
        %v1779 = vadd.f32 0.0, %v1778
        %v1780 = vpop.f32.mrb[0].mxu0
        %v1781 = vadd.f32 0.0, %v1780
        %v1782 = vpop.f32.mrb[0].mxu0
        %v1783 = vadd.f32 0.0, %v1782
        %1784 = vmatprep.mubr.bf16.mxu0 %v1469
        %1785 = vmatmul.mubr.bf16.gmra.mrb[0].mxu0 %v1468
        %v1786 = vpop.f32.mrb[0].mxu0
        %v1787 = vadd.f32 0.0, %v1786
        %v1788 = vpop.f32.mrb[0].mxu0
        %v1789 = vadd.f32 0.0, %v1788
        %v1790 = vpop.f32.mrb[0].mxu0
        %v1791 = vadd.f32 0.0, %v1790
        %v1792 = vpop.f32.mrb[0].mxu0
        %v1793 = vadd.f32 0.0, %v1792
        %1794 = vmatprep.mubr.bf16.mxu0 %v1473
        %1795 = vmatmul.mubr.bf16.gmra.mrb[0].mxu0 %v1472
        %v1796 = vpop.f32.mrb[0].mxu0
        %v1797 = vadd.f32 0.0, %v1796
        %v1798 = vpop.f32.mrb[0].mxu0
        %v1799 = vadd.f32 0.0, %v1798
        %v1800 = vpop.f32.mrb[0].mxu0
        %v1801 = vadd.f32 0.0, %v1800
        %v1802 = vpop.f32.mrb[0].mxu0
        %v1803 = vadd.f32 0.0, %v1802
        %1804 = vmatprep.mubr.bf16.mxu0 %v1477
        %1805 = vmatmul.mubr.bf16.gmra.mrb[0].mxu0 %v1476
        %v1806 = vpop.f32.mrb[0].mxu0
        %v1807 = vadd.f32 0.0, %v1806
        %v1808 = vpop.f32.mrb[0].mxu0
        %v1809 = vadd.f32 0.0, %v1808
        %v1810 = vpop.f32.mrb[0].mxu0
        %v1811 = vadd.f32 0.0, %v1810
        %v1812 = vpop.f32.mrb[0].mxu0
        %v1813 = vadd.f32 0.0, %v1812
        %1814 = vmatprep.mubr.bf16.mxu0 %v1481
        %1815 = vmatmul.mubr.bf16.gmra.mrb[0].mxu0 %v1480
        %v1816 = vpop.f32.mrb[0].mxu0
        %v1817 = vadd.f32 0.0, %v1816
        %v1818 = vpop.f32.mrb[0].mxu0
        %v1819 = vadd.f32 0.0, %v1818
        %v1820 = vpop.f32.mrb[0].mxu0
        %v1821 = vadd.f32 0.0, %v1820
        %v1822 = vpop.f32.mrb[0].mxu0
        %v1823 = vadd.f32 0.0, %v1822
        %1824 = vmatprep.mubr.bf16.mxu0 %v1485
        %1825 = vmatmul.mubr.bf16.gmra.mrb[0].mxu0 %v1484
        %v1826 = vpop.f32.mrb[0].mxu0
        %v1827 = vadd.f32 0.0, %v1826
        %v1828 = vpop.f32.mrb[0].mxu0
        %v1829 = vadd.f32 0.0, %v1828
        %v1830 = vpop.f32.mrb[0].mxu0
        %v1831 = vadd.f32 0.0, %v1830
        %v1832 = vpop.f32.mrb[0].mxu0
        %v1833 = vadd.f32 0.0, %v1832
        %1834 = vmatprep.mubr.bf16.mxu0 %v1489
        %1835 = vmatmul.mubr.bf16.gmra.mrb[0].mxu0 %v1488
        %v1836 = vpop.f32.mrb[0].mxu0
        %v1837 = vadd.f32 0.0, %v1836
        %v1838 = vpop.f32.mrb[0].mxu0
        %v1839 = vadd.f32 0.0, %v1838
        %v1840 = vpop.f32.mrb[0].mxu0
        %v1841 = vadd.f32 0.0, %v1840
        %v1842 = vpop.f32.mrb[0].mxu0
        %v1843 = vadd.f32 0.0, %v1842
        %1844 = vdwg.mxu0
        %1845 = vmatprep.subr.bf16.mxu0 %v1077
        %1846 = vmatpush1.bf16.msra.mxu0 %v1076
        %1847 = vmatprep.subr.bf16.mxu0 %v1079
        %1848 = vmatpush1.bf16.msra.mxu0 %v1078
        %1849 = vmatprep.subr.bf16.mxu0 %v1081
        %1850 = vmatpush1.bf16.msra.mxu0 %v1080
        %1851 = vmatprep.subr.bf16.mxu0 %v1083
        %1852 = vmatpush1.bf16.msra.mxu0 %v1082
        %1853 = vmatprep.subr.bf16.mxu0 %v1085
        %1854 = vmatpush1.bf16.msra.mxu0 %v1084
        %1855 = vmatprep.subr.bf16.mxu0 %v1087
        %1856 = vmatpush1.bf16.msra.mxu0 %v1086
        %1857 = vmatprep.subr.bf16.mxu0 %v1089
        %1858 = vmatpush1.bf16.msra.mxu0 %v1088
        %1859 = vmatprep.subr.bf16.mxu0 %v1091
        %1860 = vmatpush1.bf16.msra.mxu0 %v1090
        %1861 = vmatprep.subr.bf16.mxu0 %v1093
        %1862 = vmatpush1.bf16.msra.mxu0 %v1092
        %1863 = vmatprep.subr.bf16.mxu0 %v1095
        %1864 = vmatpush1.bf16.msra.mxu0 %v1094
        %1865 = vmatprep.subr.bf16.mxu0 %v1097
        %1866 = vmatpush1.bf16.msra.mxu0 %v1096
        %1867 = vmatprep.subr.bf16.mxu0 %v1099
        %1868 = vmatpush1.bf16.msra.mxu0 %v1098
        %1869 = vmatprep.subr.bf16.mxu0 %v1101
        %1870 = vmatpush1.bf16.msra.mxu0 %v1100
        %1871 = vmatprep.subr.bf16.mxu0 %v1103
        %1872 = vmatpush1.bf16.msra.mxu0 %v1102
        %1873 = vmatprep.subr.bf16.mxu0 %v1105
        %1874 = vmatpush1.bf16.msra.mxu0 %v1104
        %1875 = vmatprep.subr.bf16.mxu0 %v1107
        %1876 = vmatpush1.bf16.msra.mxu0 %v1106
        %1877 = vmatprep.mubr.bf16.mxu0 %v1367
        %1878 = vmatmul.mubr.bf16.gmra.mrb[0].mxu0 %v1366
        %v1879 = vpop.f32.mrb[0].mxu0
        %v1880 = vadd.f32 %v1527, %v1879
        %v1881 = vpop.f32.mrb[0].mxu0
        %v1882 = vadd.f32 %v1529, %v1881
        %v1883 = vpop.f32.mrb[0].mxu0
        %v1884 = vadd.f32 %v1531, %v1883
        %v1885 = vpop.f32.mrb[0].mxu0
        %v1886 = vadd.f32 %v1533, %v1885
        %1887 = vmatprep.mubr.bf16.mxu0 %v1371
        %1888 = vmatmul.mubr.bf16.gmra.mrb[0].mxu0 %v1370
        %v1889 = vpop.f32.mrb[0].mxu0
        %v1890 = vadd.f32 %v1537, %v1889
        %v1891 = vpop.f32.mrb[0].mxu0
        %v1892 = vadd.f32 %v1539, %v1891
        %v1893 = vpop.f32.mrb[0].mxu0
        %v1894 = vadd.f32 %v1541, %v1893
        %v1895 = vpop.f32.mrb[0].mxu0
        %v1896 = vadd.f32 %v1543, %v1895
        %1897 = vmatprep.mubr.bf16.mxu0 %v1375
        %1898 = vmatmul.mubr.bf16.gmra.mrb[0].mxu0 %v1374
        %v1899 = vpop.f32.mrb[0].mxu0
        %v1900 = vadd.f32 %v1547, %v1899
        %v1901 = vpop.f32.mrb[0].mxu0
        %v1902 = vadd.f32 %v1549, %v1901
        %v1903 = vpop.f32.mrb[0].mxu0
        %v1904 = vadd.f32 %v1551, %v1903
        %v1905 = vpop.f32.mrb[0].mxu0
        %v1906 = vadd.f32 %v1553, %v1905
        %1907 = vmatprep.mubr.bf16.mxu0 %v1379
        %1908 = vmatmul.mubr.bf16.gmra.mrb[0].mxu0 %v1378
        %v1909 = vpop.f32.mrb[0].mxu0
        %v1910 = vadd.f32 %v1557, %v1909
        %v1911 = vpop.f32.mrb[0].mxu0
        %v1912 = vadd.f32 %v1559, %v1911
        %v1913 = vpop.f32.mrb[0].mxu0
        %v1914 = vadd.f32 %v1561, %v1913
        %v1915 = vpop.f32.mrb[0].mxu0
        %v1916 = vadd.f32 %v1563, %v1915
        %1917 = vmatprep.mubr.bf16.mxu0 %v1383
        %1918 = vmatmul.mubr.bf16.gmra.mrb[0].mxu0 %v1382
        %v1919 = vpop.f32.mrb[0].mxu0
        %v1920 = vadd.f32 %v1567, %v1919
        %v1921 = vpop.f32.mrb[0].mxu0
        %v1922 = vadd.f32 %v1569, %v1921
        %v1923 = vpop.f32.mrb[0].mxu0
        %v1924 = vadd.f32 %v1571, %v1923
        %v1925 = vpop.f32.mrb[0].mxu0
        %v1926 = vadd.f32 %v1573, %v1925
        %1927 = vmatprep.mubr.bf16.mxu0 %v1387
        %1928 = vmatmul.mubr.bf16.gmra.mrb[0].mxu0 %v1386
        %v1929 = vpop.f32.mrb[0].mxu0
        %v1930 = vadd.f32 %v1577, %v1929
        %v1931 = vpop.f32.mrb[0].mxu0
        %v1932 = vadd.f32 %v1579, %v1931
        %v1933 = vpop.f32.mrb[0].mxu0
        %v1934 = vadd.f32 %v1581, %v1933
        %v1935 = vpop.f32.mrb[0].mxu0
        %v1936 = vadd.f32 %v1583, %v1935
        %1937 = vmatprep.mubr.bf16.mxu0 %v1391
        %1938 = vmatmul.mubr.bf16.gmra.mrb[0].mxu0 %v1390
        %v1939 = vpop.f32.mrb[0].mxu0
        %v1940 = vadd.f32 %v1587, %v1939
        %v1941 = vpop.f32.mrb[0].mxu0
        %v1942 = vadd.f32 %v1589, %v1941
        %v1943 = vpop.f32.mrb[0].mxu0
        %v1944 = vadd.f32 %v1591, %v1943
        %v1945 = vpop.f32.mrb[0].mxu0
        %v1946 = vadd.f32 %v1593, %v1945
        %1947 = vmatprep.mubr.bf16.mxu0 %v1395
        %1948 = vmatmul.mubr.bf16.gmra.mrb[0].mxu0 %v1394
        %v1949 = vpop.f32.mrb[0].mxu0
        %v1950 = vadd.f32 %v1597, %v1949
        %v1951 = vpop.f32.mrb[0].mxu0
        %v1952 = vadd.f32 %v1599, %v1951
        %v1953 = vpop.f32.mrb[0].mxu0
        %v1954 = vadd.f32 %v1601, %v1953
        %v1955 = vpop.f32.mrb[0].mxu0
        %v1956 = vadd.f32 %v1603, %v1955
        %1957 = vmatprep.mubr.bf16.mxu0 %v1399
        %1958 = vmatmul.mubr.bf16.gmra.mrb[0].mxu0 %v1398
        %v1959 = vpop.f32.mrb[0].mxu0
        %v1960 = vadd.f32 %v1607, %v1959
        %v1961 = vpop.f32.mrb[0].mxu0
        %v1962 = vadd.f32 %v1609, %v1961
        %v1963 = vpop.f32.mrb[0].mxu0
        %v1964 = vadd.f32 %v1611, %v1963
        %v1965 = vpop.f32.mrb[0].mxu0
        %v1966 = vadd.f32 %v1613, %v1965
        %1967 = vmatprep.mubr.bf16.mxu0 %v1403
        %1968 = vmatmul.mubr.bf16.gmra.mrb[0].mxu0 %v1402
        %v1969 = vpop.f32.mrb[0].mxu0
        %v1970 = vadd.f32 %v1617, %v1969
        %v1971 = vpop.f32.mrb[0].mxu0
        %v1972 = vadd.f32 %v1619, %v1971
        %v1973 = vpop.f32.mrb[0].mxu0
        %v1974 = vadd.f32 %v1621, %v1973
        %v1975 = vpop.f32.mrb[0].mxu0
        %v1976 = vadd.f32 %v1623, %v1975
        %1977 = vmatprep.mubr.bf16.mxu0 %v1407
        %1978 = vmatmul.mubr.bf16.gmra.mrb[0].mxu0 %v1406
        %v1979 = vpop.f32.mrb[0].mxu0
        %v1980 = vadd.f32 %v1627, %v1979
        %v1981 = vpop.f32.mrb[0].mxu0
        %v1982 = vadd.f32 %v1629, %v1981
        %v1983 = vpop.f32.mrb[0].mxu0
        %v1984 = vadd.f32 %v1631, %v1983
        %v1985 = vpop.f32.mrb[0].mxu0
        %v1986 = vadd.f32 %v1633, %v1985
        %1987 = vmatprep.mubr.bf16.mxu0 %v1411
        %1988 = vmatmul.mubr.bf16.gmra.mrb[0].mxu0 %v1410
        %v1989 = vpop.f32.mrb[0].mxu0
        %v1990 = vadd.f32 %v1637, %v1989
        %v1991 = vpop.f32.mrb[0].mxu0
        %v1992 = vadd.f32 %v1639, %v1991
        %v1993 = vpop.f32.mrb[0].mxu0
        %v1994 = vadd.f32 %v1641, %v1993
        %v1995 = vpop.f32.mrb[0].mxu0
        %v1996 = vadd.f32 %v1643, %v1995
        %1997 = vmatprep.mubr.bf16.mxu0 %v1415
        %1998 = vmatmul.mubr.bf16.gmra.mrb[0].mxu0 %v1414
        %v1999 = vpop.f32.mrb[0].mxu0
        %v2000 = vadd.f32 %v1647, %v1999
        %v2001 = vpop.f32.mrb[0].mxu0
        %v2002 = vadd.f32 %v1649, %v2001
        %v2003 = vpop.f32.mrb[0].mxu0
        %v2004 = vadd.f32 %v1651, %v2003
        %v2005 = vpop.f32.mrb[0].mxu0
        %v2006 = vadd.f32 %v1653, %v2005
        %2007 = vmatprep.mubr.bf16.mxu0 %v1419
        %2008 = vmatmul.mubr.bf16.gmra.mrb[0].mxu0 %v1418
        %v2009 = vpop.f32.mrb[0].mxu0
        %v2010 = vadd.f32 %v1657, %v2009
        %v2011 = vpop.f32.mrb[0].mxu0
        %v2012 = vadd.f32 %v1659, %v2011
        %v2013 = vpop.f32.mrb[0].mxu0
        %v2014 = vadd.f32 %v1661, %v2013
        %v2015 = vpop.f32.mrb[0].mxu0
        %v2016 = vadd.f32 %v1663, %v2015
        %2017 = vmatprep.mubr.bf16.mxu0 %v1423
        %2018 = vmatmul.mubr.bf16.gmra.mrb[0].mxu0 %v1422
        %v2019 = vpop.f32.mrb[0].mxu0
        %v2020 = vadd.f32 %v1667, %v2019
        %v2021 = vpop.f32.mrb[0].mxu0
        %v2022 = vadd.f32 %v1669, %v2021
        %v2023 = vpop.f32.mrb[0].mxu0
        %v2024 = vadd.f32 %v1671, %v2023
        %v2025 = vpop.f32.mrb[0].mxu0
        %v2026 = vadd.f32 %v1673, %v2025
        %2027 = vmatprep.mubr.bf16.mxu0 %v1427
        %2028 = vmatmul.mubr.bf16.gmra.mrb[0].mxu0 %v1426
        %v2029 = vpop.f32.mrb[0].mxu0
        %v2030 = vadd.f32 %v1677, %v2029
        %v2031 = vpop.f32.mrb[0].mxu0
        %v2032 = vadd.f32 %v1679, %v2031
        %v2033 = vpop.f32.mrb[0].mxu0
        %v2034 = vadd.f32 %v1681, %v2033
        %v2035 = vpop.f32.mrb[0].mxu0
        %v2036 = vadd.f32 %v1683, %v2035
        %2037 = vmatprep.mubr.bf16.mxu0 %v1431
        %2038 = vmatmul.mubr.bf16.gmra.mrb[0].mxu0 %v1430
        %v2039 = vpop.f32.mrb[0].mxu0
        %v2040 = vadd.f32 %v1687, %v2039
        %v2041 = vpop.f32.mrb[0].mxu0
        %v2042 = vadd.f32 %v1689, %v2041
        %v2043 = vpop.f32.mrb[0].mxu0
        %v2044 = vadd.f32 %v1691, %v2043
        %v2045 = vpop.f32.mrb[0].mxu0
        %v2046 = vadd.f32 %v1693, %v2045
        %2047 = vmatprep.mubr.bf16.mxu0 %v1435
        %2048 = vmatmul.mubr.bf16.gmra.mrb[0].mxu0 %v1434
        %v2049 = vpop.f32.mrb[0].mxu0
        %v2050 = vadd.f32 %v1697, %v2049
        %v2051 = vpop.f32.mrb[0].mxu0
        %v2052 = vadd.f32 %v1699, %v2051
        %v2053 = vpop.f32.mrb[0].mxu0
        %v2054 = vadd.f32 %v1701, %v2053
        %v2055 = vpop.f32.mrb[0].mxu0
        %v2056 = vadd.f32 %v1703, %v2055
        %2057 = vmatprep.mubr.bf16.mxu0 %v1439
        %2058 = vmatmul.mubr.bf16.gmra.mrb[0].mxu0 %v1438
        %v2059 = vpop.f32.mrb[0].mxu0
        %v2060 = vadd.f32 %v1707, %v2059
        %v2061 = vpop.f32.mrb[0].mxu0
        %v2062 = vadd.f32 %v1709, %v2061
        %v2063 = vpop.f32.mrb[0].mxu0
        %v2064 = vadd.f32 %v1711, %v2063
        %v2065 = vpop.f32.mrb[0].mxu0
        %v2066 = vadd.f32 %v1713, %v2065
        %2067 = vmatprep.mubr.bf16.mxu0 %v1443
        %2068 = vmatmul.mubr.bf16.gmra.mrb[0].mxu0 %v1442
        %v2069 = vpop.f32.mrb[0].mxu0
        %v2070 = vadd.f32 %v1717, %v2069
        %v2071 = vpop.f32.mrb[0].mxu0
        %v2072 = vadd.f32 %v1719, %v2071
        %v2073 = vpop.f32.mrb[0].mxu0
        %v2074 = vadd.f32 %v1721, %v2073
        %v2075 = vpop.f32.mrb[0].mxu0
        %v2076 = vadd.f32 %v1723, %v2075
        %2077 = vmatprep.mubr.bf16.mxu0 %v1447
        %2078 = vmatmul.mubr.bf16.gmra.mrb[0].mxu0 %v1446
        %v2079 = vpop.f32.mrb[0].mxu0
        %v2080 = vadd.f32 %v1727, %v2079
        %v2081 = vpop.f32.mrb[0].mxu0
        %v2082 = vadd.f32 %v1729, %v2081
        %v2083 = vpop.f32.mrb[0].mxu0
        %v2084 = vadd.f32 %v1731, %v2083
        %v2085 = vpop.f32.mrb[0].mxu0
        %v2086 = vadd.f32 %v1733, %v2085
        %2087 = vmatprep.mubr.bf16.mxu0 %v1451
        %2088 = vmatmul.mubr.bf16.gmra.mrb[0].mxu0 %v1450
        %v2089 = vpop.f32.mrb[0].mxu0
        %v2090 = vadd.f32 %v1737, %v2089
        %v2091 = vpop.f32.mrb[0].mxu0
        %v2092 = vadd.f32 %v1739, %v2091
        %v2093 = vpop.f32.mrb[0].mxu0
        %v2094 = vadd.f32 %v1741, %v2093
        %v2095 = vpop.f32.mrb[0].mxu0
        %v2096 = vadd.f32 %v1743, %v2095
        %2097 = vmatprep.mubr.bf16.mxu0 %v1455
        %2098 = vmatmul.mubr.bf16.gmra.mrb[0].mxu0 %v1454
        %v2099 = vpop.f32.mrb[0].mxu0
        %v2100 = vadd.f32 %v1747, %v2099
        %v2101 = vpop.f32.mrb[0].mxu0
        %v2102 = vadd.f32 %v1749, %v2101
        %v2103 = vpop.f32.mrb[0].mxu0
        %v2104 = vadd.f32 %v1751, %v2103
        %v2105 = vpop.f32.mrb[0].mxu0
        %v2106 = vadd.f32 %v1753, %v2105
        %2107 = vmatprep.mubr.bf16.mxu0 %v1459
        %2108 = vmatmul.mubr.bf16.gmra.mrb[0].mxu0 %v1458
        %v2109 = vpop.f32.mrb[0].mxu0
        %v2110 = vadd.f32 %v1757, %v2109
        %v2111 = vpop.f32.mrb[0].mxu0
        %v2112 = vadd.f32 %v1759, %v2111
        %v2113 = vpop.f32.mrb[0].mxu0
        %v2114 = vadd.f32 %v1761, %v2113
        %v2115 = vpop.f32.mrb[0].mxu0
        %v2116 = vadd.f32 %v1763, %v2115
        %2117 = vmatprep.mubr.bf16.mxu0 %v1463
        %2118 = vmatmul.mubr.bf16.gmra.mrb[0].mxu0 %v1462
        %v2119 = vpop.f32.mrb[0].mxu0
        %v2120 = vadd.f32 %v1767, %v2119
        %v2121 = vpop.f32.mrb[0].mxu0
        %v2122 = vadd.f32 %v1769, %v2121
        %v2123 = vpop.f32.mrb[0].mxu0
        %v2124 = vadd.f32 %v1771, %v2123
        %v2125 = vpop.f32.mrb[0].mxu0
        %v2126 = vadd.f32 %v1773, %v2125
        %2127 = vmatprep.mubr.bf16.mxu0 %v1467
        %2128 = vmatmul.mubr.bf16.gmra.mrb[0].mxu0 %v1466
        %v2129 = vpop.f32.mrb[0].mxu0
        %v2130 = vadd.f32 %v1777, %v2129
        %v2131 = vpop.f32.mrb[0].mxu0
        %v2132 = vadd.f32 %v1779, %v2131
        %v2133 = vpop.f32.mrb[0].mxu0
        %v2134 = vadd.f32 %v1781, %v2133
        %v2135 = vpop.f32.mrb[0].mxu0
        %v2136 = vadd.f32 %v1783, %v2135
        %2137 = vmatprep.mubr.bf16.mxu0 %v1471
        %2138 = vmatmul.mubr.bf16.gmra.mrb[0].mxu0 %v1470
        %v2139 = vpop.f32.mrb[0].mxu0
        %v2140 = vadd.f32 %v1787, %v2139
        %v2141 = vpop.f32.mrb[0].mxu0
        %v2142 = vadd.f32 %v1789, %v2141
        %v2143 = vpop.f32.mrb[0].mxu0
        %v2144 = vadd.f32 %v1791, %v2143
        %v2145 = vpop.f32.mrb[0].mxu0
        %v2146 = vadd.f32 %v1793, %v2145
        %2147 = vmatprep.mubr.bf16.mxu0 %v1475
        %2148 = vmatmul.mubr.bf16.gmra.mrb[0].mxu0 %v1474
        %v2149 = vpop.f32.mrb[0].mxu0
        %v2150 = vadd.f32 %v1797, %v2149
        %v2151 = vpop.f32.mrb[0].mxu0
        %v2152 = vadd.f32 %v1799, %v2151
        %v2153 = vpop.f32.mrb[0].mxu0
        %v2154 = vadd.f32 %v1801, %v2153
        %v2155 = vpop.f32.mrb[0].mxu0
        %v2156 = vadd.f32 %v1803, %v2155
        %2157 = vmatprep.mubr.bf16.mxu0 %v1479
        %2158 = vmatmul.mubr.bf16.gmra.mrb[0].mxu0 %v1478
        %v2159 = vpop.f32.mrb[0].mxu0
        %v2160 = vadd.f32 %v1807, %v2159
        %v2161 = vpop.f32.mrb[0].mxu0
        %v2162 = vadd.f32 %v1809, %v2161
        %v2163 = vpop.f32.mrb[0].mxu0
        %v2164 = vadd.f32 %v1811, %v2163
        %v2165 = vpop.f32.mrb[0].mxu0
        %v2166 = vadd.f32 %v1813, %v2165
        %2167 = vmatprep.mubr.bf16.mxu0 %v1483
        %2168 = vmatmul.mubr.bf16.gmra.mrb[0].mxu0 %v1482
        %v2169 = vpop.f32.mrb[0].mxu0
        %v2170 = vadd.f32 %v1817, %v2169
        %v2171 = vpop.f32.mrb[0].mxu0
        %v2172 = vadd.f32 %v1819, %v2171
        %v2173 = vpop.f32.mrb[0].mxu0
        %v2174 = vadd.f32 %v1821, %v2173
        %v2175 = vpop.f32.mrb[0].mxu0
        %v2176 = vadd.f32 %v1823, %v2175
        %2177 = vmatprep.mubr.bf16.mxu0 %v1487
        %2178 = vmatmul.mubr.bf16.gmra.mrb[0].mxu0 %v1486
        %v2179 = vpop.f32.mrb[0].mxu0
        %v2180 = vadd.f32 %v1827, %v2179
        %v2181 = vpop.f32.mrb[0].mxu0
        %v2182 = vadd.f32 %v1829, %v2181
        %v2183 = vpop.f32.mrb[0].mxu0
        %v2184 = vadd.f32 %v1831, %v2183
        %v2185 = vpop.f32.mrb[0].mxu0
        %v2186 = vadd.f32 %v1833, %v2185
        %2187 = vmatprep.mubr.bf16.mxu0 %v1491
        %2188 = vmatmul.mubr.bf16.gmra.mrb[0].mxu0 %v1490
        %v2189 = vpop.f32.mrb[0].mxu0
        %v2190 = vadd.f32 %v1837, %v2189
        %v2191 = vpop.f32.mrb[0].mxu0
        %v2192 = vadd.f32 %v1839, %v2191
        %v2193 = vpop.f32.mrb[0].mxu0
        %v2194 = vadd.f32 %v1841, %v2193
        %v2195 = vpop.f32.mrb[0].mxu0
        %v2196 = vadd.f32 %v1843, %v2195
        %2197 = vdwg.mxu0
        %vm2198 = vcmask 556032
        %v2200 = vsel %vm2198, %v1882, 0
        %v2203 = vsel %vm2198, %v1886, 0
        %v2206 = vsel %vm2198, %v1892, 0
        %v2209 = vsel %vm2198, %v1896, 0
        %v2212 = vsel %vm2198, %v1902, 0
        %v2215 = vsel %vm2198, %v1906, 0
        %v2218 = vsel %vm2198, %v1912, 0
        %v2221 = vsel %vm2198, %v1916, 0
        %v2224 = vsel %vm2198, %v1922, 0
        %v2227 = vsel %vm2198, %v1926, 0
        %v2230 = vsel %vm2198, %v1932, 0
        %v2233 = vsel %vm2198, %v1936, 0
        %v2236 = vsel %vm2198, %v1942, 0
        %v2239 = vsel %vm2198, %v1946, 0
        %v2242 = vsel %vm2198, %v1952, 0
        %v2245 = vsel %vm2198, %v1956, 0
        %v2248 = vsel %vm2198, %v1962, 0
        %v2251 = vsel %vm2198, %v1966, 0
        %v2254 = vsel %vm2198, %v1972, 0
        %v2257 = vsel %vm2198, %v1976, 0
        %v2260 = vsel %vm2198, %v1982, 0
        %v2263 = vsel %vm2198, %v1986, 0
        %v2266 = vsel %vm2198, %v1992, 0
        %v2269 = vsel %vm2198, %v1996, 0
        %v2272 = vsel %vm2198, %v2002, 0
        %v2275 = vsel %vm2198, %v2006, 0
        %v2278 = vsel %vm2198, %v2012, 0
        %v2281 = vsel %vm2198, %v2016, 0
        %v2284 = vsel %vm2198, %v2022, 0
        %v2287 = vsel %vm2198, %v2026, 0
        %v2290 = vsel %vm2198, %v2032, 0
        %v2293 = vsel %vm2198, %v2036, 0
        %v2296 = vsel %vm2198, %v2042, 0
        %v2299 = vsel %vm2198, %v2046, 0
        %v2302 = vsel %vm2198, %v2052, 0
        %v2305 = vsel %vm2198, %v2056, 0
        %v2308 = vsel %vm2198, %v2062, 0
        %v2311 = vsel %vm2198, %v2066, 0
        %v2314 = vsel %vm2198, %v2072, 0
        %v2317 = vsel %vm2198, %v2076, 0
        %v2320 = vsel %vm2198, %v2082, 0
        %v2323 = vsel %vm2198, %v2086, 0
        %v2326 = vsel %vm2198, %v2092, 0
        %v2329 = vsel %vm2198, %v2096, 0
        %v2332 = vsel %vm2198, %v2102, 0
        %v2335 = vsel %vm2198, %v2106, 0
        %v2338 = vsel %vm2198, %v2112, 0
        %v2341 = vsel %vm2198, %v2116, 0
        %v2344 = vsel %vm2198, %v2122, 0
        %v2347 = vsel %vm2198, %v2126, 0
        %v2350 = vsel %vm2198, %v2132, 0
        %v2353 = vsel %vm2198, %v2136, 0
        %v2356 = vsel %vm2198, %v2142, 0
        %v2359 = vsel %vm2198, %v2146, 0
        %v2362 = vsel %vm2198, %v2152, 0
        %v2365 = vsel %vm2198, %v2156, 0
        %v2368 = vsel %vm2198, %v2162, 0
        %v2371 = vsel %vm2198, %v2166, 0
        %v2374 = vsel %vm2198, %v2172, 0
        %v2377 = vsel %vm2198, %v2176, 0
        %v2380 = vsel %vm2198, %v2182, 0
        %v2383 = vsel %vm2198, %v2186, 0
        %v2386 = vsel %vm2198, %v2192, 0
        %v2389 = vsel %vm2198, %v2196, 0
        %vm2391 = vcmask 1043456
        %v2393 = vsel %vm2391, 1.0, 0
        %2395 = vmatprep.subr.mxu0 0.0
        %2396 = vmatpush1.msra.mxu0 1.0
        %2397 = vmatprep.subr.mxu0 0.0
        %2398 = vmatpush1.msra.mxu0 1.0
        %2399 = vmatprep.subr.mxu0 0.0
        %2400 = vmatpush1.msra.mxu0 1.0
        %2401 = vmatprep.subr.mxu0 0.0
        %2402 = vmatpush1.msra.mxu0 1.0
        %2403 = vmatprep.subr.mxu0 0.0
        %2404 = vmatpush1.msra.mxu0 1.0
        %2405 = vmatprep.subr.mxu0 0.0
        %2406 = vmatpush1.msra.mxu0 1.0
        %2407 = vmatprep.subr.mxu0 0.0
        %2408 = vmatpush1.msra.mxu0 1.0
        %2409 = vmatprep.subr.mxu0 0.0
        %2410 = vmatpush1.msra.mxu0 1.0
        %2411 = vmatprep.subr.mxu0 0.0
        %2412 = vmatpush1.msra.mxu0 1.0
        %2413 = vmatprep.subr.mxu0 0.0
        %2414 = vmatpush1.msra.mxu0 1.0
        %2415 = vmatprep.subr.mxu0 0.0
        %2416 = vmatpush1.msra.mxu0 1.0
        %2417 = vmatprep.subr.mxu0 0.0
        %2418 = vmatpush1.msra.mxu0 1.0
        %2419 = vmatprep.subr.mxu0 0.0
        %2420 = vmatpush1.msra.mxu0 1.0
        %2421 = vmatprep.subr.mxu0 0.0
        %2422 = vmatpush1.msra.mxu0 1.0
        %2423 = vmatprep.subr.mxu0 0.0
        %2424 = vmatpush1.msra.mxu0 1.0
        %2425 = vmatprep.subr.mxu0 0.0
        %2426 = vmatpush1.msra.mxu0 1.0
        %2427 = vmatprep.subr.mxu0 0.0
        %2428 = vmatpush1.msra.mxu0 1.0
        %2429 = vmatprep.subr.mxu0 0.0
        %2430 = vmatpush1.msra.mxu0 1.0
        %2431 = vmatprep.subr.mxu0 0.0
        %2432 = vmatpush1.msra.mxu0 1.0
        %2433 = vmatprep.subr.mxu0 0.0
        %2434 = vmatpush1.msra.mxu0 1.0
        %2435 = vmatprep.subr.mxu0 0.0
        %2436 = vmatpush1.msra.mxu0 1.0
        %2437 = vmatprep.subr.mxu0 0.0
        %2438 = vmatpush1.msra.mxu0 1.0
        %2439 = vmatprep.subr.mxu0 0.0
        %2440 = vmatpush1.msra.mxu0 1.0
        %2441 = vmatprep.subr.mxu0 0.0
        %2442 = vmatpush1.msra.mxu0 1.0
        %2443 = vmatprep.subr.mxu0 0.0
        %2444 = vmatpush1.msra.mxu0 %v2393
        %2445 = vmatprep.subr.mxu0 0.0
        %2446 = vmatpush1.msra.mxu0 0.0
        %2447 = vmatprep.subr.mxu0 0.0
        %2448 = vmatpush1.msra.mxu0 0.0
        %2449 = vmatprep.subr.mxu0 0.0
        %2450 = vmatpush1.msra.mxu0 0.0
        %2451 = vmatprep.subr.mxu0 0.0
        %2452 = vmatpush1.msra.mxu0 0.0
        %2453 = vmatprep.subr.mxu0 0.0
        %2454 = vmatpush1.msra.mxu0 0.0
        %2455 = vmatprep.subr.mxu0 0.0
        %2456 = vmatpush1.msra.mxu0 0.0
        %2457 = vmatprep.subr.mxu0 0.0
        %2458 = vmatpush1.msra.mxu0 0.0
        %2459 = vmatprep.mubr.f32.mxu0 %v2200
        %2460 = vmatmul.mubr.f32.gmra.mrb[0].mxu0 %v1880
        %v2461 = vpop.f32.mrb[0].mxu0
        %v2462 = vadd.f32 0.0, %v2461
        %v2463 = vpop.f32.mrb[0].mxu0
        %2464 = vmatprep.mubr.f32.mxu0 %v2203
        %2465 = vmatmul.mubr.f32.gmra.mrb[0].mxu0 %v1884
        %v2466 = vpop.f32.mrb[0].mxu0
        %v2467 = vadd.f32 0.0, %v2466
        %v2468 = vpop.f32.mrb[0].mxu0
        %2469 = vmatprep.mubr.f32.mxu0 %v2206
        %2470 = vmatmul.mubr.f32.gmra.mrb[0].mxu0 %v1890
        %v2471 = vpop.f32.mrb[0].mxu0
        %v2472 = vadd.f32 0.0, %v2471
        %v2473 = vpop.f32.mrb[0].mxu0
        %2474 = vmatprep.mubr.f32.mxu0 %v2209
        %2475 = vmatmul.mubr.f32.gmra.mrb[0].mxu0 %v1894
        %v2476 = vpop.f32.mrb[0].mxu0
        %v2477 = vadd.f32 0.0, %v2476
        %v2478 = vpop.f32.mrb[0].mxu0
        %2479 = vmatprep.mubr.f32.mxu0 %v2212
        %2480 = vmatmul.mubr.f32.gmra.mrb[0].mxu0 %v1900
        %v2481 = vpop.f32.mrb[0].mxu0
        %v2482 = vadd.f32 0.0, %v2481
        %v2483 = vpop.f32.mrb[0].mxu0
        %2484 = vmatprep.mubr.f32.mxu0 %v2215
        %2485 = vmatmul.mubr.f32.gmra.mrb[0].mxu0 %v1904
        %v2486 = vpop.f32.mrb[0].mxu0
        %v2487 = vadd.f32 0.0, %v2486
        %v2488 = vpop.f32.mrb[0].mxu0
        %2489 = vmatprep.mubr.f32.mxu0 %v2218
        %2490 = vmatmul.mubr.f32.gmra.mrb[0].mxu0 %v1910
        %v2491 = vpop.f32.mrb[0].mxu0
        %v2492 = vadd.f32 0.0, %v2491
        %v2493 = vpop.f32.mrb[0].mxu0
        %2494 = vmatprep.mubr.f32.mxu0 %v2221
        %2495 = vmatmul.mubr.f32.gmra.mrb[0].mxu0 %v1914
        %v2496 = vpop.f32.mrb[0].mxu0
        %v2497 = vadd.f32 0.0, %v2496
        %v2498 = vpop.f32.mrb[0].mxu0
        %2499 = vmatprep.mubr.f32.mxu0 %v2224
        %2500 = vmatmul.mubr.f32.gmra.mrb[0].mxu0 %v1920
        %v2501 = vpop.f32.mrb[0].mxu0
        %v2502 = vadd.f32 0.0, %v2501
        %v2503 = vpop.f32.mrb[0].mxu0
        %2504 = vmatprep.mubr.f32.mxu0 %v2227
        %2505 = vmatmul.mubr.f32.gmra.mrb[0].mxu0 %v1924
        %v2506 = vpop.f32.mrb[0].mxu0
        %v2507 = vadd.f32 0.0, %v2506
        %v2508 = vpop.f32.mrb[0].mxu0
        %2509 = vmatprep.mubr.f32.mxu0 %v2230
        %2510 = vmatmul.mubr.f32.gmra.mrb[0].mxu0 %v1930
        %v2511 = vpop.f32.mrb[0].mxu0
        %v2512 = vadd.f32 0.0, %v2511
        %v2513 = vpop.f32.mrb[0].mxu0
        %2514 = vmatprep.mubr.f32.mxu0 %v2233
        %2515 = vmatmul.mubr.f32.gmra.mrb[0].mxu0 %v1934
        %v2516 = vpop.f32.mrb[0].mxu0
        %v2517 = vadd.f32 0.0, %v2516
        %v2518 = vpop.f32.mrb[0].mxu0
        %2519 = vmatprep.mubr.f32.mxu0 %v2236
        %2520 = vmatmul.mubr.f32.gmra.mrb[0].mxu0 %v1940
        %v2521 = vpop.f32.mrb[0].mxu0
        %v2522 = vadd.f32 0.0, %v2521
        %v2523 = vpop.f32.mrb[0].mxu0
        %2524 = vmatprep.mubr.f32.mxu0 %v2239
        %2525 = vmatmul.mubr.f32.gmra.mrb[0].mxu0 %v1944
        %v2526 = vpop.f32.mrb[0].mxu0
        %v2527 = vadd.f32 0.0, %v2526
        %v2528 = vpop.f32.mrb[0].mxu0
        %2529 = vmatprep.mubr.f32.mxu0 %v2242
        %2530 = vmatmul.mubr.f32.gmra.mrb[0].mxu0 %v1950
        %v2531 = vpop.f32.mrb[0].mxu0
        %v2532 = vadd.f32 0.0, %v2531
        %v2533 = vpop.f32.mrb[0].mxu0
        %2534 = vmatprep.mubr.f32.mxu0 %v2245
        %2535 = vmatmul.mubr.f32.gmra.mrb[0].mxu0 %v1954
        %v2536 = vpop.f32.mrb[0].mxu0
        %v2537 = vadd.f32 0.0, %v2536
        %v2538 = vpop.f32.mrb[0].mxu0
        %2539 = vmatprep.mubr.f32.mxu0 %v2248
        %2540 = vmatmul.mubr.f32.gmra.mrb[0].mxu0 %v1960
        %v2541 = vpop.f32.mrb[0].mxu0
        %v2542 = vadd.f32 0.0, %v2541
        %v2543 = vpop.f32.mrb[0].mxu0
        %2544 = vmatprep.mubr.f32.mxu0 %v2251
        %2545 = vmatmul.mubr.f32.gmra.mrb[0].mxu0 %v1964
        %v2546 = vpop.f32.mrb[0].mxu0
        %v2547 = vadd.f32 0.0, %v2546
        %v2548 = vpop.f32.mrb[0].mxu0
        %2549 = vmatprep.mubr.f32.mxu0 %v2254
        %2550 = vmatmul.mubr.f32.gmra.mrb[0].mxu0 %v1970
        %v2551 = vpop.f32.mrb[0].mxu0
        %v2552 = vadd.f32 0.0, %v2551
        %v2553 = vpop.f32.mrb[0].mxu0
        %2554 = vmatprep.mubr.f32.mxu0 %v2257
        %2555 = vmatmul.mubr.f32.gmra.mrb[0].mxu0 %v1974
        %v2556 = vpop.f32.mrb[0].mxu0
        %v2557 = vadd.f32 0.0, %v2556
        %v2558 = vpop.f32.mrb[0].mxu0
        %2559 = vmatprep.mubr.f32.mxu0 %v2260
        %2560 = vmatmul.mubr.f32.gmra.mrb[0].mxu0 %v1980
        %v2561 = vpop.f32.mrb[0].mxu0
        %v2562 = vadd.f32 0.0, %v2561
        %v2563 = vpop.f32.mrb[0].mxu0
        %2564 = vmatprep.mubr.f32.mxu0 %v2263
        %2565 = vmatmul.mubr.f32.gmra.mrb[0].mxu0 %v1984
        %v2566 = vpop.f32.mrb[0].mxu0
        %v2567 = vadd.f32 0.0, %v2566
        %v2568 = vpop.f32.mrb[0].mxu0
        %2569 = vmatprep.mubr.f32.mxu0 %v2266
        %2570 = vmatmul.mubr.f32.gmra.mrb[0].mxu0 %v1990
        %v2571 = vpop.f32.mrb[0].mxu0
        %v2572 = vadd.f32 0.0, %v2571
        %v2573 = vpop.f32.mrb[0].mxu0
        %2574 = vmatprep.mubr.f32.mxu0 %v2269
        %2575 = vmatmul.mubr.f32.gmra.mrb[0].mxu0 %v1994
        %v2576 = vpop.f32.mrb[0].mxu0
        %v2577 = vadd.f32 0.0, %v2576
        %v2578 = vpop.f32.mrb[0].mxu0
        %2579 = vmatprep.mubr.f32.mxu0 %v2272
        %2580 = vmatmul.mubr.f32.gmra.mrb[0].mxu0 %v2000
        %v2581 = vpop.f32.mrb[0].mxu0
        %v2582 = vadd.f32 0.0, %v2581
        %v2583 = vpop.f32.mrb[0].mxu0
        %2584 = vmatprep.mubr.f32.mxu0 %v2275
        %2585 = vmatmul.mubr.f32.gmra.mrb[0].mxu0 %v2004
        %v2586 = vpop.f32.mrb[0].mxu0
        %v2587 = vadd.f32 0.0, %v2586
        %v2588 = vpop.f32.mrb[0].mxu0
        %2589 = vmatprep.mubr.f32.mxu0 %v2278
        %2590 = vmatmul.mubr.f32.gmra.mrb[0].mxu0 %v2010
        %v2591 = vpop.f32.mrb[0].mxu0
        %v2592 = vadd.f32 0.0, %v2591
        %v2593 = vpop.f32.mrb[0].mxu0
        %2594 = vmatprep.mubr.f32.mxu0 %v2281
        %2595 = vmatmul.mubr.f32.gmra.mrb[0].mxu0 %v2014
        %v2596 = vpop.f32.mrb[0].mxu0
        %v2597 = vadd.f32 0.0, %v2596
        %v2598 = vpop.f32.mrb[0].mxu0
        %2599 = vmatprep.mubr.f32.mxu0 %v2284
        %2600 = vmatmul.mubr.f32.gmra.mrb[0].mxu0 %v2020
        %v2601 = vpop.f32.mrb[0].mxu0
        %v2602 = vadd.f32 0.0, %v2601
        %v2603 = vpop.f32.mrb[0].mxu0
        %2604 = vmatprep.mubr.f32.mxu0 %v2287
        %2605 = vmatmul.mubr.f32.gmra.mrb[0].mxu0 %v2024
        %v2606 = vpop.f32.mrb[0].mxu0
        %v2607 = vadd.f32 0.0, %v2606
        %v2608 = vpop.f32.mrb[0].mxu0
        %2609 = vmatprep.mubr.f32.mxu0 %v2290
        %2610 = vmatmul.mubr.f32.gmra.mrb[0].mxu0 %v2030
        %v2611 = vpop.f32.mrb[0].mxu0
        %v2612 = vadd.f32 0.0, %v2611
        %v2613 = vpop.f32.mrb[0].mxu0
        %2614 = vmatprep.mubr.f32.mxu0 %v2293
        %2615 = vmatmul.mubr.f32.gmra.mrb[0].mxu0 %v2034
        %v2616 = vpop.f32.mrb[0].mxu0
        %v2617 = vadd.f32 0.0, %v2616
        %v2618 = vpop.f32.mrb[0].mxu0
        %2619 = vmatprep.mubr.f32.mxu0 %v2296
        %2620 = vmatmul.mubr.f32.gmra.mrb[0].mxu0 %v2040
        %v2621 = vpop.f32.mrb[0].mxu0
        %v2622 = vadd.f32 0.0, %v2621
        %v2623 = vpop.f32.mrb[0].mxu0
        %2624 = vmatprep.mubr.f32.mxu0 %v2299
        %2625 = vmatmul.mubr.f32.gmra.mrb[0].mxu0 %v2044
        %v2626 = vpop.f32.mrb[0].mxu0
        %v2627 = vadd.f32 0.0, %v2626
        %v2628 = vpop.f32.mrb[0].mxu0
        %2629 = vmatprep.mubr.f32.mxu0 %v2302
        %2630 = vmatmul.mubr.f32.gmra.mrb[0].mxu0 %v2050
        %v2631 = vpop.f32.mrb[0].mxu0
        %v2632 = vadd.f32 0.0, %v2631
        %v2633 = vpop.f32.mrb[0].mxu0
        %2634 = vmatprep.mubr.f32.mxu0 %v2305
        %2635 = vmatmul.mubr.f32.gmra.mrb[0].mxu0 %v2054
        %v2636 = vpop.f32.mrb[0].mxu0
        %v2637 = vadd.f32 0.0, %v2636
        %v2638 = vpop.f32.mrb[0].mxu0
        %2639 = vmatprep.mubr.f32.mxu0 %v2308
        %2640 = vmatmul.mubr.f32.gmra.mrb[0].mxu0 %v2060
        %v2641 = vpop.f32.mrb[0].mxu0
        %v2642 = vadd.f32 0.0, %v2641
        %v2643 = vpop.f32.mrb[0].mxu0
        %2644 = vmatprep.mubr.f32.mxu0 %v2311
        %2645 = vmatmul.mubr.f32.gmra.mrb[0].mxu0 %v2064
        %v2646 = vpop.f32.mrb[0].mxu0
        %v2647 = vadd.f32 0.0, %v2646
        %v2648 = vpop.f32.mrb[0].mxu0
        %2649 = vmatprep.mubr.f32.mxu0 %v2314
        %2650 = vmatmul.mubr.f32.gmra.mrb[0].mxu0 %v2070
        %v2651 = vpop.f32.mrb[0].mxu0
        %v2652 = vadd.f32 0.0, %v2651
        %v2653 = vpop.f32.mrb[0].mxu0
        %2654 = vmatprep.mubr.f32.mxu0 %v2317
        %2655 = vmatmul.mubr.f32.gmra.mrb[0].mxu0 %v2074
        %v2656 = vpop.f32.mrb[0].mxu0
        %v2657 = vadd.f32 0.0, %v2656
        %v2658 = vpop.f32.mrb[0].mxu0
        %2659 = vmatprep.mubr.f32.mxu0 %v2320
        %2660 = vmatmul.mubr.f32.gmra.mrb[0].mxu0 %v2080
        %v2661 = vpop.f32.mrb[0].mxu0
        %v2662 = vadd.f32 0.0, %v2661
        %v2663 = vpop.f32.mrb[0].mxu0
        %2664 = vmatprep.mubr.f32.mxu0 %v2323
        %2665 = vmatmul.mubr.f32.gmra.mrb[0].mxu0 %v2084
        %v2666 = vpop.f32.mrb[0].mxu0
        %v2667 = vadd.f32 0.0, %v2666
        %v2668 = vpop.f32.mrb[0].mxu0
        %2669 = vmatprep.mubr.f32.mxu0 %v2326
        %2670 = vmatmul.mubr.f32.gmra.mrb[0].mxu0 %v2090
        %v2671 = vpop.f32.mrb[0].mxu0
        %v2672 = vadd.f32 0.0, %v2671
        %v2673 = vpop.f32.mrb[0].mxu0
        %2674 = vmatprep.mubr.f32.mxu0 %v2329
        %2675 = vmatmul.mubr.f32.gmra.mrb[0].mxu0 %v2094
        %v2676 = vpop.f32.mrb[0].mxu0
        %v2677 = vadd.f32 0.0, %v2676
        %v2678 = vpop.f32.mrb[0].mxu0
        %2679 = vmatprep.mubr.f32.mxu0 %v2332
        %2680 = vmatmul.mubr.f32.gmra.mrb[0].mxu0 %v2100
        %v2681 = vpop.f32.mrb[0].mxu0
        %v2682 = vadd.f32 0.0, %v2681
        %v2683 = vpop.f32.mrb[0].mxu0
        %2684 = vmatprep.mubr.f32.mxu0 %v2335
        %2685 = vmatmul.mubr.f32.gmra.mrb[0].mxu0 %v2104
        %v2686 = vpop.f32.mrb[0].mxu0
        %v2687 = vadd.f32 0.0, %v2686
        %v2688 = vpop.f32.mrb[0].mxu0
        %2689 = vmatprep.mubr.f32.mxu0 %v2338
        %2690 = vmatmul.mubr.f32.gmra.mrb[0].mxu0 %v2110
        %v2691 = vpop.f32.mrb[0].mxu0
        %v2692 = vadd.f32 0.0, %v2691
        %v2693 = vpop.f32.mrb[0].mxu0
        %2694 = vmatprep.mubr.f32.mxu0 %v2341
        %2695 = vmatmul.mubr.f32.gmra.mrb[0].mxu0 %v2114
        %v2696 = vpop.f32.mrb[0].mxu0
        %v2697 = vadd.f32 0.0, %v2696
        %v2698 = vpop.f32.mrb[0].mxu0
        %2699 = vmatprep.mubr.f32.mxu0 %v2344
        %2700 = vmatmul.mubr.f32.gmra.mrb[0].mxu0 %v2120
        %v2701 = vpop.f32.mrb[0].mxu0
        %v2702 = vadd.f32 0.0, %v2701
        %v2703 = vpop.f32.mrb[0].mxu0
        %2704 = vmatprep.mubr.f32.mxu0 %v2347
        %2705 = vmatmul.mubr.f32.gmra.mrb[0].mxu0 %v2124
        %v2706 = vpop.f32.mrb[0].mxu0
        %v2707 = vadd.f32 0.0, %v2706
        %v2708 = vpop.f32.mrb[0].mxu0
        %2709 = vmatprep.mubr.f32.mxu0 %v2350
        %2710 = vmatmul.mubr.f32.gmra.mrb[0].mxu0 %v2130
        %v2711 = vpop.f32.mrb[0].mxu0
        %v2712 = vadd.f32 0.0, %v2711
        %v2713 = vpop.f32.mrb[0].mxu0
        %2714 = vmatprep.mubr.f32.mxu0 %v2353
        %2715 = vmatmul.mubr.f32.gmra.mrb[0].mxu0 %v2134
        %v2716 = vpop.f32.mrb[0].mxu0
        %v2717 = vadd.f32 0.0, %v2716
        %v2718 = vpop.f32.mrb[0].mxu0
        %2719 = vmatprep.mubr.f32.mxu0 %v2356
        %2720 = vmatmul.mubr.f32.gmra.mrb[0].mxu0 %v2140
        %v2721 = vpop.f32.mrb[0].mxu0
        %v2722 = vadd.f32 0.0, %v2721
        %v2723 = vpop.f32.mrb[0].mxu0
        %2724 = vmatprep.mubr.f32.mxu0 %v2359
        %2725 = vmatmul.mubr.f32.gmra.mrb[0].mxu0 %v2144
        %v2726 = vpop.f32.mrb[0].mxu0
        %v2727 = vadd.f32 0.0, %v2726
        %v2728 = vpop.f32.mrb[0].mxu0
        %2729 = vmatprep.mubr.f32.mxu0 %v2362
        %2730 = vmatmul.mubr.f32.gmra.mrb[0].mxu0 %v2150
        %v2731 = vpop.f32.mrb[0].mxu0
        %v2732 = vadd.f32 0.0, %v2731
        %v2733 = vpop.f32.mrb[0].mxu0
        %2734 = vmatprep.mubr.f32.mxu0 %v2365
        %2735 = vmatmul.mubr.f32.gmra.mrb[0].mxu0 %v2154
        %v2736 = vpop.f32.mrb[0].mxu0
        %v2737 = vadd.f32 0.0, %v2736
        %v2738 = vpop.f32.mrb[0].mxu0
        %2739 = vmatprep.mubr.f32.mxu0 %v2368
        %2740 = vmatmul.mubr.f32.gmra.mrb[0].mxu0 %v2160
        %v2741 = vpop.f32.mrb[0].mxu0
        %v2742 = vadd.f32 0.0, %v2741
        %v2743 = vpop.f32.mrb[0].mxu0
        %2744 = vmatprep.mubr.f32.mxu0 %v2371
        %2745 = vmatmul.mubr.f32.gmra.mrb[0].mxu0 %v2164
        %v2746 = vpop.f32.mrb[0].mxu0
        %v2747 = vadd.f32 0.0, %v2746
        %v2748 = vpop.f32.mrb[0].mxu0
        %2749 = vmatprep.mubr.f32.mxu0 %v2374
        %2750 = vmatmul.mubr.f32.gmra.mrb[0].mxu0 %v2170
        %v2751 = vpop.f32.mrb[0].mxu0
        %v2752 = vadd.f32 0.0, %v2751
        %v2753 = vpop.f32.mrb[0].mxu0
        %2754 = vmatprep.mubr.f32.mxu0 %v2377
        %2755 = vmatmul.mubr.f32.gmra.mrb[0].mxu0 %v2174
        %v2756 = vpop.f32.mrb[0].mxu0
        %v2757 = vadd.f32 0.0, %v2756
        %v2758 = vpop.f32.mrb[0].mxu0
        %2759 = vmatprep.mubr.f32.mxu0 %v2380
        %2760 = vmatmul.mubr.f32.gmra.mrb[0].mxu0 %v2180
        %v2761 = vpop.f32.mrb[0].mxu0
        %v2762 = vadd.f32 0.0, %v2761
        %v2763 = vpop.f32.mrb[0].mxu0
        %2764 = vmatprep.mubr.f32.mxu0 %v2383
        %2765 = vmatmul.mubr.f32.gmra.mrb[0].mxu0 %v2184
        %v2766 = vpop.f32.mrb[0].mxu0
        %v2767 = vadd.f32 0.0, %v2766
        %v2768 = vpop.f32.mrb[0].mxu0
        %2769 = vmatprep.mubr.f32.mxu0 %v2386
        %2770 = vmatmul.mubr.f32.gmra.mrb[0].mxu0 %v2190
        %v2771 = vpop.f32.mrb[0].mxu0
        %v2772 = vadd.f32 0.0, %v2771
        %v2773 = vpop.f32.mrb[0].mxu0
        %2774 = vmatprep.mubr.f32.mxu0 %v2389
        %2775 = vmatmul.mubr.f32.gmra.mrb[0].mxu0 %v2194
        %v2776 = vpop.f32.mrb[0].mxu0
        %v2777 = vadd.f32 0.0, %v2776
        %v2778 = vpop.f32.mrb[0].mxu0
        %2779 = vdwg.mxu0
        %v2780 = vmul.f32 %v2462, 0.0051020407
        %v2781 = vmul.f32 %v2467, 0.0051020407
        %v2782 = vmul.f32 %v2472, 0.0051020407
        %v2783 = vmul.f32 %v2477, 0.0051020407
        %v2784 = vmul.f32 %v2482, 0.0051020407
        %v2785 = vmul.f32 %v2487, 0.0051020407
        %v2786 = vmul.f32 %v2492, 0.0051020407
        %v2787 = vmul.f32 %v2497, 0.0051020407
        %v2788 = vmul.f32 %v2502, 0.0051020407
        %v2789 = vmul.f32 %v2507, 0.0051020407
        %v2790 = vmul.f32 %v2512, 0.0051020407
        %v2791 = vmul.f32 %v2517, 0.0051020407
        %v2792 = vmul.f32 %v2522, 0.0051020407
        %v2793 = vmul.f32 %v2527, 0.0051020407
        %v2794 = vmul.f32 %v2532, 0.0051020407
        %v2795 = vmul.f32 %v2537, 0.0051020407
        %v2796 = vmul.f32 %v2542, 0.0051020407
        %v2797 = vmul.f32 %v2547, 0.0051020407
        %v2798 = vmul.f32 %v2552, 0.0051020407
        %v2799 = vmul.f32 %v2557, 0.0051020407
        %v2800 = vmul.f32 %v2562, 0.0051020407
        %v2801 = vmul.f32 %v2567, 0.0051020407
        %v2802 = vmul.f32 %v2572, 0.0051020407
        %v2803 = vmul.f32 %v2577, 0.0051020407
        %v2804 = vmul.f32 %v2582, 0.0051020407
        %v2805 = vmul.f32 %v2587, 0.0051020407
        %v2806 = vmul.f32 %v2592, 0.0051020407
        %v2807 = vmul.f32 %v2597, 0.0051020407
        %v2808 = vmul.f32 %v2602, 0.0051020407
        %v2809 = vmul.f32 %v2607, 0.0051020407
        %v2810 = vmul.f32 %v2612, 0.0051020407
        %v2811 = vmul.f32 %v2617, 0.0051020407
        %v2812 = vmul.f32 %v2622, 0.0051020407
        %v2813 = vmul.f32 %v2627, 0.0051020407
        %v2814 = vmul.f32 %v2632, 0.0051020407
        %v2815 = vmul.f32 %v2637, 0.0051020407
        %v2816 = vmul.f32 %v2642, 0.0051020407
        %v2817 = vmul.f32 %v2647, 0.0051020407
        %v2818 = vmul.f32 %v2652, 0.0051020407
        %v2819 = vmul.f32 %v2657, 0.0051020407
        %v2820 = vmul.f32 %v2662, 0.0051020407
        %v2821 = vmul.f32 %v2667, 0.0051020407
        %v2822 = vmul.f32 %v2672, 0.0051020407
        %v2823 = vmul.f32 %v2677, 0.0051020407
        %v2824 = vmul.f32 %v2682, 0.0051020407
        %v2825 = vmul.f32 %v2687, 0.0051020407
        %v2826 = vmul.f32 %v2692, 0.0051020407
        %v2827 = vmul.f32 %v2697, 0.0051020407
        %v2828 = vmul.f32 %v2702, 0.0051020407
        %v2829 = vmul.f32 %v2707, 0.0051020407
        %v2830 = vmul.f32 %v2712, 0.0051020407
        %v2831 = vmul.f32 %v2717, 0.0051020407
        %v2832 = vmul.f32 %v2722, 0.0051020407
        %v2833 = vmul.f32 %v2727, 0.0051020407
        %v2834 = vmul.f32 %v2732, 0.0051020407
        %v2835 = vmul.f32 %v2737, 0.0051020407
        %v2836 = vmul.f32 %v2742, 0.0051020407
        %v2837 = vmul.f32 %v2747, 0.0051020407
        %v2838 = vmul.f32 %v2752, 0.0051020407
        %v2839 = vmul.f32 %v2757, 0.0051020407
        %v2840 = vmul.f32 %v2762, 0.0051020407
        %v2841 = vmul.f32 %v2767, 0.0051020407
        %v2842 = vmul.f32 %v2772, 0.0051020407
        %v2843 = vmul.f32 %v2777, 0.0051020407
        %2845 = vset.pattern.permute.xlu0 0
        %2846 = vperm.xlu0 %2845, %v2780
        %v2847 = vpop.permute.xlu0 %2846
        %2850 = vset.pattern.permute.xlu0 0
        %2851 = vperm.xlu0 %2850, %v2781
        %v2852 = vpop.permute.xlu0 %2851
        %2855 = vset.pattern.permute.xlu0 0
        %2856 = vperm.xlu0 %2855, %v2782
        %v2857 = vpop.permute.xlu0 %2856
        %2860 = vset.pattern.permute.xlu0 0
        %2861 = vperm.xlu0 %2860, %v2783
        %v2862 = vpop.permute.xlu0 %2861
        %2865 = vset.pattern.permute.xlu0 0
        %2866 = vperm.xlu0 %2865, %v2784
        %v2867 = vpop.permute.xlu0 %2866
        %2870 = vset.pattern.permute.xlu0 0
        %2871 = vperm.xlu0 %2870, %v2785
        %v2872 = vpop.permute.xlu0 %2871
        %2875 = vset.pattern.permute.xlu0 0
        %2876 = vperm.xlu0 %2875, %v2786
        %v2877 = vpop.permute.xlu0 %2876
        %2880 = vset.pattern.permute.xlu0 0
        %2881 = vperm.xlu0 %2880, %v2787
        %v2882 = vpop.permute.xlu0 %2881
        %2885 = vset.pattern.permute.xlu0 0
        %2886 = vperm.xlu0 %2885, %v2788
        %v2887 = vpop.permute.xlu0 %2886
        %2890 = vset.pattern.permute.xlu0 0
        %2891 = vperm.xlu0 %2890, %v2789
        %v2892 = vpop.permute.xlu0 %2891
        %2895 = vset.pattern.permute.xlu0 0
        %2896 = vperm.xlu0 %2895, %v2790
        %v2897 = vpop.permute.xlu0 %2896
        %2900 = vset.pattern.permute.xlu0 0
        %2901 = vperm.xlu0 %2900, %v2791
        %v2902 = vpop.permute.xlu0 %2901
        %2905 = vset.pattern.permute.xlu0 0
        %2906 = vperm.xlu0 %2905, %v2792
        %v2907 = vpop.permute.xlu0 %2906
        %2910 = vset.pattern.permute.xlu0 0
        %2911 = vperm.xlu0 %2910, %v2793
        %v2912 = vpop.permute.xlu0 %2911
        %2915 = vset.pattern.permute.xlu0 0
        %2916 = vperm.xlu0 %2915, %v2794
        %v2917 = vpop.permute.xlu0 %2916
        %2920 = vset.pattern.permute.xlu0 0
        %2921 = vperm.xlu0 %2920, %v2795
        %v2922 = vpop.permute.xlu0 %2921
        %2925 = vset.pattern.permute.xlu0 0
        %2926 = vperm.xlu0 %2925, %v2796
        %v2927 = vpop.permute.xlu0 %2926
        %2930 = vset.pattern.permute.xlu0 0
        %2931 = vperm.xlu0 %2930, %v2797
        %v2932 = vpop.permute.xlu0 %2931
        %2935 = vset.pattern.permute.xlu0 0
        %2936 = vperm.xlu0 %2935, %v2798
        %v2937 = vpop.permute.xlu0 %2936
        %2940 = vset.pattern.permute.xlu0 0
        %2941 = vperm.xlu0 %2940, %v2799
        %v2942 = vpop.permute.xlu0 %2941
        %2945 = vset.pattern.permute.xlu0 0
        %2946 = vperm.xlu0 %2945, %v2800
        %v2947 = vpop.permute.xlu0 %2946
        %2950 = vset.pattern.permute.xlu0 0
        %2951 = vperm.xlu0 %2950, %v2801
        %v2952 = vpop.permute.xlu0 %2951
        %2955 = vset.pattern.permute.xlu0 0
        %2956 = vperm.xlu0 %2955, %v2802
        %v2957 = vpop.permute.xlu0 %2956
        %2960 = vset.pattern.permute.xlu0 0
        %2961 = vperm.xlu0 %2960, %v2803
        %v2962 = vpop.permute.xlu0 %2961
        %2965 = vset.pattern.permute.xlu0 0
        %2966 = vperm.xlu0 %2965, %v2804
        %v2967 = vpop.permute.xlu0 %2966
        %2970 = vset.pattern.permute.xlu0 0
        %2971 = vperm.xlu0 %2970, %v2805
        %v2972 = vpop.permute.xlu0 %2971
        %2975 = vset.pattern.permute.xlu0 0
        %2976 = vperm.xlu0 %2975, %v2806
        %v2977 = vpop.permute.xlu0 %2976
        %2980 = vset.pattern.permute.xlu0 0
        %2981 = vperm.xlu0 %2980, %v2807
        %v2982 = vpop.permute.xlu0 %2981
        %2985 = vset.pattern.permute.xlu0 0
        %2986 = vperm.xlu0 %2985, %v2808
        %v2987 = vpop.permute.xlu0 %2986
        %2990 = vset.pattern.permute.xlu0 0
        %2991 = vperm.xlu0 %2990, %v2809
        %v2992 = vpop.permute.xlu0 %2991
        %2995 = vset.pattern.permute.xlu0 0
        %2996 = vperm.xlu0 %2995, %v2810
        %v2997 = vpop.permute.xlu0 %2996
        %3000 = vset.pattern.permute.xlu0 0
        %3001 = vperm.xlu0 %3000, %v2811
        %v3002 = vpop.permute.xlu0 %3001
        %3005 = vset.pattern.permute.xlu0 0
        %3006 = vperm.xlu0 %3005, %v2812
        %v3007 = vpop.permute.xlu0 %3006
        %3010 = vset.pattern.permute.xlu0 0
        %3011 = vperm.xlu0 %3010, %v2813
        %v3012 = vpop.permute.xlu0 %3011
        %3015 = vset.pattern.permute.xlu0 0
        %3016 = vperm.xlu0 %3015, %v2814
        %v3017 = vpop.permute.xlu0 %3016
        %3020 = vset.pattern.permute.xlu0 0
        %3021 = vperm.xlu0 %3020, %v2815
        %v3022 = vpop.permute.xlu0 %3021
        %3025 = vset.pattern.permute.xlu0 0
        %3026 = vperm.xlu0 %3025, %v2816
        %v3027 = vpop.permute.xlu0 %3026
        %3030 = vset.pattern.permute.xlu0 0
        %3031 = vperm.xlu0 %3030, %v2817
        %v3032 = vpop.permute.xlu0 %3031
        %3035 = vset.pattern.permute.xlu0 0
        %3036 = vperm.xlu0 %3035, %v2818
        %v3037 = vpop.permute.xlu0 %3036
        %3040 = vset.pattern.permute.xlu0 0
        %3041 = vperm.xlu0 %3040, %v2819
        %v3042 = vpop.permute.xlu0 %3041
        %3045 = vset.pattern.permute.xlu0 0
        %3046 = vperm.xlu0 %3045, %v2820
        %v3047 = vpop.permute.xlu0 %3046
        %3050 = vset.pattern.permute.xlu0 0
        %3051 = vperm.xlu0 %3050, %v2821
        %v3052 = vpop.permute.xlu0 %3051
        %3055 = vset.pattern.permute.xlu0 0
        %3056 = vperm.xlu0 %3055, %v2822
        %v3057 = vpop.permute.xlu0 %3056
        %3060 = vset.pattern.permute.xlu0 0
        %3061 = vperm.xlu0 %3060, %v2823
        %v3062 = vpop.permute.xlu0 %3061
        %3065 = vset.pattern.permute.xlu0 0
        %3066 = vperm.xlu0 %3065, %v2824
        %v3067 = vpop.permute.xlu0 %3066
        %3070 = vset.pattern.permute.xlu0 0
        %3071 = vperm.xlu0 %3070, %v2825
        %v3072 = vpop.permute.xlu0 %3071
        %3075 = vset.pattern.permute.xlu0 0
        %3076 = vperm.xlu0 %3075, %v2826
        %v3077 = vpop.permute.xlu0 %3076
        %3080 = vset.pattern.permute.xlu0 0
        %3081 = vperm.xlu0 %3080, %v2827
        %v3082 = vpop.permute.xlu0 %3081
        %3085 = vset.pattern.permute.xlu0 0
        %3086 = vperm.xlu0 %3085, %v2828
        %v3087 = vpop.permute.xlu0 %3086
        %3090 = vset.pattern.permute.xlu0 0
        %3091 = vperm.xlu0 %3090, %v2829
        %v3092 = vpop.permute.xlu0 %3091
        %3095 = vset.pattern.permute.xlu0 0
        %3096 = vperm.xlu0 %3095, %v2830
        %v3097 = vpop.permute.xlu0 %3096
        %3100 = vset.pattern.permute.xlu0 0
        %3101 = vperm.xlu0 %3100, %v2831
        %v3102 = vpop.permute.xlu0 %3101
        %3105 = vset.pattern.permute.xlu0 0
        %3106 = vperm.xlu0 %3105, %v2832
        %v3107 = vpop.permute.xlu0 %3106
        %3110 = vset.pattern.permute.xlu0 0
        %3111 = vperm.xlu0 %3110, %v2833
        %v3112 = vpop.permute.xlu0 %3111
        %3115 = vset.pattern.permute.xlu0 0
        %3116 = vperm.xlu0 %3115, %v2834
        %v3117 = vpop.permute.xlu0 %3116
        %3120 = vset.pattern.permute.xlu0 0
        %3121 = vperm.xlu0 %3120, %v2835
        %v3122 = vpop.permute.xlu0 %3121
        %3125 = vset.pattern.permute.xlu0 0
        %3126 = vperm.xlu0 %3125, %v2836
        %v3127 = vpop.permute.xlu0 %3126
        %3130 = vset.pattern.permute.xlu0 0
        %3131 = vperm.xlu0 %3130, %v2837
        %v3132 = vpop.permute.xlu0 %3131
        %3135 = vset.pattern.permute.xlu0 0
        %3136 = vperm.xlu0 %3135, %v2838
        %v3137 = vpop.permute.xlu0 %3136
        %3140 = vset.pattern.permute.xlu0 0
        %3141 = vperm.xlu0 %3140, %v2839
        %v3142 = vpop.permute.xlu0 %3141
        %3145 = vset.pattern.permute.xlu0 0
        %3146 = vperm.xlu0 %3145, %v2840
        %v3147 = vpop.permute.xlu0 %3146
        %3150 = vset.pattern.permute.xlu0 0
        %3151 = vperm.xlu0 %3150, %v2841
        %v3152 = vpop.permute.xlu0 %3151
        %3155 = vset.pattern.permute.xlu0 0
        %3156 = vperm.xlu0 %3155, %v2842
        %v3157 = vpop.permute.xlu0 %3156
        %3160 = vset.pattern.permute.xlu0 0
        %3161 = vperm.xlu0 %3160, %v2843
        %v3162 = vpop.permute.xlu0 %3161
        %v3164 = vsub.f32 %v1880, %v2847
        %v3165 = vsub.f32 %v1882, %v2847
        %v3166 = vsub.f32 %v1884, %v2852
        %v3167 = vsub.f32 %v1886, %v2852
        %v3168 = vsub.f32 %v1890, %v2857
        %v3169 = vsub.f32 %v1892, %v2857
        %v3170 = vsub.f32 %v1894, %v2862
        %v3171 = vsub.f32 %v1896, %v2862
        %v3172 = vsub.f32 %v1900, %v2867
        %v3173 = vsub.f32 %v1902, %v2867
        %v3174 = vsub.f32 %v1904, %v2872
        %v3175 = vsub.f32 %v1906, %v2872
        %v3176 = vsub.f32 %v1910, %v2877
        %v3177 = vsub.f32 %v1912, %v2877
        %v3178 = vsub.f32 %v1914, %v2882
        %v3179 = vsub.f32 %v1916, %v2882
        %v3180 = vsub.f32 %v1920, %v2887
        %v3181 = vsub.f32 %v1922, %v2887
        %v3182 = vsub.f32 %v1924, %v2892
        %v3183 = vsub.f32 %v1926, %v2892
        %v3184 = vsub.f32 %v1930, %v2897
        %v3185 = vsub.f32 %v1932, %v2897
        %v3186 = vsub.f32 %v1934, %v2902
        %v3187 = vsub.f32 %v1936, %v2902
        %v3188 = vsub.f32 %v1940, %v2907
        %v3189 = vsub.f32 %v1942, %v2907
        %v3190 = vsub.f32 %v1944, %v2912
        %v3191 = vsub.f32 %v1946, %v2912
        %v3192 = vsub.f32 %v1950, %v2917
        %v3193 = vsub.f32 %v1952, %v2917
        %v3194 = vsub.f32 %v1954, %v2922
        %v3195 = vsub.f32 %v1956, %v2922
        %v3196 = vsub.f32 %v1960, %v2927
        %v3197 = vsub.f32 %v1962, %v2927
        %v3198 = vsub.f32 %v1964, %v2932
        %v3199 = vsub.f32 %v1966, %v2932
        %v3200 = vsub.f32 %v1970, %v2937
        %v3201 = vsub.f32 %v1972, %v2937
        %v3202 = vsub.f32 %v1974, %v2942
        %v3203 = vsub.f32 %v1976, %v2942
        %v3204 = vsub.f32 %v1980, %v2947
        %v3205 = vsub.f32 %v1982, %v2947
        %v3206 = vsub.f32 %v1984, %v2952
        %v3207 = vsub.f32 %v1986, %v2952
        %v3208 = vsub.f32 %v1990, %v2957
        %v3209 = vsub.f32 %v1992, %v2957
        %v3210 = vsub.f32 %v1994, %v2962
        %v3211 = vsub.f32 %v1996, %v2962
        %v3212 = vsub.f32 %v2000, %v2967
        %v3213 = vsub.f32 %v2002, %v2967
        %v3214 = vsub.f32 %v2004, %v2972
        %v3215 = vsub.f32 %v2006, %v2972
        %v3216 = vsub.f32 %v2010, %v2977
        %v3217 = vsub.f32 %v2012, %v2977
        %v3218 = vsub.f32 %v2014, %v2982
        %v3219 = vsub.f32 %v2016, %v2982
        %v3220 = vsub.f32 %v2020, %v2987
        %v3221 = vsub.f32 %v2022, %v2987
        %v3222 = vsub.f32 %v2024, %v2992
        %v3223 = vsub.f32 %v2026, %v2992
        %v3224 = vsub.f32 %v2030, %v2997
        %v3225 = vsub.f32 %v2032, %v2997
        %v3226 = vsub.f32 %v2034, %v3002
        %v3227 = vsub.f32 %v2036, %v3002
        %v3228 = vsub.f32 %v2040, %v3007
        %v3229 = vsub.f32 %v2042, %v3007
        %v3230 = vsub.f32 %v2044, %v3012
        %v3231 = vsub.f32 %v2046, %v3012
        %v3232 = vsub.f32 %v2050, %v3017
        %v3233 = vsub.f32 %v2052, %v3017
        %v3234 = vsub.f32 %v2054, %v3022
        %v3235 = vsub.f32 %v2056, %v3022
        %v3236 = vsub.f32 %v2060, %v3027
        %v3237 = vsub.f32 %v2062, %v3027
        %v3238 = vsub.f32 %v2064, %v3032
        %v3239 = vsub.f32 %v2066, %v3032
        %v3240 = vsub.f32 %v2070, %v3037
        %v3241 = vsub.f32 %v2072, %v3037
        %v3242 = vsub.f32 %v2074, %v3042
        %v3243 = vsub.f32 %v2076, %v3042
        %v3244 = vsub.f32 %v2080, %v3047
        %v3245 = vsub.f32 %v2082, %v3047
        %v3246 = vsub.f32 %v2084, %v3052
        %v3247 = vsub.f32 %v2086, %v3052
        %v3248 = vsub.f32 %v2090, %v3057
        %v3249 = vsub.f32 %v2092, %v3057
        %v3250 = vsub.f32 %v2094, %v3062
        %v3251 = vsub.f32 %v2096, %v3062
        %v3252 = vsub.f32 %v2100, %v3067
        %v3253 = vsub.f32 %v2102, %v3067
        %v3254 = vsub.f32 %v2104, %v3072
        %v3255 = vsub.f32 %v2106, %v3072
        %v3256 = vsub.f32 %v2110, %v3077
        %v3257 = vsub.f32 %v2112, %v3077
        %v3258 = vsub.f32 %v2114, %v3082
        %v3259 = vsub.f32 %v2116, %v3082
        %v3260 = vsub.f32 %v2120, %v3087
        %v3261 = vsub.f32 %v2122, %v3087
        %v3262 = vsub.f32 %v2124, %v3092
        %v3263 = vsub.f32 %v2126, %v3092
        %v3264 = vsub.f32 %v2130, %v3097
        %v3265 = vsub.f32 %v2132, %v3097
        %v3266 = vsub.f32 %v2134, %v3102
        %v3267 = vsub.f32 %v2136, %v3102
        %v3268 = vsub.f32 %v2140, %v3107
        %v3269 = vsub.f32 %v2142, %v3107
        %v3270 = vsub.f32 %v2144, %v3112
        %v3271 = vsub.f32 %v2146, %v3112
        %v3272 = vsub.f32 %v2150, %v3117
        %v3273 = vsub.f32 %v2152, %v3117
        %v3274 = vsub.f32 %v2154, %v3122
        %v3275 = vsub.f32 %v2156, %v3122
        %v3276 = vsub.f32 %v2160, %v3127
        %v3277 = vsub.f32 %v2162, %v3127
        %v3278 = vsub.f32 %v2164, %v3132
        %v3279 = vsub.f32 %v2166, %v3132
        %v3280 = vsub.f32 %v2170, %v3137
        %v3281 = vsub.f32 %v2172, %v3137
        %v3282 = vsub.f32 %v2174, %v3142
        %v3283 = vsub.f32 %v2176, %v3142
        %v3284 = vsub.f32 %v2180, %v3147
        %v3285 = vsub.f32 %v2182, %v3147
        %v3286 = vsub.f32 %v2184, %v3152
        %v3287 = vsub.f32 %v2186, %v3152
        %v3288 = vsub.f32 %v2190, %v3157
        %v3289 = vsub.f32 %v2192, %v3157
        %v3290 = vsub.f32 %v2194, %v3162
        %v3291 = vsub.f32 %v2196, %v3162
        %v3292 = vmul.f32 %v3164, %v3164
        %v3293 = vmul.f32 %v3165, %v3165
        %v3294 = vmul.f32 %v3166, %v3166
        %v3295 = vmul.f32 %v3167, %v3167
        %v3296 = vmul.f32 %v3168, %v3168
        %v3297 = vmul.f32 %v3169, %v3169
        %v3298 = vmul.f32 %v3170, %v3170
        %v3299 = vmul.f32 %v3171, %v3171
        %v3300 = vmul.f32 %v3172, %v3172
        %v3301 = vmul.f32 %v3173, %v3173
        %v3302 = vmul.f32 %v3174, %v3174
        %v3303 = vmul.f32 %v3175, %v3175
        %v3304 = vmul.f32 %v3176, %v3176
        %v3305 = vmul.f32 %v3177, %v3177
        %v3306 = vmul.f32 %v3178, %v3178
        %v3307 = vmul.f32 %v3179, %v3179
        %v3308 = vmul.f32 %v3180, %v3180
        %v3309 = vmul.f32 %v3181, %v3181
        %v3310 = vmul.f32 %v3182, %v3182
        %v3311 = vmul.f32 %v3183, %v3183
        %v3312 = vmul.f32 %v3184, %v3184
        %v3313 = vmul.f32 %v3185, %v3185
        %v3314 = vmul.f32 %v3186, %v3186
        %v3315 = vmul.f32 %v3187, %v3187
        %v3316 = vmul.f32 %v3188, %v3188
        %v3317 = vmul.f32 %v3189, %v3189
        %v3318 = vmul.f32 %v3190, %v3190
        %v3319 = vmul.f32 %v3191, %v3191
        %v3320 = vmul.f32 %v3192, %v3192
        %v3321 = vmul.f32 %v3193, %v3193
        %v3322 = vmul.f32 %v3194, %v3194
        %v3323 = vmul.f32 %v3195, %v3195
        %v3324 = vmul.f32 %v3196, %v3196
        %v3325 = vmul.f32 %v3197, %v3197
        %v3326 = vmul.f32 %v3198, %v3198
        %v3327 = vmul.f32 %v3199, %v3199
        %v3328 = vmul.f32 %v3200, %v3200
        %v3329 = vmul.f32 %v3201, %v3201
        %v3330 = vmul.f32 %v3202, %v3202
        %v3331 = vmul.f32 %v3203, %v3203
        %v3332 = vmul.f32 %v3204, %v3204
        %v3333 = vmul.f32 %v3205, %v3205
        %v3334 = vmul.f32 %v3206, %v3206
        %v3335 = vmul.f32 %v3207, %v3207
        %v3336 = vmul.f32 %v3208, %v3208
        %v3337 = vmul.f32 %v3209, %v3209
        %v3338 = vmul.f32 %v3210, %v3210
        %v3339 = vmul.f32 %v3211, %v3211
        %v3340 = vmul.f32 %v3212, %v3212
        %v3341 = vmul.f32 %v3213, %v3213
        %v3342 = vmul.f32 %v3214, %v3214
        %v3343 = vmul.f32 %v3215, %v3215
        %v3344 = vmul.f32 %v3216, %v3216
        %v3345 = vmul.f32 %v3217, %v3217
        %v3346 = vmul.f32 %v3218, %v3218
        %v3347 = vmul.f32 %v3219, %v3219
        %v3348 = vmul.f32 %v3220, %v3220
        %v3349 = vmul.f32 %v3221, %v3221
        %v3350 = vmul.f32 %v3222, %v3222
        %v3351 = vmul.f32 %v3223, %v3223
        %v3352 = vmul.f32 %v3224, %v3224
        %v3353 = vmul.f32 %v3225, %v3225
        %v3354 = vmul.f32 %v3226, %v3226
        %v3355 = vmul.f32 %v3227, %v3227
        %v3356 = vmul.f32 %v3228, %v3228
        %v3357 = vmul.f32 %v3229, %v3229
        %v3358 = vmul.f32 %v3230, %v3230
        %v3359 = vmul.f32 %v3231, %v3231
        %v3360 = vmul.f32 %v3232, %v3232
        %v3361 = vmul.f32 %v3233, %v3233
        %v3362 = vmul.f32 %v3234, %v3234
        %v3363 = vmul.f32 %v3235, %v3235
        %v3364 = vmul.f32 %v3236, %v3236
        %v3365 = vmul.f32 %v3237, %v3237
        %v3366 = vmul.f32 %v3238, %v3238
        %v3367 = vmul.f32 %v3239, %v3239
        %v3368 = vmul.f32 %v3240, %v3240
        %v3369 = vmul.f32 %v3241, %v3241
        %v3370 = vmul.f32 %v3242, %v3242
        %v3371 = vmul.f32 %v3243, %v3243
        %v3372 = vmul.f32 %v3244, %v3244
        %v3373 = vmul.f32 %v3245, %v3245
        %v3374 = vmul.f32 %v3246, %v3246
        %v3375 = vmul.f32 %v3247, %v3247
        %v3376 = vmul.f32 %v3248, %v3248
        %v3377 = vmul.f32 %v3249, %v3249
        %v3378 = vmul.f32 %v3250, %v3250
        %v3379 = vmul.f32 %v3251, %v3251
        %v3380 = vmul.f32 %v3252, %v3252
        %v3381 = vmul.f32 %v3253, %v3253
        %v3382 = vmul.f32 %v3254, %v3254
        %v3383 = vmul.f32 %v3255, %v3255
        %v3384 = vmul.f32 %v3256, %v3256
        %v3385 = vmul.f32 %v3257, %v3257
        %v3386 = vmul.f32 %v3258, %v3258
        %v3387 = vmul.f32 %v3259, %v3259
        %v3388 = vmul.f32 %v3260, %v3260
        %v3389 = vmul.f32 %v3261, %v3261
        %v3390 = vmul.f32 %v3262, %v3262
        %v3391 = vmul.f32 %v3263, %v3263
        %v3392 = vmul.f32 %v3264, %v3264
        %v3393 = vmul.f32 %v3265, %v3265
        %v3394 = vmul.f32 %v3266, %v3266
        %v3395 = vmul.f32 %v3267, %v3267
        %v3396 = vmul.f32 %v3268, %v3268
        %v3397 = vmul.f32 %v3269, %v3269
        %v3398 = vmul.f32 %v3270, %v3270
        %v3399 = vmul.f32 %v3271, %v3271
        %v3400 = vmul.f32 %v3272, %v3272
        %v3401 = vmul.f32 %v3273, %v3273
        %v3402 = vmul.f32 %v3274, %v3274
        %v3403 = vmul.f32 %v3275, %v3275
        %v3404 = vmul.f32 %v3276, %v3276
        %v3405 = vmul.f32 %v3277, %v3277
        %v3406 = vmul.f32 %v3278, %v3278
        %v3407 = vmul.f32 %v3279, %v3279
        %v3408 = vmul.f32 %v3280, %v3280
        %v3409 = vmul.f32 %v3281, %v3281
        %v3410 = vmul.f32 %v3282, %v3282
        %v3411 = vmul.f32 %v3283, %v3283
        %v3412 = vmul.f32 %v3284, %v3284
        %v3413 = vmul.f32 %v3285, %v3285
        %v3414 = vmul.f32 %v3286, %v3286
        %v3415 = vmul.f32 %v3287, %v3287
        %v3416 = vmul.f32 %v3288, %v3288
        %v3417 = vmul.f32 %v3289, %v3289
        %v3418 = vmul.f32 %v3290, %v3290
        %v3419 = vmul.f32 %v3291, %v3291
        %v3421 = vsel %vm2198, %v3293, 0
        %v3424 = vsel %vm2198, %v3295, 0
        %v3427 = vsel %vm2198, %v3297, 0
        %v3430 = vsel %vm2198, %v3299, 0
        %v3433 = vsel %vm2198, %v3301, 0
        %v3436 = vsel %vm2198, %v3303, 0
        %v3439 = vsel %vm2198, %v3305, 0
        %v3442 = vsel %vm2198, %v3307, 0
        %v3445 = vsel %vm2198, %v3309, 0
        %v3448 = vsel %vm2198, %v3311, 0
        %v3451 = vsel %vm2198, %v3313, 0
        %v3454 = vsel %vm2198, %v3315, 0
        %v3457 = vsel %vm2198, %v3317, 0
        %v3460 = vsel %vm2198, %v3319, 0
        %v3463 = vsel %vm2198, %v3321, 0
        %v3466 = vsel %vm2198, %v3323, 0
        %v3469 = vsel %vm2198, %v3325, 0
        %v3472 = vsel %vm2198, %v3327, 0
        %v3475 = vsel %vm2198, %v3329, 0
        %v3478 = vsel %vm2198, %v3331, 0
        %v3481 = vsel %vm2198, %v3333, 0
        %v3484 = vsel %vm2198, %v3335, 0
        %v3487 = vsel %vm2198, %v3337, 0
        %v3490 = vsel %vm2198, %v3339, 0
        %v3493 = vsel %vm2198, %v3341, 0
        %v3496 = vsel %vm2198, %v3343, 0
        %v3499 = vsel %vm2198, %v3345, 0
        %v3502 = vsel %vm2198, %v3347, 0
        %v3505 = vsel %vm2198, %v3349, 0
        %v3508 = vsel %vm2198, %v3351, 0
        %v3511 = vsel %vm2198, %v3353, 0
        %v3514 = vsel %vm2198, %v3355, 0
        %v3517 = vsel %vm2198, %v3357, 0
        %v3520 = vsel %vm2198, %v3359, 0
        %v3523 = vsel %vm2198, %v3361, 0
        %v3526 = vsel %vm2198, %v3363, 0
        %v3529 = vsel %vm2198, %v3365, 0
        %v3532 = vsel %vm2198, %v3367, 0
        %v3535 = vsel %vm2198, %v3369, 0
        %v3538 = vsel %vm2198, %v3371, 0
        %v3541 = vsel %vm2198, %v3373, 0
        %v3544 = vsel %vm2198, %v3375, 0
        %v3547 = vsel %vm2198, %v3377, 0
        %v3550 = vsel %vm2198, %v3379, 0
        %v3553 = vsel %vm2198, %v3381, 0
        %v3556 = vsel %vm2198, %v3383, 0
        %v3559 = vsel %vm2198, %v3385, 0
        %v3562 = vsel %vm2198, %v3387, 0
        %v3565 = vsel %vm2198, %v3389, 0
        %v3568 = vsel %vm2198, %v3391, 0
        %v3571 = vsel %vm2198, %v3393, 0
        %v3574 = vsel %vm2198, %v3395, 0
        %v3577 = vsel %vm2198, %v3397, 0
        %v3580 = vsel %vm2198, %v3399, 0
        %v3583 = vsel %vm2198, %v3401, 0
        %v3586 = vsel %vm2198, %v3403, 0
        %v3589 = vsel %vm2198, %v3405, 0
        %v3592 = vsel %vm2198, %v3407, 0
        %v3595 = vsel %vm2198, %v3409, 0
        %v3598 = vsel %vm2198, %v3411, 0
        %v3601 = vsel %vm2198, %v3413, 0
        %v3604 = vsel %vm2198, %v3415, 0
        %v3607 = vsel %vm2198, %v3417, 0
        %v3610 = vsel %vm2198, %v3419, 0
        %3612 = vmatprep.subr.mxu0 0.0
        %3613 = vmatpush1.msra.mxu0 1.0
        %3614 = vmatprep.subr.mxu0 0.0
        %3615 = vmatpush1.msra.mxu0 1.0
        %3616 = vmatprep.subr.mxu0 0.0
        %3617 = vmatpush1.msra.mxu0 1.0
        %3618 = vmatprep.subr.mxu0 0.0
        %3619 = vmatpush1.msra.mxu0 1.0
        %3620 = vmatprep.subr.mxu0 0.0
        %3621 = vmatpush1.msra.mxu0 1.0
        %3622 = vmatprep.subr.mxu0 0.0
        %3623 = vmatpush1.msra.mxu0 1.0
        %3624 = vmatprep.subr.mxu0 0.0
        %3625 = vmatpush1.msra.mxu0 1.0
        %3626 = vmatprep.subr.mxu0 0.0
        %3627 = vmatpush1.msra.mxu0 1.0
        %3628 = vmatprep.subr.mxu0 0.0
        %3629 = vmatpush1.msra.mxu0 1.0
        %3630 = vmatprep.subr.mxu0 0.0
        %3631 = vmatpush1.msra.mxu0 1.0
        %3632 = vmatprep.subr.mxu0 0.0
        %3633 = vmatpush1.msra.mxu0 1.0
        %3634 = vmatprep.subr.mxu0 0.0
        %3635 = vmatpush1.msra.mxu0 1.0
        %3636 = vmatprep.subr.mxu0 0.0
        %3637 = vmatpush1.msra.mxu0 1.0
        %3638 = vmatprep.subr.mxu0 0.0
        %3639 = vmatpush1.msra.mxu0 1.0
        %3640 = vmatprep.subr.mxu0 0.0
        %3641 = vmatpush1.msra.mxu0 1.0
        %3642 = vmatprep.subr.mxu0 0.0
        %3643 = vmatpush1.msra.mxu0 1.0
        %3644 = vmatprep.subr.mxu0 0.0
        %3645 = vmatpush1.msra.mxu0 1.0
        %3646 = vmatprep.subr.mxu0 0.0
        %3647 = vmatpush1.msra.mxu0 1.0
        %3648 = vmatprep.subr.mxu0 0.0
        %3649 = vmatpush1.msra.mxu0 1.0
        %3650 = vmatprep.subr.mxu0 0.0
        %3651 = vmatpush1.msra.mxu0 1.0
        %3652 = vmatprep.subr.mxu0 0.0
        %3653 = vmatpush1.msra.mxu0 1.0
        %3654 = vmatprep.subr.mxu0 0.0
        %3655 = vmatpush1.msra.mxu0 1.0
        %3656 = vmatprep.subr.mxu0 0.0
        %3657 = vmatpush1.msra.mxu0 1.0
        %3658 = vmatprep.subr.mxu0 0.0
        %3659 = vmatpush1.msra.mxu0 1.0
        %3660 = vmatprep.subr.mxu0 0.0
        %3661 = vmatpush1.msra.mxu0 %v2393
        %3662 = vmatprep.subr.mxu0 0.0
        %3663 = vmatpush1.msra.mxu0 0.0
        %3664 = vmatprep.subr.mxu0 0.0
        %3665 = vmatpush1.msra.mxu0 0.0
        %3666 = vmatprep.subr.mxu0 0.0
        %3667 = vmatpush1.msra.mxu0 0.0
        %3668 = vmatprep.subr.mxu0 0.0
        %3669 = vmatpush1.msra.mxu0 0.0
        %3670 = vmatprep.subr.mxu0 0.0
        %3671 = vmatpush1.msra.mxu0 0.0
        %3672 = vmatprep.subr.mxu0 0.0
        %3673 = vmatpush1.msra.mxu0 0.0
        %3674 = vmatprep.subr.mxu0 0.0
        %3675 = vmatpush1.msra.mxu0 0.0
        %3676 = vmatprep.mubr.f32.mxu0 %v3421
        %3677 = vmatmul.mubr.f32.gmra.mrb[0].mxu0 %v3292
        %v3678 = vpop.f32.mrb[0].mxu0
        %v3679 = vadd.f32 0.0, %v3678
        %v3680 = vpop.f32.mrb[0].mxu0
        %3681 = vmatprep.mubr.f32.mxu0 %v3424
        %3682 = vmatmul.mubr.f32.gmra.mrb[0].mxu0 %v3294
        %v3683 = vpop.f32.mrb[0].mxu0
        %v3684 = vadd.f32 0.0, %v3683
        %v3685 = vpop.f32.mrb[0].mxu0
        %3686 = vmatprep.mubr.f32.mxu0 %v3427
        %3687 = vmatmul.mubr.f32.gmra.mrb[0].mxu0 %v3296
        %v3688 = vpop.f32.mrb[0].mxu0
        %v3689 = vadd.f32 0.0, %v3688
        %v3690 = vpop.f32.mrb[0].mxu0
        %3691 = vmatprep.mubr.f32.mxu0 %v3430
        %3692 = vmatmul.mubr.f32.gmra.mrb[0].mxu0 %v3298
        %v3693 = vpop.f32.mrb[0].mxu0
        %v3694 = vadd.f32 0.0, %v3693
        %v3695 = vpop.f32.mrb[0].mxu0
        %3696 = vmatprep.mubr.f32.mxu0 %v3433
        %3697 = vmatmul.mubr.f32.gmra.mrb[0].mxu0 %v3300
        %v3698 = vpop.f32.mrb[0].mxu0
        %v3699 = vadd.f32 0.0, %v3698
        %v3700 = vpop.f32.mrb[0].mxu0
        %3701 = vmatprep.mubr.f32.mxu0 %v3436
        %3702 = vmatmul.mubr.f32.gmra.mrb[0].mxu0 %v3302
        %v3703 = vpop.f32.mrb[0].mxu0
        %v3704 = vadd.f32 0.0, %v3703
        %v3705 = vpop.f32.mrb[0].mxu0
        %3706 = vmatprep.mubr.f32.mxu0 %v3439
        %3707 = vmatmul.mubr.f32.gmra.mrb[0].mxu0 %v3304
        %v3708 = vpop.f32.mrb[0].mxu0
        %v3709 = vadd.f32 0.0, %v3708
        %v3710 = vpop.f32.mrb[0].mxu0
        %3711 = vmatprep.mubr.f32.mxu0 %v3442
        %3712 = vmatmul.mubr.f32.gmra.mrb[0].mxu0 %v3306
        %v3713 = vpop.f32.mrb[0].mxu0
        %v3714 = vadd.f32 0.0, %v3713
        %v3715 = vpop.f32.mrb[0].mxu0
        %3716 = vmatprep.mubr.f32.mxu0 %v3445
        %3717 = vmatmul.mubr.f32.gmra.mrb[0].mxu0 %v3308
        %v3718 = vpop.f32.mrb[0].mxu0
        %v3719 = vadd.f32 0.0, %v3718
        %v3720 = vpop.f32.mrb[0].mxu0
        %3721 = vmatprep.mubr.f32.mxu0 %v3448
        %3722 = vmatmul.mubr.f32.gmra.mrb[0].mxu0 %v3310
        %v3723 = vpop.f32.mrb[0].mxu0
        %v3724 = vadd.f32 0.0, %v3723
        %v3725 = vpop.f32.mrb[0].mxu0
        %3726 = vmatprep.mubr.f32.mxu0 %v3451
        %3727 = vmatmul.mubr.f32.gmra.mrb[0].mxu0 %v3312
        %v3728 = vpop.f32.mrb[0].mxu0
        %v3729 = vadd.f32 0.0, %v3728
        %v3730 = vpop.f32.mrb[0].mxu0
        %3731 = vmatprep.mubr.f32.mxu0 %v3454
        %3732 = vmatmul.mubr.f32.gmra.mrb[0].mxu0 %v3314
        %v3733 = vpop.f32.mrb[0].mxu0
        %v3734 = vadd.f32 0.0, %v3733
        %v3735 = vpop.f32.mrb[0].mxu0
        %3736 = vmatprep.mubr.f32.mxu0 %v3457
        %3737 = vmatmul.mubr.f32.gmra.mrb[0].mxu0 %v3316
        %v3738 = vpop.f32.mrb[0].mxu0
        %v3739 = vadd.f32 0.0, %v3738
        %v3740 = vpop.f32.mrb[0].mxu0
        %3741 = vmatprep.mubr.f32.mxu0 %v3460
        %3742 = vmatmul.mubr.f32.gmra.mrb[0].mxu0 %v3318
        %v3743 = vpop.f32.mrb[0].mxu0
        %v3744 = vadd.f32 0.0, %v3743
        %v3745 = vpop.f32.mrb[0].mxu0
        %3746 = vmatprep.mubr.f32.mxu0 %v3463
        %3747 = vmatmul.mubr.f32.gmra.mrb[0].mxu0 %v3320
        %v3748 = vpop.f32.mrb[0].mxu0
        %v3749 = vadd.f32 0.0, %v3748
        %v3750 = vpop.f32.mrb[0].mxu0
        %3751 = vmatprep.mubr.f32.mxu0 %v3466
        %3752 = vmatmul.mubr.f32.gmra.mrb[0].mxu0 %v3322
        %v3753 = vpop.f32.mrb[0].mxu0
        %v3754 = vadd.f32 0.0, %v3753
        %v3755 = vpop.f32.mrb[0].mxu0
        %3756 = vmatprep.mubr.f32.mxu0 %v3469
        %3757 = vmatmul.mubr.f32.gmra.mrb[0].mxu0 %v3324
        %v3758 = vpop.f32.mrb[0].mxu0
        %v3759 = vadd.f32 0.0, %v3758
        %v3760 = vpop.f32.mrb[0].mxu0
        %3761 = vmatprep.mubr.f32.mxu0 %v3472
        %3762 = vmatmul.mubr.f32.gmra.mrb[0].mxu0 %v3326
        %v3763 = vpop.f32.mrb[0].mxu0
        %v3764 = vadd.f32 0.0, %v3763
        %v3765 = vpop.f32.mrb[0].mxu0
        %3766 = vmatprep.mubr.f32.mxu0 %v3475
        %3767 = vmatmul.mubr.f32.gmra.mrb[0].mxu0 %v3328
        %v3768 = vpop.f32.mrb[0].mxu0
        %v3769 = vadd.f32 0.0, %v3768
        %v3770 = vpop.f32.mrb[0].mxu0
        %3771 = vmatprep.mubr.f32.mxu0 %v3478
        %3772 = vmatmul.mubr.f32.gmra.mrb[0].mxu0 %v3330
        %v3773 = vpop.f32.mrb[0].mxu0
        %v3774 = vadd.f32 0.0, %v3773
        %v3775 = vpop.f32.mrb[0].mxu0
        %3776 = vmatprep.mubr.f32.mxu0 %v3481
        %3777 = vmatmul.mubr.f32.gmra.mrb[0].mxu0 %v3332
        %v3778 = vpop.f32.mrb[0].mxu0
        %v3779 = vadd.f32 0.0, %v3778
        %v3780 = vpop.f32.mrb[0].mxu0
        %3781 = vmatprep.mubr.f32.mxu0 %v3484
        %3782 = vmatmul.mubr.f32.gmra.mrb[0].mxu0 %v3334
        %v3783 = vpop.f32.mrb[0].mxu0
        %v3784 = vadd.f32 0.0, %v3783
        %v3785 = vpop.f32.mrb[0].mxu0
        %3786 = vmatprep.mubr.f32.mxu0 %v3487
        %3787 = vmatmul.mubr.f32.gmra.mrb[0].mxu0 %v3336
        %v3788 = vpop.f32.mrb[0].mxu0
        %v3789 = vadd.f32 0.0, %v3788
        %v3790 = vpop.f32.mrb[0].mxu0
        %3791 = vmatprep.mubr.f32.mxu0 %v3490
        %3792 = vmatmul.mubr.f32.gmra.mrb[0].mxu0 %v3338
        %v3793 = vpop.f32.mrb[0].mxu0
        %v3794 = vadd.f32 0.0, %v3793
        %v3795 = vpop.f32.mrb[0].mxu0
        %3796 = vmatprep.mubr.f32.mxu0 %v3493
        %3797 = vmatmul.mubr.f32.gmra.mrb[0].mxu0 %v3340
        %v3798 = vpop.f32.mrb[0].mxu0
        %v3799 = vadd.f32 0.0, %v3798
        %v3800 = vpop.f32.mrb[0].mxu0
        %3801 = vmatprep.mubr.f32.mxu0 %v3496
        %3802 = vmatmul.mubr.f32.gmra.mrb[0].mxu0 %v3342
        %v3803 = vpop.f32.mrb[0].mxu0
        %v3804 = vadd.f32 0.0, %v3803
        %v3805 = vpop.f32.mrb[0].mxu0
        %3806 = vmatprep.mubr.f32.mxu0 %v3499
        %3807 = vmatmul.mubr.f32.gmra.mrb[0].mxu0 %v3344
        %v3808 = vpop.f32.mrb[0].mxu0
        %v3809 = vadd.f32 0.0, %v3808
        %v3810 = vpop.f32.mrb[0].mxu0
        %3811 = vmatprep.mubr.f32.mxu0 %v3502
        %3812 = vmatmul.mubr.f32.gmra.mrb[0].mxu0 %v3346
        %v3813 = vpop.f32.mrb[0].mxu0
        %v3814 = vadd.f32 0.0, %v3813
        %v3815 = vpop.f32.mrb[0].mxu0
        %3816 = vmatprep.mubr.f32.mxu0 %v3505
        %3817 = vmatmul.mubr.f32.gmra.mrb[0].mxu0 %v3348
        %v3818 = vpop.f32.mrb[0].mxu0
        %v3819 = vadd.f32 0.0, %v3818
        %v3820 = vpop.f32.mrb[0].mxu0
        %3821 = vmatprep.mubr.f32.mxu0 %v3508
        %3822 = vmatmul.mubr.f32.gmra.mrb[0].mxu0 %v3350
        %v3823 = vpop.f32.mrb[0].mxu0
        %v3824 = vadd.f32 0.0, %v3823
        %v3825 = vpop.f32.mrb[0].mxu0
        %3826 = vmatprep.mubr.f32.mxu0 %v3511
        %3827 = vmatmul.mubr.f32.gmra.mrb[0].mxu0 %v3352
        %v3828 = vpop.f32.mrb[0].mxu0
        %v3829 = vadd.f32 0.0, %v3828
        %v3830 = vpop.f32.mrb[0].mxu0
        %3831 = vmatprep.mubr.f32.mxu0 %v3514
        %3832 = vmatmul.mubr.f32.gmra.mrb[0].mxu0 %v3354
        %v3833 = vpop.f32.mrb[0].mxu0
        %v3834 = vadd.f32 0.0, %v3833
        %v3835 = vpop.f32.mrb[0].mxu0
        %3836 = vmatprep.mubr.f32.mxu0 %v3517
        %3837 = vmatmul.mubr.f32.gmra.mrb[0].mxu0 %v3356
        %v3838 = vpop.f32.mrb[0].mxu0
        %v3839 = vadd.f32 0.0, %v3838
        %v3840 = vpop.f32.mrb[0].mxu0
        %3841 = vmatprep.mubr.f32.mxu0 %v3520
        %3842 = vmatmul.mubr.f32.gmra.mrb[0].mxu0 %v3358
        %v3843 = vpop.f32.mrb[0].mxu0
        %v3844 = vadd.f32 0.0, %v3843
        %v3845 = vpop.f32.mrb[0].mxu0
        %3846 = vmatprep.mubr.f32.mxu0 %v3523
        %3847 = vmatmul.mubr.f32.gmra.mrb[0].mxu0 %v3360
        %v3848 = vpop.f32.mrb[0].mxu0
        %v3849 = vadd.f32 0.0, %v3848
        %v3850 = vpop.f32.mrb[0].mxu0
        %3851 = vmatprep.mubr.f32.mxu0 %v3526
        %3852 = vmatmul.mubr.f32.gmra.mrb[0].mxu0 %v3362
        %v3853 = vpop.f32.mrb[0].mxu0
        %v3854 = vadd.f32 0.0, %v3853
        %v3855 = vpop.f32.mrb[0].mxu0
        %3856 = vmatprep.mubr.f32.mxu0 %v3529
        %3857 = vmatmul.mubr.f32.gmra.mrb[0].mxu0 %v3364
        %v3858 = vpop.f32.mrb[0].mxu0
        %v3859 = vadd.f32 0.0, %v3858
        %v3860 = vpop.f32.mrb[0].mxu0
        %3861 = vmatprep.mubr.f32.mxu0 %v3532
        %3862 = vmatmul.mubr.f32.gmra.mrb[0].mxu0 %v3366
        %v3863 = vpop.f32.mrb[0].mxu0
        %v3864 = vadd.f32 0.0, %v3863
        %v3865 = vpop.f32.mrb[0].mxu0
        %3866 = vmatprep.mubr.f32.mxu0 %v3535
        %3867 = vmatmul.mubr.f32.gmra.mrb[0].mxu0 %v3368
        %v3868 = vpop.f32.mrb[0].mxu0
        %v3869 = vadd.f32 0.0, %v3868
        %v3870 = vpop.f32.mrb[0].mxu0
        %3871 = vmatprep.mubr.f32.mxu0 %v3538
        %3872 = vmatmul.mubr.f32.gmra.mrb[0].mxu0 %v3370
        %v3873 = vpop.f32.mrb[0].mxu0
        %v3874 = vadd.f32 0.0, %v3873
        %v3875 = vpop.f32.mrb[0].mxu0
        %3876 = vmatprep.mubr.f32.mxu0 %v3541
        %3877 = vmatmul.mubr.f32.gmra.mrb[0].mxu0 %v3372
        %v3878 = vpop.f32.mrb[0].mxu0
        %v3879 = vadd.f32 0.0, %v3878
        %v3880 = vpop.f32.mrb[0].mxu0
        %3881 = vmatprep.mubr.f32.mxu0 %v3544
        %3882 = vmatmul.mubr.f32.gmra.mrb[0].mxu0 %v3374
        %v3883 = vpop.f32.mrb[0].mxu0
        %v3884 = vadd.f32 0.0, %v3883
        %v3885 = vpop.f32.mrb[0].mxu0
        %3886 = vmatprep.mubr.f32.mxu0 %v3547
        %3887 = vmatmul.mubr.f32.gmra.mrb[0].mxu0 %v3376
        %v3888 = vpop.f32.mrb[0].mxu0
        %v3889 = vadd.f32 0.0, %v3888
        %v3890 = vpop.f32.mrb[0].mxu0
        %3891 = vmatprep.mubr.f32.mxu0 %v3550
        %3892 = vmatmul.mubr.f32.gmra.mrb[0].mxu0 %v3378
        %v3893 = vpop.f32.mrb[0].mxu0
        %v3894 = vadd.f32 0.0, %v3893
        %v3895 = vpop.f32.mrb[0].mxu0
        %3896 = vmatprep.mubr.f32.mxu0 %v3553
        %3897 = vmatmul.mubr.f32.gmra.mrb[0].mxu0 %v3380
        %v3898 = vpop.f32.mrb[0].mxu0
        %v3899 = vadd.f32 0.0, %v3898
        %v3900 = vpop.f32.mrb[0].mxu0
        %3901 = vmatprep.mubr.f32.mxu0 %v3556
        %3902 = vmatmul.mubr.f32.gmra.mrb[0].mxu0 %v3382
        %v3903 = vpop.f32.mrb[0].mxu0
        %v3904 = vadd.f32 0.0, %v3903
        %v3905 = vpop.f32.mrb[0].mxu0
        %3906 = vmatprep.mubr.f32.mxu0 %v3559
        %3907 = vmatmul.mubr.f32.gmra.mrb[0].mxu0 %v3384
        %v3908 = vpop.f32.mrb[0].mxu0
        %v3909 = vadd.f32 0.0, %v3908
        %v3910 = vpop.f32.mrb[0].mxu0
        %3911 = vmatprep.mubr.f32.mxu0 %v3562
        %3912 = vmatmul.mubr.f32.gmra.mrb[0].mxu0 %v3386
        %v3913 = vpop.f32.mrb[0].mxu0
        %v3914 = vadd.f32 0.0, %v3913
        %v3915 = vpop.f32.mrb[0].mxu0
        %3916 = vmatprep.mubr.f32.mxu0 %v3565
        %3917 = vmatmul.mubr.f32.gmra.mrb[0].mxu0 %v3388
        %v3918 = vpop.f32.mrb[0].mxu0
        %v3919 = vadd.f32 0.0, %v3918
        %v3920 = vpop.f32.mrb[0].mxu0
        %3921 = vmatprep.mubr.f32.mxu0 %v3568
        %3922 = vmatmul.mubr.f32.gmra.mrb[0].mxu0 %v3390
        %v3923 = vpop.f32.mrb[0].mxu0
        %v3924 = vadd.f32 0.0, %v3923
        %v3925 = vpop.f32.mrb[0].mxu0
        %3926 = vmatprep.mubr.f32.mxu0 %v3571
        %3927 = vmatmul.mubr.f32.gmra.mrb[0].mxu0 %v3392
        %v3928 = vpop.f32.mrb[0].mxu0
        %v3929 = vadd.f32 0.0, %v3928
        %v3930 = vpop.f32.mrb[0].mxu0
        %3931 = vmatprep.mubr.f32.mxu0 %v3574
        %3932 = vmatmul.mubr.f32.gmra.mrb[0].mxu0 %v3394
        %v3933 = vpop.f32.mrb[0].mxu0
        %v3934 = vadd.f32 0.0, %v3933
        %v3935 = vpop.f32.mrb[0].mxu0
        %3936 = vmatprep.mubr.f32.mxu0 %v3577
        %3937 = vmatmul.mubr.f32.gmra.mrb[0].mxu0 %v3396
        %v3938 = vpop.f32.mrb[0].mxu0
        %v3939 = vadd.f32 0.0, %v3938
        %v3940 = vpop.f32.mrb[0].mxu0
        %3941 = vmatprep.mubr.f32.mxu0 %v3580
        %3942 = vmatmul.mubr.f32.gmra.mrb[0].mxu0 %v3398
        %v3943 = vpop.f32.mrb[0].mxu0
        %v3944 = vadd.f32 0.0, %v3943
        %v3945 = vpop.f32.mrb[0].mxu0
        %3946 = vmatprep.mubr.f32.mxu0 %v3583
        %3947 = vmatmul.mubr.f32.gmra.mrb[0].mxu0 %v3400
        %v3948 = vpop.f32.mrb[0].mxu0
        %v3949 = vadd.f32 0.0, %v3948
        %v3950 = vpop.f32.mrb[0].mxu0
        %3951 = vmatprep.mubr.f32.mxu0 %v3586
        %3952 = vmatmul.mubr.f32.gmra.mrb[0].mxu0 %v3402
        %v3953 = vpop.f32.mrb[0].mxu0
        %v3954 = vadd.f32 0.0, %v3953
        %v3955 = vpop.f32.mrb[0].mxu0
        %3956 = vmatprep.mubr.f32.mxu0 %v3589
        %3957 = vmatmul.mubr.f32.gmra.mrb[0].mxu0 %v3404
        %v3958 = vpop.f32.mrb[0].mxu0
        %v3959 = vadd.f32 0.0, %v3958
        %v3960 = vpop.f32.mrb[0].mxu0
        %3961 = vmatprep.mubr.f32.mxu0 %v3592
        %3962 = vmatmul.mubr.f32.gmra.mrb[0].mxu0 %v3406
        %v3963 = vpop.f32.mrb[0].mxu0
        %v3964 = vadd.f32 0.0, %v3963
        %v3965 = vpop.f32.mrb[0].mxu0
        %3966 = vmatprep.mubr.f32.mxu0 %v3595
        %3967 = vmatmul.mubr.f32.gmra.mrb[0].mxu0 %v3408
        %v3968 = vpop.f32.mrb[0].mxu0
        %v3969 = vadd.f32 0.0, %v3968
        %v3970 = vpop.f32.mrb[0].mxu0
        %3971 = vmatprep.mubr.f32.mxu0 %v3598
        %3972 = vmatmul.mubr.f32.gmra.mrb[0].mxu0 %v3410
        %v3973 = vpop.f32.mrb[0].mxu0
        %v3974 = vadd.f32 0.0, %v3973
        %v3975 = vpop.f32.mrb[0].mxu0
        %3976 = vmatprep.mubr.f32.mxu0 %v3601
        %3977 = vmatmul.mubr.f32.gmra.mrb[0].mxu0 %v3412
        %v3978 = vpop.f32.mrb[0].mxu0
        %v3979 = vadd.f32 0.0, %v3978
        %v3980 = vpop.f32.mrb[0].mxu0
        %3981 = vmatprep.mubr.f32.mxu0 %v3604
        %3982 = vmatmul.mubr.f32.gmra.mrb[0].mxu0 %v3414
        %v3983 = vpop.f32.mrb[0].mxu0
        %v3984 = vadd.f32 0.0, %v3983
        %v3985 = vpop.f32.mrb[0].mxu0
        %3986 = vmatprep.mubr.f32.mxu0 %v3607
        %3987 = vmatmul.mubr.f32.gmra.mrb[0].mxu0 %v3416
        %v3988 = vpop.f32.mrb[0].mxu0
        %v3989 = vadd.f32 0.0, %v3988
        %v3990 = vpop.f32.mrb[0].mxu0
        %3991 = vmatprep.mubr.f32.mxu0 %v3610
        %3992 = vmatmul.mubr.f32.gmra.mrb[0].mxu0 %v3418
        %v3993 = vpop.f32.mrb[0].mxu0
        %v3994 = vadd.f32 0.0, %v3993
        %v3995 = vpop.f32.mrb[0].mxu0
        %3996 = vdwg.mxu0
        %v3997 = vmul.f32 %v3679, 0.0051020407
        %v3998 = vmul.f32 %v3684, 0.0051020407
        %v3999 = vmul.f32 %v3689, 0.0051020407
        %v4000 = vmul.f32 %v3694, 0.0051020407
        %v4001 = vmul.f32 %v3699, 0.0051020407
        %v4002 = vmul.f32 %v3704, 0.0051020407
        %v4003 = vmul.f32 %v3709, 0.0051020407
        %v4004 = vmul.f32 %v3714, 0.0051020407
        %v4005 = vmul.f32 %v3719, 0.0051020407
        %v4006 = vmul.f32 %v3724, 0.0051020407
        %v4007 = vmul.f32 %v3729, 0.0051020407
        %v4008 = vmul.f32 %v3734, 0.0051020407
        %v4009 = vmul.f32 %v3739, 0.0051020407
        %v4010 = vmul.f32 %v3744, 0.0051020407
        %v4011 = vmul.f32 %v3749, 0.0051020407
        %v4012 = vmul.f32 %v3754, 0.0051020407
        %v4013 = vmul.f32 %v3759, 0.0051020407
        %v4014 = vmul.f32 %v3764, 0.0051020407
        %v4015 = vmul.f32 %v3769, 0.0051020407
        %v4016 = vmul.f32 %v3774, 0.0051020407
        %v4017 = vmul.f32 %v3779, 0.0051020407
        %v4018 = vmul.f32 %v3784, 0.0051020407
        %v4019 = vmul.f32 %v3789, 0.0051020407
        %v4020 = vmul.f32 %v3794, 0.0051020407
        %v4021 = vmul.f32 %v3799, 0.0051020407
        %v4022 = vmul.f32 %v3804, 0.0051020407
        %v4023 = vmul.f32 %v3809, 0.0051020407
        %v4024 = vmul.f32 %v3814, 0.0051020407
        %v4025 = vmul.f32 %v3819, 0.0051020407
        %v4026 = vmul.f32 %v3824, 0.0051020407
        %v4027 = vmul.f32 %v3829, 0.0051020407
        %v4028 = vmul.f32 %v3834, 0.0051020407
        %v4029 = vmul.f32 %v3839, 0.0051020407
        %v4030 = vmul.f32 %v3844, 0.0051020407
        %v4031 = vmul.f32 %v3849, 0.0051020407
        %v4032 = vmul.f32 %v3854, 0.0051020407
        %v4033 = vmul.f32 %v3859, 0.0051020407
        %v4034 = vmul.f32 %v3864, 0.0051020407
        %v4035 = vmul.f32 %v3869, 0.0051020407
        %v4036 = vmul.f32 %v3874, 0.0051020407
        %v4037 = vmul.f32 %v3879, 0.0051020407
        %v4038 = vmul.f32 %v3884, 0.0051020407
        %v4039 = vmul.f32 %v3889, 0.0051020407
        %v4040 = vmul.f32 %v3894, 0.0051020407
        %v4041 = vmul.f32 %v3899, 0.0051020407
        %v4042 = vmul.f32 %v3904, 0.0051020407
        %v4043 = vmul.f32 %v3909, 0.0051020407
        %v4044 = vmul.f32 %v3914, 0.0051020407
        %v4045 = vmul.f32 %v3919, 0.0051020407
        %v4046 = vmul.f32 %v3924, 0.0051020407
        %v4047 = vmul.f32 %v3929, 0.0051020407
        %v4048 = vmul.f32 %v3934, 0.0051020407
        %v4049 = vmul.f32 %v3939, 0.0051020407
        %v4050 = vmul.f32 %v3944, 0.0051020407
        %v4051 = vmul.f32 %v3949, 0.0051020407
        %v4052 = vmul.f32 %v3954, 0.0051020407
        %v4053 = vmul.f32 %v3959, 0.0051020407
        %v4054 = vmul.f32 %v3964, 0.0051020407
        %v4055 = vmul.f32 %v3969, 0.0051020407
        %v4056 = vmul.f32 %v3974, 0.0051020407
        %v4057 = vmul.f32 %v3979, 0.0051020407
        %v4058 = vmul.f32 %v3984, 0.0051020407
        %v4059 = vmul.f32 %v3989, 0.0051020407
        %v4060 = vmul.f32 %v3994, 0.0051020407
        %v4061 = vld [vmem:[%s907] sm:$0xff]
        %v4062 = vld [vmem:[%s907 + $0x8] sm:$0xff]
        %v4063 = vld [vmem:[%s907 + $0x10] sm:$0xff]
        %v4064 = vld [vmem:[%s907 + $0x18] sm:$0xff]
        %v4065 = vld [vmem:[%s907 + $0x20] sm:$0xff]
        %v4066 = vld [vmem:[%s907 + $0x28] sm:$0xff]
        %v4067 = vld [vmem:[%s907 + $0x30] sm:$0xff]
        %v4068 = vld [vmem:[%s907 + $0x38] sm:$0xff]
        %v4069 = vld [vmem:[%s907 + $0x40] sm:$0xff]
        %v4070 = vld [vmem:[%s907 + $0x48] sm:$0xff]
        %v4071 = vld [vmem:[%s907 + $0x50] sm:$0xff]
        %v4072 = vld [vmem:[%s907 + $0x58] sm:$0xff]
        %v4073 = vld [vmem:[%s907 + $0x60] sm:$0xff]
        %v4074 = vld [vmem:[%s907 + $0x68] sm:$0xff]
        %v4075 = vld [vmem:[%s907 + $0x70] sm:$0xff]
        %v4076 = vld [vmem:[%s907 + $0x78] sm:$0xff]
        %v4077 = vld [vmem:[%s907 + $0x80] sm:$0xff]
        %v4078 = vld [vmem:[%s907 + $0x88] sm:$0xff]
        %v4079 = vld [vmem:[%s907 + $0x90] sm:$0xff]
        %v4080 = vld [vmem:[%s907 + $0x98] sm:$0xff]
        %v4081 = vld [vmem:[%s907 + $0xa0] sm:$0xff]
        %v4082 = vld [vmem:[%s907 + $0xa8] sm:$0xff]
        %v4083 = vld [vmem:[%s907 + $0xb0] sm:$0xff]
        %v4084 = vld [vmem:[%s907 + $0xb8] sm:$0xff]
        %v4085 = vld [vmem:[%s907 + $0xc0] sm:$0xff]
        %v4086 = vld [vmem:[%s907 + $0xc8] sm:$0xff]
        %v4087 = vld [vmem:[%s907 + $0xd0] sm:$0xff]
        %v4088 = vld [vmem:[%s907 + $0xd8] sm:$0xff]
        %v4089 = vld [vmem:[%s907 + $0xe0] sm:$0xff]
        %v4090 = vld [vmem:[%s907 + $0xe8] sm:$0xff]
        %v4091 = vld [vmem:[%s907 + $0xf0] sm:$0xff]
        %v4092 = vld [vmem:[%s907 + $0xf8] sm:$0xff]
        %v4093 = vld [vmem:[%s907 + $0x100] sm:$0xff]
        %v4094 = vld [vmem:[%s907 + $0x108] sm:$0xff]
        %v4095 = vld [vmem:[%s907 + $0x110] sm:$0xff]
        %v4096 = vld [vmem:[%s907 + $0x118] sm:$0xff]
        %v4097 = vld [vmem:[%s907 + $0x120] sm:$0xff]
        %v4098 = vld [vmem:[%s907 + $0x128] sm:$0xff]
        %v4099 = vld [vmem:[%s907 + $0x130] sm:$0xff]
        %v4100 = vld [vmem:[%s907 + $0x138] sm:$0xff]
        %v4101 = vld [vmem:[%s907 + $0x140] sm:$0xff]
        %v4102 = vld [vmem:[%s907 + $0x148] sm:$0xff]
        %v4103 = vld [vmem:[%s907 + $0x150] sm:$0xff]
        %v4104 = vld [vmem:[%s907 + $0x158] sm:$0xff]
        %v4105 = vld [vmem:[%s907 + $0x160] sm:$0xff]
        %v4106 = vld [vmem:[%s907 + $0x168] sm:$0xff]
        %v4107 = vld [vmem:[%s907 + $0x170] sm:$0xff]
        %v4108 = vld [vmem:[%s907 + $0x178] sm:$0xff]
        %v4109 = vld [vmem:[%s907 + $0x180] sm:$0xff]
        %v4110 = vld [vmem:[%s907 + $0x188] sm:$0xff]
        %v4111 = vld [vmem:[%s907 + $0x190] sm:$0xff]
        %v4112 = vld [vmem:[%s907 + $0x198] sm:$0xff]
        %v4113 = vld [vmem:[%s907 + $0x1a0] sm:$0xff]
        %v4114 = vld [vmem:[%s907 + $0x1a8] sm:$0xff]
        %v4115 = vld [vmem:[%s907 + $0x1b0] sm:$0xff]
        %v4116 = vld [vmem:[%s907 + $0x1b8] sm:$0xff]
        %v4117 = vld [vmem:[%s907 + $0x1c0] sm:$0xff]
        %v4118 = vld [vmem:[%s907 + $0x1c8] sm:$0xff]
        %v4119 = vld [vmem:[%s907 + $0x1d0] sm:$0xff]
        %v4120 = vld [vmem:[%s907 + $0x1d8] sm:$0xff]
        %v4121 = vld [vmem:[%s907 + $0x1e0] sm:$0xff]
        %v4122 = vld [vmem:[%s907 + $0x1e8] sm:$0xff]
        %v4123 = vld [vmem:[%s907 + $0x1f0] sm:$0xff]
        %v4124 = vld [vmem:[%s907 + $0x1f8] sm:$0xff]
        %v4125 = vadd.f32 %v3997, 1e-05
        %v4126 = vadd.f32 %v3998, 1e-05
        %v4127 = vadd.f32 %v3999, 1e-05
        %v4128 = vadd.f32 %v4000, 1e-05
        %v4129 = vadd.f32 %v4001, 1e-05
        %v4130 = vadd.f32 %v4002, 1e-05
        %v4131 = vadd.f32 %v4003, 1e-05
        %v4132 = vadd.f32 %v4004, 1e-05
        %v4133 = vadd.f32 %v4005, 1e-05
        %v4134 = vadd.f32 %v4006, 1e-05
        %v4135 = vadd.f32 %v4007, 1e-05
        %v4136 = vadd.f32 %v4008, 1e-05
        %v4137 = vadd.f32 %v4009, 1e-05
        %v4138 = vadd.f32 %v4010, 1e-05
        %v4139 = vadd.f32 %v4011, 1e-05
        %v4140 = vadd.f32 %v4012, 1e-05
        %v4141 = vadd.f32 %v4013, 1e-05
        %v4142 = vadd.f32 %v4014, 1e-05
        %v4143 = vadd.f32 %v4015, 1e-05
        %v4144 = vadd.f32 %v4016, 1e-05
        %v4145 = vadd.f32 %v4017, 1e-05
        %v4146 = vadd.f32 %v4018, 1e-05
        %v4147 = vadd.f32 %v4019, 1e-05
        %v4148 = vadd.f32 %v4020, 1e-05
        %v4149 = vadd.f32 %v4021, 1e-05
        %v4150 = vadd.f32 %v4022, 1e-05
        %v4151 = vadd.f32 %v4023, 1e-05
        %v4152 = vadd.f32 %v4024, 1e-05
        %v4153 = vadd.f32 %v4025, 1e-05
        %v4154 = vadd.f32 %v4026, 1e-05
        %v4155 = vadd.f32 %v4027, 1e-05
        %v4156 = vadd.f32 %v4028, 1e-05
        %v4157 = vadd.f32 %v4029, 1e-05
        %v4158 = vadd.f32 %v4030, 1e-05
        %v4159 = vadd.f32 %v4031, 1e-05
        %v4160 = vadd.f32 %v4032, 1e-05
        %v4161 = vadd.f32 %v4033, 1e-05
        %v4162 = vadd.f32 %v4034, 1e-05
        %v4163 = vadd.f32 %v4035, 1e-05
        %v4164 = vadd.f32 %v4036, 1e-05
        %v4165 = vadd.f32 %v4037, 1e-05
        %v4166 = vadd.f32 %v4038, 1e-05
        %v4167 = vadd.f32 %v4039, 1e-05
        %v4168 = vadd.f32 %v4040, 1e-05
        %v4169 = vadd.f32 %v4041, 1e-05
        %v4170 = vadd.f32 %v4042, 1e-05
        %v4171 = vadd.f32 %v4043, 1e-05
        %v4172 = vadd.f32 %v4044, 1e-05
        %v4173 = vadd.f32 %v4045, 1e-05
        %v4174 = vadd.f32 %v4046, 1e-05
        %v4175 = vadd.f32 %v4047, 1e-05
        %v4176 = vadd.f32 %v4048, 1e-05
        %v4177 = vadd.f32 %v4049, 1e-05
        %v4178 = vadd.f32 %v4050, 1e-05
        %v4179 = vadd.f32 %v4051, 1e-05
        %v4180 = vadd.f32 %v4052, 1e-05
        %v4181 = vadd.f32 %v4053, 1e-05
        %v4182 = vadd.f32 %v4054, 1e-05
        %v4183 = vadd.f32 %v4055, 1e-05
        %v4184 = vadd.f32 %v4056, 1e-05
        %v4185 = vadd.f32 %v4057, 1e-05
        %v4186 = vadd.f32 %v4058, 1e-05
        %v4187 = vadd.f32 %v4059, 1e-05
        %v4188 = vadd.f32 %v4060, 1e-05
        %v4189 = vrsqrt.pop %v4125
        %v4190 = vrsqrt.pop %v4126
        %v4191 = vrsqrt.pop %v4127
        %v4192 = vrsqrt.pop %v4128
        %v4193 = vrsqrt.pop %v4129
        %v4194 = vrsqrt.pop %v4130
        %v4195 = vrsqrt.pop %v4131
        %v4196 = vrsqrt.pop %v4132
        %v4197 = vrsqrt.pop %v4133
        %v4198 = vrsqrt.pop %v4134
        %v4199 = vrsqrt.pop %v4135
        %v4200 = vrsqrt.pop %v4136
        %v4201 = vrsqrt.pop %v4137
        %v4202 = vrsqrt.pop %v4138
        %v4203 = vrsqrt.pop %v4139
        %v4204 = vrsqrt.pop %v4140
        %v4205 = vrsqrt.pop %v4141
        %v4206 = vrsqrt.pop %v4142
        %v4207 = vrsqrt.pop %v4143
        %v4208 = vrsqrt.pop %v4144
        %v4209 = vrsqrt.pop %v4145
        %v4210 = vrsqrt.pop %v4146
        %v4211 = vrsqrt.pop %v4147
        %v4212 = vrsqrt.pop %v4148
        %v4213 = vrsqrt.pop %v4149
        %v4214 = vrsqrt.pop %v4150
        %v4215 = vrsqrt.pop %v4151
        %v4216 = vrsqrt.pop %v4152
        %v4217 = vrsqrt.pop %v4153
        %v4218 = vrsqrt.pop %v4154
        %v4219 = vrsqrt.pop %v4155
        %v4220 = vrsqrt.pop %v4156
        %v4221 = vrsqrt.pop %v4157
        %v4222 = vrsqrt.pop %v4158
        %v4223 = vrsqrt.pop %v4159
        %v4224 = vrsqrt.pop %v4160
        %v4225 = vrsqrt.pop %v4161
        %v4226 = vrsqrt.pop %v4162
        %v4227 = vrsqrt.pop %v4163
        %v4228 = vrsqrt.pop %v4164
        %v4229 = vrsqrt.pop %v4165
        %v4230 = vrsqrt.pop %v4166
        %v4231 = vrsqrt.pop %v4167
        %v4232 = vrsqrt.pop %v4168
        %v4233 = vrsqrt.pop %v4169
        %v4234 = vrsqrt.pop %v4170
        %v4235 = vrsqrt.pop %v4171
        %v4236 = vrsqrt.pop %v4172
        %v4237 = vrsqrt.pop %v4173
        %v4238 = vrsqrt.pop %v4174
        %v4239 = vrsqrt.pop %v4175
        %v4240 = vrsqrt.pop %v4176
        %v4241 = vrsqrt.pop %v4177
        %v4242 = vrsqrt.pop %v4178
        %v4243 = vrsqrt.pop %v4179
        %v4244 = vrsqrt.pop %v4180
        %v4245 = vrsqrt.pop %v4181
        %v4246 = vrsqrt.pop %v4182
        %v4247 = vrsqrt.pop %v4183
        %v4248 = vrsqrt.pop %v4184
        %v4249 = vrsqrt.pop %v4185
        %v4250 = vrsqrt.pop %v4186
        %v4251 = vrsqrt.pop %v4187
        %v4252 = vrsqrt.pop %v4188
        %v4253 = vmul.f32 %v4061, %v4189
        %v4254 = vmul.f32 %v4062, %v4190
        %v4255 = vmul.f32 %v4063, %v4191
        %v4256 = vmul.f32 %v4064, %v4192
        %v4257 = vmul.f32 %v4065, %v4193
        %v4258 = vmul.f32 %v4066, %v4194
        %v4259 = vmul.f32 %v4067, %v4195
        %v4260 = vmul.f32 %v4068, %v4196
        %v4261 = vmul.f32 %v4069, %v4197
        %v4262 = vmul.f32 %v4070, %v4198
        %v4263 = vmul.f32 %v4071, %v4199
        %v4264 = vmul.f32 %v4072, %v4200
        %v4265 = vmul.f32 %v4073, %v4201
        %v4266 = vmul.f32 %v4074, %v4202
        %v4267 = vmul.f32 %v4075, %v4203
        %v4268 = vmul.f32 %v4076, %v4204
        %v4269 = vmul.f32 %v4077, %v4205
        %v4270 = vmul.f32 %v4078, %v4206
        %v4271 = vmul.f32 %v4079, %v4207
        %v4272 = vmul.f32 %v4080, %v4208
        %v4273 = vmul.f32 %v4081, %v4209
        %v4274 = vmul.f32 %v4082, %v4210
        %v4275 = vmul.f32 %v4083, %v4211
        %v4276 = vmul.f32 %v4084, %v4212
        %v4277 = vmul.f32 %v4085, %v4213
        %v4278 = vmul.f32 %v4086, %v4214
        %v4279 = vmul.f32 %v4087, %v4215
        %v4280 = vmul.f32 %v4088, %v4216
        %v4281 = vmul.f32 %v4089, %v4217
        %v4282 = vmul.f32 %v4090, %v4218
        %v4283 = vmul.f32 %v4091, %v4219
        %v4284 = vmul.f32 %v4092, %v4220
        %v4285 = vmul.f32 %v4093, %v4221
        %v4286 = vmul.f32 %v4094, %v4222
        %v4287 = vmul.f32 %v4095, %v4223
        %v4288 = vmul.f32 %v4096, %v4224
        %v4289 = vmul.f32 %v4097, %v4225
        %v4290 = vmul.f32 %v4098, %v4226
        %v4291 = vmul.f32 %v4099, %v4227
        %v4292 = vmul.f32 %v4100, %v4228
        %v4293 = vmul.f32 %v4101, %v4229
        %v4294 = vmul.f32 %v4102, %v4230
        %v4295 = vmul.f32 %v4103, %v4231
        %v4296 = vmul.f32 %v4104, %v4232
        %v4297 = vmul.f32 %v4105, %v4233
        %v4298 = vmul.f32 %v4106, %v4234
        %v4299 = vmul.f32 %v4107, %v4235
        %v4300 = vmul.f32 %v4108, %v4236
        %v4301 = vmul.f32 %v4109, %v4237
        %v4302 = vmul.f32 %v4110, %v4238
        %v4303 = vmul.f32 %v4111, %v4239
        %v4304 = vmul.f32 %v4112, %v4240
        %v4305 = vmul.f32 %v4113, %v4241
        %v4306 = vmul.f32 %v4114, %v4242
        %v4307 = vmul.f32 %v4115, %v4243
        %v4308 = vmul.f32 %v4116, %v4244
        %v4309 = vmul.f32 %v4117, %v4245
        %v4310 = vmul.f32 %v4118, %v4246
        %v4311 = vmul.f32 %v4119, %v4247
        %v4312 = vmul.f32 %v4120, %v4248
        %v4313 = vmul.f32 %v4121, %v4249
        %v4314 = vmul.f32 %v4122, %v4250
        %v4315 = vmul.f32 %v4123, %v4251
        %v4316 = vmul.f32 %v4124, %v4252
        %4318 = vset.pattern.permute.xlu0 0
        %4319 = vperm.xlu0 %4318, %v4253
        %v4320 = vpop.permute.xlu0 %4319
        %4323 = vset.pattern.permute.xlu0 0
        %4324 = vperm.xlu0 %4323, %v4254
        %v4325 = vpop.permute.xlu0 %4324
        %4328 = vset.pattern.permute.xlu0 0
        %4329 = vperm.xlu0 %4328, %v4255
        %v4330 = vpop.permute.xlu0 %4329
        %4333 = vset.pattern.permute.xlu0 0
        %4334 = vperm.xlu0 %4333, %v4256
        %v4335 = vpop.permute.xlu0 %4334
        %4338 = vset.pattern.permute.xlu0 0
        %4339 = vperm.xlu0 %4338, %v4257
        %v4340 = vpop.permute.xlu0 %4339
        %4343 = vset.pattern.permute.xlu0 0
        %4344 = vperm.xlu0 %4343, %v4258
        %v4345 = vpop.permute.xlu0 %4344
        %4348 = vset.pattern.permute.xlu0 0
        %4349 = vperm.xlu0 %4348, %v4259
        %v4350 = vpop.permute.xlu0 %4349
        %4353 = vset.pattern.permute.xlu0 0
        %4354 = vperm.xlu0 %4353, %v4260
        %v4355 = vpop.permute.xlu0 %4354
        %4358 = vset.pattern.permute.xlu0 0
        %4359 = vperm.xlu0 %4358, %v4261
        %v4360 = vpop.permute.xlu0 %4359
        %4363 = vset.pattern.permute.xlu0 0
        %4364 = vperm.xlu0 %4363, %v4262
        %v4365 = vpop.permute.xlu0 %4364
        %4368 = vset.pattern.permute.xlu0 0
        %4369 = vperm.xlu0 %4368, %v4263
        %v4370 = vpop.permute.xlu0 %4369
        %4373 = vset.pattern.permute.xlu0 0
        %4374 = vperm.xlu0 %4373, %v4264
        %v4375 = vpop.permute.xlu0 %4374
        %4378 = vset.pattern.permute.xlu0 0
        %4379 = vperm.xlu0 %4378, %v4265
        %v4380 = vpop.permute.xlu0 %4379
        %4383 = vset.pattern.permute.xlu0 0
        %4384 = vperm.xlu0 %4383, %v4266
        %v4385 = vpop.permute.xlu0 %4384
        %4388 = vset.pattern.permute.xlu0 0
        %4389 = vperm.xlu0 %4388, %v4267
        %v4390 = vpop.permute.xlu0 %4389
        %4393 = vset.pattern.permute.xlu0 0
        %4394 = vperm.xlu0 %4393, %v4268
        %v4395 = vpop.permute.xlu0 %4394
        %4398 = vset.pattern.permute.xlu0 0
        %4399 = vperm.xlu0 %4398, %v4269
        %v4400 = vpop.permute.xlu0 %4399
        %4403 = vset.pattern.permute.xlu0 0
        %4404 = vperm.xlu0 %4403, %v4270
        %v4405 = vpop.permute.xlu0 %4404
        %4408 = vset.pattern.permute.xlu0 0
        %4409 = vperm.xlu0 %4408, %v4271
        %v4410 = vpop.permute.xlu0 %4409
        %4413 = vset.pattern.permute.xlu0 0
        %4414 = vperm.xlu0 %4413, %v4272
        %v4415 = vpop.permute.xlu0 %4414
        %4418 = vset.pattern.permute.xlu0 0
        %4419 = vperm.xlu0 %4418, %v4273
        %v4420 = vpop.permute.xlu0 %4419
        %4423 = vset.pattern.permute.xlu0 0
        %4424 = vperm.xlu0 %4423, %v4274
        %v4425 = vpop.permute.xlu0 %4424
        %4428 = vset.pattern.permute.xlu0 0
        %4429 = vperm.xlu0 %4428, %v4275
        %v4430 = vpop.permute.xlu0 %4429
        %4433 = vset.pattern.permute.xlu0 0
        %4434 = vperm.xlu0 %4433, %v4276
        %v4435 = vpop.permute.xlu0 %4434
        %4438 = vset.pattern.permute.xlu0 0
        %4439 = vperm.xlu0 %4438, %v4277
        %v4440 = vpop.permute.xlu0 %4439
        %4443 = vset.pattern.permute.xlu0 0
        %4444 = vperm.xlu0 %4443, %v4278
        %v4445 = vpop.permute.xlu0 %4444
        %4448 = vset.pattern.permute.xlu0 0
        %4449 = vperm.xlu0 %4448, %v4279
        %v4450 = vpop.permute.xlu0 %4449
        %4453 = vset.pattern.permute.xlu0 0
        %4454 = vperm.xlu0 %4453, %v4280
        %v4455 = vpop.permute.xlu0 %4454
        %4458 = vset.pattern.permute.xlu0 0
        %4459 = vperm.xlu0 %4458, %v4281
        %v4460 = vpop.permute.xlu0 %4459
        %4463 = vset.pattern.permute.xlu0 0
        %4464 = vperm.xlu0 %4463, %v4282
        %v4465 = vpop.permute.xlu0 %4464
        %4468 = vset.pattern.permute.xlu0 0
        %4469 = vperm.xlu0 %4468, %v4283
        %v4470 = vpop.permute.xlu0 %4469
        %4473 = vset.pattern.permute.xlu0 0
        %4474 = vperm.xlu0 %4473, %v4284
        %v4475 = vpop.permute.xlu0 %4474
        %4478 = vset.pattern.permute.xlu0 0
        %4479 = vperm.xlu0 %4478, %v4285
        %v4480 = vpop.permute.xlu0 %4479
        %4483 = vset.pattern.permute.xlu0 0
        %4484 = vperm.xlu0 %4483, %v4286
        %v4485 = vpop.permute.xlu0 %4484
        %4488 = vset.pattern.permute.xlu0 0
        %4489 = vperm.xlu0 %4488, %v4287
        %v4490 = vpop.permute.xlu0 %4489
        %4493 = vset.pattern.permute.xlu0 0
        %4494 = vperm.xlu0 %4493, %v4288
        %v4495 = vpop.permute.xlu0 %4494
        %4498 = vset.pattern.permute.xlu0 0
        %4499 = vperm.xlu0 %4498, %v4289
        %v4500 = vpop.permute.xlu0 %4499
        %4503 = vset.pattern.permute.xlu0 0
        %4504 = vperm.xlu0 %4503, %v4290
        %v4505 = vpop.permute.xlu0 %4504
        %4508 = vset.pattern.permute.xlu0 0
        %4509 = vperm.xlu0 %4508, %v4291
        %v4510 = vpop.permute.xlu0 %4509
        %4513 = vset.pattern.permute.xlu0 0
        %4514 = vperm.xlu0 %4513, %v4292
        %v4515 = vpop.permute.xlu0 %4514
        %4518 = vset.pattern.permute.xlu0 0
        %4519 = vperm.xlu0 %4518, %v4293
        %v4520 = vpop.permute.xlu0 %4519
        %4523 = vset.pattern.permute.xlu0 0
        %4524 = vperm.xlu0 %4523, %v4294
        %v4525 = vpop.permute.xlu0 %4524
        %4528 = vset.pattern.permute.xlu0 0
        %4529 = vperm.xlu0 %4528, %v4295
        %v4530 = vpop.permute.xlu0 %4529
        %4533 = vset.pattern.permute.xlu0 0
        %4534 = vperm.xlu0 %4533, %v4296
        %v4535 = vpop.permute.xlu0 %4534
        %4538 = vset.pattern.permute.xlu0 0
        %4539 = vperm.xlu0 %4538, %v4297
        %v4540 = vpop.permute.xlu0 %4539
        %4543 = vset.pattern.permute.xlu0 0
        %4544 = vperm.xlu0 %4543, %v4298
        %v4545 = vpop.permute.xlu0 %4544
        %4548 = vset.pattern.permute.xlu0 0
        %4549 = vperm.xlu0 %4548, %v4299
        %v4550 = vpop.permute.xlu0 %4549
        %4553 = vset.pattern.permute.xlu0 0
        %4554 = vperm.xlu0 %4553, %v4300
        %v4555 = vpop.permute.xlu0 %4554
        %4558 = vset.pattern.permute.xlu0 0
        %4559 = vperm.xlu0 %4558, %v4301
        %v4560 = vpop.permute.xlu0 %4559
        %4563 = vset.pattern.permute.xlu0 0
        %4564 = vperm.xlu0 %4563, %v4302
        %v4565 = vpop.permute.xlu0 %4564
        %4568 = vset.pattern.permute.xlu0 0
        %4569 = vperm.xlu0 %4568, %v4303
        %v4570 = vpop.permute.xlu0 %4569
        %4573 = vset.pattern.permute.xlu0 0
        %4574 = vperm.xlu0 %4573, %v4304
        %v4575 = vpop.permute.xlu0 %4574
        %4578 = vset.pattern.permute.xlu0 0
        %4579 = vperm.xlu0 %4578, %v4305
        %v4580 = vpop.permute.xlu0 %4579
        %4583 = vset.pattern.permute.xlu0 0
        %4584 = vperm.xlu0 %4583, %v4306
        %v4585 = vpop.permute.xlu0 %4584
        %4588 = vset.pattern.permute.xlu0 0
        %4589 = vperm.xlu0 %4588, %v4307
        %v4590 = vpop.permute.xlu0 %4589
        %4593 = vset.pattern.permute.xlu0 0
        %4594 = vperm.xlu0 %4593, %v4308
        %v4595 = vpop.permute.xlu0 %4594
        %4598 = vset.pattern.permute.xlu0 0
        %4599 = vperm.xlu0 %4598, %v4309
        %v4600 = vpop.permute.xlu0 %4599
        %4603 = vset.pattern.permute.xlu0 0
        %4604 = vperm.xlu0 %4603, %v4310
        %v4605 = vpop.permute.xlu0 %4604
        %4608 = vset.pattern.permute.xlu0 0
        %4609 = vperm.xlu0 %4608, %v4311
        %v4610 = vpop.permute.xlu0 %4609
        %4613 = vset.pattern.permute.xlu0 0
        %4614 = vperm.xlu0 %4613, %v4312
        %v4615 = vpop.permute.xlu0 %4614
        %4618 = vset.pattern.permute.xlu0 0
        %4619 = vperm.xlu0 %4618, %v4313
        %v4620 = vpop.permute.xlu0 %4619
        %4623 = vset.pattern.permute.xlu0 0
        %4624 = vperm.xlu0 %4623, %v4314
        %v4625 = vpop.permute.xlu0 %4624
        %4628 = vset.pattern.permute.xlu0 0
        %4629 = vperm.xlu0 %4628, %v4315
        %v4630 = vpop.permute.xlu0 %4629
        %4633 = vset.pattern.permute.xlu0 0
        %4634 = vperm.xlu0 %4633, %v4316
        %v4635 = vpop.permute.xlu0 %4634
        %v4637 = vmul.f32 %v3164, %v4320
        %v4638 = vmul.f32 %v3165, %v4320
        %v4639 = vmul.f32 %v3166, %v4325
        %v4640 = vmul.f32 %v3167, %v4325
        %v4641 = vmul.f32 %v3168, %v4330
        %v4642 = vmul.f32 %v3169, %v4330
        %v4643 = vmul.f32 %v3170, %v4335
        %v4644 = vmul.f32 %v3171, %v4335
        %v4645 = vmul.f32 %v3172, %v4340
        %v4646 = vmul.f32 %v3173, %v4340
        %v4647 = vmul.f32 %v3174, %v4345
        %v4648 = vmul.f32 %v3175, %v4345
        %v4649 = vmul.f32 %v3176, %v4350
        %v4650 = vmul.f32 %v3177, %v4350
        %v4651 = vmul.f32 %v3178, %v4355
        %v4652 = vmul.f32 %v3179, %v4355
        %v4653 = vmul.f32 %v3180, %v4360
        %v4654 = vmul.f32 %v3181, %v4360
        %v4655 = vmul.f32 %v3182, %v4365
        %v4656 = vmul.f32 %v3183, %v4365
        %v4657 = vmul.f32 %v3184, %v4370
        %v4658 = vmul.f32 %v3185, %v4370
        %v4659 = vmul.f32 %v3186, %v4375
        %v4660 = vmul.f32 %v3187, %v4375
        %v4661 = vmul.f32 %v3188, %v4380
        %v4662 = vmul.f32 %v3189, %v4380
        %v4663 = vmul.f32 %v3190, %v4385
        %v4664 = vmul.f32 %v3191, %v4385
        %v4665 = vmul.f32 %v3192, %v4390
        %v4666 = vmul.f32 %v3193, %v4390
        %v4667 = vmul.f32 %v3194, %v4395
        %v4668 = vmul.f32 %v3195, %v4395
        %v4669 = vmul.f32 %v3196, %v4400
        %v4670 = vmul.f32 %v3197, %v4400
        %v4671 = vmul.f32 %v3198, %v4405
        %v4672 = vmul.f32 %v3199, %v4405
        %v4673 = vmul.f32 %v3200, %v4410
        %v4674 = vmul.f32 %v3201, %v4410
        %v4675 = vmul.f32 %v3202, %v4415
        %v4676 = vmul.f32 %v3203, %v4415
        %v4677 = vmul.f32 %v3204, %v4420
        %v4678 = vmul.f32 %v3205, %v4420
        %v4679 = vmul.f32 %v3206, %v4425
        %v4680 = vmul.f32 %v3207, %v4425
        %v4681 = vmul.f32 %v3208, %v4430
        %v4682 = vmul.f32 %v3209, %v4430
        %v4683 = vmul.f32 %v3210, %v4435
        %v4684 = vmul.f32 %v3211, %v4435
        %v4685 = vmul.f32 %v3212, %v4440
        %v4686 = vmul.f32 %v3213, %v4440
        %v4687 = vmul.f32 %v3214, %v4445
        %v4688 = vmul.f32 %v3215, %v4445
        %v4689 = vmul.f32 %v3216, %v4450
        %v4690 = vmul.f32 %v3217, %v4450
        %v4691 = vmul.f32 %v3218, %v4455
        %v4692 = vmul.f32 %v3219, %v4455
        %v4693 = vmul.f32 %v3220, %v4460
        %v4694 = vmul.f32 %v3221, %v4460
        %v4695 = vmul.f32 %v3222, %v4465
        %v4696 = vmul.f32 %v3223, %v4465
        %v4697 = vmul.f32 %v3224, %v4470
        %v4698 = vmul.f32 %v3225, %v4470
        %v4699 = vmul.f32 %v3226, %v4475
        %v4700 = vmul.f32 %v3227, %v4475
        %v4701 = vmul.f32 %v3228, %v4480
        %v4702 = vmul.f32 %v3229, %v4480
        %v4703 = vmul.f32 %v3230, %v4485
        %v4704 = vmul.f32 %v3231, %v4485
        %v4705 = vmul.f32 %v3232, %v4490
        %v4706 = vmul.f32 %v3233, %v4490
        %v4707 = vmul.f32 %v3234, %v4495
        %v4708 = vmul.f32 %v3235, %v4495
        %v4709 = vmul.f32 %v3236, %v4500
        %v4710 = vmul.f32 %v3237, %v4500
        %v4711 = vmul.f32 %v3238, %v4505
        %v4712 = vmul.f32 %v3239, %v4505
        %v4713 = vmul.f32 %v3240, %v4510
        %v4714 = vmul.f32 %v3241, %v4510
        %v4715 = vmul.f32 %v3242, %v4515
        %v4716 = vmul.f32 %v3243, %v4515
        %v4717 = vmul.f32 %v3244, %v4520
        %v4718 = vmul.f32 %v3245, %v4520
        %v4719 = vmul.f32 %v3246, %v4525
        %v4720 = vmul.f32 %v3247, %v4525
        %v4721 = vmul.f32 %v3248, %v4530
        %v4722 = vmul.f32 %v3249, %v4530
        %v4723 = vmul.f32 %v3250, %v4535
        %v4724 = vmul.f32 %v3251, %v4535
        %v4725 = vmul.f32 %v3252, %v4540
        %v4726 = vmul.f32 %v3253, %v4540
        %v4727 = vmul.f32 %v3254, %v4545
        %v4728 = vmul.f32 %v3255, %v4545
        %v4729 = vmul.f32 %v3256, %v4550
        %v4730 = vmul.f32 %v3257, %v4550
        %v4731 = vmul.f32 %v3258, %v4555
        %v4732 = vmul.f32 %v3259, %v4555
        %v4733 = vmul.f32 %v3260, %v4560
        %v4734 = vmul.f32 %v3261, %v4560
        %v4735 = vmul.f32 %v3262, %v4565
        %v4736 = vmul.f32 %v3263, %v4565
        %v4737 = vmul.f32 %v3264, %v4570
        %v4738 = vmul.f32 %v3265, %v4570
        %v4739 = vmul.f32 %v3266, %v4575
        %v4740 = vmul.f32 %v3267, %v4575
        %v4741 = vmul.f32 %v3268, %v4580
        %v4742 = vmul.f32 %v3269, %v4580
        %v4743 = vmul.f32 %v3270, %v4585
        %v4744 = vmul.f32 %v3271, %v4585
        %v4745 = vmul.f32 %v3272, %v4590
        %v4746 = vmul.f32 %v3273, %v4590
        %v4747 = vmul.f32 %v3274, %v4595
        %v4748 = vmul.f32 %v3275, %v4595
        %v4749 = vmul.f32 %v3276, %v4600
        %v4750 = vmul.f32 %v3277, %v4600
        %v4751 = vmul.f32 %v3278, %v4605
        %v4752 = vmul.f32 %v3279, %v4605
        %v4753 = vmul.f32 %v3280, %v4610
        %v4754 = vmul.f32 %v3281, %v4610
        %v4755 = vmul.f32 %v3282, %v4615
        %v4756 = vmul.f32 %v3283, %v4615
        %v4757 = vmul.f32 %v3284, %v4620
        %v4758 = vmul.f32 %v3285, %v4620
        %v4759 = vmul.f32 %v3286, %v4625
        %v4760 = vmul.f32 %v3287, %v4625
        %v4761 = vmul.f32 %v3288, %v4630
        %v4762 = vmul.f32 %v3289, %v4630
        %v4763 = vmul.f32 %v3290, %v4635
        %v4764 = vmul.f32 %v3291, %v4635
        %v4765 = vld [vmem:[%s913] sm:$0xff]
        %v4766 = vld [vmem:[%s913 + $0x8] sm:$0xff]
        %v4767 = vld [vmem:[%s913 + $0x10] sm:$0xff]
        %v4768 = vld [vmem:[%s913 + $0x18] sm:$0xff]
        %v4769 = vld [vmem:[%s913 + $0x20] sm:$0xff]
        %v4770 = vld [vmem:[%s913 + $0x28] sm:$0xff]
        %v4771 = vld [vmem:[%s913 + $0x30] sm:$0xff]
        %v4772 = vld [vmem:[%s913 + $0x38] sm:$0xff]
        %v4773 = vld [vmem:[%s913 + $0x40] sm:$0xff]
        %v4774 = vld [vmem:[%s913 + $0x48] sm:$0xff]
        %v4775 = vld [vmem:[%s913 + $0x50] sm:$0xff]
        %v4776 = vld [vmem:[%s913 + $0x58] sm:$0xff]
        %v4777 = vld [vmem:[%s913 + $0x60] sm:$0xff]
        %v4778 = vld [vmem:[%s913 + $0x68] sm:$0xff]
        %v4779 = vld [vmem:[%s913 + $0x70] sm:$0xff]
        %v4780 = vld [vmem:[%s913 + $0x78] sm:$0xff]
        %v4781 = vld [vmem:[%s913 + $0x80] sm:$0xff]
        %v4782 = vld [vmem:[%s913 + $0x88] sm:$0xff]
        %v4783 = vld [vmem:[%s913 + $0x90] sm:$0xff]
        %v4784 = vld [vmem:[%s913 + $0x98] sm:$0xff]
        %v4785 = vld [vmem:[%s913 + $0xa0] sm:$0xff]
        %v4786 = vld [vmem:[%s913 + $0xa8] sm:$0xff]
        %v4787 = vld [vmem:[%s913 + $0xb0] sm:$0xff]
        %v4788 = vld [vmem:[%s913 + $0xb8] sm:$0xff]
        %v4789 = vld [vmem:[%s913 + $0xc0] sm:$0xff]
        %v4790 = vld [vmem:[%s913 + $0xc8] sm:$0xff]
        %v4791 = vld [vmem:[%s913 + $0xd0] sm:$0xff]
        %v4792 = vld [vmem:[%s913 + $0xd8] sm:$0xff]
        %v4793 = vld [vmem:[%s913 + $0xe0] sm:$0xff]
        %v4794 = vld [vmem:[%s913 + $0xe8] sm:$0xff]
        %v4795 = vld [vmem:[%s913 + $0xf0] sm:$0xff]
        %v4796 = vld [vmem:[%s913 + $0xf8] sm:$0xff]
        %v4797 = vld [vmem:[%s913 + $0x100] sm:$0xff]
        %v4798 = vld [vmem:[%s913 + $0x108] sm:$0xff]
        %v4799 = vld [vmem:[%s913 + $0x110] sm:$0xff]
        %v4800 = vld [vmem:[%s913 + $0x118] sm:$0xff]
        %v4801 = vld [vmem:[%s913 + $0x120] sm:$0xff]
        %v4802 = vld [vmem:[%s913 + $0x128] sm:$0xff]
        %v4803 = vld [vmem:[%s913 + $0x130] sm:$0xff]
        %v4804 = vld [vmem:[%s913 + $0x138] sm:$0xff]
        %v4805 = vld [vmem:[%s913 + $0x140] sm:$0xff]
        %v4806 = vld [vmem:[%s913 + $0x148] sm:$0xff]
        %v4807 = vld [vmem:[%s913 + $0x150] sm:$0xff]
        %v4808 = vld [vmem:[%s913 + $0x158] sm:$0xff]
        %v4809 = vld [vmem:[%s913 + $0x160] sm:$0xff]
        %v4810 = vld [vmem:[%s913 + $0x168] sm:$0xff]
        %v4811 = vld [vmem:[%s913 + $0x170] sm:$0xff]
        %v4812 = vld [vmem:[%s913 + $0x178] sm:$0xff]
        %v4813 = vld [vmem:[%s913 + $0x180] sm:$0xff]
        %v4814 = vld [vmem:[%s913 + $0x188] sm:$0xff]
        %v4815 = vld [vmem:[%s913 + $0x190] sm:$0xff]
        %v4816 = vld [vmem:[%s913 + $0x198] sm:$0xff]
        %v4817 = vld [vmem:[%s913 + $0x1a0] sm:$0xff]
        %v4818 = vld [vmem:[%s913 + $0x1a8] sm:$0xff]
        %v4819 = vld [vmem:[%s913 + $0x1b0] sm:$0xff]
        %v4820 = vld [vmem:[%s913 + $0x1b8] sm:$0xff]
        %v4821 = vld [vmem:[%s913 + $0x1c0] sm:$0xff]
        %v4822 = vld [vmem:[%s913 + $0x1c8] sm:$0xff]
        %v4823 = vld [vmem:[%s913 + $0x1d0] sm:$0xff]
        %v4824 = vld [vmem:[%s913 + $0x1d8] sm:$0xff]
        %v4825 = vld [vmem:[%s913 + $0x1e0] sm:$0xff]
        %v4826 = vld [vmem:[%s913 + $0x1e8] sm:$0xff]
        %v4827 = vld [vmem:[%s913 + $0x1f0] sm:$0xff]
        %v4828 = vld [vmem:[%s913 + $0x1f8] sm:$0xff]
        %4830 = vset.pattern.permute.xlu0 0
        %4831 = vperm.xlu0 %4830, %v4765
        %v4832 = vpop.permute.xlu0 %4831
        %4835 = vset.pattern.permute.xlu0 0
        %4836 = vperm.xlu0 %4835, %v4766
        %v4837 = vpop.permute.xlu0 %4836
        %4840 = vset.pattern.permute.xlu0 0
        %4841 = vperm.xlu0 %4840, %v4767
        %v4842 = vpop.permute.xlu0 %4841
        %4845 = vset.pattern.permute.xlu0 0
        %4846 = vperm.xlu0 %4845, %v4768
        %v4847 = vpop.permute.xlu0 %4846
        %4850 = vset.pattern.permute.xlu0 0
        %4851 = vperm.xlu0 %4850, %v4769
        %v4852 = vpop.permute.xlu0 %4851
        %4855 = vset.pattern.permute.xlu0 0
        %4856 = vperm.xlu0 %4855, %v4770
        %v4857 = vpop.permute.xlu0 %4856
        %4860 = vset.pattern.permute.xlu0 0
        %4861 = vperm.xlu0 %4860, %v4771
        %v4862 = vpop.permute.xlu0 %4861
        %4865 = vset.pattern.permute.xlu0 0
        %4866 = vperm.xlu0 %4865, %v4772
        %v4867 = vpop.permute.xlu0 %4866
        %4870 = vset.pattern.permute.xlu0 0
        %4871 = vperm.xlu0 %4870, %v4773
        %v4872 = vpop.permute.xlu0 %4871
        %4875 = vset.pattern.permute.xlu0 0
        %4876 = vperm.xlu0 %4875, %v4774
        %v4877 = vpop.permute.xlu0 %4876
        %4880 = vset.pattern.permute.xlu0 0
        %4881 = vperm.xlu0 %4880, %v4775
        %v4882 = vpop.permute.xlu0 %4881
        %4885 = vset.pattern.permute.xlu0 0
        %4886 = vperm.xlu0 %4885, %v4776
        %v4887 = vpop.permute.xlu0 %4886
        %4890 = vset.pattern.permute.xlu0 0
        %4891 = vperm.xlu0 %4890, %v4777
        %v4892 = vpop.permute.xlu0 %4891
        %4895 = vset.pattern.permute.xlu0 0
        %4896 = vperm.xlu0 %4895, %v4778
        %v4897 = vpop.permute.xlu0 %4896
        %4900 = vset.pattern.permute.xlu0 0
        %4901 = vperm.xlu0 %4900, %v4779
        %v4902 = vpop.permute.xlu0 %4901
        %4905 = vset.pattern.permute.xlu0 0
        %4906 = vperm.xlu0 %4905, %v4780
        %v4907 = vpop.permute.xlu0 %4906
        %4910 = vset.pattern.permute.xlu0 0
        %4911 = vperm.xlu0 %4910, %v4781
        %v4912 = vpop.permute.xlu0 %4911
        %4915 = vset.pattern.permute.xlu0 0
        %4916 = vperm.xlu0 %4915, %v4782
        %v4917 = vpop.permute.xlu0 %4916
        %4920 = vset.pattern.permute.xlu0 0
        %4921 = vperm.xlu0 %4920, %v4783
        %v4922 = vpop.permute.xlu0 %4921
        %4925 = vset.pattern.permute.xlu0 0
        %4926 = vperm.xlu0 %4925, %v4784
        %v4927 = vpop.permute.xlu0 %4926
        %4930 = vset.pattern.permute.xlu0 0
        %4931 = vperm.xlu0 %4930, %v4785
        %v4932 = vpop.permute.xlu0 %4931
        %4935 = vset.pattern.permute.xlu0 0
        %4936 = vperm.xlu0 %4935, %v4786
        %v4937 = vpop.permute.xlu0 %4936
        %4940 = vset.pattern.permute.xlu0 0
        %4941 = vperm.xlu0 %4940, %v4787
        %v4942 = vpop.permute.xlu0 %4941
        %4945 = vset.pattern.permute.xlu0 0
        %4946 = vperm.xlu0 %4945, %v4788
        %v4947 = vpop.permute.xlu0 %4946
        %4950 = vset.pattern.permute.xlu0 0
        %4951 = vperm.xlu0 %4950, %v4789
        %v4952 = vpop.permute.xlu0 %4951
        %4955 = vset.pattern.permute.xlu0 0
        %4956 = vperm.xlu0 %4955, %v4790
        %v4957 = vpop.permute.xlu0 %4956
        %4960 = vset.pattern.permute.xlu0 0
        %4961 = vperm.xlu0 %4960, %v4791
        %v4962 = vpop.permute.xlu0 %4961
        %4965 = vset.pattern.permute.xlu0 0
        %4966 = vperm.xlu0 %4965, %v4792
        %v4967 = vpop.permute.xlu0 %4966
        %4970 = vset.pattern.permute.xlu0 0
        %4971 = vperm.xlu0 %4970, %v4793
        %v4972 = vpop.permute.xlu0 %4971
        %4975 = vset.pattern.permute.xlu0 0
        %4976 = vperm.xlu0 %4975, %v4794
        %v4977 = vpop.permute.xlu0 %4976
        %4980 = vset.pattern.permute.xlu0 0
        %4981 = vperm.xlu0 %4980, %v4795
        %v4982 = vpop.permute.xlu0 %4981
        %4985 = vset.pattern.permute.xlu0 0
        %4986 = vperm.xlu0 %4985, %v4796
        %v4987 = vpop.permute.xlu0 %4986
        %4990 = vset.pattern.permute.xlu0 0
        %4991 = vperm.xlu0 %4990, %v4797
        %v4992 = vpop.permute.xlu0 %4991
        %4995 = vset.pattern.permute.xlu0 0
        %4996 = vperm.xlu0 %4995, %v4798
        %v4997 = vpop.permute.xlu0 %4996
        %5000 = vset.pattern.permute.xlu0 0
        %5001 = vperm.xlu0 %5000, %v4799
        %v5002 = vpop.permute.xlu0 %5001
        %5005 = vset.pattern.permute.xlu0 0
        %5006 = vperm.xlu0 %5005, %v4800
        %v5007 = vpop.permute.xlu0 %5006
        %5010 = vset.pattern.permute.xlu0 0
        %5011 = vperm.xlu0 %5010, %v4801
        %v5012 = vpop.permute.xlu0 %5011
        %5015 = vset.pattern.permute.xlu0 0
        %5016 = vperm.xlu0 %5015, %v4802
        %v5017 = vpop.permute.xlu0 %5016
        %5020 = vset.pattern.permute.xlu0 0
        %5021 = vperm.xlu0 %5020, %v4803
        %v5022 = vpop.permute.xlu0 %5021
        %5025 = vset.pattern.permute.xlu0 0
        %5026 = vperm.xlu0 %5025, %v4804
        %v5027 = vpop.permute.xlu0 %5026
        %5030 = vset.pattern.permute.xlu0 0
        %5031 = vperm.xlu0 %5030, %v4805
        %v5032 = vpop.permute.xlu0 %5031
        %5035 = vset.pattern.permute.xlu0 0
        %5036 = vperm.xlu0 %5035, %v4806
        %v5037 = vpop.permute.xlu0 %5036
        %5040 = vset.pattern.permute.xlu0 0
        %5041 = vperm.xlu0 %5040, %v4807
        %v5042 = vpop.permute.xlu0 %5041
        %5045 = vset.pattern.permute.xlu0 0
        %5046 = vperm.xlu0 %5045, %v4808
        %v5047 = vpop.permute.xlu0 %5046
        %5050 = vset.pattern.permute.xlu0 0
        %5051 = vperm.xlu0 %5050, %v4809
        %v5052 = vpop.permute.xlu0 %5051
        %5055 = vset.pattern.permute.xlu0 0
        %5056 = vperm.xlu0 %5055, %v4810
        %v5057 = vpop.permute.xlu0 %5056
        %5060 = vset.pattern.permute.xlu0 0
        %5061 = vperm.xlu0 %5060, %v4811
        %v5062 = vpop.permute.xlu0 %5061
        %5065 = vset.pattern.permute.xlu0 0
        %5066 = vperm.xlu0 %5065, %v4812
        %v5067 = vpop.permute.xlu0 %5066
        %5070 = vset.pattern.permute.xlu0 0
        %5071 = vperm.xlu0 %5070, %v4813
        %v5072 = vpop.permute.xlu0 %5071
        %5075 = vset.pattern.permute.xlu0 0
        %5076 = vperm.xlu0 %5075, %v4814
        %v5077 = vpop.permute.xlu0 %5076
        %5080 = vset.pattern.permute.xlu0 0
        %5081 = vperm.xlu0 %5080, %v4815
        %v5082 = vpop.permute.xlu0 %5081
        %5085 = vset.pattern.permute.xlu0 0
        %5086 = vperm.xlu0 %5085, %v4816
        %v5087 = vpop.permute.xlu0 %5086
        %5090 = vset.pattern.permute.xlu0 0
        %5091 = vperm.xlu0 %5090, %v4817
        %v5092 = vpop.permute.xlu0 %5091
        %5095 = vset.pattern.permute.xlu0 0
        %5096 = vperm.xlu0 %5095, %v4818
        %v5097 = vpop.permute.xlu0 %5096
        %5100 = vset.pattern.permute.xlu0 0
        %5101 = vperm.xlu0 %5100, %v4819
        %v5102 = vpop.permute.xlu0 %5101
        %5105 = vset.pattern.permute.xlu0 0
        %5106 = vperm.xlu0 %5105, %v4820
        %v5107 = vpop.permute.xlu0 %5106
        %5110 = vset.pattern.permute.xlu0 0
        %5111 = vperm.xlu0 %5110, %v4821
        %v5112 = vpop.permute.xlu0 %5111
        %5115 = vset.pattern.permute.xlu0 0
        %5116 = vperm.xlu0 %5115, %v4822
        %v5117 = vpop.permute.xlu0 %5116
        %5120 = vset.pattern.permute.xlu0 0
        %5121 = vperm.xlu0 %5120, %v4823
        %v5122 = vpop.permute.xlu0 %5121
        %5125 = vset.pattern.permute.xlu0 0
        %5126 = vperm.xlu0 %5125, %v4824
        %v5127 = vpop.permute.xlu0 %5126
        %5130 = vset.pattern.permute.xlu0 0
        %5131 = vperm.xlu0 %5130, %v4825
        %v5132 = vpop.permute.xlu0 %5131
        %5135 = vset.pattern.permute.xlu0 0
        %5136 = vperm.xlu0 %5135, %v4826
        %v5137 = vpop.permute.xlu0 %5136
        %5140 = vset.pattern.permute.xlu0 0
        %5141 = vperm.xlu0 %5140, %v4827
        %v5142 = vpop.permute.xlu0 %5141
        %5145 = vset.pattern.permute.xlu0 0
        %5146 = vperm.xlu0 %5145, %v4828
        %v5147 = vpop.permute.xlu0 %5146
        %v5149 = vadd.f32 %v4637, %v4832
        %v5150 = vadd.f32 %v4638, %v4832
        %v5151 = vadd.f32 %v4639, %v4837
        %v5152 = vadd.f32 %v4640, %v4837
        %v5153 = vadd.f32 %v4641, %v4842
        %v5154 = vadd.f32 %v4642, %v4842
        %v5155 = vadd.f32 %v4643, %v4847
        %v5156 = vadd.f32 %v4644, %v4847
        %v5157 = vadd.f32 %v4645, %v4852
        %v5158 = vadd.f32 %v4646, %v4852
        %v5159 = vadd.f32 %v4647, %v4857
        %v5160 = vadd.f32 %v4648, %v4857
        %v5161 = vadd.f32 %v4649, %v4862
        %v5162 = vadd.f32 %v4650, %v4862
        %v5163 = vadd.f32 %v4651, %v4867
        %v5164 = vadd.f32 %v4652, %v4867
        %v5165 = vadd.f32 %v4653, %v4872
        %v5166 = vadd.f32 %v4654, %v4872
        %v5167 = vadd.f32 %v4655, %v4877
        %v5168 = vadd.f32 %v4656, %v4877
        %v5169 = vadd.f32 %v4657, %v4882
        %v5170 = vadd.f32 %v4658, %v4882
        %v5171 = vadd.f32 %v4659, %v4887
        %v5172 = vadd.f32 %v4660, %v4887
        %v5173 = vadd.f32 %v4661, %v4892
        %v5174 = vadd.f32 %v4662, %v4892
        %v5175 = vadd.f32 %v4663, %v4897
        %v5176 = vadd.f32 %v4664, %v4897
        %v5177 = vadd.f32 %v4665, %v4902
        %v5178 = vadd.f32 %v4666, %v4902
        %v5179 = vadd.f32 %v4667, %v4907
        %v5180 = vadd.f32 %v4668, %v4907
        %v5181 = vadd.f32 %v4669, %v4912
        %v5182 = vadd.f32 %v4670, %v4912
        %v5183 = vadd.f32 %v4671, %v4917
        %v5184 = vadd.f32 %v4672, %v4917
        %v5185 = vadd.f32 %v4673, %v4922
        %v5186 = vadd.f32 %v4674, %v4922
        %v5187 = vadd.f32 %v4675, %v4927
        %v5188 = vadd.f32 %v4676, %v4927
        %v5189 = vadd.f32 %v4677, %v4932
        %v5190 = vadd.f32 %v4678, %v4932
        %v5191 = vadd.f32 %v4679, %v4937
        %v5192 = vadd.f32 %v4680, %v4937
        %v5193 = vadd.f32 %v4681, %v4942
        %v5194 = vadd.f32 %v4682, %v4942
        %v5195 = vadd.f32 %v4683, %v4947
        %v5196 = vadd.f32 %v4684, %v4947
        %v5197 = vadd.f32 %v4685, %v4952
        %v5198 = vadd.f32 %v4686, %v4952
        %v5199 = vadd.f32 %v4687, %v4957
        %v5200 = vadd.f32 %v4688, %v4957
        %v5201 = vadd.f32 %v4689, %v4962
        %v5202 = vadd.f32 %v4690, %v4962
        %v5203 = vadd.f32 %v4691, %v4967
        %v5204 = vadd.f32 %v4692, %v4967
        %v5205 = vadd.f32 %v4693, %v4972
        %v5206 = vadd.f32 %v4694, %v4972
        %v5207 = vadd.f32 %v4695, %v4977
        %v5208 = vadd.f32 %v4696, %v4977
        %v5209 = vadd.f32 %v4697, %v4982
        %v5210 = vadd.f32 %v4698, %v4982
        %v5211 = vadd.f32 %v4699, %v4987
        %v5212 = vadd.f32 %v4700, %v4987
        %v5213 = vadd.f32 %v4701, %v4992
        %v5214 = vadd.f32 %v4702, %v4992
        %v5215 = vadd.f32 %v4703, %v4997
        %v5216 = vadd.f32 %v4704, %v4997
        %v5217 = vadd.f32 %v4705, %v5002
        %v5218 = vadd.f32 %v4706, %v5002
        %v5219 = vadd.f32 %v4707, %v5007
        %v5220 = vadd.f32 %v4708, %v5007
        %v5221 = vadd.f32 %v4709, %v5012
        %v5222 = vadd.f32 %v4710, %v5012
        %v5223 = vadd.f32 %v4711, %v5017
        %v5224 = vadd.f32 %v4712, %v5017
        %v5225 = vadd.f32 %v4713, %v5022
        %v5226 = vadd.f32 %v4714, %v5022
        %v5227 = vadd.f32 %v4715, %v5027
        %v5228 = vadd.f32 %v4716, %v5027
        %v5229 = vadd.f32 %v4717, %v5032
        %v5230 = vadd.f32 %v4718, %v5032
        %v5231 = vadd.f32 %v4719, %v5037
        %v5232 = vadd.f32 %v4720, %v5037
        %v5233 = vadd.f32 %v4721, %v5042
        %v5234 = vadd.f32 %v4722, %v5042
        %v5235 = vadd.f32 %v4723, %v5047
        %v5236 = vadd.f32 %v4724, %v5047
        %v5237 = vadd.f32 %v4725, %v5052
        %v5238 = vadd.f32 %v4726, %v5052
        %v5239 = vadd.f32 %v4727, %v5057
        %v5240 = vadd.f32 %v4728, %v5057
        %v5241 = vadd.f32 %v4729, %v5062
        %v5242 = vadd.f32 %v4730, %v5062
        %v5243 = vadd.f32 %v4731, %v5067
        %v5244 = vadd.f32 %v4732, %v5067
        %v5245 = vadd.f32 %v4733, %v5072
        %v5246 = vadd.f32 %v4734, %v5072
        %v5247 = vadd.f32 %v4735, %v5077
        %v5248 = vadd.f32 %v4736, %v5077
        %v5249 = vadd.f32 %v4737, %v5082
        %v5250 = vadd.f32 %v4738, %v5082
        %v5251 = vadd.f32 %v4739, %v5087
        %v5252 = vadd.f32 %v4740, %v5087
        %v5253 = vadd.f32 %v4741, %v5092
        %v5254 = vadd.f32 %v4742, %v5092
        %v5255 = vadd.f32 %v4743, %v5097
        %v5256 = vadd.f32 %v4744, %v5097
        %v5257 = vadd.f32 %v4745, %v5102
        %v5258 = vadd.f32 %v4746, %v5102
        %v5259 = vadd.f32 %v4747, %v5107
        %v5260 = vadd.f32 %v4748, %v5107
        %v5261 = vadd.f32 %v4749, %v5112
        %v5262 = vadd.f32 %v4750, %v5112
        %v5263 = vadd.f32 %v4751, %v5117
        %v5264 = vadd.f32 %v4752, %v5117
        %v5265 = vadd.f32 %v4753, %v5122
        %v5266 = vadd.f32 %v4754, %v5122
        %v5267 = vadd.f32 %v4755, %v5127
        %v5268 = vadd.f32 %v4756, %v5127
        %v5269 = vadd.f32 %v4757, %v5132
        %v5270 = vadd.f32 %v4758, %v5132
        %v5271 = vadd.f32 %v4759, %v5137
        %v5272 = vadd.f32 %v4760, %v5137
        %v5273 = vadd.f32 %v4761, %v5142
        %v5274 = vadd.f32 %v4762, %v5142
        %v5275 = vadd.f32 %v4763, %v5147
        %v5276 = vadd.f32 %v4764, %v5147
        %v5277 = vld [vmem:[%s894] sm:$0xff]
        %v5278 = vld [vmem:[%s894 + $0x8] sm:$0xff]
        %v5279 = vld [vmem:[%s894 + $0x10] sm:$0xff]
        %v5280 = vld [vmem:[%s894 + $0x18] sm:$0xff]
        %v5281 = vld [vmem:[%s894 + $0x20] sm:$0xff]
        %v5282 = vld [vmem:[%s894 + $0x28] sm:$0xff]
        %v5283 = vld [vmem:[%s894 + $0x30] sm:$0xff]
        %v5284 = vld [vmem:[%s894 + $0x38] sm:$0xff]
        %v5285 = vld [vmem:[%s894 + $0x40] sm:$0xff]
        %v5286 = vld [vmem:[%s894 + $0x48] sm:$0xff]
        %v5287 = vld [vmem:[%s894 + $0x50] sm:$0xff]
        %v5288 = vld [vmem:[%s894 + $0x58] sm:$0xff]
        %v5289 = vld [vmem:[%s894 + $0x60] sm:$0xff]
        %v5290 = vld [vmem:[%s894 + $0x68] sm:$0xff]
        %v5291 = vld [vmem:[%s894 + $0x70] sm:$0xff]
        %v5292 = vld [vmem:[%s894 + $0x78] sm:$0xff]
        %v5293 = vld [vmem:[%s894 + $0x80] sm:$0xff]
        %v5294 = vld [vmem:[%s894 + $0x88] sm:$0xff]
        %v5295 = vld [vmem:[%s894 + $0x90] sm:$0xff]
        %v5296 = vld [vmem:[%s894 + $0x98] sm:$0xff]
        %v5297 = vld [vmem:[%s894 + $0xa0] sm:$0xff]
        %v5298 = vld [vmem:[%s894 + $0xa8] sm:$0xff]
        %v5299 = vld [vmem:[%s894 + $0xb0] sm:$0xff]
        %v5300 = vld [vmem:[%s894 + $0xb8] sm:$0xff]
        %v5301 = vld [vmem:[%s894 + $0xc0] sm:$0xff]
        %v5302 = vld [vmem:[%s894 + $0xc8] sm:$0xff]
        %v5303 = vld [vmem:[%s894 + $0xd0] sm:$0xff]
        %v5304 = vld [vmem:[%s894 + $0xd8] sm:$0xff]
        %v5305 = vld [vmem:[%s894 + $0xe0] sm:$0xff]
        %v5306 = vld [vmem:[%s894 + $0xe8] sm:$0xff]
        %v5307 = vld [vmem:[%s894 + $0xf0] sm:$0xff]
        %v5308 = vld [vmem:[%s894 + $0xf8] sm:$0xff]
        %v5309 = vld [vmem:[%s894 + $0x100] sm:$0xff]
        %v5310 = vld [vmem:[%s894 + $0x108] sm:$0xff]
        %v5311 = vld [vmem:[%s894 + $0x110] sm:$0xff]
        %v5312 = vld [vmem:[%s894 + $0x118] sm:$0xff]
        %v5313 = vld [vmem:[%s894 + $0x120] sm:$0xff]
        %v5314 = vld [vmem:[%s894 + $0x128] sm:$0xff]
        %v5315 = vld [vmem:[%s894 + $0x130] sm:$0xff]
        %v5316 = vld [vmem:[%s894 + $0x138] sm:$0xff]
        %v5317 = vld [vmem:[%s894 + $0x140] sm:$0xff]
        %v5318 = vld [vmem:[%s894 + $0x148] sm:$0xff]
        %v5319 = vld [vmem:[%s894 + $0x150] sm:$0xff]
        %v5320 = vld [vmem:[%s894 + $0x158] sm:$0xff]
        %v5321 = vld [vmem:[%s894 + $0x160] sm:$0xff]
        %v5322 = vld [vmem:[%s894 + $0x168] sm:$0xff]
        %v5323 = vld [vmem:[%s894 + $0x170] sm:$0xff]
        %v5324 = vld [vmem:[%s894 + $0x178] sm:$0xff]
        %v5325 = vld [vmem:[%s894 + $0x180] sm:$0xff]
        %v5326 = vld [vmem:[%s894 + $0x188] sm:$0xff]
        %v5327 = vld [vmem:[%s894 + $0x190] sm:$0xff]
        %v5328 = vld [vmem:[%s894 + $0x198] sm:$0xff]
        %v5329 = vld [vmem:[%s894 + $0x1a0] sm:$0xff]
        %v5330 = vld [vmem:[%s894 + $0x1a8] sm:$0xff]
        %v5331 = vld [vmem:[%s894 + $0x1b0] sm:$0xff]
        %v5332 = vld [vmem:[%s894 + $0x1b8] sm:$0xff]
        %v5333 = vld [vmem:[%s894 + $0x1c0] sm:$0xff]
        %v5334 = vld [vmem:[%s894 + $0x1c8] sm:$0xff]
        %v5335 = vld [vmem:[%s894 + $0x1d0] sm:$0xff]
        %v5336 = vld [vmem:[%s894 + $0x1d8] sm:$0xff]
        %v5337 = vld [vmem:[%s894 + $0x1e0] sm:$0xff]
        %v5338 = vld [vmem:[%s894 + $0x1e8] sm:$0xff]
        %v5339 = vld [vmem:[%s894 + $0x1f0] sm:$0xff]
        %v5340 = vld [vmem:[%s894 + $0x1f8] sm:$0xff]
        %v5341 = vld [vmem:[%s894 + $0x200] sm:$0xff]
        %v5342 = vld [vmem:[%s894 + $0x208] sm:$0xff]
        %v5343 = vld [vmem:[%s894 + $0x210] sm:$0xff]
        %v5344 = vld [vmem:[%s894 + $0x218] sm:$0xff]
        %v5345 = vld [vmem:[%s894 + $0x220] sm:$0xff]
        %v5346 = vld [vmem:[%s894 + $0x228] sm:$0xff]
        %v5347 = vld [vmem:[%s894 + $0x230] sm:$0xff]
        %v5348 = vld [vmem:[%s894 + $0x238] sm:$0xff]
        %v5349 = vld [vmem:[%s894 + $0x240] sm:$0xff]
        %v5350 = vld [vmem:[%s894 + $0x248] sm:$0xff]
        %v5351 = vld [vmem:[%s894 + $0x250] sm:$0xff]
        %v5352 = vld [vmem:[%s894 + $0x258] sm:$0xff]
        %v5353 = vld [vmem:[%s894 + $0x260] sm:$0xff]
        %v5354 = vld [vmem:[%s894 + $0x268] sm:$0xff]
        %v5355 = vld [vmem:[%s894 + $0x270] sm:$0xff]
        %v5356 = vld [vmem:[%s894 + $0x278] sm:$0xff]
        %v5357 = vld [vmem:[%s894 + $0x280] sm:$0xff]
        %v5358 = vld [vmem:[%s894 + $0x288] sm:$0xff]
        %v5359 = vld [vmem:[%s894 + $0x290] sm:$0xff]
        %v5360 = vld [vmem:[%s894 + $0x298] sm:$0xff]
        %v5361 = vld [vmem:[%s894 + $0x2a0] sm:$0xff]
        %v5362 = vld [vmem:[%s894 + $0x2a8] sm:$0xff]
        %v5363 = vld [vmem:[%s894 + $0x2b0] sm:$0xff]
        %v5364 = vld [vmem:[%s894 + $0x2b8] sm:$0xff]
        %v5365 = vld [vmem:[%s894 + $0x2c0] sm:$0xff]
        %v5366 = vld [vmem:[%s894 + $0x2c8] sm:$0xff]
        %v5367 = vld [vmem:[%s894 + $0x2d0] sm:$0xff]
        %v5368 = vld [vmem:[%s894 + $0x2d8] sm:$0xff]
        %v5369 = vld [vmem:[%s894 + $0x2e0] sm:$0xff]
        %v5370 = vld [vmem:[%s894 + $0x2e8] sm:$0xff]
        %v5371 = vld [vmem:[%s894 + $0x2f0] sm:$0xff]
        %v5372 = vld [vmem:[%s894 + $0x2f8] sm:$0xff]
        %v5373 = vld [vmem:[%s894 + $0x300] sm:$0xff]
        %v5374 = vld [vmem:[%s894 + $0x308] sm:$0xff]
        %v5375 = vld [vmem:[%s894 + $0x310] sm:$0xff]
        %v5376 = vld [vmem:[%s894 + $0x318] sm:$0xff]
        %v5377 = vld [vmem:[%s894 + $0x320] sm:$0xff]
        %v5378 = vld [vmem:[%s894 + $0x328] sm:$0xff]
        %v5379 = vld [vmem:[%s894 + $0x330] sm:$0xff]
        %v5380 = vld [vmem:[%s894 + $0x338] sm:$0xff]
        %v5381 = vld [vmem:[%s894 + $0x340] sm:$0xff]
        %v5382 = vld [vmem:[%s894 + $0x348] sm:$0xff]
        %v5383 = vld [vmem:[%s894 + $0x350] sm:$0xff]
        %v5384 = vld [vmem:[%s894 + $0x358] sm:$0xff]
        %v5385 = vld [vmem:[%s894 + $0x360] sm:$0xff]
        %v5386 = vld [vmem:[%s894 + $0x368] sm:$0xff]
        %v5387 = vld [vmem:[%s894 + $0x370] sm:$0xff]
        %v5388 = vld [vmem:[%s894 + $0x378] sm:$0xff]
        %v5389 = vld [vmem:[%s894 + $0x380] sm:$0xff]
        %v5390 = vld [vmem:[%s894 + $0x388] sm:$0xff]
        %v5391 = vld [vmem:[%s894 + $0x390] sm:$0xff]
        %v5392 = vld [vmem:[%s894 + $0x398] sm:$0xff]
        %v5393 = vld [vmem:[%s894 + $0x3a0] sm:$0xff]
        %v5394 = vld [vmem:[%s894 + $0x3a8] sm:$0xff]
        %v5395 = vld [vmem:[%s894 + $0x3b0] sm:$0xff]
        %v5396 = vld [vmem:[%s894 + $0x3b8] sm:$0xff]
        %v5397 = vld [vmem:[%s894 + $0x3c0] sm:$0xff]
        %v5398 = vld [vmem:[%s894 + $0x3c8] sm:$0xff]
        %v5399 = vld [vmem:[%s894 + $0x3d0] sm:$0xff]
        %v5400 = vld [vmem:[%s894 + $0x3d8] sm:$0xff]
        %v5401 = vld [vmem:[%s894 + $0x3e0] sm:$0xff]
        %v5402 = vld [vmem:[%s894 + $0x3e8] sm:$0xff]
        %v5403 = vld [vmem:[%s894 + $0x3f0] sm:$0xff]
        %v5404 = vld [vmem:[%s894 + $0x3f8] sm:$0xff]
        %v5405 = vadd.f32 %v5149, %v5277
        %v5406 = vadd.f32 %v5150, %v5278
        %v5407 = vadd.f32 %v5151, %v5279
        %v5408 = vadd.f32 %v5152, %v5280
        %v5409 = vadd.f32 %v5153, %v5281
        %v5410 = vadd.f32 %v5154, %v5282
        %v5411 = vadd.f32 %v5155, %v5283
        %v5412 = vadd.f32 %v5156, %v5284
        %v5413 = vadd.f32 %v5157, %v5285
        %v5414 = vadd.f32 %v5158, %v5286
        %v5415 = vadd.f32 %v5159, %v5287
        %v5416 = vadd.f32 %v5160, %v5288
        %v5417 = vadd.f32 %v5161, %v5289
        %v5418 = vadd.f32 %v5162, %v5290
        %v5419 = vadd.f32 %v5163, %v5291
        %v5420 = vadd.f32 %v5164, %v5292
        %v5421 = vadd.f32 %v5165, %v5293
        %v5422 = vadd.f32 %v5166, %v5294
        %v5423 = vadd.f32 %v5167, %v5295
        %v5424 = vadd.f32 %v5168, %v5296
        %v5425 = vadd.f32 %v5169, %v5297
        %v5426 = vadd.f32 %v5170, %v5298
        %v5427 = vadd.f32 %v5171, %v5299
        %v5428 = vadd.f32 %v5172, %v5300
        %v5429 = vadd.f32 %v5173, %v5301
        %v5430 = vadd.f32 %v5174, %v5302
        %v5431 = vadd.f32 %v5175, %v5303
        %v5432 = vadd.f32 %v5176, %v5304
        %v5433 = vadd.f32 %v5177, %v5305
        %v5434 = vadd.f32 %v5178, %v5306
        %v5435 = vadd.f32 %v5179, %v5307
        %v5436 = vadd.f32 %v5180, %v5308
        %v5437 = vadd.f32 %v5181, %v5309
        %v5438 = vadd.f32 %v5182, %v5310
        %v5439 = vadd.f32 %v5183, %v5311
        %v5440 = vadd.f32 %v5184, %v5312
        %v5441 = vadd.f32 %v5185, %v5313
        %v5442 = vadd.f32 %v5186, %v5314
        %v5443 = vadd.f32 %v5187, %v5315
        %v5444 = vadd.f32 %v5188, %v5316
        %v5445 = vadd.f32 %v5189, %v5317
        %v5446 = vadd.f32 %v5190, %v5318
        %v5447 = vadd.f32 %v5191, %v5319
        %v5448 = vadd.f32 %v5192, %v5320
        %v5449 = vadd.f32 %v5193, %v5321
        %v5450 = vadd.f32 %v5194, %v5322
        %v5451 = vadd.f32 %v5195, %v5323
        %v5452 = vadd.f32 %v5196, %v5324
        %v5453 = vadd.f32 %v5197, %v5325
        %v5454 = vadd.f32 %v5198, %v5326
        %v5455 = vadd.f32 %v5199, %v5327
        %v5456 = vadd.f32 %v5200, %v5328
        %v5457 = vadd.f32 %v5201, %v5329
        %v5458 = vadd.f32 %v5202, %v5330
        %v5459 = vadd.f32 %v5203, %v5331
        %v5460 = vadd.f32 %v5204, %v5332
        %v5461 = vadd.f32 %v5205, %v5333
        %v5462 = vadd.f32 %v5206, %v5334
        %v5463 = vadd.f32 %v5207, %v5335
        %v5464 = vadd.f32 %v5208, %v5336
        %v5465 = vadd.f32 %v5209, %v5337
        %v5466 = vadd.f32 %v5210, %v5338
        %v5467 = vadd.f32 %v5211, %v5339
        %v5468 = vadd.f32 %v5212, %v5340
        %v5469 = vadd.f32 %v5213, %v5341
        %v5470 = vadd.f32 %v5214, %v5342
        %v5471 = vadd.f32 %v5215, %v5343
        %v5472 = vadd.f32 %v5216, %v5344
        %v5473 = vadd.f32 %v5217, %v5345
        %v5474 = vadd.f32 %v5218, %v5346
        %v5475 = vadd.f32 %v5219, %v5347
        %v5476 = vadd.f32 %v5220, %v5348
        %v5477 = vadd.f32 %v5221, %v5349
        %v5478 = vadd.f32 %v5222, %v5350
        %v5479 = vadd.f32 %v5223, %v5351
        %v5480 = vadd.f32 %v5224, %v5352
        %v5481 = vadd.f32 %v5225, %v5353
        %v5482 = vadd.f32 %v5226, %v5354
        %v5483 = vadd.f32 %v5227, %v5355
        %v5484 = vadd.f32 %v5228, %v5356
        %v5485 = vadd.f32 %v5229, %v5357
        %v5486 = vadd.f32 %v5230, %v5358
        %v5487 = vadd.f32 %v5231, %v5359
        %v5488 = vadd.f32 %v5232, %v5360
        %v5489 = vadd.f32 %v5233, %v5361
        %v5490 = vadd.f32 %v5234, %v5362
        %v5491 = vadd.f32 %v5235, %v5363
        %v5492 = vadd.f32 %v5236, %v5364
        %v5493 = vadd.f32 %v5237, %v5365
        %v5494 = vadd.f32 %v5238, %v5366
        %v5495 = vadd.f32 %v5239, %v5367
        %v5496 = vadd.f32 %v5240, %v5368
        %v5497 = vadd.f32 %v5241, %v5369
        %v5498 = vadd.f32 %v5242, %v5370
        %v5499 = vadd.f32 %v5243, %v5371
        %v5500 = vadd.f32 %v5244, %v5372
        %v5501 = vadd.f32 %v5245, %v5373
        %v5502 = vadd.f32 %v5246, %v5374
        %v5503 = vadd.f32 %v5247, %v5375
        %v5504 = vadd.f32 %v5248, %v5376
        %v5505 = vadd.f32 %v5249, %v5377
        %v5506 = vadd.f32 %v5250, %v5378
        %v5507 = vadd.f32 %v5251, %v5379
        %v5508 = vadd.f32 %v5252, %v5380
        %v5509 = vadd.f32 %v5253, %v5381
        %v5510 = vadd.f32 %v5254, %v5382
        %v5511 = vadd.f32 %v5255, %v5383
        %v5512 = vadd.f32 %v5256, %v5384
        %v5513 = vadd.f32 %v5257, %v5385
        %v5514 = vadd.f32 %v5258, %v5386
        %v5515 = vadd.f32 %v5259, %v5387
        %v5516 = vadd.f32 %v5260, %v5388
        %v5517 = vadd.f32 %v5261, %v5389
        %v5518 = vadd.f32 %v5262, %v5390
        %v5519 = vadd.f32 %v5263, %v5391
        %v5520 = vadd.f32 %v5264, %v5392
        %v5521 = vadd.f32 %v5265, %v5393
        %v5522 = vadd.f32 %v5266, %v5394
        %v5523 = vadd.f32 %v5267, %v5395
        %v5524 = vadd.f32 %v5268, %v5396
        %v5525 = vadd.f32 %v5269, %v5397
        %v5526 = vadd.f32 %v5270, %v5398
        %v5527 = vadd.f32 %v5271, %v5399
        %v5528 = vadd.f32 %v5272, %v5400
        %v5529 = vadd.f32 %v5273, %v5401
        %v5530 = vadd.f32 %v5274, %v5402
        %v5531 = vadd.f32 %v5275, %v5403
        %v5532 = vadd.f32 %v5276, %v5404
        %v5533 = vmax.f32 %v5405, 0.0
        %v5534 = vmax.f32 %v5406, 0.0
        %v5535 = vmax.f32 %v5407, 0.0
        %v5536 = vmax.f32 %v5408, 0.0
        %v5537 = vmax.f32 %v5409, 0.0
        %v5538 = vmax.f32 %v5410, 0.0
        %v5539 = vmax.f32 %v5411, 0.0
        %v5540 = vmax.f32 %v5412, 0.0
        %v5541 = vmax.f32 %v5413, 0.0
        %v5542 = vmax.f32 %v5414, 0.0
        %v5543 = vmax.f32 %v5415, 0.0
        %v5544 = vmax.f32 %v5416, 0.0
        %v5545 = vmax.f32 %v5417, 0.0
        %v5546 = vmax.f32 %v5418, 0.0
        %v5547 = vmax.f32 %v5419, 0.0
        %v5548 = vmax.f32 %v5420, 0.0
        %v5549 = vmax.f32 %v5421, 0.0
        %v5550 = vmax.f32 %v5422, 0.0
        %v5551 = vmax.f32 %v5423, 0.0
        %v5552 = vmax.f32 %v5424, 0.0
        %v5553 = vmax.f32 %v5425, 0.0
        %v5554 = vmax.f32 %v5426, 0.0
        %v5555 = vmax.f32 %v5427, 0.0
        %v5556 = vmax.f32 %v5428, 0.0
        %v5557 = vmax.f32 %v5429, 0.0
        %v5558 = vmax.f32 %v5430, 0.0
        %v5559 = vmax.f32 %v5431, 0.0
        %v5560 = vmax.f32 %v5432, 0.0
        %v5561 = vmax.f32 %v5433, 0.0
        %v5562 = vmax.f32 %v5434, 0.0
        %v5563 = vmax.f32 %v5435, 0.0
        %v5564 = vmax.f32 %v5436, 0.0
        %v5565 = vmax.f32 %v5437, 0.0
        %v5566 = vmax.f32 %v5438, 0.0
        %v5567 = vmax.f32 %v5439, 0.0
        %v5568 = vmax.f32 %v5440, 0.0
        %v5569 = vmax.f32 %v5441, 0.0
        %v5570 = vmax.f32 %v5442, 0.0
        %v5571 = vmax.f32 %v5443, 0.0
        %v5572 = vmax.f32 %v5444, 0.0
        %v5573 = vmax.f32 %v5445, 0.0
        %v5574 = vmax.f32 %v5446, 0.0
        %v5575 = vmax.f32 %v5447, 0.0
        %v5576 = vmax.f32 %v5448, 0.0
        %v5577 = vmax.f32 %v5449, 0.0
        %v5578 = vmax.f32 %v5450, 0.0
        %v5579 = vmax.f32 %v5451, 0.0
        %v5580 = vmax.f32 %v5452, 0.0
        %v5581 = vmax.f32 %v5453, 0.0
        %v5582 = vmax.f32 %v5454, 0.0
        %v5583 = vmax.f32 %v5455, 0.0
        %v5584 = vmax.f32 %v5456, 0.0
        %v5585 = vmax.f32 %v5457, 0.0
        %v5586 = vmax.f32 %v5458, 0.0
        %v5587 = vmax.f32 %v5459, 0.0
        %v5588 = vmax.f32 %v5460, 0.0
        %v5589 = vmax.f32 %v5461, 0.0
        %v5590 = vmax.f32 %v5462, 0.0
        %v5591 = vmax.f32 %v5463, 0.0
        %v5592 = vmax.f32 %v5464, 0.0
        %v5593 = vmax.f32 %v5465, 0.0
        %v5594 = vmax.f32 %v5466, 0.0
        %v5595 = vmax.f32 %v5467, 0.0
        %v5596 = vmax.f32 %v5468, 0.0
        %v5597 = vmax.f32 %v5469, 0.0
        %v5598 = vmax.f32 %v5470, 0.0
        %v5599 = vmax.f32 %v5471, 0.0
        %v5600 = vmax.f32 %v5472, 0.0
        %v5601 = vmax.f32 %v5473, 0.0
        %v5602 = vmax.f32 %v5474, 0.0
        %v5603 = vmax.f32 %v5475, 0.0
        %v5604 = vmax.f32 %v5476, 0.0
        %v5605 = vmax.f32 %v5477, 0.0
        %v5606 = vmax.f32 %v5478, 0.0
        %v5607 = vmax.f32 %v5479, 0.0
        %v5608 = vmax.f32 %v5480, 0.0
        %v5609 = vmax.f32 %v5481, 0.0
        %v5610 = vmax.f32 %v5482, 0.0
        %v5611 = vmax.f32 %v5483, 0.0
        %v5612 = vmax.f32 %v5484, 0.0
        %v5613 = vmax.f32 %v5485, 0.0
        %v5614 = vmax.f32 %v5486, 0.0
        %v5615 = vmax.f32 %v5487, 0.0
        %v5616 = vmax.f32 %v5488, 0.0
        %v5617 = vmax.f32 %v5489, 0.0
        %v5618 = vmax.f32 %v5490, 0.0
        %v5619 = vmax.f32 %v5491, 0.0
        %v5620 = vmax.f32 %v5492, 0.0
        %v5621 = vmax.f32 %v5493, 0.0
        %v5622 = vmax.f32 %v5494, 0.0
        %v5623 = vmax.f32 %v5495, 0.0
        %v5624 = vmax.f32 %v5496, 0.0
        %v5625 = vmax.f32 %v5497, 0.0
        %v5626 = vmax.f32 %v5498, 0.0
        %v5627 = vmax.f32 %v5499, 0.0
        %v5628 = vmax.f32 %v5500, 0.0
        %v5629 = vmax.f32 %v5501, 0.0
        %v5630 = vmax.f32 %v5502, 0.0
        %v5631 = vmax.f32 %v5503, 0.0
        %v5632 = vmax.f32 %v5504, 0.0
        %v5633 = vmax.f32 %v5505, 0.0
        %v5634 = vmax.f32 %v5506, 0.0
        %v5635 = vmax.f32 %v5507, 0.0
        %v5636 = vmax.f32 %v5508, 0.0
        %v5637 = vmax.f32 %v5509, 0.0
        %v5638 = vmax.f32 %v5510, 0.0
        %v5639 = vmax.f32 %v5511, 0.0
        %v5640 = vmax.f32 %v5512, 0.0
        %v5641 = vmax.f32 %v5513, 0.0
        %v5642 = vmax.f32 %v5514, 0.0
        %v5643 = vmax.f32 %v5515, 0.0
        %v5644 = vmax.f32 %v5516, 0.0
        %v5645 = vmax.f32 %v5517, 0.0
        %v5646 = vmax.f32 %v5518, 0.0
        %v5647 = vmax.f32 %v5519, 0.0
        %v5648 = vmax.f32 %v5520, 0.0
        %v5649 = vmax.f32 %v5521, 0.0
        %v5650 = vmax.f32 %v5522, 0.0
        %v5651 = vmax.f32 %v5523, 0.0
        %v5652 = vmax.f32 %v5524, 0.0
        %v5653 = vmax.f32 %v5525, 0.0
        %v5654 = vmax.f32 %v5526, 0.0
        %v5655 = vmax.f32 %v5527, 0.0
        %v5656 = vmax.f32 %v5528, 0.0
        %v5657 = vmax.f32 %v5529, 0.0
        %v5658 = vmax.f32 %v5530, 0.0
        %v5659 = vmax.f32 %v5531, 0.0
        %v5660 = vmax.f32 %v5532, 0.0
        %v5661 = vld [vmem:[%s841] sm:$0xff]
        %v5662 = vld [vmem:[%s841 + $0x8] sm:$0xff]
        %v5663 = vld [vmem:[%s841 + $0x10] sm:$0xff]
        %v5664 = vld [vmem:[%s841 + $0x18] sm:$0xff]
        %v5665 = vld [vmem:[%s841 + $0x20] sm:$0xff]
        %v5666 = vld [vmem:[%s841 + $0x28] sm:$0xff]
        %v5667 = vld [vmem:[%s841 + $0x30] sm:$0xff]
        %v5668 = vld [vmem:[%s841 + $0x38] sm:$0xff]
        %v5669 = vld [vmem:[%s841 + $0x40] sm:$0xff]
        %v5670 = vld [vmem:[%s841 + $0x48] sm:$0xff]
        %v5671 = vld [vmem:[%s841 + $0x50] sm:$0xff]
        %v5672 = vld [vmem:[%s841 + $0x58] sm:$0xff]
        %v5673 = vld [vmem:[%s841 + $0x60] sm:$0xff]
        %v5674 = vld [vmem:[%s841 + $0x68] sm:$0xff]
        %v5675 = vld [vmem:[%s841 + $0x70] sm:$0xff]
        %v5676 = vld [vmem:[%s841 + $0x78] sm:$0xff]
        %v5677 = vld [vmem:[%s841 + $0x80] sm:$0xff]
        %v5678 = vld [vmem:[%s841 + $0x88] sm:$0xff]
        %v5679 = vld [vmem:[%s841 + $0x90] sm:$0xff]
        %v5680 = vld [vmem:[%s841 + $0x98] sm:$0xff]
        %v5681 = vld [vmem:[%s841 + $0xa0] sm:$0xff]
        %v5682 = vld [vmem:[%s841 + $0xa8] sm:$0xff]
        %v5683 = vld [vmem:[%s841 + $0xb0] sm:$0xff]
        %v5684 = vld [vmem:[%s841 + $0xb8] sm:$0xff]
        %v5685 = vld [vmem:[%s841 + $0xc0] sm:$0xff]
        %v5686 = vld [vmem:[%s841 + $0xc8] sm:$0xff]
        %v5687 = vld [vmem:[%s841 + $0xd0] sm:$0xff]
        %v5688 = vld [vmem:[%s841 + $0xd8] sm:$0xff]
        %v5689 = vld [vmem:[%s841 + $0xe0] sm:$0xff]
        %v5690 = vld [vmem:[%s841 + $0xe8] sm:$0xff]
        %v5691 = vld [vmem:[%s841 + $0xf0] sm:$0xff]
        %v5692 = vld [vmem:[%s841 + $0xf8] sm:$0xff]
        %v5693 = vld [vmem:[%s841 + $0x100] sm:$0xff]
        %v5694 = vld [vmem:[%s841 + $0x108] sm:$0xff]
        %v5695 = vld [vmem:[%s841 + $0x110] sm:$0xff]
        %v5696 = vld [vmem:[%s841 + $0x118] sm:$0xff]
        %v5697 = vld [vmem:[%s841 + $0x120] sm:$0xff]
        %v5698 = vld [vmem:[%s841 + $0x128] sm:$0xff]
        %v5699 = vld [vmem:[%s841 + $0x130] sm:$0xff]
        %v5700 = vld [vmem:[%s841 + $0x138] sm:$0xff]
        %v5701 = vld [vmem:[%s841 + $0x140] sm:$0xff]
        %v5702 = vld [vmem:[%s841 + $0x148] sm:$0xff]
        %v5703 = vld [vmem:[%s841 + $0x150] sm:$0xff]
        %v5704 = vld [vmem:[%s841 + $0x158] sm:$0xff]
        %v5705 = vld [vmem:[%s841 + $0x160] sm:$0xff]
        %v5706 = vld [vmem:[%s841 + $0x168] sm:$0xff]
        %v5707 = vld [vmem:[%s841 + $0x170] sm:$0xff]
        %v5708 = vld [vmem:[%s841 + $0x178] sm:$0xff]
        %v5709 = vld [vmem:[%s841 + $0x180] sm:$0xff]
        %v5710 = vld [vmem:[%s841 + $0x188] sm:$0xff]
        %v5711 = vld [vmem:[%s841 + $0x190] sm:$0xff]
        %v5712 = vld [vmem:[%s841 + $0x198] sm:$0xff]
        %v5713 = vld [vmem:[%s841 + $0x1a0] sm:$0xff]
        %v5714 = vld [vmem:[%s841 + $0x1a8] sm:$0xff]
        %v5715 = vld [vmem:[%s841 + $0x1b0] sm:$0xff]
        %v5716 = vld [vmem:[%s841 + $0x1b8] sm:$0xff]
        %v5717 = vld [vmem:[%s841 + $0x1c0] sm:$0xff]
        %v5718 = vld [vmem:[%s841 + $0x1c8] sm:$0xff]
        %v5719 = vld [vmem:[%s841 + $0x1d0] sm:$0xff]
        %v5720 = vld [vmem:[%s841 + $0x1d8] sm:$0xff]
        %v5721 = vld [vmem:[%s841 + $0x1e0] sm:$0xff]
        %v5722 = vld [vmem:[%s841 + $0x1e8] sm:$0xff]
        %v5723 = vld [vmem:[%s841 + $0x1f0] sm:$0xff]
        %v5724 = vld [vmem:[%s841 + $0x1f8] sm:$0xff]
        %v5725 = vld [vmem:[%s841 + $0x200] sm:$0xff]
        %v5726 = vld [vmem:[%s841 + $0x208] sm:$0xff]
        %v5727 = vld [vmem:[%s841 + $0x210] sm:$0xff]
        %v5728 = vld [vmem:[%s841 + $0x218] sm:$0xff]
        %v5729 = vld [vmem:[%s841 + $0x220] sm:$0xff]
        %v5730 = vld [vmem:[%s841 + $0x228] sm:$0xff]
        %v5731 = vld [vmem:[%s841 + $0x230] sm:$0xff]
        %v5732 = vld [vmem:[%s841 + $0x238] sm:$0xff]
        %v5733 = vld [vmem:[%s841 + $0x240] sm:$0xff]
        %v5734 = vld [vmem:[%s841 + $0x248] sm:$0xff]
        %v5735 = vld [vmem:[%s841 + $0x250] sm:$0xff]
        %v5736 = vld [vmem:[%s841 + $0x258] sm:$0xff]
        %v5737 = vld [vmem:[%s841 + $0x260] sm:$0xff]
        %v5738 = vld [vmem:[%s841 + $0x268] sm:$0xff]
        %v5739 = vld [vmem:[%s841 + $0x270] sm:$0xff]
        %v5740 = vld [vmem:[%s841 + $0x278] sm:$0xff]
        %v5741 = vld [vmem:[%s841 + $0x280] sm:$0xff]
        %v5742 = vld [vmem:[%s841 + $0x288] sm:$0xff]
        %v5743 = vld [vmem:[%s841 + $0x290] sm:$0xff]
        %v5744 = vld [vmem:[%s841 + $0x298] sm:$0xff]
        %v5745 = vld [vmem:[%s841 + $0x2a0] sm:$0xff]
        %v5746 = vld [vmem:[%s841 + $0x2a8] sm:$0xff]
        %v5747 = vld [vmem:[%s841 + $0x2b0] sm:$0xff]
        %v5748 = vld [vmem:[%s841 + $0x2b8] sm:$0xff]
        %v5749 = vld [vmem:[%s841 + $0x2c0] sm:$0xff]
        %v5750 = vld [vmem:[%s841 + $0x2c8] sm:$0xff]
        %v5751 = vld [vmem:[%s841 + $0x2d0] sm:$0xff]
        %v5752 = vld [vmem:[%s841 + $0x2d8] sm:$0xff]
        %v5753 = vld [vmem:[%s841 + $0x2e0] sm:$0xff]
        %v5754 = vld [vmem:[%s841 + $0x2e8] sm:$0xff]
        %v5755 = vld [vmem:[%s841 + $0x2f0] sm:$0xff]
        %v5756 = vld [vmem:[%s841 + $0x2f8] sm:$0xff]
        %v5757 = vld [vmem:[%s841 + $0x300] sm:$0xff]
        %v5758 = vld [vmem:[%s841 + $0x308] sm:$0xff]
        %v5759 = vld [vmem:[%s841 + $0x310] sm:$0xff]
        %v5760 = vld [vmem:[%s841 + $0x318] sm:$0xff]
        %v5761 = vld [vmem:[%s841 + $0x320] sm:$0xff]
        %v5762 = vld [vmem:[%s841 + $0x328] sm:$0xff]
        %v5763 = vld [vmem:[%s841 + $0x330] sm:$0xff]
        %v5764 = vld [vmem:[%s841 + $0x338] sm:$0xff]
        %v5765 = vld [vmem:[%s841 + $0x340] sm:$0xff]
        %v5766 = vld [vmem:[%s841 + $0x348] sm:$0xff]
        %v5767 = vld [vmem:[%s841 + $0x350] sm:$0xff]
        %v5768 = vld [vmem:[%s841 + $0x358] sm:$0xff]
        %v5769 = vld [vmem:[%s841 + $0x360] sm:$0xff]
        %v5770 = vld [vmem:[%s841 + $0x368] sm:$0xff]
        %v5771 = vld [vmem:[%s841 + $0x370] sm:$0xff]
        %v5772 = vld [vmem:[%s841 + $0x378] sm:$0xff]
        %v5773 = vld [vmem:[%s841 + $0x380] sm:$0xff]
        %v5774 = vld [vmem:[%s841 + $0x388] sm:$0xff]
        %v5775 = vld [vmem:[%s841 + $0x390] sm:$0xff]
        %v5776 = vld [vmem:[%s841 + $0x398] sm:$0xff]
        %v5777 = vld [vmem:[%s841 + $0x3a0] sm:$0xff]
        %v5778 = vld [vmem:[%s841 + $0x3a8] sm:$0xff]
        %v5779 = vld [vmem:[%s841 + $0x3b0] sm:$0xff]
        %v5780 = vld [vmem:[%s841 + $0x3b8] sm:$0xff]
        %v5781 = vld [vmem:[%s841 + $0x3c0] sm:$0xff]
        %v5782 = vld [vmem:[%s841 + $0x3c8] sm:$0xff]
        %v5783 = vld [vmem:[%s841 + $0x3d0] sm:$0xff]
        %v5784 = vld [vmem:[%s841 + $0x3d8] sm:$0xff]
        %v5785 = vld [vmem:[%s841 + $0x3e0] sm:$0xff]
        %v5786 = vld [vmem:[%s841 + $0x3e8] sm:$0xff]
        %v5787 = vld [vmem:[%s841 + $0x3f0] sm:$0xff]
        %v5788 = vld [vmem:[%s841 + $0x3f8] sm:$0xff]
        %v5789 = vld [vmem:[%s841 + $0x400] sm:$0xff]
        %v5790 = vld [vmem:[%s841 + $0x408] sm:$0xff]
        %v5791 = vld [vmem:[%s841 + $0x410] sm:$0xff]
        %v5792 = vld [vmem:[%s841 + $0x418] sm:$0xff]
        %v5793 = vld [vmem:[%s841 + $0x420] sm:$0xff]
        %v5794 = vld [vmem:[%s841 + $0x428] sm:$0xff]
        %v5795 = vld [vmem:[%s841 + $0x430] sm:$0xff]
        %v5796 = vld [vmem:[%s841 + $0x438] sm:$0xff]
        %v5797 = vld [vmem:[%s841 + $0x440] sm:$0xff]
        %v5798 = vld [vmem:[%s841 + $0x448] sm:$0xff]
        %v5799 = vld [vmem:[%s841 + $0x450] sm:$0xff]
        %v5800 = vld [vmem:[%s841 + $0x458] sm:$0xff]
        %v5801 = vld [vmem:[%s841 + $0x460] sm:$0xff]
        %v5802 = vld [vmem:[%s841 + $0x468] sm:$0xff]
        %v5803 = vld [vmem:[%s841 + $0x470] sm:$0xff]
        %v5804 = vld [vmem:[%s841 + $0x478] sm:$0xff]
        %v5805 = vld [vmem:[%s841 + $0x480] sm:$0xff]
        %v5806 = vld [vmem:[%s841 + $0x488] sm:$0xff]
        %v5807 = vld [vmem:[%s841 + $0x490] sm:$0xff]
        %v5808 = vld [vmem:[%s841 + $0x498] sm:$0xff]
        %v5809 = vld [vmem:[%s841 + $0x4a0] sm:$0xff]
        %v5810 = vld [vmem:[%s841 + $0x4a8] sm:$0xff]
        %v5811 = vld [vmem:[%s841 + $0x4b0] sm:$0xff]
        %v5812 = vld [vmem:[%s841 + $0x4b8] sm:$0xff]
        %v5813 = vld [vmem:[%s841 + $0x4c0] sm:$0xff]
        %v5814 = vld [vmem:[%s841 + $0x4c8] sm:$0xff]
        %v5815 = vld [vmem:[%s841 + $0x4d0] sm:$0xff]
        %v5816 = vld [vmem:[%s841 + $0x4d8] sm:$0xff]
        %v5817 = vld [vmem:[%s841 + $0x4e0] sm:$0xff]
        %v5818 = vld [vmem:[%s841 + $0x4e8] sm:$0xff]
        %v5819 = vld [vmem:[%s841 + $0x4f0] sm:$0xff]
        %v5820 = vld [vmem:[%s841 + $0x4f8] sm:$0xff]
        %v5821 = vld [vmem:[%s841 + $0x500] sm:$0xff]
        %v5822 = vld [vmem:[%s841 + $0x508] sm:$0xff]
        %v5823 = vld [vmem:[%s841 + $0x510] sm:$0xff]
        %v5824 = vld [vmem:[%s841 + $0x518] sm:$0xff]
        %v5825 = vld [vmem:[%s841 + $0x520] sm:$0xff]
        %v5826 = vld [vmem:[%s841 + $0x528] sm:$0xff]
        %v5827 = vld [vmem:[%s841 + $0x530] sm:$0xff]
        %v5828 = vld [vmem:[%s841 + $0x538] sm:$0xff]
        %v5829 = vld [vmem:[%s841 + $0x540] sm:$0xff]
        %v5830 = vld [vmem:[%s841 + $0x548] sm:$0xff]
        %v5831 = vld [vmem:[%s841 + $0x550] sm:$0xff]
        %v5832 = vld [vmem:[%s841 + $0x558] sm:$0xff]
        %v5833 = vld [vmem:[%s841 + $0x560] sm:$0xff]
        %v5834 = vld [vmem:[%s841 + $0x568] sm:$0xff]
        %v5835 = vld [vmem:[%s841 + $0x570] sm:$0xff]
        %v5836 = vld [vmem:[%s841 + $0x578] sm:$0xff]
        %v5837 = vld [vmem:[%s841 + $0x580] sm:$0xff]
        %v5838 = vld [vmem:[%s841 + $0x588] sm:$0xff]
        %v5839 = vld [vmem:[%s841 + $0x590] sm:$0xff]
        %v5840 = vld [vmem:[%s841 + $0x598] sm:$0xff]
        %v5841 = vld [vmem:[%s841 + $0x5a0] sm:$0xff]
        %v5842 = vld [vmem:[%s841 + $0x5a8] sm:$0xff]
        %v5843 = vld [vmem:[%s841 + $0x5b0] sm:$0xff]
        %v5844 = vld [vmem:[%s841 + $0x5b8] sm:$0xff]
        %v5845 = vld [vmem:[%s841 + $0x5c0] sm:$0xff]
        %v5846 = vld [vmem:[%s841 + $0x5c8] sm:$0xff]
        %v5847 = vld [vmem:[%s841 + $0x5d0] sm:$0xff]
        %v5848 = vld [vmem:[%s841 + $0x5d8] sm:$0xff]
        %v5849 = vld [vmem:[%s841 + $0x5e0] sm:$0xff]
        %v5850 = vld [vmem:[%s841 + $0x5e8] sm:$0xff]
        %v5851 = vld [vmem:[%s841 + $0x5f0] sm:$0xff]
        %v5852 = vld [vmem:[%s841 + $0x5f8] sm:$0xff]
        %v5853 = vld [vmem:[%s841 + $0x600] sm:$0xff]
        %v5854 = vld [vmem:[%s841 + $0x608] sm:$0xff]
        %v5855 = vld [vmem:[%s841 + $0x610] sm:$0xff]
        %v5856 = vld [vmem:[%s841 + $0x618] sm:$0xff]
        %v5857 = vld [vmem:[%s841 + $0x620] sm:$0xff]
        %v5858 = vld [vmem:[%s841 + $0x628] sm:$0xff]
        %v5859 = vld [vmem:[%s841 + $0x630] sm:$0xff]
        %v5860 = vld [vmem:[%s841 + $0x638] sm:$0xff]
        %v5861 = vld [vmem:[%s841 + $0x640] sm:$0xff]
        %v5862 = vld [vmem:[%s841 + $0x648] sm:$0xff]
        %v5863 = vld [vmem:[%s841 + $0x650] sm:$0xff]
        %v5864 = vld [vmem:[%s841 + $0x658] sm:$0xff]
        %v5865 = vld [vmem:[%s841 + $0x660] sm:$0xff]
        %v5866 = vld [vmem:[%s841 + $0x668] sm:$0xff]
        %v5867 = vld [vmem:[%s841 + $0x670] sm:$0xff]
        %v5868 = vld [vmem:[%s841 + $0x678] sm:$0xff]
        %v5869 = vld [vmem:[%s841 + $0x680] sm:$0xff]
        %v5870 = vld [vmem:[%s841 + $0x688] sm:$0xff]
        %v5871 = vld [vmem:[%s841 + $0x690] sm:$0xff]
        %v5872 = vld [vmem:[%s841 + $0x698] sm:$0xff]
        %v5873 = vld [vmem:[%s841 + $0x6a0] sm:$0xff]
        %v5874 = vld [vmem:[%s841 + $0x6a8] sm:$0xff]
        %v5875 = vld [vmem:[%s841 + $0x6b0] sm:$0xff]
        %v5876 = vld [vmem:[%s841 + $0x6b8] sm:$0xff]
        %v5877 = vld [vmem:[%s841 + $0x6c0] sm:$0xff]
        %v5878 = vld [vmem:[%s841 + $0x6c8] sm:$0xff]
        %v5879 = vld [vmem:[%s841 + $0x6d0] sm:$0xff]
        %v5880 = vld [vmem:[%s841 + $0x6d8] sm:$0xff]
        %v5881 = vld [vmem:[%s841 + $0x6e0] sm:$0xff]
        %v5882 = vld [vmem:[%s841 + $0x6e8] sm:$0xff]
        %v5883 = vld [vmem:[%s841 + $0x6f0] sm:$0xff]
        %v5884 = vld [vmem:[%s841 + $0x6f8] sm:$0xff]
        %v5885 = vld [vmem:[%s841 + $0x700] sm:$0xff]
        %v5886 = vld [vmem:[%s841 + $0x708] sm:$0xff]
        %v5887 = vld [vmem:[%s841 + $0x710] sm:$0xff]
        %v5888 = vld [vmem:[%s841 + $0x718] sm:$0xff]
        %v5889 = vld [vmem:[%s841 + $0x720] sm:$0xff]
        %v5890 = vld [vmem:[%s841 + $0x728] sm:$0xff]
        %v5891 = vld [vmem:[%s841 + $0x730] sm:$0xff]
        %v5892 = vld [vmem:[%s841 + $0x738] sm:$0xff]
        %v5893 = vld [vmem:[%s841 + $0x740] sm:$0xff]
        %v5894 = vld [vmem:[%s841 + $0x748] sm:$0xff]
        %v5895 = vld [vmem:[%s841 + $0x750] sm:$0xff]
        %v5896 = vld [vmem:[%s841 + $0x758] sm:$0xff]
        %v5897 = vld [vmem:[%s841 + $0x760] sm:$0xff]
        %v5898 = vld [vmem:[%s841 + $0x768] sm:$0xff]
        %v5899 = vld [vmem:[%s841 + $0x770] sm:$0xff]
        %v5900 = vld [vmem:[%s841 + $0x778] sm:$0xff]
        %v5901 = vld [vmem:[%s841 + $0x780] sm:$0xff]
        %v5902 = vld [vmem:[%s841 + $0x788] sm:$0xff]
        %v5903 = vld [vmem:[%s841 + $0x790] sm:$0xff]
        %v5904 = vld [vmem:[%s841 + $0x798] sm:$0xff]
        %v5905 = vld [vmem:[%s841 + $0x7a0] sm:$0xff]
        %v5906 = vld [vmem:[%s841 + $0x7a8] sm:$0xff]
        %v5907 = vld [vmem:[%s841 + $0x7b0] sm:$0xff]
        %v5908 = vld [vmem:[%s841 + $0x7b8] sm:$0xff]
        %v5909 = vld [vmem:[%s841 + $0x7c0] sm:$0xff]
        %v5910 = vld [vmem:[%s841 + $0x7c8] sm:$0xff]
        %v5911 = vld [vmem:[%s841 + $0x7d0] sm:$0xff]
        %v5912 = vld [vmem:[%s841 + $0x7d8] sm:$0xff]
        %v5913 = vld [vmem:[%s841 + $0x7e0] sm:$0xff]
        %v5914 = vld [vmem:[%s841 + $0x7e8] sm:$0xff]
        %v5915 = vld [vmem:[%s841 + $0x7f0] sm:$0xff]
        %v5916 = vld [vmem:[%s841 + $0x7f8] sm:$0xff]
        %v5917 = vpack.c.bf16 %v5665, %v5661
        %v5918 = vpack.c.bf16 %v5666, %v5662
        %v5919 = vpack.c.bf16 %v5667, %v5663
        %v5920 = vpack.c.bf16 %v5668, %v5664
        %v5921 = vpack.c.bf16 %v5673, %v5669
        %v5922 = vpack.c.bf16 %v5674, %v5670
        %v5923 = vpack.c.bf16 %v5675, %v5671
        %v5924 = vpack.c.bf16 %v5676, %v5672
        %v5925 = vpack.c.bf16 %v5681, %v5677
        %v5926 = vpack.c.bf16 %v5682, %v5678
        %v5927 = vpack.c.bf16 %v5683, %v5679
        %v5928 = vpack.c.bf16 %v5684, %v5680
        %v5929 = vpack.c.bf16 %v5689, %v5685
        %v5930 = vpack.c.bf16 %v5690, %v5686
        %v5931 = vpack.c.bf16 %v5691, %v5687
        %v5932 = vpack.c.bf16 %v5692, %v5688
        %v5933 = vpack.c.bf16 %v5697, %v5693
        %v5934 = vpack.c.bf16 %v5698, %v5694
        %v5935 = vpack.c.bf16 %v5699, %v5695
        %v5936 = vpack.c.bf16 %v5700, %v5696
        %v5937 = vpack.c.bf16 %v5705, %v5701
        %v5938 = vpack.c.bf16 %v5706, %v5702
        %v5939 = vpack.c.bf16 %v5707, %v5703
        %v5940 = vpack.c.bf16 %v5708, %v5704
        %v5941 = vpack.c.bf16 %v5713, %v5709
        %v5942 = vpack.c.bf16 %v5714, %v5710
        %v5943 = vpack.c.bf16 %v5715, %v5711
        %v5944 = vpack.c.bf16 %v5716, %v5712
        %v5945 = vpack.c.bf16 %v5721, %v5717
        %v5946 = vpack.c.bf16 %v5722, %v5718
        %v5947 = vpack.c.bf16 %v5723, %v5719
        %v5948 = vpack.c.bf16 %v5724, %v5720
        %v5949 = vpack.c.bf16 %v5729, %v5725
        %v5950 = vpack.c.bf16 %v5730, %v5726
        %v5951 = vpack.c.bf16 %v5731, %v5727
        %v5952 = vpack.c.bf16 %v5732, %v5728
        %v5953 = vpack.c.bf16 %v5737, %v5733
        %v5954 = vpack.c.bf16 %v5738, %v5734
        %v5955 = vpack.c.bf16 %v5739, %v5735
        %v5956 = vpack.c.bf16 %v5740, %v5736
        %v5957 = vpack.c.bf16 %v5745, %v5741
        %v5958 = vpack.c.bf16 %v5746, %v5742
        %v5959 = vpack.c.bf16 %v5747, %v5743
        %v5960 = vpack.c.bf16 %v5748, %v5744
        %v5961 = vpack.c.bf16 %v5753, %v5749
        %v5962 = vpack.c.bf16 %v5754, %v5750
        %v5963 = vpack.c.bf16 %v5755, %v5751
        %v5964 = vpack.c.bf16 %v5756, %v5752
        %v5965 = vpack.c.bf16 %v5761, %v5757
        %v5966 = vpack.c.bf16 %v5762, %v5758
        %v5967 = vpack.c.bf16 %v5763, %v5759
        %v5968 = vpack.c.bf16 %v5764, %v5760
        %v5969 = vpack.c.bf16 %v5769, %v5765
        %v5970 = vpack.c.bf16 %v5770, %v5766
        %v5971 = vpack.c.bf16 %v5771, %v5767
        %v5972 = vpack.c.bf16 %v5772, %v5768
        %v5973 = vpack.c.bf16 %v5777, %v5773
        %v5974 = vpack.c.bf16 %v5778, %v5774
        %v5975 = vpack.c.bf16 %v5779, %v5775
        %v5976 = vpack.c.bf16 %v5780, %v5776
        %v5977 = vpack.c.bf16 %v5785, %v5781
        %v5978 = vpack.c.bf16 %v5786, %v5782
        %v5979 = vpack.c.bf16 %v5787, %v5783
        %v5980 = vpack.c.bf16 %v5788, %v5784
        %v5981 = vpack.c.bf16 %v5793, %v5789
        %v5982 = vpack.c.bf16 %v5794, %v5790
        %v5983 = vpack.c.bf16 %v5795, %v5791
        %v5984 = vpack.c.bf16 %v5796, %v5792
        %v5985 = vpack.c.bf16 %v5801, %v5797
        %v5986 = vpack.c.bf16 %v5802, %v5798
        %v5987 = vpack.c.bf16 %v5803, %v5799
        %v5988 = vpack.c.bf16 %v5804, %v5800
        %v5989 = vpack.c.bf16 %v5809, %v5805
        %v5990 = vpack.c.bf16 %v5810, %v5806
        %v5991 = vpack.c.bf16 %v5811, %v5807
        %v5992 = vpack.c.bf16 %v5812, %v5808
        %v5993 = vpack.c.bf16 %v5817, %v5813
        %v5994 = vpack.c.bf16 %v5818, %v5814
        %v5995 = vpack.c.bf16 %v5819, %v5815
        %v5996 = vpack.c.bf16 %v5820, %v5816
        %v5997 = vpack.c.bf16 %v5825, %v5821
        %v5998 = vpack.c.bf16 %v5826, %v5822
        %v5999 = vpack.c.bf16 %v5827, %v5823
        %v6000 = vpack.c.bf16 %v5828, %v5824
        %v6001 = vpack.c.bf16 %v5833, %v5829
        %v6002 = vpack.c.bf16 %v5834, %v5830
        %v6003 = vpack.c.bf16 %v5835, %v5831
        %v6004 = vpack.c.bf16 %v5836, %v5832
        %v6005 = vpack.c.bf16 %v5841, %v5837
        %v6006 = vpack.c.bf16 %v5842, %v5838
        %v6007 = vpack.c.bf16 %v5843, %v5839
        %v6008 = vpack.c.bf16 %v5844, %v5840
        %v6009 = vpack.c.bf16 %v5849, %v5845
        %v6010 = vpack.c.bf16 %v5850, %v5846
        %v6011 = vpack.c.bf16 %v5851, %v5847
        %v6012 = vpack.c.bf16 %v5852, %v5848
        %v6013 = vpack.c.bf16 %v5857, %v5853
        %v6014 = vpack.c.bf16 %v5858, %v5854
        %v6015 = vpack.c.bf16 %v5859, %v5855
        %v6016 = vpack.c.bf16 %v5860, %v5856
        %v6017 = vpack.c.bf16 %v5865, %v5861
        %v6018 = vpack.c.bf16 %v5866, %v5862
        %v6019 = vpack.c.bf16 %v5867, %v5863
        %v6020 = vpack.c.bf16 %v5868, %v5864
        %v6021 = vpack.c.bf16 %v5873, %v5869
        %v6022 = vpack.c.bf16 %v5874, %v5870
        %v6023 = vpack.c.bf16 %v5875, %v5871
        %v6024 = vpack.c.bf16 %v5876, %v5872
        %v6025 = vpack.c.bf16 %v5881, %v5877
        %v6026 = vpack.c.bf16 %v5882, %v5878
        %v6027 = vpack.c.bf16 %v5883, %v5879
        %v6028 = vpack.c.bf16 %v5884, %v5880
        %v6029 = vpack.c.bf16 %v5889, %v5885
        %v6030 = vpack.c.bf16 %v5890, %v5886
        %v6031 = vpack.c.bf16 %v5891, %v5887
        %v6032 = vpack.c.bf16 %v5892, %v5888
        %v6033 = vpack.c.bf16 %v5897, %v5893
        %v6034 = vpack.c.bf16 %v5898, %v5894
        %v6035 = vpack.c.bf16 %v5899, %v5895
        %v6036 = vpack.c.bf16 %v5900, %v5896
        %v6037 = vpack.c.bf16 %v5905, %v5901
        %v6038 = vpack.c.bf16 %v5906, %v5902
        %v6039 = vpack.c.bf16 %v5907, %v5903
        %v6040 = vpack.c.bf16 %v5908, %v5904
        %v6041 = vpack.c.bf16 %v5913, %v5909
        %v6042 = vpack.c.bf16 %v5914, %v5910
        %v6043 = vpack.c.bf16 %v5915, %v5911
        %v6044 = vpack.c.bf16 %v5916, %v5912
        %v6045 = vpack.c.bf16 %v5535, %v5533
        %v6046 = vpack.c.bf16 %v5536, %v5534
        %v6047 = vpack.c.bf16 %v5539, %v5537
        %v6048 = vpack.c.bf16 %v5540, %v5538
        %v6049 = vpack.c.bf16 %v5543, %v5541
        %v6050 = vpack.c.bf16 %v5544, %v5542
        %v6051 = vpack.c.bf16 %v5547, %v5545
        %v6052 = vpack.c.bf16 %v5548, %v5546
        %v6053 = vpack.c.bf16 %v5551, %v5549
        %v6054 = vpack.c.bf16 %v5552, %v5550
        %v6055 = vpack.c.bf16 %v5555, %v5553
        %v6056 = vpack.c.bf16 %v5556, %v5554
        %v6057 = vpack.c.bf16 %v5559, %v5557
        %v6058 = vpack.c.bf16 %v5560, %v5558
        %v6059 = vpack.c.bf16 %v5563, %v5561
        %v6060 = vpack.c.bf16 %v5564, %v5562
        %v6061 = vpack.c.bf16 %v5567, %v5565
        %v6062 = vpack.c.bf16 %v5568, %v5566
        %v6063 = vpack.c.bf16 %v5571, %v5569
        %v6064 = vpack.c.bf16 %v5572, %v5570
        %v6065 = vpack.c.bf16 %v5575, %v5573
        %v6066 = vpack.c.bf16 %v5576, %v5574
        %v6067 = vpack.c.bf16 %v5579, %v5577
        %v6068 = vpack.c.bf16 %v5580, %v5578
        %v6069 = vpack.c.bf16 %v5583, %v5581
        %v6070 = vpack.c.bf16 %v5584, %v5582
        %v6071 = vpack.c.bf16 %v5587, %v5585
        %v6072 = vpack.c.bf16 %v5588, %v5586
        %v6073 = vpack.c.bf16 %v5591, %v5589
        %v6074 = vpack.c.bf16 %v5592, %v5590
        %v6075 = vpack.c.bf16 %v5595, %v5593
        %v6076 = vpack.c.bf16 %v5596, %v5594
        %v6077 = vpack.c.bf16 %v5599, %v5597
        %v6078 = vpack.c.bf16 %v5600, %v5598
        %v6079 = vpack.c.bf16 %v5603, %v5601
        %v6080 = vpack.c.bf16 %v5604, %v5602
        %v6081 = vpack.c.bf16 %v5607, %v5605
        %v6082 = vpack.c.bf16 %v5608, %v5606
        %v6083 = vpack.c.bf16 %v5611, %v5609
        %v6084 = vpack.c.bf16 %v5612, %v5610
        %v6085 = vpack.c.bf16 %v5615, %v5613
        %v6086 = vpack.c.bf16 %v5616, %v5614
        %v6087 = vpack.c.bf16 %v5619, %v5617
        %v6088 = vpack.c.bf16 %v5620, %v5618
        %v6089 = vpack.c.bf16 %v5623, %v5621
        %v6090 = vpack.c.bf16 %v5624, %v5622
        %v6091 = vpack.c.bf16 %v5627, %v5625
        %v6092 = vpack.c.bf16 %v5628, %v5626
        %v6093 = vpack.c.bf16 %v5631, %v5629
        %v6094 = vpack.c.bf16 %v5632, %v5630
        %v6095 = vpack.c.bf16 %v5635, %v5633
        %v6096 = vpack.c.bf16 %v5636, %v5634
        %v6097 = vpack.c.bf16 %v5639, %v5637
        %v6098 = vpack.c.bf16 %v5640, %v5638
        %v6099 = vpack.c.bf16 %v5643, %v5641
        %v6100 = vpack.c.bf16 %v5644, %v5642
        %v6101 = vpack.c.bf16 %v5647, %v5645
        %v6102 = vpack.c.bf16 %v5648, %v5646
        %v6103 = vpack.c.bf16 %v5651, %v5649
        %v6104 = vpack.c.bf16 %v5652, %v5650
        %v6105 = vpack.c.bf16 %v5655, %v5653
        %v6106 = vpack.c.bf16 %v5656, %v5654
        %v6107 = vpack.c.bf16 %v5659, %v5657
        %v6108 = vpack.c.bf16 %v5660, %v5658
        %6109 = vmatprep.subr.bf16.mxu0 %v6046
        %6110 = vmatpush1.bf16.msra.mxu0 %v6045
        %6111 = vmatprep.subr.bf16.mxu0 %v6048
        %6112 = vmatpush1.bf16.msra.mxu0 %v6047
        %6113 = vmatprep.subr.bf16.mxu0 %v6050
        %6114 = vmatpush1.bf16.msra.mxu0 %v6049
        %6115 = vmatprep.subr.bf16.mxu0 %v6052
        %6116 = vmatpush1.bf16.msra.mxu0 %v6051
        %6117 = vmatprep.subr.bf16.mxu0 %v6054
        %6118 = vmatpush1.bf16.msra.mxu0 %v6053
        %6119 = vmatprep.subr.bf16.mxu0 %v6056
        %6120 = vmatpush1.bf16.msra.mxu0 %v6055
        %6121 = vmatprep.subr.bf16.mxu0 %v6058
        %6122 = vmatpush1.bf16.msra.mxu0 %v6057
        %6123 = vmatprep.subr.bf16.mxu0 %v6060
        %6124 = vmatpush1.bf16.msra.mxu0 %v6059
        %6125 = vmatprep.subr.bf16.mxu0 %v6062
        %6126 = vmatpush1.bf16.msra.mxu0 %v6061
        %6127 = vmatprep.subr.bf16.mxu0 %v6064
        %6128 = vmatpush1.bf16.msra.mxu0 %v6063
        %6129 = vmatprep.subr.bf16.mxu0 %v6066
        %6130 = vmatpush1.bf16.msra.mxu0 %v6065
        %6131 = vmatprep.subr.bf16.mxu0 %v6068
        %6132 = vmatpush1.bf16.msra.mxu0 %v6067
        %6133 = vmatprep.subr.bf16.mxu0 %v6070
        %6134 = vmatpush1.bf16.msra.mxu0 %v6069
        %6135 = vmatprep.subr.bf16.mxu0 %v6072
        %6136 = vmatpush1.bf16.msra.mxu0 %v6071
        %6137 = vmatprep.subr.bf16.mxu0 %v6074
        %6138 = vmatpush1.bf16.msra.mxu0 %v6073
        %6139 = vmatprep.subr.bf16.mxu0 %v6076
        %6140 = vmatpush1.bf16.msra.mxu0 %v6075
        %6141 = vmatprep.mubr.bf16.mxu0 %v5918
        %6142 = vmatmul.mubr.bf16.gmra.mrb[0].mxu0 %v5917
        %v6143 = vpop.f32.mrb[0].mxu0
        %v6144 = vadd.f32 0.0, %v6143
        %v6145 = vpop.f32.mrb[0].mxu0
        %v6146 = vadd.f32 0.0, %v6145
        %v6147 = vpop.f32.mrb[0].mxu0
        %v6148 = vadd.f32 0.0, %v6147
        %v6149 = vpop.f32.mrb[0].mxu0
        %v6150 = vadd.f32 0.0, %v6149
        %6151 = vmatprep.mubr.bf16.mxu0 %v5922
        %6152 = vmatmul.mubr.bf16.gmra.mrb[0].mxu0 %v5921
        %v6153 = vpop.f32.mrb[0].mxu0
        %v6154 = vadd.f32 0.0, %v6153
        %v6155 = vpop.f32.mrb[0].mxu0
        %v6156 = vadd.f32 0.0, %v6155
        %v6157 = vpop.f32.mrb[0].mxu0
        %v6158 = vadd.f32 0.0, %v6157
        %v6159 = vpop.f32.mrb[0].mxu0
        %v6160 = vadd.f32 0.0, %v6159
        %6161 = vmatprep.mubr.bf16.mxu0 %v5926
        %6162 = vmatmul.mubr.bf16.gmra.mrb[0].mxu0 %v5925
        %v6163 = vpop.f32.mrb[0].mxu0
        %v6164 = vadd.f32 0.0, %v6163
        %v6165 = vpop.f32.mrb[0].mxu0
        %v6166 = vadd.f32 0.0, %v6165
        %v6167 = vpop.f32.mrb[0].mxu0
        %v6168 = vadd.f32 0.0, %v6167
        %v6169 = vpop.f32.mrb[0].mxu0
        %v6170 = vadd.f32 0.0, %v6169
        %6171 = vmatprep.mubr.bf16.mxu0 %v5930
        %6172 = vmatmul.mubr.bf16.gmra.mrb[0].mxu0 %v5929
        %v6173 = vpop.f32.mrb[0].mxu0
        %v6174 = vadd.f32 0.0, %v6173
        %v6175 = vpop.f32.mrb[0].mxu0
        %v6176 = vadd.f32 0.0, %v6175
        %v6177 = vpop.f32.mrb[0].mxu0
        %v6178 = vadd.f32 0.0, %v6177
        %v6179 = vpop.f32.mrb[0].mxu0
        %v6180 = vadd.f32 0.0, %v6179
        %6181 = vmatprep.mubr.bf16.mxu0 %v5934
        %6182 = vmatmul.mubr.bf16.gmra.mrb[0].mxu0 %v5933
        %v6183 = vpop.f32.mrb[0].mxu0
        %v6184 = vadd.f32 0.0, %v6183
        %v6185 = vpop.f32.mrb[0].mxu0
        %v6186 = vadd.f32 0.0, %v6185
        %v6187 = vpop.f32.mrb[0].mxu0
        %v6188 = vadd.f32 0.0, %v6187
        %v6189 = vpop.f32.mrb[0].mxu0
        %v6190 = vadd.f32 0.0, %v6189
        %6191 = vmatprep.mubr.bf16.mxu0 %v5938
        %6192 = vmatmul.mubr.bf16.gmra.mrb[0].mxu0 %v5937
        %v6193 = vpop.f32.mrb[0].mxu0
        %v6194 = vadd.f32 0.0, %v6193
        %v6195 = vpop.f32.mrb[0].mxu0
        %v6196 = vadd.f32 0.0, %v6195
        %v6197 = vpop.f32.mrb[0].mxu0
        %v6198 = vadd.f32 0.0, %v6197
        %v6199 = vpop.f32.mrb[0].mxu0
        %v6200 = vadd.f32 0.0, %v6199
        %6201 = vmatprep.mubr.bf16.mxu0 %v5942
        %6202 = vmatmul.mubr.bf16.gmra.mrb[0].mxu0 %v5941
        %v6203 = vpop.f32.mrb[0].mxu0
        %v6204 = vadd.f32 0.0, %v6203
        %v6205 = vpop.f32.mrb[0].mxu0
        %v6206 = vadd.f32 0.0, %v6205
        %v6207 = vpop.f32.mrb[0].mxu0
        %v6208 = vadd.f32 0.0, %v6207
        %v6209 = vpop.f32.mrb[0].mxu0
        %v6210 = vadd.f32 0.0, %v6209
        %6211 = vmatprep.mubr.bf16.mxu0 %v5946
        %6212 = vmatmul.mubr.bf16.gmra.mrb[0].mxu0 %v5945
        %v6213 = vpop.f32.mrb[0].mxu0
        %v6214 = vadd.f32 0.0, %v6213
        %v6215 = vpop.f32.mrb[0].mxu0
        %v6216 = vadd.f32 0.0, %v6215
        %v6217 = vpop.f32.mrb[0].mxu0
        %v6218 = vadd.f32 0.0, %v6217
        %v6219 = vpop.f32.mrb[0].mxu0
        %v6220 = vadd.f32 0.0, %v6219
        %6221 = vmatprep.mubr.bf16.mxu0 %v5950
        %6222 = vmatmul.mubr.bf16.gmra.mrb[0].mxu0 %v5949
        %v6223 = vpop.f32.mrb[0].mxu0
        %v6224 = vadd.f32 0.0, %v6223
        %v6225 = vpop.f32.mrb[0].mxu0
        %v6226 = vadd.f32 0.0, %v6225
        %v6227 = vpop.f32.mrb[0].mxu0
        %v6228 = vadd.f32 0.0, %v6227
        %v6229 = vpop.f32.mrb[0].mxu0
        %v6230 = vadd.f32 0.0, %v6229
        %6231 = vmatprep.mubr.bf16.mxu0 %v5954
        %6232 = vmatmul.mubr.bf16.gmra.mrb[0].mxu0 %v5953
        %v6233 = vpop.f32.mrb[0].mxu0
        %v6234 = vadd.f32 0.0, %v6233
        %v6235 = vpop.f32.mrb[0].mxu0
        %v6236 = vadd.f32 0.0, %v6235
        %v6237 = vpop.f32.mrb[0].mxu0
        %v6238 = vadd.f32 0.0, %v6237
        %v6239 = vpop.f32.mrb[0].mxu0
        %v6240 = vadd.f32 0.0, %v6239
        %6241 = vmatprep.mubr.bf16.mxu0 %v5958
        %6242 = vmatmul.mubr.bf16.gmra.mrb[0].mxu0 %v5957
        %v6243 = vpop.f32.mrb[0].mxu0
        %v6244 = vadd.f32 0.0, %v6243
        %v6245 = vpop.f32.mrb[0].mxu0
        %v6246 = vadd.f32 0.0, %v6245
        %v6247 = vpop.f32.mrb[0].mxu0
        %v6248 = vadd.f32 0.0, %v6247
        %v6249 = vpop.f32.mrb[0].mxu0
        %v6250 = vadd.f32 0.0, %v6249
        %6251 = vmatprep.mubr.bf16.mxu0 %v5962
        %6252 = vmatmul.mubr.bf16.gmra.mrb[0].mxu0 %v5961
        %v6253 = vpop.f32.mrb[0].mxu0
        %v6254 = vadd.f32 0.0, %v6253
        %v6255 = vpop.f32.mrb[0].mxu0
        %v6256 = vadd.f32 0.0, %v6255
        %v6257 = vpop.f32.mrb[0].mxu0
        %v6258 = vadd.f32 0.0, %v6257
        %v6259 = vpop.f32.mrb[0].mxu0
        %v6260 = vadd.f32 0.0, %v6259
        %6261 = vmatprep.mubr.bf16.mxu0 %v5966
        %6262 = vmatmul.mubr.bf16.gmra.mrb[0].mxu0 %v5965
        %v6263 = vpop.f32.mrb[0].mxu0
        %v6264 = vadd.f32 0.0, %v6263
        %v6265 = vpop.f32.mrb[0].mxu0
        %v6266 = vadd.f32 0.0, %v6265
        %v6267 = vpop.f32.mrb[0].mxu0
        %v6268 = vadd.f32 0.0, %v6267
        %v6269 = vpop.f32.mrb[0].mxu0
        %v6270 = vadd.f32 0.0, %v6269
        %6271 = vmatprep.mubr.bf16.mxu0 %v5970
        %6272 = vmatmul.mubr.bf16.gmra.mrb[0].mxu0 %v5969
        %v6273 = vpop.f32.mrb[0].mxu0
        %v6274 = vadd.f32 0.0, %v6273
        %v6275 = vpop.f32.mrb[0].mxu0
        %v6276 = vadd.f32 0.0, %v6275
        %v6277 = vpop.f32.mrb[0].mxu0
        %v6278 = vadd.f32 0.0, %v6277
        %v6279 = vpop.f32.mrb[0].mxu0
        %v6280 = vadd.f32 0.0, %v6279
        %6281 = vmatprep.mubr.bf16.mxu0 %v5974
        %6282 = vmatmul.mubr.bf16.gmra.mrb[0].mxu0 %v5973
        %v6283 = vpop.f32.mrb[0].mxu0
        %v6284 = vadd.f32 0.0, %v6283
        %v6285 = vpop.f32.mrb[0].mxu0
        %v6286 = vadd.f32 0.0, %v6285
        %v6287 = vpop.f32.mrb[0].mxu0
        %v6288 = vadd.f32 0.0, %v6287
        %v6289 = vpop.f32.mrb[0].mxu0
        %v6290 = vadd.f32 0.0, %v6289
        %6291 = vmatprep.mubr.bf16.mxu0 %v5978
        %6292 = vmatmul.mubr.bf16.gmra.mrb[0].mxu0 %v5977
        %v6293 = vpop.f32.mrb[0].mxu0
        %v6294 = vadd.f32 0.0, %v6293
        %v6295 = vpop.f32.mrb[0].mxu0
        %v6296 = vadd.f32 0.0, %v6295
        %v6297 = vpop.f32.mrb[0].mxu0
        %v6298 = vadd.f32 0.0, %v6297
        %v6299 = vpop.f32.mrb[0].mxu0
        %v6300 = vadd.f32 0.0, %v6299
        %6301 = vmatprep.mubr.bf16.mxu0 %v5982
        %6302 = vmatmul.mubr.bf16.gmra.mrb[0].mxu0 %v5981
        %v6303 = vpop.f32.mrb[0].mxu0
        %v6304 = vadd.f32 0.0, %v6303
        %v6305 = vpop.f32.mrb[0].mxu0
        %v6306 = vadd.f32 0.0, %v6305
        %v6307 = vpop.f32.mrb[0].mxu0
        %v6308 = vadd.f32 0.0, %v6307
        %v6309 = vpop.f32.mrb[0].mxu0
        %v6310 = vadd.f32 0.0, %v6309
        %6311 = vmatprep.mubr.bf16.mxu0 %v5986
        %6312 = vmatmul.mubr.bf16.gmra.mrb[0].mxu0 %v5985
        %v6313 = vpop.f32.mrb[0].mxu0
        %v6314 = vadd.f32 0.0, %v6313
        %v6315 = vpop.f32.mrb[0].mxu0
        %v6316 = vadd.f32 0.0, %v6315
        %v6317 = vpop.f32.mrb[0].mxu0
        %v6318 = vadd.f32 0.0, %v6317
        %v6319 = vpop.f32.mrb[0].mxu0
        %v6320 = vadd.f32 0.0, %v6319
        %6321 = vmatprep.mubr.bf16.mxu0 %v5990
        %6322 = vmatmul.mubr.bf16.gmra.mrb[0].mxu0 %v5989
        %v6323 = vpop.f32.mrb[0].mxu0
        %v6324 = vadd.f32 0.0, %v6323
        %v6325 = vpop.f32.mrb[0].mxu0
        %v6326 = vadd.f32 0.0, %v6325
        %v6327 = vpop.f32.mrb[0].mxu0
        %v6328 = vadd.f32 0.0, %v6327
        %v6329 = vpop.f32.mrb[0].mxu0
        %v6330 = vadd.f32 0.0, %v6329
        %6331 = vmatprep.mubr.bf16.mxu0 %v5994
        %6332 = vmatmul.mubr.bf16.gmra.mrb[0].mxu0 %v5993
        %v6333 = vpop.f32.mrb[0].mxu0
        %v6334 = vadd.f32 0.0, %v6333
        %v6335 = vpop.f32.mrb[0].mxu0
        %v6336 = vadd.f32 0.0, %v6335
        %v6337 = vpop.f32.mrb[0].mxu0
        %v6338 = vadd.f32 0.0, %v6337
        %v6339 = vpop.f32.mrb[0].mxu0
        %v6340 = vadd.f32 0.0, %v6339
        %6341 = vmatprep.mubr.bf16.mxu0 %v5998
        %6342 = vmatmul.mubr.bf16.gmra.mrb[0].mxu0 %v5997
        %v6343 = vpop.f32.mrb[0].mxu0
        %v6344 = vadd.f32 0.0, %v6343
        %v6345 = vpop.f32.mrb[0].mxu0
        %v6346 = vadd.f32 0.0, %v6345
        %v6347 = vpop.f32.mrb[0].mxu0
        %v6348 = vadd.f32 0.0, %v6347
        %v6349 = vpop.f32.mrb[0].mxu0
        %v6350 = vadd.f32 0.0, %v6349
        %6351 = vmatprep.mubr.bf16.mxu0 %v6002
        %6352 = vmatmul.mubr.bf16.gmra.mrb[0].mxu0 %v6001
        %v6353 = vpop.f32.mrb[0].mxu0
        %v6354 = vadd.f32 0.0, %v6353
        %v6355 = vpop.f32.mrb[0].mxu0
        %v6356 = vadd.f32 0.0, %v6355
        %v6357 = vpop.f32.mrb[0].mxu0
        %v6358 = vadd.f32 0.0, %v6357
        %v6359 = vpop.f32.mrb[0].mxu0
        %v6360 = vadd.f32 0.0, %v6359
        %6361 = vmatprep.mubr.bf16.mxu0 %v6006
        %6362 = vmatmul.mubr.bf16.gmra.mrb[0].mxu0 %v6005
        %v6363 = vpop.f32.mrb[0].mxu0
        %v6364 = vadd.f32 0.0, %v6363
        %v6365 = vpop.f32.mrb[0].mxu0
        %v6366 = vadd.f32 0.0, %v6365
        %v6367 = vpop.f32.mrb[0].mxu0
        %v6368 = vadd.f32 0.0, %v6367
        %v6369 = vpop.f32.mrb[0].mxu0
        %v6370 = vadd.f32 0.0, %v6369
        %6371 = vmatprep.mubr.bf16.mxu0 %v6010
        %6372 = vmatmul.mubr.bf16.gmra.mrb[0].mxu0 %v6009
        %v6373 = vpop.f32.mrb[0].mxu0
        %v6374 = vadd.f32 0.0, %v6373
        %v6375 = vpop.f32.mrb[0].mxu0
        %v6376 = vadd.f32 0.0, %v6375
        %v6377 = vpop.f32.mrb[0].mxu0
        %v6378 = vadd.f32 0.0, %v6377
        %v6379 = vpop.f32.mrb[0].mxu0
        %v6380 = vadd.f32 0.0, %v6379
        %6381 = vmatprep.mubr.bf16.mxu0 %v6014
        %6382 = vmatmul.mubr.bf16.gmra.mrb[0].mxu0 %v6013
        %v6383 = vpop.f32.mrb[0].mxu0
        %v6384 = vadd.f32 0.0, %v6383
        %v6385 = vpop.f32.mrb[0].mxu0
        %v6386 = vadd.f32 0.0, %v6385
        %v6387 = vpop.f32.mrb[0].mxu0
        %v6388 = vadd.f32 0.0, %v6387
        %v6389 = vpop.f32.mrb[0].mxu0
        %v6390 = vadd.f32 0.0, %v6389
        %6391 = vmatprep.mubr.bf16.mxu0 %v6018
        %6392 = vmatmul.mubr.bf16.gmra.mrb[0].mxu0 %v6017
        %v6393 = vpop.f32.mrb[0].mxu0
        %v6394 = vadd.f32 0.0, %v6393
        %v6395 = vpop.f32.mrb[0].mxu0
        %v6396 = vadd.f32 0.0, %v6395
        %v6397 = vpop.f32.mrb[0].mxu0
        %v6398 = vadd.f32 0.0, %v6397
        %v6399 = vpop.f32.mrb[0].mxu0
        %v6400 = vadd.f32 0.0, %v6399
        %6401 = vmatprep.mubr.bf16.mxu0 %v6022
        %6402 = vmatmul.mubr.bf16.gmra.mrb[0].mxu0 %v6021
        %v6403 = vpop.f32.mrb[0].mxu0
        %v6404 = vadd.f32 0.0, %v6403
        %v6405 = vpop.f32.mrb[0].mxu0
        %v6406 = vadd.f32 0.0, %v6405
        %v6407 = vpop.f32.mrb[0].mxu0
        %v6408 = vadd.f32 0.0, %v6407
        %v6409 = vpop.f32.mrb[0].mxu0
        %v6410 = vadd.f32 0.0, %v6409
        %6411 = vmatprep.mubr.bf16.mxu0 %v6026
        %6412 = vmatmul.mubr.bf16.gmra.mrb[0].mxu0 %v6025
        %v6413 = vpop.f32.mrb[0].mxu0
        %v6414 = vadd.f32 0.0, %v6413
        %v6415 = vpop.f32.mrb[0].mxu0
        %v6416 = vadd.f32 0.0, %v6415
        %v6417 = vpop.f32.mrb[0].mxu0
        %v6418 = vadd.f32 0.0, %v6417
        %v6419 = vpop.f32.mrb[0].mxu0
        %v6420 = vadd.f32 0.0, %v6419
        %6421 = vmatprep.mubr.bf16.mxu0 %v6030
        %6422 = vmatmul.mubr.bf16.gmra.mrb[0].mxu0 %v6029
        %v6423 = vpop.f32.mrb[0].mxu0
        %v6424 = vadd.f32 0.0, %v6423
        %v6425 = vpop.f32.mrb[0].mxu0
        %v6426 = vadd.f32 0.0, %v6425
        %v6427 = vpop.f32.mrb[0].mxu0
        %v6428 = vadd.f32 0.0, %v6427
        %v6429 = vpop.f32.mrb[0].mxu0
        %v6430 = vadd.f32 0.0, %v6429
        %6431 = vmatprep.mubr.bf16.mxu0 %v6034
        %6432 = vmatmul.mubr.bf16.gmra.mrb[0].mxu0 %v6033
        %v6433 = vpop.f32.mrb[0].mxu0
        %v6434 = vadd.f32 0.0, %v6433
        %v6435 = vpop.f32.mrb[0].mxu0
        %v6436 = vadd.f32 0.0, %v6435
        %v6437 = vpop.f32.mrb[0].mxu0
        %v6438 = vadd.f32 0.0, %v6437
        %v6439 = vpop.f32.mrb[0].mxu0
        %v6440 = vadd.f32 0.0, %v6439
        %6441 = vmatprep.mubr.bf16.mxu0 %v6038
        %6442 = vmatmul.mubr.bf16.gmra.mrb[0].mxu0 %v6037
        %v6443 = vpop.f32.mrb[0].mxu0
        %v6444 = vadd.f32 0.0, %v6443
        %v6445 = vpop.f32.mrb[0].mxu0
        %v6446 = vadd.f32 0.0, %v6445
        %v6447 = vpop.f32.mrb[0].mxu0
        %v6448 = vadd.f32 0.0, %v6447
        %v6449 = vpop.f32.mrb[0].mxu0
        %v6450 = vadd.f32 0.0, %v6449
        %6451 = vmatprep.mubr.bf16.mxu0 %v6042
        %6452 = vmatmul.mubr.bf16.gmra.mrb[0].mxu0 %v6041
        %v6453 = vpop.f32.mrb[0].mxu0
        %v6454 = vadd.f32 0.0, %v6453
        %v6455 = vpop.f32.mrb[0].mxu0
        %v6456 = vadd.f32 0.0, %v6455
        %v6457 = vpop.f32.mrb[0].mxu0
        %v6458 = vadd.f32 0.0, %v6457
        %v6459 = vpop.f32.mrb[0].mxu0
        %v6460 = vadd.f32 0.0, %v6459
        %6461 = vdwg.mxu0
        %6462 = vmatprep.subr.bf16.mxu0 %v6078
        %6463 = vmatpush1.bf16.msra.mxu0 %v6077
        %6464 = vmatprep.subr.bf16.mxu0 %v6080
        %6465 = vmatpush1.bf16.msra.mxu0 %v6079
        %6466 = vmatprep.subr.bf16.mxu0 %v6082
        %6467 = vmatpush1.bf16.msra.mxu0 %v6081
        %6468 = vmatprep.subr.bf16.mxu0 %v6084
        %6469 = vmatpush1.bf16.msra.mxu0 %v6083
        %6470 = vmatprep.subr.bf16.mxu0 %v6086
        %6471 = vmatpush1.bf16.msra.mxu0 %v6085
        %6472 = vmatprep.subr.bf16.mxu0 %v6088
        %6473 = vmatpush1.bf16.msra.mxu0 %v6087
        %6474 = vmatprep.subr.bf16.mxu0 %v6090
        %6475 = vmatpush1.bf16.msra.mxu0 %v6089
        %6476 = vmatprep.subr.bf16.mxu0 %v6092
        %6477 = vmatpush1.bf16.msra.mxu0 %v6091
        %6478 = vmatprep.subr.bf16.mxu0 %v6094
        %6479 = vmatpush1.bf16.msra.mxu0 %v6093
        %6480 = vmatprep.subr.bf16.mxu0 %v6096
        %6481 = vmatpush1.bf16.msra.mxu0 %v6095
        %6482 = vmatprep.subr.bf16.mxu0 %v6098
        %6483 = vmatpush1.bf16.msra.mxu0 %v6097
        %6484 = vmatprep.subr.bf16.mxu0 %v6100
        %6485 = vmatpush1.bf16.msra.mxu0 %v6099
        %6486 = vmatprep.subr.bf16.mxu0 %v6102
        %6487 = vmatpush1.bf16.msra.mxu0 %v6101
        %6488 = vmatprep.subr.bf16.mxu0 %v6104
        %6489 = vmatpush1.bf16.msra.mxu0 %v6103
        %6490 = vmatprep.subr.bf16.mxu0 %v6106
        %6491 = vmatpush1.bf16.msra.mxu0 %v6105
        %6492 = vmatprep.subr.bf16.mxu0 %v6108
        %6493 = vmatpush1.bf16.msra.mxu0 %v6107
        %6494 = vmatprep.mubr.bf16.mxu0 %v5920
        %6495 = vmatmul.mubr.bf16.gmra.mrb[0].mxu0 %v5919
        %v6496 = vpop.f32.mrb[0].mxu0
        %v6497 = vadd.f32 %v6144, %v6496
        %v6498 = vpop.f32.mrb[0].mxu0
        %v6499 = vadd.f32 %v6146, %v6498
        %v6500 = vpop.f32.mrb[0].mxu0
        %v6501 = vadd.f32 %v6148, %v6500
        %v6502 = vpop.f32.mrb[0].mxu0
        %v6503 = vadd.f32 %v6150, %v6502
        %6504 = vmatprep.mubr.bf16.mxu0 %v5924
        %6505 = vmatmul.mubr.bf16.gmra.mrb[0].mxu0 %v5923
        %v6506 = vpop.f32.mrb[0].mxu0
        %v6507 = vadd.f32 %v6154, %v6506
        %v6508 = vpop.f32.mrb[0].mxu0
        %v6509 = vadd.f32 %v6156, %v6508
        %v6510 = vpop.f32.mrb[0].mxu0
        %v6511 = vadd.f32 %v6158, %v6510
        %v6512 = vpop.f32.mrb[0].mxu0
        %v6513 = vadd.f32 %v6160, %v6512
        %6514 = vmatprep.mubr.bf16.mxu0 %v5928
        %6515 = vmatmul.mubr.bf16.gmra.mrb[0].mxu0 %v5927
        %v6516 = vpop.f32.mrb[0].mxu0
        %v6517 = vadd.f32 %v6164, %v6516
        %v6518 = vpop.f32.mrb[0].mxu0
        %v6519 = vadd.f32 %v6166, %v6518
        %v6520 = vpop.f32.mrb[0].mxu0
        %v6521 = vadd.f32 %v6168, %v6520
        %v6522 = vpop.f32.mrb[0].mxu0
        %v6523 = vadd.f32 %v6170, %v6522
        %6524 = vmatprep.mubr.bf16.mxu0 %v5932
        %6525 = vmatmul.mubr.bf16.gmra.mrb[0].mxu0 %v5931
        %v6526 = vpop.f32.mrb[0].mxu0
        %v6527 = vadd.f32 %v6174, %v6526
        %v6528 = vpop.f32.mrb[0].mxu0
        %v6529 = vadd.f32 %v6176, %v6528
        %v6530 = vpop.f32.mrb[0].mxu0
        %v6531 = vadd.f32 %v6178, %v6530
        %v6532 = vpop.f32.mrb[0].mxu0
        %v6533 = vadd.f32 %v6180, %v6532
        %6534 = vmatprep.mubr.bf16.mxu0 %v5936
        %6535 = vmatmul.mubr.bf16.gmra.mrb[0].mxu0 %v5935
        %v6536 = vpop.f32.mrb[0].mxu0
        %v6537 = vadd.f32 %v6184, %v6536
        %v6538 = vpop.f32.mrb[0].mxu0
        %v6539 = vadd.f32 %v6186, %v6538
        %v6540 = vpop.f32.mrb[0].mxu0
        %v6541 = vadd.f32 %v6188, %v6540
        %v6542 = vpop.f32.mrb[0].mxu0
        %v6543 = vadd.f32 %v6190, %v6542
        %6544 = vmatprep.mubr.bf16.mxu0 %v5940
        %6545 = vmatmul.mubr.bf16.gmra.mrb[0].mxu0 %v5939
        %v6546 = vpop.f32.mrb[0].mxu0
        %v6547 = vadd.f32 %v6194, %v6546
        %v6548 = vpop.f32.mrb[0].mxu0
        %v6549 = vadd.f32 %v6196, %v6548
        %v6550 = vpop.f32.mrb[0].mxu0
        %v6551 = vadd.f32 %v6198, %v6550
        %v6552 = vpop.f32.mrb[0].mxu0
        %v6553 = vadd.f32 %v6200, %v6552
        %6554 = vmatprep.mubr.bf16.mxu0 %v5944
        %6555 = vmatmul.mubr.bf16.gmra.mrb[0].mxu0 %v5943
        %v6556 = vpop.f32.mrb[0].mxu0
        %v6557 = vadd.f32 %v6204, %v6556
        %v6558 = vpop.f32.mrb[0].mxu0
        %v6559 = vadd.f32 %v6206, %v6558
        %v6560 = vpop.f32.mrb[0].mxu0
        %v6561 = vadd.f32 %v6208, %v6560
        %v6562 = vpop.f32.mrb[0].mxu0
        %v6563 = vadd.f32 %v6210, %v6562
        %6564 = vmatprep.mubr.bf16.mxu0 %v5948
        %6565 = vmatmul.mubr.bf16.gmra.mrb[0].mxu0 %v5947
        %v6566 = vpop.f32.mrb[0].mxu0
        %v6567 = vadd.f32 %v6214, %v6566
        %v6568 = vpop.f32.mrb[0].mxu0
        %v6569 = vadd.f32 %v6216, %v6568
        %v6570 = vpop.f32.mrb[0].mxu0
        %v6571 = vadd.f32 %v6218, %v6570
        %v6572 = vpop.f32.mrb[0].mxu0
        %v6573 = vadd.f32 %v6220, %v6572
        %6574 = vmatprep.mubr.bf16.mxu0 %v5952
        %6575 = vmatmul.mubr.bf16.gmra.mrb[0].mxu0 %v5951
        %v6576 = vpop.f32.mrb[0].mxu0
        %v6577 = vadd.f32 %v6224, %v6576
        %v6578 = vpop.f32.mrb[0].mxu0
        %v6579 = vadd.f32 %v6226, %v6578
        %v6580 = vpop.f32.mrb[0].mxu0
        %v6581 = vadd.f32 %v6228, %v6580
        %v6582 = vpop.f32.mrb[0].mxu0
        %v6583 = vadd.f32 %v6230, %v6582
        %6584 = vmatprep.mubr.bf16.mxu0 %v5956
        %6585 = vmatmul.mubr.bf16.gmra.mrb[0].mxu0 %v5955
        %v6586 = vpop.f32.mrb[0].mxu0
        %v6587 = vadd.f32 %v6234, %v6586
        %v6588 = vpop.f32.mrb[0].mxu0
        %v6589 = vadd.f32 %v6236, %v6588
        %v6590 = vpop.f32.mrb[0].mxu0
        %v6591 = vadd.f32 %v6238, %v6590
        %v6592 = vpop.f32.mrb[0].mxu0
        %v6593 = vadd.f32 %v6240, %v6592
        %6594 = vmatprep.mubr.bf16.mxu0 %v5960
        %6595 = vmatmul.mubr.bf16.gmra.mrb[0].mxu0 %v5959
        %v6596 = vpop.f32.mrb[0].mxu0
        %v6597 = vadd.f32 %v6244, %v6596
        %v6598 = vpop.f32.mrb[0].mxu0
        %v6599 = vadd.f32 %v6246, %v6598
        %v6600 = vpop.f32.mrb[0].mxu0
        %v6601 = vadd.f32 %v6248, %v6600
        %v6602 = vpop.f32.mrb[0].mxu0
        %v6603 = vadd.f32 %v6250, %v6602
        %6604 = vmatprep.mubr.bf16.mxu0 %v5964
        %6605 = vmatmul.mubr.bf16.gmra.mrb[0].mxu0 %v5963
        %v6606 = vpop.f32.mrb[0].mxu0
        %v6607 = vadd.f32 %v6254, %v6606
        %v6608 = vpop.f32.mrb[0].mxu0
        %v6609 = vadd.f32 %v6256, %v6608
        %v6610 = vpop.f32.mrb[0].mxu0
        %v6611 = vadd.f32 %v6258, %v6610
        %v6612 = vpop.f32.mrb[0].mxu0
        %v6613 = vadd.f32 %v6260, %v6612
        %6614 = vmatprep.mubr.bf16.mxu0 %v5968
        %6615 = vmatmul.mubr.bf16.gmra.mrb[0].mxu0 %v5967
        %v6616 = vpop.f32.mrb[0].mxu0
        %v6617 = vadd.f32 %v6264, %v6616
        %v6618 = vpop.f32.mrb[0].mxu0
        %v6619 = vadd.f32 %v6266, %v6618
        %v6620 = vpop.f32.mrb[0].mxu0
        %v6621 = vadd.f32 %v6268, %v6620
        %v6622 = vpop.f32.mrb[0].mxu0
        %v6623 = vadd.f32 %v6270, %v6622
        %6624 = vmatprep.mubr.bf16.mxu0 %v5972
        %6625 = vmatmul.mubr.bf16.gmra.mrb[0].mxu0 %v5971
        %v6626 = vpop.f32.mrb[0].mxu0
        %v6627 = vadd.f32 %v6274, %v6626
        %v6628 = vpop.f32.mrb[0].mxu0
        %v6629 = vadd.f32 %v6276, %v6628
        %v6630 = vpop.f32.mrb[0].mxu0
        %v6631 = vadd.f32 %v6278, %v6630
        %v6632 = vpop.f32.mrb[0].mxu0
        %v6633 = vadd.f32 %v6280, %v6632
        %6634 = vmatprep.mubr.bf16.mxu0 %v5976
        %6635 = vmatmul.mubr.bf16.gmra.mrb[0].mxu0 %v5975
        %v6636 = vpop.f32.mrb[0].mxu0
        %v6637 = vadd.f32 %v6284, %v6636
        %v6638 = vpop.f32.mrb[0].mxu0
        %v6639 = vadd.f32 %v6286, %v6638
        %v6640 = vpop.f32.mrb[0].mxu0
        %v6641 = vadd.f32 %v6288, %v6640
        %v6642 = vpop.f32.mrb[0].mxu0
        %v6643 = vadd.f32 %v6290, %v6642
        %6644 = vmatprep.mubr.bf16.mxu0 %v5980
        %6645 = vmatmul.mubr.bf16.gmra.mrb[0].mxu0 %v5979
        %v6646 = vpop.f32.mrb[0].mxu0
        %v6647 = vadd.f32 %v6294, %v6646
        %v6648 = vpop.f32.mrb[0].mxu0
        %v6649 = vadd.f32 %v6296, %v6648
        %v6650 = vpop.f32.mrb[0].mxu0
        %v6651 = vadd.f32 %v6298, %v6650
        %v6652 = vpop.f32.mrb[0].mxu0
        %v6653 = vadd.f32 %v6300, %v6652
        %6654 = vmatprep.mubr.bf16.mxu0 %v5984
        %6655 = vmatmul.mubr.bf16.gmra.mrb[0].mxu0 %v5983
        %v6656 = vpop.f32.mrb[0].mxu0
        %v6657 = vadd.f32 %v6304, %v6656
        %v6658 = vpop.f32.mrb[0].mxu0
        %v6659 = vadd.f32 %v6306, %v6658
        %v6660 = vpop.f32.mrb[0].mxu0
        %v6661 = vadd.f32 %v6308, %v6660
        %v6662 = vpop.f32.mrb[0].mxu0
        %v6663 = vadd.f32 %v6310, %v6662
        %6664 = vmatprep.mubr.bf16.mxu0 %v5988
        %6665 = vmatmul.mubr.bf16.gmra.mrb[0].mxu0 %v5987
        %v6666 = vpop.f32.mrb[0].mxu0
        %v6667 = vadd.f32 %v6314, %v6666
        %v6668 = vpop.f32.mrb[0].mxu0
        %v6669 = vadd.f32 %v6316, %v6668
        %v6670 = vpop.f32.mrb[0].mxu0
        %v6671 = vadd.f32 %v6318, %v6670
        %v6672 = vpop.f32.mrb[0].mxu0
        %v6673 = vadd.f32 %v6320, %v6672
        %6674 = vmatprep.mubr.bf16.mxu0 %v5992
        %6675 = vmatmul.mubr.bf16.gmra.mrb[0].mxu0 %v5991
        %v6676 = vpop.f32.mrb[0].mxu0
        %v6677 = vadd.f32 %v6324, %v6676
        %v6678 = vpop.f32.mrb[0].mxu0
        %v6679 = vadd.f32 %v6326, %v6678
        %v6680 = vpop.f32.mrb[0].mxu0
        %v6681 = vadd.f32 %v6328, %v6680
        %v6682 = vpop.f32.mrb[0].mxu0
        %v6683 = vadd.f32 %v6330, %v6682
        %6684 = vmatprep.mubr.bf16.mxu0 %v5996
        %6685 = vmatmul.mubr.bf16.gmra.mrb[0].mxu0 %v5995
        %v6686 = vpop.f32.mrb[0].mxu0
        %v6687 = vadd.f32 %v6334, %v6686
        %v6688 = vpop.f32.mrb[0].mxu0
        %v6689 = vadd.f32 %v6336, %v6688
        %v6690 = vpop.f32.mrb[0].mxu0
        %v6691 = vadd.f32 %v6338, %v6690
        %v6692 = vpop.f32.mrb[0].mxu0
        %v6693 = vadd.f32 %v6340, %v6692
        %6694 = vmatprep.mubr.bf16.mxu0 %v6000
        %6695 = vmatmul.mubr.bf16.gmra.mrb[0].mxu0 %v5999
        %v6696 = vpop.f32.mrb[0].mxu0
        %v6697 = vadd.f32 %v6344, %v6696
        %v6698 = vpop.f32.mrb[0].mxu0
        %v6699 = vadd.f32 %v6346, %v6698
        %v6700 = vpop.f32.mrb[0].mxu0
        %v6701 = vadd.f32 %v6348, %v6700
        %v6702 = vpop.f32.mrb[0].mxu0
        %v6703 = vadd.f32 %v6350, %v6702
        %6704 = vmatprep.mubr.bf16.mxu0 %v6004
        %6705 = vmatmul.mubr.bf16.gmra.mrb[0].mxu0 %v6003
        %v6706 = vpop.f32.mrb[0].mxu0
        %v6707 = vadd.f32 %v6354, %v6706
        %v6708 = vpop.f32.mrb[0].mxu0
        %v6709 = vadd.f32 %v6356, %v6708
        %v6710 = vpop.f32.mrb[0].mxu0
        %v6711 = vadd.f32 %v6358, %v6710
        %v6712 = vpop.f32.mrb[0].mxu0
        %v6713 = vadd.f32 %v6360, %v6712
        %6714 = vmatprep.mubr.bf16.mxu0 %v6008
        %6715 = vmatmul.mubr.bf16.gmra.mrb[0].mxu0 %v6007
        %v6716 = vpop.f32.mrb[0].mxu0
        %v6717 = vadd.f32 %v6364, %v6716
        %v6718 = vpop.f32.mrb[0].mxu0
        %v6719 = vadd.f32 %v6366, %v6718
        %v6720 = vpop.f32.mrb[0].mxu0
        %v6721 = vadd.f32 %v6368, %v6720
        %v6722 = vpop.f32.mrb[0].mxu0
        %v6723 = vadd.f32 %v6370, %v6722
        %6724 = vmatprep.mubr.bf16.mxu0 %v6012
        %6725 = vmatmul.mubr.bf16.gmra.mrb[0].mxu0 %v6011
        %v6726 = vpop.f32.mrb[0].mxu0
        %v6727 = vadd.f32 %v6374, %v6726
        %v6728 = vpop.f32.mrb[0].mxu0
        %v6729 = vadd.f32 %v6376, %v6728
        %v6730 = vpop.f32.mrb[0].mxu0
        %v6731 = vadd.f32 %v6378, %v6730
        %v6732 = vpop.f32.mrb[0].mxu0
        %v6733 = vadd.f32 %v6380, %v6732
        %6734 = vmatprep.mubr.bf16.mxu0 %v6016
        %6735 = vmatmul.mubr.bf16.gmra.mrb[0].mxu0 %v6015
        %v6736 = vpop.f32.mrb[0].mxu0
        %v6737 = vadd.f32 %v6384, %v6736
        %v6738 = vpop.f32.mrb[0].mxu0
        %v6739 = vadd.f32 %v6386, %v6738
        %v6740 = vpop.f32.mrb[0].mxu0
        %v6741 = vadd.f32 %v6388, %v6740
        %v6742 = vpop.f32.mrb[0].mxu0
        %v6743 = vadd.f32 %v6390, %v6742
        %6744 = vmatprep.mubr.bf16.mxu0 %v6020
        %6745 = vmatmul.mubr.bf16.gmra.mrb[0].mxu0 %v6019
        %v6746 = vpop.f32.mrb[0].mxu0
        %v6747 = vadd.f32 %v6394, %v6746
        %v6748 = vpop.f32.mrb[0].mxu0
        %v6749 = vadd.f32 %v6396, %v6748
        %v6750 = vpop.f32.mrb[0].mxu0
        %v6751 = vadd.f32 %v6398, %v6750
        %v6752 = vpop.f32.mrb[0].mxu0
        %v6753 = vadd.f32 %v6400, %v6752
        %6754 = vmatprep.mubr.bf16.mxu0 %v6024
        %6755 = vmatmul.mubr.bf16.gmra.mrb[0].mxu0 %v6023
        %v6756 = vpop.f32.mrb[0].mxu0
        %v6757 = vadd.f32 %v6404, %v6756
        %v6758 = vpop.f32.mrb[0].mxu0
        %v6759 = vadd.f32 %v6406, %v6758
        %v6760 = vpop.f32.mrb[0].mxu0
        %v6761 = vadd.f32 %v6408, %v6760
        %v6762 = vpop.f32.mrb[0].mxu0
        %v6763 = vadd.f32 %v6410, %v6762
        %6764 = vmatprep.mubr.bf16.mxu0 %v6028
        %6765 = vmatmul.mubr.bf16.gmra.mrb[0].mxu0 %v6027
        %v6766 = vpop.f32.mrb[0].mxu0
        %v6767 = vadd.f32 %v6414, %v6766
        %v6768 = vpop.f32.mrb[0].mxu0
        %v6769 = vadd.f32 %v6416, %v6768
        %v6770 = vpop.f32.mrb[0].mxu0
        %v6771 = vadd.f32 %v6418, %v6770
        %v6772 = vpop.f32.mrb[0].mxu0
        %v6773 = vadd.f32 %v6420, %v6772
        %6774 = vmatprep.mubr.bf16.mxu0 %v6032
        %6775 = vmatmul.mubr.bf16.gmra.mrb[0].mxu0 %v6031
        %v6776 = vpop.f32.mrb[0].mxu0
        %v6777 = vadd.f32 %v6424, %v6776
        %v6778 = vpop.f32.mrb[0].mxu0
        %v6779 = vadd.f32 %v6426, %v6778
        %v6780 = vpop.f32.mrb[0].mxu0
        %v6781 = vadd.f32 %v6428, %v6780
        %v6782 = vpop.f32.mrb[0].mxu0
        %v6783 = vadd.f32 %v6430, %v6782
        %6784 = vmatprep.mubr.bf16.mxu0 %v6036
        %6785 = vmatmul.mubr.bf16.gmra.mrb[0].mxu0 %v6035
        %v6786 = vpop.f32.mrb[0].mxu0
        %v6787 = vadd.f32 %v6434, %v6786
        %v6788 = vpop.f32.mrb[0].mxu0
        %v6789 = vadd.f32 %v6436, %v6788
        %v6790 = vpop.f32.mrb[0].mxu0
        %v6791 = vadd.f32 %v6438, %v6790
        %v6792 = vpop.f32.mrb[0].mxu0
        %v6793 = vadd.f32 %v6440, %v6792
        %6794 = vmatprep.mubr.bf16.mxu0 %v6040
        %6795 = vmatmul.mubr.bf16.gmra.mrb[0].mxu0 %v6039
        %v6796 = vpop.f32.mrb[0].mxu0
        %v6797 = vadd.f32 %v6444, %v6796
        %v6798 = vpop.f32.mrb[0].mxu0
        %v6799 = vadd.f32 %v6446, %v6798
        %v6800 = vpop.f32.mrb[0].mxu0
        %v6801 = vadd.f32 %v6448, %v6800
        %v6802 = vpop.f32.mrb[0].mxu0
        %v6803 = vadd.f32 %v6450, %v6802
        %6804 = vmatprep.mubr.bf16.mxu0 %v6044
        %6805 = vmatmul.mubr.bf16.gmra.mrb[0].mxu0 %v6043
        %v6806 = vpop.f32.mrb[0].mxu0
        %v6807 = vadd.f32 %v6454, %v6806
        %v6808 = vpop.f32.mrb[0].mxu0
        %v6809 = vadd.f32 %v6456, %v6808
        %v6810 = vpop.f32.mrb[0].mxu0
        %v6811 = vadd.f32 %v6458, %v6810
        %v6812 = vpop.f32.mrb[0].mxu0
        %v6813 = vadd.f32 %v6460, %v6812
        %6814 = vdwg.mxu0
        %p6815 = scmp.eq.s32.totalorder %s19, 0
        // Predicated region
        $region76: #{fused_block.1} parent=70 // pred_check
          %p6816 = pneg %p6815
        $region77: #{fused_block.1} parent=70 // pred_check_branch
          %6818 = sbr.rel (%p6816) target = $region79
        $region78: #{fused_block.1} parent=70 // pred_region
          %6819 = vst [vmem:[%s8] sm:$0xff] 0.0
          %6820 = vst.msk [vmem:[%s8 + $0x8] sm:$0xff] %vm2198, 0.0
          %6821 = vst [vmem:[%s8 + $0x10] sm:$0xff] 0.0
          %6822 = vst.msk [vmem:[%s8 + $0x18] sm:$0xff] %vm2198, 0.0
          %6823 = vst [vmem:[%s8 + $0x20] sm:$0xff] 0.0
          %6824 = vst.msk [vmem:[%s8 + $0x28] sm:$0xff] %vm2198, 0.0
          %6825 = vst [vmem:[%s8 + $0x30] sm:$0xff] 0.0
          %6826 = vst.msk [vmem:[%s8 + $0x38] sm:$0xff] %vm2198, 0.0
          %6827 = vst [vmem:[%s8 + $0x40] sm:$0xff] 0.0
          %6828 = vst.msk [vmem:[%s8 + $0x48] sm:$0xff] %vm2198, 0.0
          %6829 = vst [vmem:[%s8 + $0x50] sm:$0xff] 0.0
          %6830 = vst.msk [vmem:[%s8 + $0x58] sm:$0xff] %vm2198, 0.0
          %6831 = vst [vmem:[%s8 + $0x60] sm:$0xff] 0.0
          %6832 = vst.msk [vmem:[%s8 + $0x68] sm:$0xff] %vm2198, 0.0
          %6833 = vst [vmem:[%s8 + $0x70] sm:$0xff] 0.0
          %6834 = vst.msk [vmem:[%s8 + $0x78] sm:$0xff] %vm2198, 0.0
          %6835 = vst [vmem:[%s8 + $0x80] sm:$0xff] 0.0
          %6836 = vst.msk [vmem:[%s8 + $0x88] sm:$0xff] %vm2198, 0.0
          %6837 = vst [vmem:[%s8 + $0x90] sm:$0xff] 0.0
          %6838 = vst.msk [vmem:[%s8 + $0x98] sm:$0xff] %vm2198, 0.0
          %6839 = vst [vmem:[%s8 + $0xa0] sm:$0xff] 0.0
          %6840 = vst.msk [vmem:[%s8 + $0xa8] sm:$0xff] %vm2198, 0.0
          %6841 = vst [vmem:[%s8 + $0xb0] sm:$0xff] 0.0
          %6842 = vst.msk [vmem:[%s8 + $0xb8] sm:$0xff] %vm2198, 0.0
          %6843 = vst [vmem:[%s8 + $0xc0] sm:$0xff] 0.0
          %6844 = vst.msk [vmem:[%s8 + $0xc8] sm:$0xff] %vm2198, 0.0
          %6845 = vst [vmem:[%s8 + $0xd0] sm:$0xff] 0.0
          %6846 = vst.msk [vmem:[%s8 + $0xd8] sm:$0xff] %vm2198, 0.0
          %6847 = vst [vmem:[%s8 + $0xe0] sm:$0xff] 0.0
          %6848 = vst.msk [vmem:[%s8 + $0xe8] sm:$0xff] %vm2198, 0.0
          %6849 = vst [vmem:[%s8 + $0xf0] sm:$0xff] 0.0
          %6850 = vst.msk [vmem:[%s8 + $0xf8] sm:$0xff] %vm2198, 0.0
          %6851 = vst [vmem:[%s8 + $0x100] sm:$0xff] 0.0
          %6852 = vst.msk [vmem:[%s8 + $0x108] sm:$0xff] %vm2198, 0.0
          %6853 = vst [vmem:[%s8 + $0x110] sm:$0xff] 0.0
          %6854 = vst.msk [vmem:[%s8 + $0x118] sm:$0xff] %vm2198, 0.0
          %6855 = vst [vmem:[%s8 + $0x120] sm:$0xff] 0.0
          %6856 = vst.msk [vmem:[%s8 + $0x128] sm:$0xff] %vm2198, 0.0
          %6857 = vst [vmem:[%s8 + $0x130] sm:$0xff] 0.0
          %6858 = vst.msk [vmem:[%s8 + $0x138] sm:$0xff] %vm2198, 0.0
          %6859 = vst [vmem:[%s8 + $0x140] sm:$0xff] 0.0
          %6860 = vst.msk [vmem:[%s8 + $0x148] sm:$0xff] %vm2198, 0.0
          %6861 = vst [vmem:[%s8 + $0x150] sm:$0xff] 0.0
          %6862 = vst.msk [vmem:[%s8 + $0x158] sm:$0xff] %vm2198, 0.0
          %6863 = vst [vmem:[%s8 + $0x160] sm:$0xff] 0.0
          %6864 = vst.msk [vmem:[%s8 + $0x168] sm:$0xff] %vm2198, 0.0
          %6865 = vst [vmem:[%s8 + $0x170] sm:$0xff] 0.0
          %6866 = vst.msk [vmem:[%s8 + $0x178] sm:$0xff] %vm2198, 0.0
          %6867 = vst [vmem:[%s8 + $0x180] sm:$0xff] 0.0
          %6868 = vst.msk [vmem:[%s8 + $0x188] sm:$0xff] %vm2198, 0.0
          %6869 = vst [vmem:[%s8 + $0x190] sm:$0xff] 0.0
          %6870 = vst.msk [vmem:[%s8 + $0x198] sm:$0xff] %vm2198, 0.0
          %6871 = vst [vmem:[%s8 + $0x1a0] sm:$0xff] 0.0
          %6872 = vst.msk [vmem:[%s8 + $0x1a8] sm:$0xff] %vm2198, 0.0
          %6873 = vst [vmem:[%s8 + $0x1b0] sm:$0xff] 0.0
          %6874 = vst.msk [vmem:[%s8 + $0x1b8] sm:$0xff] %vm2198, 0.0
          %6875 = vst [vmem:[%s8 + $0x1c0] sm:$0xff] 0.0
          %6876 = vst.msk [vmem:[%s8 + $0x1c8] sm:$0xff] %vm2198, 0.0
          %6877 = vst [vmem:[%s8 + $0x1d0] sm:$0xff] 0.0
          %6878 = vst.msk [vmem:[%s8 + $0x1d8] sm:$0xff] %vm2198, 0.0
          %6879 = vst [vmem:[%s8 + $0x1e0] sm:$0xff] 0.0
          %6880 = vst.msk [vmem:[%s8 + $0x1e8] sm:$0xff] %vm2198, 0.0
          %6881 = vst [vmem:[%s8 + $0x1f0] sm:$0xff] 0.0
          %6882 = vst.msk [vmem:[%s8 + $0x1f8] sm:$0xff] %vm2198, 0.0
          %6883 = vst [vmem:[%s8 + $0x200] sm:$0xff] 0.0
          %6884 = vst.msk [vmem:[%s8 + $0x208] sm:$0xff] %vm2198, 0.0
          %6885 = vst [vmem:[%s8 + $0x210] sm:$0xff] 0.0
          %6886 = vst.msk [vmem:[%s8 + $0x218] sm:$0xff] %vm2198, 0.0
          %6887 = vst [vmem:[%s8 + $0x220] sm:$0xff] 0.0
          %6888 = vst.msk [vmem:[%s8 + $0x228] sm:$0xff] %vm2198, 0.0
          %6889 = vst [vmem:[%s8 + $0x230] sm:$0xff] 0.0
          %6890 = vst.msk [vmem:[%s8 + $0x238] sm:$0xff] %vm2198, 0.0
          %6891 = vst [vmem:[%s8 + $0x240] sm:$0xff] 0.0
          %6892 = vst.msk [vmem:[%s8 + $0x248] sm:$0xff] %vm2198, 0.0
          %6893 = vst [vmem:[%s8 + $0x250] sm:$0xff] 0.0
          %6894 = vst.msk [vmem:[%s8 + $0x258] sm:$0xff] %vm2198, 0.0
          %6895 = vst [vmem:[%s8 + $0x260] sm:$0xff] 0.0
          %6896 = vst.msk [vmem:[%s8 + $0x268] sm:$0xff] %vm2198, 0.0
          %6897 = vst [vmem:[%s8 + $0x270] sm:$0xff] 0.0
          %6898 = vst.msk [vmem:[%s8 + $0x278] sm:$0xff] %vm2198, 0.0
          %6899 = vst [vmem:[%s8 + $0x280] sm:$0xff] 0.0
          %6900 = vst.msk [vmem:[%s8 + $0x288] sm:$0xff] %vm2198, 0.0
          %6901 = vst [vmem:[%s8 + $0x290] sm:$0xff] 0.0
          %6902 = vst.msk [vmem:[%s8 + $0x298] sm:$0xff] %vm2198, 0.0
          %6903 = vst [vmem:[%s8 + $0x2a0] sm:$0xff] 0.0
          %6904 = vst.msk [vmem:[%s8 + $0x2a8] sm:$0xff] %vm2198, 0.0
          %6905 = vst [vmem:[%s8 + $0x2b0] sm:$0xff] 0.0
          %6906 = vst.msk [vmem:[%s8 + $0x2b8] sm:$0xff] %vm2198, 0.0
          %6907 = vst [vmem:[%s8 + $0x2c0] sm:$0xff] 0.0
          %6908 = vst.msk [vmem:[%s8 + $0x2c8] sm:$0xff] %vm2198, 0.0
          %6909 = vst [vmem:[%s8 + $0x2d0] sm:$0xff] 0.0
          %6910 = vst.msk [vmem:[%s8 + $0x2d8] sm:$0xff] %vm2198, 0.0
          %6911 = vst [vmem:[%s8 + $0x2e0] sm:$0xff] 0.0
          %6912 = vst.msk [vmem:[%s8 + $0x2e8] sm:$0xff] %vm2198, 0.0
          %6913 = vst [vmem:[%s8 + $0x2f0] sm:$0xff] 0.0
          %6914 = vst.msk [vmem:[%s8 + $0x2f8] sm:$0xff] %vm2198, 0.0
          %6915 = vst [vmem:[%s8 + $0x300] sm:$0xff] 0.0
          %6916 = vst.msk [vmem:[%s8 + $0x308] sm:$0xff] %vm2198, 0.0
          %6917 = vst [vmem:[%s8 + $0x310] sm:$0xff] 0.0
          %6918 = vst.msk [vmem:[%s8 + $0x318] sm:$0xff] %vm2198, 0.0
          %6919 = vst [vmem:[%s8 + $0x320] sm:$0xff] 0.0
          %6920 = vst.msk [vmem:[%s8 + $0x328] sm:$0xff] %vm2198, 0.0
          %6921 = vst [vmem:[%s8 + $0x330] sm:$0xff] 0.0
          %6922 = vst.msk [vmem:[%s8 + $0x338] sm:$0xff] %vm2198, 0.0
          %6923 = vst [vmem:[%s8 + $0x340] sm:$0xff] 0.0
          %6924 = vst.msk [vmem:[%s8 + $0x348] sm:$0xff] %vm2198, 0.0
          %6925 = vst [vmem:[%s8 + $0x350] sm:$0xff] 0.0
          %6926 = vst.msk [vmem:[%s8 + $0x358] sm:$0xff] %vm2198, 0.0
          %6927 = vst [vmem:[%s8 + $0x360] sm:$0xff] 0.0
          %6928 = vst.msk [vmem:[%s8 + $0x368] sm:$0xff] %vm2198, 0.0
          %6929 = vst [vmem:[%s8 + $0x370] sm:$0xff] 0.0
          %6930 = vst.msk [vmem:[%s8 + $0x378] sm:$0xff] %vm2198, 0.0
          %6931 = vst [vmem:[%s8 + $0x380] sm:$0xff] 0.0
          %6932 = vst.msk [vmem:[%s8 + $0x388] sm:$0xff] %vm2198, 0.0
          %6933 = vst [vmem:[%s8 + $0x390] sm:$0xff] 0.0
          %6934 = vst.msk [vmem:[%s8 + $0x398] sm:$0xff] %vm2198, 0.0
          %6935 = vst [vmem:[%s8 + $0x3a0] sm:$0xff] 0.0
          %6936 = vst.msk [vmem:[%s8 + $0x3a8] sm:$0xff] %vm2198, 0.0
          %6937 = vst [vmem:[%s8 + $0x3b0] sm:$0xff] 0.0
          %6938 = vst.msk [vmem:[%s8 + $0x3b8] sm:$0xff] %vm2198, 0.0
          %6939 = vst [vmem:[%s8 + $0x3c0] sm:$0xff] 0.0
          %6940 = vst.msk [vmem:[%s8 + $0x3c8] sm:$0xff] %vm2198, 0.0
          %6941 = vst [vmem:[%s8 + $0x3d0] sm:$0xff] 0.0
          %6942 = vst.msk [vmem:[%s8 + $0x3d8] sm:$0xff] %vm2198, 0.0
          %6943 = vst [vmem:[%s8 + $0x3e0] sm:$0xff] 0.0
          %6944 = vst.msk [vmem:[%s8 + $0x3e8] sm:$0xff] %vm2198, 0.0
          %6945 = vst [vmem:[%s8 + $0x3f0] sm:$0xff] 0.0
          %6946 = vst.msk [vmem:[%s8 + $0x3f8] sm:$0xff] %vm2198, 0.0
        $region79: #{fused_block.1} parent=70 // pred_fallthru
          _
        %v6947 = vld [vmem:[%s8] sm:$0xff]
        %v6948 = vld [vmem:[%s8 + $0x8] sm:$0xff]
        %v6949 = vld [vmem:[%s8 + $0x10] sm:$0xff]
        %v6950 = vld [vmem:[%s8 + $0x18] sm:$0xff]
        %v6951 = vld [vmem:[%s8 + $0x20] sm:$0xff]
        %v6952 = vld [vmem:[%s8 + $0x28] sm:$0xff]
        %v6953 = vld [vmem:[%s8 + $0x30] sm:$0xff]
        %v6954 = vld [vmem:[%s8 + $0x38] sm:$0xff]
        %v6955 = vld [vmem:[%s8 + $0x40] sm:$0xff]
        %v6956 = vld [vmem:[%s8 + $0x48] sm:$0xff]
        %v6957 = vld [vmem:[%s8 + $0x50] sm:$0xff]
        %v6958 = vld [vmem:[%s8 + $0x58] sm:$0xff]
        %v6959 = vld [vmem:[%s8 + $0x60] sm:$0xff]
        %v6960 = vld [vmem:[%s8 + $0x68] sm:$0xff]
        %v6961 = vld [vmem:[%s8 + $0x70] sm:$0xff]
        %v6962 = vld [vmem:[%s8 + $0x78] sm:$0xff]
        %v6963 = vld [vmem:[%s8 + $0x80] sm:$0xff]
        %v6964 = vld [vmem:[%s8 + $0x88] sm:$0xff]
        %v6965 = vld [vmem:[%s8 + $0x90] sm:$0xff]
        %v6966 = vld [vmem:[%s8 + $0x98] sm:$0xff]
        %v6967 = vld [vmem:[%s8 + $0xa0] sm:$0xff]
        %v6968 = vld [vmem:[%s8 + $0xa8] sm:$0xff]
        %v6969 = vld [vmem:[%s8 + $0xb0] sm:$0xff]
        %v6970 = vld [vmem:[%s8 + $0xb8] sm:$0xff]
        %v6971 = vld [vmem:[%s8 + $0xc0] sm:$0xff]
        %v6972 = vld [vmem:[%s8 + $0xc8] sm:$0xff]
        %v6973 = vld [vmem:[%s8 + $0xd0] sm:$0xff]
        %v6974 = vld [vmem:[%s8 + $0xd8] sm:$0xff]
        %v6975 = vld [vmem:[%s8 + $0xe0] sm:$0xff]
        %v6976 = vld [vmem:[%s8 + $0xe8] sm:$0xff]
        %v6977 = vld [vmem:[%s8 + $0xf0] sm:$0xff]
        %v6978 = vld [vmem:[%s8 + $0xf8] sm:$0xff]
        %v6979 = vld [vmem:[%s8 + $0x100] sm:$0xff]
        %v6980 = vld [vmem:[%s8 + $0x108] sm:$0xff]
        %v6981 = vld [vmem:[%s8 + $0x110] sm:$0xff]
        %v6982 = vld [vmem:[%s8 + $0x118] sm:$0xff]
        %v6983 = vld [vmem:[%s8 + $0x120] sm:$0xff]
        %v6984 = vld [vmem:[%s8 + $0x128] sm:$0xff]
        %v6985 = vld [vmem:[%s8 + $0x130] sm:$0xff]
        %v6986 = vld [vmem:[%s8 + $0x138] sm:$0xff]
        %v6987 = vld [vmem:[%s8 + $0x140] sm:$0xff]
        %v6988 = vld [vmem:[%s8 + $0x148] sm:$0xff]
        %v6989 = vld [vmem:[%s8 + $0x150] sm:$0xff]
        %v6990 = vld [vmem:[%s8 + $0x158] sm:$0xff]
        %v6991 = vld [vmem:[%s8 + $0x160] sm:$0xff]
        %v6992 = vld [vmem:[%s8 + $0x168] sm:$0xff]
        %v6993 = vld [vmem:[%s8 + $0x170] sm:$0xff]
        %v6994 = vld [vmem:[%s8 + $0x178] sm:$0xff]
        %v6995 = vld [vmem:[%s8 + $0x180] sm:$0xff]
        %v6996 = vld [vmem:[%s8 + $0x188] sm:$0xff]
        %v6997 = vld [vmem:[%s8 + $0x190] sm:$0xff]
        %v6998 = vld [vmem:[%s8 + $0x198] sm:$0xff]
        %v6999 = vld [vmem:[%s8 + $0x1a0] sm:$0xff]
        %v7000 = vld [vmem:[%s8 + $0x1a8] sm:$0xff]
        %v7001 = vld [vmem:[%s8 + $0x1b0] sm:$0xff]
        %v7002 = vld [vmem:[%s8 + $0x1b8] sm:$0xff]
        %v7003 = vld [vmem:[%s8 + $0x1c0] sm:$0xff]
        %v7004 = vld [vmem:[%s8 + $0x1c8] sm:$0xff]
        %v7005 = vld [vmem:[%s8 + $0x1d0] sm:$0xff]
        %v7006 = vld [vmem:[%s8 + $0x1d8] sm:$0xff]
        %v7007 = vld [vmem:[%s8 + $0x1e0] sm:$0xff]
        %v7008 = vld [vmem:[%s8 + $0x1e8] sm:$0xff]
        %v7009 = vld [vmem:[%s8 + $0x1f0] sm:$0xff]
        %v7010 = vld [vmem:[%s8 + $0x1f8] sm:$0xff]
        %v7011 = vld [vmem:[%s8 + $0x200] sm:$0xff]
        %v7012 = vld [vmem:[%s8 + $0x208] sm:$0xff]
        %v7013 = vld [vmem:[%s8 + $0x210] sm:$0xff]
        %v7014 = vld [vmem:[%s8 + $0x218] sm:$0xff]
        %v7015 = vld [vmem:[%s8 + $0x220] sm:$0xff]
        %v7016 = vld [vmem:[%s8 + $0x228] sm:$0xff]
        %v7017 = vld [vmem:[%s8 + $0x230] sm:$0xff]
        %v7018 = vld [vmem:[%s8 + $0x238] sm:$0xff]
        %v7019 = vld [vmem:[%s8 + $0x240] sm:$0xff]
        %v7020 = vld [vmem:[%s8 + $0x248] sm:$0xff]
        %v7021 = vld [vmem:[%s8 + $0x250] sm:$0xff]
        %v7022 = vld [vmem:[%s8 + $0x258] sm:$0xff]
        %v7023 = vld [vmem:[%s8 + $0x260] sm:$0xff]
        %v7024 = vld [vmem:[%s8 + $0x268] sm:$0xff]
        %v7025 = vld [vmem:[%s8 + $0x270] sm:$0xff]
        %v7026 = vld [vmem:[%s8 + $0x278] sm:$0xff]
        %v7027 = vld [vmem:[%s8 + $0x280] sm:$0xff]
        %v7028 = vld [vmem:[%s8 + $0x288] sm:$0xff]
        %v7029 = vld [vmem:[%s8 + $0x290] sm:$0xff]
        %v7030 = vld [vmem:[%s8 + $0x298] sm:$0xff]
        %v7031 = vld [vmem:[%s8 + $0x2a0] sm:$0xff]
        %v7032 = vld [vmem:[%s8 + $0x2a8] sm:$0xff]
        %v7033 = vld [vmem:[%s8 + $0x2b0] sm:$0xff]
        %v7034 = vld [vmem:[%s8 + $0x2b8] sm:$0xff]
        %v7035 = vld [vmem:[%s8 + $0x2c0] sm:$0xff]
        %v7036 = vld [vmem:[%s8 + $0x2c8] sm:$0xff]
        %v7037 = vld [vmem:[%s8 + $0x2d0] sm:$0xff]
        %v7038 = vld [vmem:[%s8 + $0x2d8] sm:$0xff]
        %v7039 = vld [vmem:[%s8 + $0x2e0] sm:$0xff]
        %v7040 = vld [vmem:[%s8 + $0x2e8] sm:$0xff]
        %v7041 = vld [vmem:[%s8 + $0x2f0] sm:$0xff]
        %v7042 = vld [vmem:[%s8 + $0x2f8] sm:$0xff]
        %v7043 = vld [vmem:[%s8 + $0x300] sm:$0xff]
        %v7044 = vld [vmem:[%s8 + $0x308] sm:$0xff]
        %v7045 = vld [vmem:[%s8 + $0x310] sm:$0xff]
        %v7046 = vld [vmem:[%s8 + $0x318] sm:$0xff]
        %v7047 = vld [vmem:[%s8 + $0x320] sm:$0xff]
        %v7048 = vld [vmem:[%s8 + $0x328] sm:$0xff]
        %v7049 = vld [vmem:[%s8 + $0x330] sm:$0xff]
        %v7050 = vld [vmem:[%s8 + $0x338] sm:$0xff]
        %v7051 = vld [vmem:[%s8 + $0x340] sm:$0xff]
        %v7052 = vld [vmem:[%s8 + $0x348] sm:$0xff]
        %v7053 = vld [vmem:[%s8 + $0x350] sm:$0xff]
        %v7054 = vld [vmem:[%s8 + $0x358] sm:$0xff]
        %v7055 = vld [vmem:[%s8 + $0x360] sm:$0xff]
        %v7056 = vld [vmem:[%s8 + $0x368] sm:$0xff]
        %v7057 = vld [vmem:[%s8 + $0x370] sm:$0xff]
        %v7058 = vld [vmem:[%s8 + $0x378] sm:$0xff]
        %v7059 = vld [vmem:[%s8 + $0x380] sm:$0xff]
        %v7060 = vld [vmem:[%s8 + $0x388] sm:$0xff]
        %v7061 = vld [vmem:[%s8 + $0x390] sm:$0xff]
        %v7062 = vld [vmem:[%s8 + $0x398] sm:$0xff]
        %v7063 = vld [vmem:[%s8 + $0x3a0] sm:$0xff]
        %v7064 = vld [vmem:[%s8 + $0x3a8] sm:$0xff]
        %v7065 = vld [vmem:[%s8 + $0x3b0] sm:$0xff]
        %v7066 = vld [vmem:[%s8 + $0x3b8] sm:$0xff]
        %v7067 = vld [vmem:[%s8 + $0x3c0] sm:$0xff]
        %v7068 = vld [vmem:[%s8 + $0x3c8] sm:$0xff]
        %v7069 = vld [vmem:[%s8 + $0x3d0] sm:$0xff]
        %v7070 = vld [vmem:[%s8 + $0x3d8] sm:$0xff]
        %v7071 = vld [vmem:[%s8 + $0x3e0] sm:$0xff]
        %v7072 = vld [vmem:[%s8 + $0x3e8] sm:$0xff]
        %v7073 = vld [vmem:[%s8 + $0x3f0] sm:$0xff]
        %v7074 = vld [vmem:[%s8 + $0x3f8] sm:$0xff]
        %v7075 = vadd.f32 %v6947, %v6497
        %v7076 = vadd.f32 %v6948, %v6499
        %v7077 = vadd.f32 %v6949, %v6501
        %v7078 = vadd.f32 %v6950, %v6503
        %v7079 = vadd.f32 %v6951, %v6507
        %v7080 = vadd.f32 %v6952, %v6509
        %v7081 = vadd.f32 %v6953, %v6511
        %v7082 = vadd.f32 %v6954, %v6513
        %v7083 = vadd.f32 %v6955, %v6517
        %v7084 = vadd.f32 %v6956, %v6519
        %v7085 = vadd.f32 %v6957, %v6521
        %v7086 = vadd.f32 %v6958, %v6523
        %v7087 = vadd.f32 %v6959, %v6527
        %v7088 = vadd.f32 %v6960, %v6529
        %v7089 = vadd.f32 %v6961, %v6531
        %v7090 = vadd.f32 %v6962, %v6533
        %v7091 = vadd.f32 %v6963, %v6537
        %v7092 = vadd.f32 %v6964, %v6539
        %v7093 = vadd.f32 %v6965, %v6541
        %v7094 = vadd.f32 %v6966, %v6543
        %v7095 = vadd.f32 %v6967, %v6547
        %v7096 = vadd.f32 %v6968, %v6549
        %v7097 = vadd.f32 %v6969, %v6551
        %v7098 = vadd.f32 %v6970, %v6553
        %v7099 = vadd.f32 %v6971, %v6557
        %v7100 = vadd.f32 %v6972, %v6559
        %v7101 = vadd.f32 %v6973, %v6561
        %v7102 = vadd.f32 %v6974, %v6563
        %v7103 = vadd.f32 %v6975, %v6567
        %v7104 = vadd.f32 %v6976, %v6569
        %v7105 = vadd.f32 %v6977, %v6571
        %v7106 = vadd.f32 %v6978, %v6573
        %v7107 = vadd.f32 %v6979, %v6577
        %v7108 = vadd.f32 %v6980, %v6579
        %v7109 = vadd.f32 %v6981, %v6581
        %v7110 = vadd.f32 %v6982, %v6583
        %v7111 = vadd.f32 %v6983, %v6587
        %v7112 = vadd.f32 %v6984, %v6589
        %v7113 = vadd.f32 %v6985, %v6591
        %v7114 = vadd.f32 %v6986, %v6593
        %v7115 = vadd.f32 %v6987, %v6597
        %v7116 = vadd.f32 %v6988, %v6599
        %v7117 = vadd.f32 %v6989, %v6601
        %v7118 = vadd.f32 %v6990, %v6603
        %v7119 = vadd.f32 %v6991, %v6607
        %v7120 = vadd.f32 %v6992, %v6609
        %v7121 = vadd.f32 %v6993, %v6611
        %v7122 = vadd.f32 %v6994, %v6613
        %v7123 = vadd.f32 %v6995, %v6617
        %v7124 = vadd.f32 %v6996, %v6619
        %v7125 = vadd.f32 %v6997, %v6621
        %v7126 = vadd.f32 %v6998, %v6623
        %v7127 = vadd.f32 %v6999, %v6627
        %v7128 = vadd.f32 %v7000, %v6629
        %v7129 = vadd.f32 %v7001, %v6631
        %v7130 = vadd.f32 %v7002, %v6633
        %v7131 = vadd.f32 %v7003, %v6637
        %v7132 = vadd.f32 %v7004, %v6639
        %v7133 = vadd.f32 %v7005, %v6641
        %v7134 = vadd.f32 %v7006, %v6643
        %v7135 = vadd.f32 %v7007, %v6647
        %v7136 = vadd.f32 %v7008, %v6649
        %v7137 = vadd.f32 %v7009, %v6651
        %v7138 = vadd.f32 %v7010, %v6653
        %v7139 = vadd.f32 %v7011, %v6657
        %v7140 = vadd.f32 %v7012, %v6659
        %v7141 = vadd.f32 %v7013, %v6661
        %v7142 = vadd.f32 %v7014, %v6663
        %v7143 = vadd.f32 %v7015, %v6667
        %v7144 = vadd.f32 %v7016, %v6669
        %v7145 = vadd.f32 %v7017, %v6671
        %v7146 = vadd.f32 %v7018, %v6673
        %v7147 = vadd.f32 %v7019, %v6677
        %v7148 = vadd.f32 %v7020, %v6679
        %v7149 = vadd.f32 %v7021, %v6681
        %v7150 = vadd.f32 %v7022, %v6683
        %v7151 = vadd.f32 %v7023, %v6687
        %v7152 = vadd.f32 %v7024, %v6689
        %v7153 = vadd.f32 %v7025, %v6691
        %v7154 = vadd.f32 %v7026, %v6693
        %v7155 = vadd.f32 %v7027, %v6697
        %v7156 = vadd.f32 %v7028, %v6699
        %v7157 = vadd.f32 %v7029, %v6701
        %v7158 = vadd.f32 %v7030, %v6703
        %v7159 = vadd.f32 %v7031, %v6707
        %v7160 = vadd.f32 %v7032, %v6709
        %v7161 = vadd.f32 %v7033, %v6711
        %v7162 = vadd.f32 %v7034, %v6713
        %v7163 = vadd.f32 %v7035, %v6717
        %v7164 = vadd.f32 %v7036, %v6719
        %v7165 = vadd.f32 %v7037, %v6721
        %v7166 = vadd.f32 %v7038, %v6723
        %v7167 = vadd.f32 %v7039, %v6727
        %v7168 = vadd.f32 %v7040, %v6729
        %v7169 = vadd.f32 %v7041, %v6731
        %v7170 = vadd.f32 %v7042, %v6733
        %v7171 = vadd.f32 %v7043, %v6737
        %v7172 = vadd.f32 %v7044, %v6739
        %v7173 = vadd.f32 %v7045, %v6741
        %v7174 = vadd.f32 %v7046, %v6743
        %v7175 = vadd.f32 %v7047, %v6747
        %v7176 = vadd.f32 %v7048, %v6749
        %v7177 = vadd.f32 %v7049, %v6751
        %v7178 = vadd.f32 %v7050, %v6753
        %v7179 = vadd.f32 %v7051, %v6757
        %v7180 = vadd.f32 %v7052, %v6759
        %v7181 = vadd.f32 %v7053, %v6761
        %v7182 = vadd.f32 %v7054, %v6763
        %v7183 = vadd.f32 %v7055, %v6767
        %v7184 = vadd.f32 %v7056, %v6769
        %v7185 = vadd.f32 %v7057, %v6771
        %v7186 = vadd.f32 %v7058, %v6773
        %v7187 = vadd.f32 %v7059, %v6777
        %v7188 = vadd.f32 %v7060, %v6779
        %v7189 = vadd.f32 %v7061, %v6781
        %v7190 = vadd.f32 %v7062, %v6783
        %v7191 = vadd.f32 %v7063, %v6787
        %v7192 = vadd.f32 %v7064, %v6789
        %v7193 = vadd.f32 %v7065, %v6791
        %v7194 = vadd.f32 %v7066, %v6793
        %v7195 = vadd.f32 %v7067, %v6797
        %v7196 = vadd.f32 %v7068, %v6799
        %v7197 = vadd.f32 %v7069, %v6801
        %v7198 = vadd.f32 %v7070, %v6803
        %v7199 = vadd.f32 %v7071, %v6807
        %v7200 = vadd.f32 %v7072, %v6809
        %v7201 = vadd.f32 %v7073, %v6811
        %v7202 = vadd.f32 %v7074, %v6813
        %7203 = vst [vmem:[%s8] sm:$0xff] %v7075
        %7204 = vst.msk [vmem:[%s8 + $0x8] sm:$0xff] %vm2198, %v7076
        %7205 = vst [vmem:[%s8 + $0x10] sm:$0xff] %v7077
        %7206 = vst.msk [vmem:[%s8 + $0x18] sm:$0xff] %vm2198, %v7078
        %7207 = vst [vmem:[%s8 + $0x20] sm:$0xff] %v7079
        %7208 = vst.msk [vmem:[%s8 + $0x28] sm:$0xff] %vm2198, %v7080
        %7209 = vst [vmem:[%s8 + $0x30] sm:$0xff] %v7081
        %7210 = vst.msk [vmem:[%s8 + $0x38] sm:$0xff] %vm2198, %v7082
        %7211 = vst [vmem:[%s8 + $0x40] sm:$0xff] %v7083
        %7212 = vst.msk [vmem:[%s8 + $0x48] sm:$0xff] %vm2198, %v7084
        %7213 = vst [vmem:[%s8 + $0x50] sm:$0xff] %v7085
        %7214 = vst.msk [vmem:[%s8 + $0x58] sm:$0xff] %vm2198, %v7086
        %7215 = vst [vmem:[%s8 + $0x60] sm:$0xff] %v7087
        %7216 = vst.msk [vmem:[%s8 + $0x68] sm:$0xff] %vm2198, %v7088
        %7217 = vst [vmem:[%s8 + $0x70] sm:$0xff] %v7089
        %7218 = vst.msk [vmem:[%s8 + $0x78] sm:$0xff] %vm2198, %v7090
        %7219 = vst [vmem:[%s8 + $0x80] sm:$0xff] %v7091
        %7220 = vst.msk [vmem:[%s8 + $0x88] sm:$0xff] %vm2198, %v7092
        %7221 = vst [vmem:[%s8 + $0x90] sm:$0xff] %v7093
        %7222 = vst.msk [vmem:[%s8 + $0x98] sm:$0xff] %vm2198, %v7094
        %7223 = vst [vmem:[%s8 + $0xa0] sm:$0xff] %v7095
        %7224 = vst.msk [vmem:[%s8 + $0xa8] sm:$0xff] %vm2198, %v7096
        %7225 = vst [vmem:[%s8 + $0xb0] sm:$0xff] %v7097
        %7226 = vst.msk [vmem:[%s8 + $0xb8] sm:$0xff] %vm2198, %v7098
        %7227 = vst [vmem:[%s8 + $0xc0] sm:$0xff] %v7099
        %7228 = vst.msk [vmem:[%s8 + $0xc8] sm:$0xff] %vm2198, %v7100
        %7229 = vst [vmem:[%s8 + $0xd0] sm:$0xff] %v7101
        %7230 = vst.msk [vmem:[%s8 + $0xd8] sm:$0xff] %vm2198, %v7102
        %7231 = vst [vmem:[%s8 + $0xe0] sm:$0xff] %v7103
        %7232 = vst.msk [vmem:[%s8 + $0xe8] sm:$0xff] %vm2198, %v7104
        %7233 = vst [vmem:[%s8 + $0xf0] sm:$0xff] %v7105
        %7234 = vst.msk [vmem:[%s8 + $0xf8] sm:$0xff] %vm2198, %v7106
        %7235 = vst [vmem:[%s8 + $0x100] sm:$0xff] %v7107
        %7236 = vst.msk [vmem:[%s8 + $0x108] sm:$0xff] %vm2198, %v7108
        %7237 = vst [vmem:[%s8 + $0x110] sm:$0xff] %v7109
        %7238 = vst.msk [vmem:[%s8 + $0x118] sm:$0xff] %vm2198, %v7110
        %7239 = vst [vmem:[%s8 + $0x120] sm:$0xff] %v7111
        %7240 = vst.msk [vmem:[%s8 + $0x128] sm:$0xff] %vm2198, %v7112
        %7241 = vst [vmem:[%s8 + $0x130] sm:$0xff] %v7113
        %7242 = vst.msk [vmem:[%s8 + $0x138] sm:$0xff] %vm2198, %v7114
        %7243 = vst [vmem:[%s8 + $0x140] sm:$0xff] %v7115
        %7244 = vst.msk [vmem:[%s8 + $0x148] sm:$0xff] %vm2198, %v7116
        %7245 = vst [vmem:[%s8 + $0x150] sm:$0xff] %v7117
        %7246 = vst.msk [vmem:[%s8 + $0x158] sm:$0xff] %vm2198, %v7118
        %7247 = vst [vmem:[%s8 + $0x160] sm:$0xff] %v7119
        %7248 = vst.msk [vmem:[%s8 + $0x168] sm:$0xff] %vm2198, %v7120
        %7249 = vst [vmem:[%s8 + $0x170] sm:$0xff] %v7121
        %7250 = vst.msk [vmem:[%s8 + $0x178] sm:$0xff] %vm2198, %v7122
        %7251 = vst [vmem:[%s8 + $0x180] sm:$0xff] %v7123
        %7252 = vst.msk [vmem:[%s8 + $0x188] sm:$0xff] %vm2198, %v7124
        %7253 = vst [vmem:[%s8 + $0x190] sm:$0xff] %v7125
        %7254 = vst.msk [vmem:[%s8 + $0x198] sm:$0xff] %vm2198, %v7126
        %7255 = vst [vmem:[%s8 + $0x1a0] sm:$0xff] %v7127
        %7256 = vst.msk [vmem:[%s8 + $0x1a8] sm:$0xff] %vm2198, %v7128
        %7257 = vst [vmem:[%s8 + $0x1b0] sm:$0xff] %v7129
        %7258 = vst.msk [vmem:[%s8 + $0x1b8] sm:$0xff] %vm2198, %v7130
        %7259 = vst [vmem:[%s8 + $0x1c0] sm:$0xff] %v7131
        %7260 = vst.msk [vmem:[%s8 + $0x1c8] sm:$0xff] %vm2198, %v7132
        %7261 = vst [vmem:[%s8 + $0x1d0] sm:$0xff] %v7133
        %7262 = vst.msk [vmem:[%s8 + $0x1d8] sm:$0xff] %vm2198, %v7134
        %7263 = vst [vmem:[%s8 + $0x1e0] sm:$0xff] %v7135
        %7264 = vst.msk [vmem:[%s8 + $0x1e8] sm:$0xff] %vm2198, %v7136
        %7265 = vst [vmem:[%s8 + $0x1f0] sm:$0xff] %v7137
        %7266 = vst.msk [vmem:[%s8 + $0x1f8] sm:$0xff] %vm2198, %v7138
        %7267 = vst [vmem:[%s8 + $0x200] sm:$0xff] %v7139
        %7268 = vst.msk [vmem:[%s8 + $0x208] sm:$0xff] %vm2198, %v7140
        %7269 = vst [vmem:[%s8 + $0x210] sm:$0xff] %v7141
        %7270 = vst.msk [vmem:[%s8 + $0x218] sm:$0xff] %vm2198, %v7142
        %7271 = vst [vmem:[%s8 + $0x220] sm:$0xff] %v7143
        %7272 = vst.msk [vmem:[%s8 + $0x228] sm:$0xff] %vm2198, %v7144
        %7273 = vst [vmem:[%s8 + $0x230] sm:$0xff] %v7145
        %7274 = vst.msk [vmem:[%s8 + $0x238] sm:$0xff] %vm2198, %v7146
        %7275 = vst [vmem:[%s8 + $0x240] sm:$0xff] %v7147
        %7276 = vst.msk [vmem:[%s8 + $0x248] sm:$0xff] %vm2198, %v7148
        %7277 = vst [vmem:[%s8 + $0x250] sm:$0xff] %v7149
        %7278 = vst.msk [vmem:[%s8 + $0x258] sm:$0xff] %vm2198, %v7150
        %7279 = vst [vmem:[%s8 + $0x260] sm:$0xff] %v7151
        %7280 = vst.msk [vmem:[%s8 + $0x268] sm:$0xff] %vm2198, %v7152
        %7281 = vst [vmem:[%s8 + $0x270] sm:$0xff] %v7153
        %7282 = vst.msk [vmem:[%s8 + $0x278] sm:$0xff] %vm2198, %v7154
        %7283 = vst [vmem:[%s8 + $0x280] sm:$0xff] %v7155
        %7284 = vst.msk [vmem:[%s8 + $0x288] sm:$0xff] %vm2198, %v7156
        %7285 = vst [vmem:[%s8 + $0x290] sm:$0xff] %v7157
        %7286 = vst.msk [vmem:[%s8 + $0x298] sm:$0xff] %vm2198, %v7158
        %7287 = vst [vmem:[%s8 + $0x2a0] sm:$0xff] %v7159
        %7288 = vst.msk [vmem:[%s8 + $0x2a8] sm:$0xff] %vm2198, %v7160
        %7289 = vst [vmem:[%s8 + $0x2b0] sm:$0xff] %v7161
        %7290 = vst.msk [vmem:[%s8 + $0x2b8] sm:$0xff] %vm2198, %v7162
        %7291 = vst [vmem:[%s8 + $0x2c0] sm:$0xff] %v7163
        %7292 = vst.msk [vmem:[%s8 + $0x2c8] sm:$0xff] %vm2198, %v7164
        %7293 = vst [vmem:[%s8 + $0x2d0] sm:$0xff] %v7165
        %7294 = vst.msk [vmem:[%s8 + $0x2d8] sm:$0xff] %vm2198, %v7166
        %7295 = vst [vmem:[%s8 + $0x2e0] sm:$0xff] %v7167
        %7296 = vst.msk [vmem:[%s8 + $0x2e8] sm:$0xff] %vm2198, %v7168
        %7297 = vst [vmem:[%s8 + $0x2f0] sm:$0xff] %v7169
        %7298 = vst.msk [vmem:[%s8 + $0x2f8] sm:$0xff] %vm2198, %v7170
        %7299 = vst [vmem:[%s8 + $0x300] sm:$0xff] %v7171
        %7300 = vst.msk [vmem:[%s8 + $0x308] sm:$0xff] %vm2198, %v7172
        %7301 = vst [vmem:[%s8 + $0x310] sm:$0xff] %v7173
        %7302 = vst.msk [vmem:[%s8 + $0x318] sm:$0xff] %vm2198, %v7174
        %7303 = vst [vmem:[%s8 + $0x320] sm:$0xff] %v7175
        %7304 = vst.msk [vmem:[%s8 + $0x328] sm:$0xff] %vm2198, %v7176
        %7305 = vst [vmem:[%s8 + $0x330] sm:$0xff] %v7177
        %7306 = vst.msk [vmem:[%s8 + $0x338] sm:$0xff] %vm2198, %v7178
        %7307 = vst [vmem:[%s8 + $0x340] sm:$0xff] %v7179
        %7308 = vst.msk [vmem:[%s8 + $0x348] sm:$0xff] %vm2198, %v7180
        %7309 = vst [vmem:[%s8 + $0x350] sm:$0xff] %v7181
        %7310 = vst.msk [vmem:[%s8 + $0x358] sm:$0xff] %vm2198, %v7182
        %7311 = vst [vmem:[%s8 + $0x360] sm:$0xff] %v7183
        %7312 = vst.msk [vmem:[%s8 + $0x368] sm:$0xff] %vm2198, %v7184
        %7313 = vst [vmem:[%s8 + $0x370] sm:$0xff] %v7185
        %7314 = vst.msk [vmem:[%s8 + $0x378] sm:$0xff] %vm2198, %v7186
        %7315 = vst [vmem:[%s8 + $0x380] sm:$0xff] %v7187
        %7316 = vst.msk [vmem:[%s8 + $0x388] sm:$0xff] %vm2198, %v7188
        %7317 = vst [vmem:[%s8 + $0x390] sm:$0xff] %v7189
        %7318 = vst.msk [vmem:[%s8 + $0x398] sm:$0xff] %vm2198, %v7190
        %7319 = vst [vmem:[%s8 + $0x3a0] sm:$0xff] %v7191
        %7320 = vst.msk [vmem:[%s8 + $0x3a8] sm:$0xff] %vm2198, %v7192
        %7321 = vst [vmem:[%s8 + $0x3b0] sm:$0xff] %v7193
        %7322 = vst.msk [vmem:[%s8 + $0x3b8] sm:$0xff] %vm2198, %v7194
        %7323 = vst [vmem:[%s8 + $0x3c0] sm:$0xff] %v7195
        %7324 = vst.msk [vmem:[%s8 + $0x3c8] sm:$0xff] %vm2198, %v7196
        %7325 = vst [vmem:[%s8 + $0x3d0] sm:$0xff] %v7197
        %7326 = vst.msk [vmem:[%s8 + $0x3d8] sm:$0xff] %vm2198, %v7198
        %7327 = vst [vmem:[%s8 + $0x3e0] sm:$0xff] %v7199
        %7328 = vst.msk [vmem:[%s8 + $0x3e8] sm:$0xff] %vm2198, %v7200
        %7329 = vst [vmem:[%s8 + $0x3f0] sm:$0xff] %v7201
        %7330 = vst.msk [vmem:[%s8 + $0x3f8] sm:$0xff] %vm2198, %v7202
        %p7331 = scmp.eq.s32.totalorder %s19, 1
        // Predicated region
        $region80: #{fused_block.1} parent=70 // pred_check
          %p7332 = pneg %p7331
        $region81: #{fused_block.1} parent=70 // pred_check_branch
          %7334 = sbr.rel (%p7332) target = $region83
        $region82: #{fused_block.1} parent=70 // pred_region
          %v7335 = vld [vmem:[%s8] sm:$0xff]
          %v7336 = vld [vmem:[%s8 + $0x8] sm:$0xff]
          %v7337 = vld [vmem:[%s8 + $0x10] sm:$0xff]
          %v7338 = vld [vmem:[%s8 + $0x18] sm:$0xff]
          %v7339 = vld [vmem:[%s8 + $0x20] sm:$0xff]
          %v7340 = vld [vmem:[%s8 + $0x28] sm:$0xff]
          %v7341 = vld [vmem:[%s8 + $0x30] sm:$0xff]
          %v7342 = vld [vmem:[%s8 + $0x38] sm:$0xff]
          %v7343 = vld [vmem:[%s8 + $0x40] sm:$0xff]
          %v7344 = vld [vmem:[%s8 + $0x48] sm:$0xff]
          %v7345 = vld [vmem:[%s8 + $0x50] sm:$0xff]
          %v7346 = vld [vmem:[%s8 + $0x58] sm:$0xff]
          %v7347 = vld [vmem:[%s8 + $0x60] sm:$0xff]
          %v7348 = vld [vmem:[%s8 + $0x68] sm:$0xff]
          %v7349 = vld [vmem:[%s8 + $0x70] sm:$0xff]
          %v7350 = vld [vmem:[%s8 + $0x78] sm:$0xff]
          %v7351 = vld [vmem:[%s8 + $0x80] sm:$0xff]
          %v7352 = vld [vmem:[%s8 + $0x88] sm:$0xff]
          %v7353 = vld [vmem:[%s8 + $0x90] sm:$0xff]
          %v7354 = vld [vmem:[%s8 + $0x98] sm:$0xff]
          %v7355 = vld [vmem:[%s8 + $0xa0] sm:$0xff]
          %v7356 = vld [vmem:[%s8 + $0xa8] sm:$0xff]
          %v7357 = vld [vmem:[%s8 + $0xb0] sm:$0xff]
          %v7358 = vld [vmem:[%s8 + $0xb8] sm:$0xff]
          %v7359 = vld [vmem:[%s8 + $0xc0] sm:$0xff]
          %v7360 = vld [vmem:[%s8 + $0xc8] sm:$0xff]
          %v7361 = vld [vmem:[%s8 + $0xd0] sm:$0xff]
          %v7362 = vld [vmem:[%s8 + $0xd8] sm:$0xff]
          %v7363 = vld [vmem:[%s8 + $0xe0] sm:$0xff]
          %v7364 = vld [vmem:[%s8 + $0xe8] sm:$0xff]
          %v7365 = vld [vmem:[%s8 + $0xf0] sm:$0xff]
          %v7366 = vld [vmem:[%s8 + $0xf8] sm:$0xff]
          %v7367 = vld [vmem:[%s8 + $0x100] sm:$0xff]
          %v7368 = vld [vmem:[%s8 + $0x108] sm:$0xff]
          %v7369 = vld [vmem:[%s8 + $0x110] sm:$0xff]
          %v7370 = vld [vmem:[%s8 + $0x118] sm:$0xff]
          %v7371 = vld [vmem:[%s8 + $0x120] sm:$0xff]
          %v7372 = vld [vmem:[%s8 + $0x128] sm:$0xff]
          %v7373 = vld [vmem:[%s8 + $0x130] sm:$0xff]
          %v7374 = vld [vmem:[%s8 + $0x138] sm:$0xff]
          %v7375 = vld [vmem:[%s8 + $0x140] sm:$0xff]
          %v7376 = vld [vmem:[%s8 + $0x148] sm:$0xff]
          %v7377 = vld [vmem:[%s8 + $0x150] sm:$0xff]
          %v7378 = vld [vmem:[%s8 + $0x158] sm:$0xff]
          %v7379 = vld [vmem:[%s8 + $0x160] sm:$0xff]
          %v7380 = vld [vmem:[%s8 + $0x168] sm:$0xff]
          %v7381 = vld [vmem:[%s8 + $0x170] sm:$0xff]
          %v7382 = vld [vmem:[%s8 + $0x178] sm:$0xff]
          %v7383 = vld [vmem:[%s8 + $0x180] sm:$0xff]
          %v7384 = vld [vmem:[%s8 + $0x188] sm:$0xff]
          %v7385 = vld [vmem:[%s8 + $0x190] sm:$0xff]
          %v7386 = vld [vmem:[%s8 + $0x198] sm:$0xff]
          %v7387 = vld [vmem:[%s8 + $0x1a0] sm:$0xff]
          %v7388 = vld [vmem:[%s8 + $0x1a8] sm:$0xff]
          %v7389 = vld [vmem:[%s8 + $0x1b0] sm:$0xff]
          %v7390 = vld [vmem:[%s8 + $0x1b8] sm:$0xff]
          %v7391 = vld [vmem:[%s8 + $0x1c0] sm:$0xff]
          %v7392 = vld [vmem:[%s8 + $0x1c8] sm:$0xff]
          %v7393 = vld [vmem:[%s8 + $0x1d0] sm:$0xff]
          %v7394 = vld [vmem:[%s8 + $0x1d8] sm:$0xff]
          %v7395 = vld [vmem:[%s8 + $0x1e0] sm:$0xff]
          %v7396 = vld [vmem:[%s8 + $0x1e8] sm:$0xff]
          %v7397 = vld [vmem:[%s8 + $0x1f0] sm:$0xff]
          %v7398 = vld [vmem:[%s8 + $0x1f8] sm:$0xff]
          %v7399 = vld [vmem:[%s8 + $0x200] sm:$0xff]
          %v7400 = vld [vmem:[%s8 + $0x208] sm:$0xff]
          %v7401 = vld [vmem:[%s8 + $0x210] sm:$0xff]
          %v7402 = vld [vmem:[%s8 + $0x218] sm:$0xff]
          %v7403 = vld [vmem:[%s8 + $0x220] sm:$0xff]
          %v7404 = vld [vmem:[%s8 + $0x228] sm:$0xff]
          %v7405 = vld [vmem:[%s8 + $0x230] sm:$0xff]
          %v7406 = vld [vmem:[%s8 + $0x238] sm:$0xff]
          %v7407 = vld [vmem:[%s8 + $0x240] sm:$0xff]
          %v7408 = vld [vmem:[%s8 + $0x248] sm:$0xff]
          %v7409 = vld [vmem:[%s8 + $0x250] sm:$0xff]
          %v7410 = vld [vmem:[%s8 + $0x258] sm:$0xff]
          %v7411 = vld [vmem:[%s8 + $0x260] sm:$0xff]
          %v7412 = vld [vmem:[%s8 + $0x268] sm:$0xff]
          %v7413 = vld [vmem:[%s8 + $0x270] sm:$0xff]
          %v7414 = vld [vmem:[%s8 + $0x278] sm:$0xff]
          %v7415 = vld [vmem:[%s8 + $0x280] sm:$0xff]
          %v7416 = vld [vmem:[%s8 + $0x288] sm:$0xff]
          %v7417 = vld [vmem:[%s8 + $0x290] sm:$0xff]
          %v7418 = vld [vmem:[%s8 + $0x298] sm:$0xff]
          %v7419 = vld [vmem:[%s8 + $0x2a0] sm:$0xff]
          %v7420 = vld [vmem:[%s8 + $0x2a8] sm:$0xff]
          %v7421 = vld [vmem:[%s8 + $0x2b0] sm:$0xff]
          %v7422 = vld [vmem:[%s8 + $0x2b8] sm:$0xff]
          %v7423 = vld [vmem:[%s8 + $0x2c0] sm:$0xff]
          %v7424 = vld [vmem:[%s8 + $0x2c8] sm:$0xff]
          %v7425 = vld [vmem:[%s8 + $0x2d0] sm:$0xff]
          %v7426 = vld [vmem:[%s8 + $0x2d8] sm:$0xff]
          %v7427 = vld [vmem:[%s8 + $0x2e0] sm:$0xff]
          %v7428 = vld [vmem:[%s8 + $0x2e8] sm:$0xff]
          %v7429 = vld [vmem:[%s8 + $0x2f0] sm:$0xff]
          %v7430 = vld [vmem:[%s8 + $0x2f8] sm:$0xff]
          %v7431 = vld [vmem:[%s8 + $0x300] sm:$0xff]
          %v7432 = vld [vmem:[%s8 + $0x308] sm:$0xff]
          %v7433 = vld [vmem:[%s8 + $0x310] sm:$0xff]
          %v7434 = vld [vmem:[%s8 + $0x318] sm:$0xff]
          %v7435 = vld [vmem:[%s8 + $0x320] sm:$0xff]
          %v7436 = vld [vmem:[%s8 + $0x328] sm:$0xff]
          %v7437 = vld [vmem:[%s8 + $0x330] sm:$0xff]
          %v7438 = vld [vmem:[%s8 + $0x338] sm:$0xff]
          %v7439 = vld [vmem:[%s8 + $0x340] sm:$0xff]
          %v7440 = vld [vmem:[%s8 + $0x348] sm:$0xff]
          %v7441 = vld [vmem:[%s8 + $0x350] sm:$0xff]
          %v7442 = vld [vmem:[%s8 + $0x358] sm:$0xff]
          %v7443 = vld [vmem:[%s8 + $0x360] sm:$0xff]
          %v7444 = vld [vmem:[%s8 + $0x368] sm:$0xff]
          %v7445 = vld [vmem:[%s8 + $0x370] sm:$0xff]
          %v7446 = vld [vmem:[%s8 + $0x378] sm:$0xff]
          %v7447 = vld [vmem:[%s8 + $0x380] sm:$0xff]
          %v7448 = vld [vmem:[%s8 + $0x388] sm:$0xff]
          %v7449 = vld [vmem:[%s8 + $0x390] sm:$0xff]
          %v7450 = vld [vmem:[%s8 + $0x398] sm:$0xff]
          %v7451 = vld [vmem:[%s8 + $0x3a0] sm:$0xff]
          %v7452 = vld [vmem:[%s8 + $0x3a8] sm:$0xff]
          %v7453 = vld [vmem:[%s8 + $0x3b0] sm:$0xff]
          %v7454 = vld [vmem:[%s8 + $0x3b8] sm:$0xff]
          %v7455 = vld [vmem:[%s8 + $0x3c0] sm:$0xff]
          %v7456 = vld [vmem:[%s8 + $0x3c8] sm:$0xff]
          %v7457 = vld [vmem:[%s8 + $0x3d0] sm:$0xff]
          %v7458 = vld [vmem:[%s8 + $0x3d8] sm:$0xff]
          %v7459 = vld [vmem:[%s8 + $0x3e0] sm:$0xff]
          %v7460 = vld [vmem:[%s8 + $0x3e8] sm:$0xff]
          %v7461 = vld [vmem:[%s8 + $0x3f0] sm:$0xff]
          %v7462 = vld [vmem:[%s8 + $0x3f8] sm:$0xff]
          %v7464 = vsel %vm2198, %v7336, 0
          %v7467 = vsel %vm2198, %v7338, 0
          %v7470 = vsel %vm2198, %v7340, 0
          %v7473 = vsel %vm2198, %v7342, 0
          %v7476 = vsel %vm2198, %v7344, 0
          %v7479 = vsel %vm2198, %v7346, 0
          %v7482 = vsel %vm2198, %v7348, 0
          %v7485 = vsel %vm2198, %v7350, 0
          %v7488 = vsel %vm2198, %v7352, 0
          %v7491 = vsel %vm2198, %v7354, 0
          %v7494 = vsel %vm2198, %v7356, 0
          %v7497 = vsel %vm2198, %v7358, 0
          %v7500 = vsel %vm2198, %v7360, 0
          %v7503 = vsel %vm2198, %v7362, 0
          %v7506 = vsel %vm2198, %v7364, 0
          %v7509 = vsel %vm2198, %v7366, 0
          %v7512 = vsel %vm2198, %v7368, 0
          %v7515 = vsel %vm2198, %v7370, 0
          %v7518 = vsel %vm2198, %v7372, 0
          %v7521 = vsel %vm2198, %v7374, 0
          %v7524 = vsel %vm2198, %v7376, 0
          %v7527 = vsel %vm2198, %v7378, 0
          %v7530 = vsel %vm2198, %v7380, 0
          %v7533 = vsel %vm2198, %v7382, 0
          %v7536 = vsel %vm2198, %v7384, 0
          %v7539 = vsel %vm2198, %v7386, 0
          %v7542 = vsel %vm2198, %v7388, 0
          %v7545 = vsel %vm2198, %v7390, 0
          %v7548 = vsel %vm2198, %v7392, 0
          %v7551 = vsel %vm2198, %v7394, 0
          %v7554 = vsel %vm2198, %v7396, 0
          %v7557 = vsel %vm2198, %v7398, 0
          %v7560 = vsel %vm2198, %v7400, 0
          %v7563 = vsel %vm2198, %v7402, 0
          %v7566 = vsel %vm2198, %v7404, 0
          %v7569 = vsel %vm2198, %v7406, 0
          %v7572 = vsel %vm2198, %v7408, 0
          %v7575 = vsel %vm2198, %v7410, 0
          %v7578 = vsel %vm2198, %v7412, 0
          %v7581 = vsel %vm2198, %v7414, 0
          %v7584 = vsel %vm2198, %v7416, 0
          %v7587 = vsel %vm2198, %v7418, 0
          %v7590 = vsel %vm2198, %v7420, 0
          %v7593 = vsel %vm2198, %v7422, 0
          %v7596 = vsel %vm2198, %v7424, 0
          %v7599 = vsel %vm2198, %v7426, 0
          %v7602 = vsel %vm2198, %v7428, 0
          %v7605 = vsel %vm2198, %v7430, 0
          %v7608 = vsel %vm2198, %v7432, 0
          %v7611 = vsel %vm2198, %v7434, 0
          %v7614 = vsel %vm2198, %v7436, 0
          %v7617 = vsel %vm2198, %v7438, 0
          %v7620 = vsel %vm2198, %v7440, 0
          %v7623 = vsel %vm2198, %v7442, 0
          %v7626 = vsel %vm2198, %v7444, 0
          %v7629 = vsel %vm2198, %v7446, 0
          %v7632 = vsel %vm2198, %v7448, 0
          %v7635 = vsel %vm2198, %v7450, 0
          %v7638 = vsel %vm2198, %v7452, 0
          %v7641 = vsel %vm2198, %v7454, 0
          %v7644 = vsel %vm2198, %v7456, 0
          %v7647 = vsel %vm2198, %v7458, 0
          %v7650 = vsel %vm2198, %v7460, 0
          %v7653 = vsel %vm2198, %v7462, 0
          %7655 = vmatprep.subr.mxu0 0.0
          %7656 = vmatpush1.msra.mxu0 1.0
          %7657 = vmatprep.subr.mxu0 0.0
          %7658 = vmatpush1.msra.mxu0 1.0
          %7659 = vmatprep.subr.mxu0 0.0
          %7660 = vmatpush1.msra.mxu0 1.0
          %7661 = vmatprep.subr.mxu0 0.0
          %7662 = vmatpush1.msra.mxu0 1.0
          %7663 = vmatprep.subr.mxu0 0.0
          %7664 = vmatpush1.msra.mxu0 1.0
          %7665 = vmatprep.subr.mxu0 0.0
          %7666 = vmatpush1.msra.mxu0 1.0
          %7667 = vmatprep.subr.mxu0 0.0
          %7668 = vmatpush1.msra.mxu0 1.0
          %7669 = vmatprep.subr.mxu0 0.0
          %7670 = vmatpush1.msra.mxu0 1.0
          %7671 = vmatprep.subr.mxu0 0.0
          %7672 = vmatpush1.msra.mxu0 1.0
          %7673 = vmatprep.subr.mxu0 0.0
          %7674 = vmatpush1.msra.mxu0 1.0
          %7675 = vmatprep.subr.mxu0 0.0
          %7676 = vmatpush1.msra.mxu0 1.0
          %7677 = vmatprep.subr.mxu0 0.0
          %7678 = vmatpush1.msra.mxu0 1.0
          %7679 = vmatprep.subr.mxu0 0.0
          %7680 = vmatpush1.msra.mxu0 1.0
          %7681 = vmatprep.subr.mxu0 0.0
          %7682 = vmatpush1.msra.mxu0 1.0
          %7683 = vmatprep.subr.mxu0 0.0
          %7684 = vmatpush1.msra.mxu0 1.0
          %7685 = vmatprep.subr.mxu0 0.0
          %7686 = vmatpush1.msra.mxu0 1.0
          %7687 = vmatprep.subr.mxu0 0.0
          %7688 = vmatpush1.msra.mxu0 1.0
          %7689 = vmatprep.subr.mxu0 0.0
          %7690 = vmatpush1.msra.mxu0 1.0
          %7691 = vmatprep.subr.mxu0 0.0
          %7692 = vmatpush1.msra.mxu0 1.0
          %7693 = vmatprep.subr.mxu0 0.0
          %7694 = vmatpush1.msra.mxu0 1.0
          %7695 = vmatprep.subr.mxu0 0.0
          %7696 = vmatpush1.msra.mxu0 1.0
          %7697 = vmatprep.subr.mxu0 0.0
          %7698 = vmatpush1.msra.mxu0 1.0
          %7699 = vmatprep.subr.mxu0 0.0
          %7700 = vmatpush1.msra.mxu0 1.0
          %7701 = vmatprep.subr.mxu0 0.0
          %7702 = vmatpush1.msra.mxu0 1.0
          %7703 = vmatprep.subr.mxu0 0.0
          %7704 = vmatpush1.msra.mxu0 %v2393
          %7705 = vmatprep.subr.mxu0 0.0
          %7706 = vmatpush1.msra.mxu0 0.0
          %7707 = vmatprep.subr.mxu0 0.0
          %7708 = vmatpush1.msra.mxu0 0.0
          %7709 = vmatprep.subr.mxu0 0.0
          %7710 = vmatpush1.msra.mxu0 0.0
          %7711 = vmatprep.subr.mxu0 0.0
          %7712 = vmatpush1.msra.mxu0 0.0
          %7713 = vmatprep.subr.mxu0 0.0
          %7714 = vmatpush1.msra.mxu0 0.0
          %7715 = vmatprep.subr.mxu0 0.0
          %7716 = vmatpush1.msra.mxu0 0.0
          %7717 = vmatprep.subr.mxu0 0.0
          %7718 = vmatpush1.msra.mxu0 0.0
          %7719 = vmatprep.mubr.f32.mxu0 %v7464
          %7720 = vmatmul.mubr.f32.gmra.mrb[0].mxu0 %v7335
          %v7721 = vpop.f32.mrb[0].mxu0
          %v7722 = vadd.f32 0.0, %v7721
          %v7723 = vpop.f32.mrb[0].mxu0
          %7724 = vmatprep.mubr.f32.mxu0 %v7467
          %7725 = vmatmul.mubr.f32.gmra.mrb[0].mxu0 %v7337
          %v7726 = vpop.f32.mrb[0].mxu0
          %v7727 = vadd.f32 0.0, %v7726
          %v7728 = vpop.f32.mrb[0].mxu0
          %7729 = vmatprep.mubr.f32.mxu0 %v7470
          %7730 = vmatmul.mubr.f32.gmra.mrb[0].mxu0 %v7339
          %v7731 = vpop.f32.mrb[0].mxu0
          %v7732 = vadd.f32 0.0, %v7731
          %v7733 = vpop.f32.mrb[0].mxu0
          %7734 = vmatprep.mubr.f32.mxu0 %v7473
          %7735 = vmatmul.mubr.f32.gmra.mrb[0].mxu0 %v7341
          %v7736 = vpop.f32.mrb[0].mxu0
          %v7737 = vadd.f32 0.0, %v7736
          %v7738 = vpop.f32.mrb[0].mxu0
          %7739 = vmatprep.mubr.f32.mxu0 %v7476
          %7740 = vmatmul.mubr.f32.gmra.mrb[0].mxu0 %v7343
          %v7741 = vpop.f32.mrb[0].mxu0
          %v7742 = vadd.f32 0.0, %v7741
          %v7743 = vpop.f32.mrb[0].mxu0
          %7744 = vmatprep.mubr.f32.mxu0 %v7479
          %7745 = vmatmul.mubr.f32.gmra.mrb[0].mxu0 %v7345
          %v7746 = vpop.f32.mrb[0].mxu0
          %v7747 = vadd.f32 0.0, %v7746
          %v7748 = vpop.f32.mrb[0].mxu0
          %7749 = vmatprep.mubr.f32.mxu0 %v7482
          %7750 = vmatmul.mubr.f32.gmra.mrb[0].mxu0 %v7347
          %v7751 = vpop.f32.mrb[0].mxu0
          %v7752 = vadd.f32 0.0, %v7751
          %v7753 = vpop.f32.mrb[0].mxu0
          %7754 = vmatprep.mubr.f32.mxu0 %v7485
          %7755 = vmatmul.mubr.f32.gmra.mrb[0].mxu0 %v7349
          %v7756 = vpop.f32.mrb[0].mxu0
          %v7757 = vadd.f32 0.0, %v7756
          %v7758 = vpop.f32.mrb[0].mxu0
          %7759 = vmatprep.mubr.f32.mxu0 %v7488
          %7760 = vmatmul.mubr.f32.gmra.mrb[0].mxu0 %v7351
          %v7761 = vpop.f32.mrb[0].mxu0
          %v7762 = vadd.f32 0.0, %v7761
          %v7763 = vpop.f32.mrb[0].mxu0
          %7764 = vmatprep.mubr.f32.mxu0 %v7491
          %7765 = vmatmul.mubr.f32.gmra.mrb[0].mxu0 %v7353
          %v7766 = vpop.f32.mrb[0].mxu0
          %v7767 = vadd.f32 0.0, %v7766
          %v7768 = vpop.f32.mrb[0].mxu0
          %7769 = vmatprep.mubr.f32.mxu0 %v7494
          %7770 = vmatmul.mubr.f32.gmra.mrb[0].mxu0 %v7355
          %v7771 = vpop.f32.mrb[0].mxu0
          %v7772 = vadd.f32 0.0, %v7771
          %v7773 = vpop.f32.mrb[0].mxu0
          %7774 = vmatprep.mubr.f32.mxu0 %v7497
          %7775 = vmatmul.mubr.f32.gmra.mrb[0].mxu0 %v7357
          %v7776 = vpop.f32.mrb[0].mxu0
          %v7777 = vadd.f32 0.0, %v7776
          %v7778 = vpop.f32.mrb[0].mxu0
          %7779 = vmatprep.mubr.f32.mxu0 %v7500
          %7780 = vmatmul.mubr.f32.gmra.mrb[0].mxu0 %v7359
          %v7781 = vpop.f32.mrb[0].mxu0
          %v7782 = vadd.f32 0.0, %v7781
          %v7783 = vpop.f32.mrb[0].mxu0
          %7784 = vmatprep.mubr.f32.mxu0 %v7503
          %7785 = vmatmul.mubr.f32.gmra.mrb[0].mxu0 %v7361
          %v7786 = vpop.f32.mrb[0].mxu0
          %v7787 = vadd.f32 0.0, %v7786
          %v7788 = vpop.f32.mrb[0].mxu0
          %7789 = vmatprep.mubr.f32.mxu0 %v7506
          %7790 = vmatmul.mubr.f32.gmra.mrb[0].mxu0 %v7363
          %v7791 = vpop.f32.mrb[0].mxu0
          %v7792 = vadd.f32 0.0, %v7791
          %v7793 = vpop.f32.mrb[0].mxu0
          %7794 = vmatprep.mubr.f32.mxu0 %v7509
          %7795 = vmatmul.mubr.f32.gmra.mrb[0].mxu0 %v7365
          %v7796 = vpop.f32.mrb[0].mxu0
          %v7797 = vadd.f32 0.0, %v7796
          %v7798 = vpop.f32.mrb[0].mxu0
          %7799 = vmatprep.mubr.f32.mxu0 %v7512
          %7800 = vmatmul.mubr.f32.gmra.mrb[0].mxu0 %v7367
          %v7801 = vpop.f32.mrb[0].mxu0
          %v7802 = vadd.f32 0.0, %v7801
          %v7803 = vpop.f32.mrb[0].mxu0
          %7804 = vmatprep.mubr.f32.mxu0 %v7515
          %7805 = vmatmul.mubr.f32.gmra.mrb[0].mxu0 %v7369
          %v7806 = vpop.f32.mrb[0].mxu0
          %v7807 = vadd.f32 0.0, %v7806
          %v7808 = vpop.f32.mrb[0].mxu0
          %7809 = vmatprep.mubr.f32.mxu0 %v7518
          %7810 = vmatmul.mubr.f32.gmra.mrb[0].mxu0 %v7371
          %v7811 = vpop.f32.mrb[0].mxu0
          %v7812 = vadd.f32 0.0, %v7811
          %v7813 = vpop.f32.mrb[0].mxu0
          %7814 = vmatprep.mubr.f32.mxu0 %v7521
          %7815 = vmatmul.mubr.f32.gmra.mrb[0].mxu0 %v7373
          %v7816 = vpop.f32.mrb[0].mxu0
          %v7817 = vadd.f32 0.0, %v7816
          %v7818 = vpop.f32.mrb[0].mxu0
          %7819 = vmatprep.mubr.f32.mxu0 %v7524
          %7820 = vmatmul.mubr.f32.gmra.mrb[0].mxu0 %v7375
          %v7821 = vpop.f32.mrb[0].mxu0
          %v7822 = vadd.f32 0.0, %v7821
          %v7823 = vpop.f32.mrb[0].mxu0
          %7824 = vmatprep.mubr.f32.mxu0 %v7527
          %7825 = vmatmul.mubr.f32.gmra.mrb[0].mxu0 %v7377
          %v7826 = vpop.f32.mrb[0].mxu0
          %v7827 = vadd.f32 0.0, %v7826
          %v7828 = vpop.f32.mrb[0].mxu0
          %7829 = vmatprep.mubr.f32.mxu0 %v7530
          %7830 = vmatmul.mubr.f32.gmra.mrb[0].mxu0 %v7379
          %v7831 = vpop.f32.mrb[0].mxu0
          %v7832 = vadd.f32 0.0, %v7831
          %v7833 = vpop.f32.mrb[0].mxu0
          %7834 = vmatprep.mubr.f32.mxu0 %v7533
          %7835 = vmatmul.mubr.f32.gmra.mrb[0].mxu0 %v7381
          %v7836 = vpop.f32.mrb[0].mxu0
          %v7837 = vadd.f32 0.0, %v7836
          %v7838 = vpop.f32.mrb[0].mxu0
          %7839 = vmatprep.mubr.f32.mxu0 %v7536
          %7840 = vmatmul.mubr.f32.gmra.mrb[0].mxu0 %v7383
          %v7841 = vpop.f32.mrb[0].mxu0
          %v7842 = vadd.f32 0.0, %v7841
          %v7843 = vpop.f32.mrb[0].mxu0
          %7844 = vmatprep.mubr.f32.mxu0 %v7539
          %7845 = vmatmul.mubr.f32.gmra.mrb[0].mxu0 %v7385
          %v7846 = vpop.f32.mrb[0].mxu0
          %v7847 = vadd.f32 0.0, %v7846
          %v7848 = vpop.f32.mrb[0].mxu0
          %7849 = vmatprep.mubr.f32.mxu0 %v7542
          %7850 = vmatmul.mubr.f32.gmra.mrb[0].mxu0 %v7387
          %v7851 = vpop.f32.mrb[0].mxu0
          %v7852 = vadd.f32 0.0, %v7851
          %v7853 = vpop.f32.mrb[0].mxu0
          %7854 = vmatprep.mubr.f32.mxu0 %v7545
          %7855 = vmatmul.mubr.f32.gmra.mrb[0].mxu0 %v7389
          %v7856 = vpop.f32.mrb[0].mxu0
          %v7857 = vadd.f32 0.0, %v7856
          %v7858 = vpop.f32.mrb[0].mxu0
          %7859 = vmatprep.mubr.f32.mxu0 %v7548
          %7860 = vmatmul.mubr.f32.gmra.mrb[0].mxu0 %v7391
          %v7861 = vpop.f32.mrb[0].mxu0
          %v7862 = vadd.f32 0.0, %v7861
          %v7863 = vpop.f32.mrb[0].mxu0
          %7864 = vmatprep.mubr.f32.mxu0 %v7551
          %7865 = vmatmul.mubr.f32.gmra.mrb[0].mxu0 %v7393
          %v7866 = vpop.f32.mrb[0].mxu0
          %v7867 = vadd.f32 0.0, %v7866
          %v7868 = vpop.f32.mrb[0].mxu0
          %7869 = vmatprep.mubr.f32.mxu0 %v7554
          %7870 = vmatmul.mubr.f32.gmra.mrb[0].mxu0 %v7395
          %v7871 = vpop.f32.mrb[0].mxu0
          %v7872 = vadd.f32 0.0, %v7871
          %v7873 = vpop.f32.mrb[0].mxu0
          %7874 = vmatprep.mubr.f32.mxu0 %v7557
          %7875 = vmatmul.mubr.f32.gmra.mrb[0].mxu0 %v7397
          %v7876 = vpop.f32.mrb[0].mxu0
          %v7877 = vadd.f32 0.0, %v7876
          %v7878 = vpop.f32.mrb[0].mxu0
          %7879 = vmatprep.mubr.f32.mxu0 %v7560
          %7880 = vmatmul.mubr.f32.gmra.mrb[0].mxu0 %v7399
          %v7881 = vpop.f32.mrb[0].mxu0
          %v7882 = vadd.f32 0.0, %v7881
          %v7883 = vpop.f32.mrb[0].mxu0
          %7884 = vmatprep.mubr.f32.mxu0 %v7563
          %7885 = vmatmul.mubr.f32.gmra.mrb[0].mxu0 %v7401
          %v7886 = vpop.f32.mrb[0].mxu0
          %v7887 = vadd.f32 0.0, %v7886
          %v7888 = vpop.f32.mrb[0].mxu0
          %7889 = vmatprep.mubr.f32.mxu0 %v7566
          %7890 = vmatmul.mubr.f32.gmra.mrb[0].mxu0 %v7403
          %v7891 = vpop.f32.mrb[0].mxu0
          %v7892 = vadd.f32 0.0, %v7891
          %v7893 = vpop.f32.mrb[0].mxu0
          %7894 = vmatprep.mubr.f32.mxu0 %v7569
          %7895 = vmatmul.mubr.f32.gmra.mrb[0].mxu0 %v7405
          %v7896 = vpop.f32.mrb[0].mxu0
          %v7897 = vadd.f32 0.0, %v7896
          %v7898 = vpop.f32.mrb[0].mxu0
          %7899 = vmatprep.mubr.f32.mxu0 %v7572
          %7900 = vmatmul.mubr.f32.gmra.mrb[0].mxu0 %v7407
          %v7901 = vpop.f32.mrb[0].mxu0
          %v7902 = vadd.f32 0.0, %v7901
          %v7903 = vpop.f32.mrb[0].mxu0
          %7904 = vmatprep.mubr.f32.mxu0 %v7575
          %7905 = vmatmul.mubr.f32.gmra.mrb[0].mxu0 %v7409
          %v7906 = vpop.f32.mrb[0].mxu0
          %v7907 = vadd.f32 0.0, %v7906
          %v7908 = vpop.f32.mrb[0].mxu0
          %7909 = vmatprep.mubr.f32.mxu0 %v7578
          %7910 = vmatmul.mubr.f32.gmra.mrb[0].mxu0 %v7411
          %v7911 = vpop.f32.mrb[0].mxu0
          %v7912 = vadd.f32 0.0, %v7911
          %v7913 = vpop.f32.mrb[0].mxu0
          %7914 = vmatprep.mubr.f32.mxu0 %v7581
          %7915 = vmatmul.mubr.f32.gmra.mrb[0].mxu0 %v7413
          %v7916 = vpop.f32.mrb[0].mxu0
          %v7917 = vadd.f32 0.0, %v7916
          %v7918 = vpop.f32.mrb[0].mxu0
          %7919 = vmatprep.mubr.f32.mxu0 %v7584
          %7920 = vmatmul.mubr.f32.gmra.mrb[0].mxu0 %v7415
          %v7921 = vpop.f32.mrb[0].mxu0
          %v7922 = vadd.f32 0.0, %v7921
          %v7923 = vpop.f32.mrb[0].mxu0
          %7924 = vmatprep.mubr.f32.mxu0 %v7587
          %7925 = vmatmul.mubr.f32.gmra.mrb[0].mxu0 %v7417
          %v7926 = vpop.f32.mrb[0].mxu0
          %v7927 = vadd.f32 0.0, %v7926
          %v7928 = vpop.f32.mrb[0].mxu0
          %7929 = vmatprep.mubr.f32.mxu0 %v7590
          %7930 = vmatmul.mubr.f32.gmra.mrb[0].mxu0 %v7419
          %v7931 = vpop.f32.mrb[0].mxu0
          %v7932 = vadd.f32 0.0, %v7931
          %v7933 = vpop.f32.mrb[0].mxu0
          %7934 = vmatprep.mubr.f32.mxu0 %v7593
          %7935 = vmatmul.mubr.f32.gmra.mrb[0].mxu0 %v7421
          %v7936 = vpop.f32.mrb[0].mxu0
          %v7937 = vadd.f32 0.0, %v7936
          %v7938 = vpop.f32.mrb[0].mxu0
          %7939 = vmatprep.mubr.f32.mxu0 %v7596
          %7940 = vmatmul.mubr.f32.gmra.mrb[0].mxu0 %v7423
          %v7941 = vpop.f32.mrb[0].mxu0
          %v7942 = vadd.f32 0.0, %v7941
          %v7943 = vpop.f32.mrb[0].mxu0
          %7944 = vmatprep.mubr.f32.mxu0 %v7599
          %7945 = vmatmul.mubr.f32.gmra.mrb[0].mxu0 %v7425
          %v7946 = vpop.f32.mrb[0].mxu0
          %v7947 = vadd.f32 0.0, %v7946
          %v7948 = vpop.f32.mrb[0].mxu0
          %7949 = vmatprep.mubr.f32.mxu0 %v7602
          %7950 = vmatmul.mubr.f32.gmra.mrb[0].mxu0 %v7427
          %v7951 = vpop.f32.mrb[0].mxu0
          %v7952 = vadd.f32 0.0, %v7951
          %v7953 = vpop.f32.mrb[0].mxu0
          %7954 = vmatprep.mubr.f32.mxu0 %v7605
          %7955 = vmatmul.mubr.f32.gmra.mrb[0].mxu0 %v7429
          %v7956 = vpop.f32.mrb[0].mxu0
          %v7957 = vadd.f32 0.0, %v7956
          %v7958 = vpop.f32.mrb[0].mxu0
          %7959 = vmatprep.mubr.f32.mxu0 %v7608
          %7960 = vmatmul.mubr.f32.gmra.mrb[0].mxu0 %v7431
          %v7961 = vpop.f32.mrb[0].mxu0
          %v7962 = vadd.f32 0.0, %v7961
          %v7963 = vpop.f32.mrb[0].mxu0
          %7964 = vmatprep.mubr.f32.mxu0 %v7611
          %7965 = vmatmul.mubr.f32.gmra.mrb[0].mxu0 %v7433
          %v7966 = vpop.f32.mrb[0].mxu0
          %v7967 = vadd.f32 0.0, %v7966
          %v7968 = vpop.f32.mrb[0].mxu0
          %7969 = vmatprep.mubr.f32.mxu0 %v7614
          %7970 = vmatmul.mubr.f32.gmra.mrb[0].mxu0 %v7435
          %v7971 = vpop.f32.mrb[0].mxu0
          %v7972 = vadd.f32 0.0, %v7971
          %v7973 = vpop.f32.mrb[0].mxu0
          %7974 = vmatprep.mubr.f32.mxu0 %v7617
          %7975 = vmatmul.mubr.f32.gmra.mrb[0].mxu0 %v7437
          %v7976 = vpop.f32.mrb[0].mxu0
          %v7977 = vadd.f32 0.0, %v7976
          %v7978 = vpop.f32.mrb[0].mxu0
          %7979 = vmatprep.mubr.f32.mxu0 %v7620
          %7980 = vmatmul.mubr.f32.gmra.mrb[0].mxu0 %v7439
          %v7981 = vpop.f32.mrb[0].mxu0
          %v7982 = vadd.f32 0.0, %v7981
          %v7983 = vpop.f32.mrb[0].mxu0
          %7984 = vmatprep.mubr.f32.mxu0 %v7623
          %7985 = vmatmul.mubr.f32.gmra.mrb[0].mxu0 %v7441
          %v7986 = vpop.f32.mrb[0].mxu0
          %v7987 = vadd.f32 0.0, %v7986
          %v7988 = vpop.f32.mrb[0].mxu0
          %7989 = vmatprep.mubr.f32.mxu0 %v7626
          %7990 = vmatmul.mubr.f32.gmra.mrb[0].mxu0 %v7443
          %v7991 = vpop.f32.mrb[0].mxu0
          %v7992 = vadd.f32 0.0, %v7991
          %v7993 = vpop.f32.mrb[0].mxu0
          %7994 = vmatprep.mubr.f32.mxu0 %v7629
          %7995 = vmatmul.mubr.f32.gmra.mrb[0].mxu0 %v7445
          %v7996 = vpop.f32.mrb[0].mxu0
          %v7997 = vadd.f32 0.0, %v7996
          %v7998 = vpop.f32.mrb[0].mxu0
          %7999 = vmatprep.mubr.f32.mxu0 %v7632
          %8000 = vmatmul.mubr.f32.gmra.mrb[0].mxu0 %v7447
          %v8001 = vpop.f32.mrb[0].mxu0
          %v8002 = vadd.f32 0.0, %v8001
          %v8003 = vpop.f32.mrb[0].mxu0
          %8004 = vmatprep.mubr.f32.mxu0 %v7635
          %8005 = vmatmul.mubr.f32.gmra.mrb[0].mxu0 %v7449
          %v8006 = vpop.f32.mrb[0].mxu0
          %v8007 = vadd.f32 0.0, %v8006
          %v8008 = vpop.f32.mrb[0].mxu0
          %8009 = vmatprep.mubr.f32.mxu0 %v7638
          %8010 = vmatmul.mubr.f32.gmra.mrb[0].mxu0 %v7451
          %v8011 = vpop.f32.mrb[0].mxu0
          %v8012 = vadd.f32 0.0, %v8011
          %v8013 = vpop.f32.mrb[0].mxu0
          %8014 = vmatprep.mubr.f32.mxu0 %v7641
          %8015 = vmatmul.mubr.f32.gmra.mrb[0].mxu0 %v7453
          %v8016 = vpop.f32.mrb[0].mxu0
          %v8017 = vadd.f32 0.0, %v8016
          %v8018 = vpop.f32.mrb[0].mxu0
          %8019 = vmatprep.mubr.f32.mxu0 %v7644
          %8020 = vmatmul.mubr.f32.gmra.mrb[0].mxu0 %v7455
          %v8021 = vpop.f32.mrb[0].mxu0
          %v8022 = vadd.f32 0.0, %v8021
          %v8023 = vpop.f32.mrb[0].mxu0
          %8024 = vmatprep.mubr.f32.mxu0 %v7647
          %8025 = vmatmul.mubr.f32.gmra.mrb[0].mxu0 %v7457
          %v8026 = vpop.f32.mrb[0].mxu0
          %v8027 = vadd.f32 0.0, %v8026
          %v8028 = vpop.f32.mrb[0].mxu0
          %8029 = vmatprep.mubr.f32.mxu0 %v7650
          %8030 = vmatmul.mubr.f32.gmra.mrb[0].mxu0 %v7459
          %v8031 = vpop.f32.mrb[0].mxu0
          %v8032 = vadd.f32 0.0, %v8031
          %v8033 = vpop.f32.mrb[0].mxu0
          %8034 = vmatprep.mubr.f32.mxu0 %v7653
          %8035 = vmatmul.mubr.f32.gmra.mrb[0].mxu0 %v7461
          %v8036 = vpop.f32.mrb[0].mxu0
          %v8037 = vadd.f32 0.0, %v8036
          %v8038 = vpop.f32.mrb[0].mxu0
          %8039 = vdwg.mxu0
          %v8040 = vmul.f32 %v7722, 0.0051020407
          %v8041 = vmul.f32 %v7727, 0.0051020407
          %v8042 = vmul.f32 %v7732, 0.0051020407
          %v8043 = vmul.f32 %v7737, 0.0051020407
          %v8044 = vmul.f32 %v7742, 0.0051020407
          %v8045 = vmul.f32 %v7747, 0.0051020407
          %v8046 = vmul.f32 %v7752, 0.0051020407
          %v8047 = vmul.f32 %v7757, 0.0051020407
          %v8048 = vmul.f32 %v7762, 0.0051020407
          %v8049 = vmul.f32 %v7767, 0.0051020407
          %v8050 = vmul.f32 %v7772, 0.0051020407
          %v8051 = vmul.f32 %v7777, 0.0051020407
          %v8052 = vmul.f32 %v7782, 0.0051020407
          %v8053 = vmul.f32 %v7787, 0.0051020407
          %v8054 = vmul.f32 %v7792, 0.0051020407
          %v8055 = vmul.f32 %v7797, 0.0051020407
          %v8056 = vmul.f32 %v7802, 0.0051020407
          %v8057 = vmul.f32 %v7807, 0.0051020407
          %v8058 = vmul.f32 %v7812, 0.0051020407
          %v8059 = vmul.f32 %v7817, 0.0051020407
          %v8060 = vmul.f32 %v7822, 0.0051020407
          %v8061 = vmul.f32 %v7827, 0.0051020407
          %v8062 = vmul.f32 %v7832, 0.0051020407
          %v8063 = vmul.f32 %v7837, 0.0051020407
          %v8064 = vmul.f32 %v7842, 0.0051020407
          %v8065 = vmul.f32 %v7847, 0.0051020407
          %v8066 = vmul.f32 %v7852, 0.0051020407
          %v8067 = vmul.f32 %v7857, 0.0051020407
          %v8068 = vmul.f32 %v7862, 0.0051020407
          %v8069 = vmul.f32 %v7867, 0.0051020407
          %v8070 = vmul.f32 %v7872, 0.0051020407
          %v8071 = vmul.f32 %v7877, 0.0051020407
          %v8072 = vmul.f32 %v7882, 0.0051020407
          %v8073 = vmul.f32 %v7887, 0.0051020407
          %v8074 = vmul.f32 %v7892, 0.0051020407
          %v8075 = vmul.f32 %v7897, 0.0051020407
          %v8076 = vmul.f32 %v7902, 0.0051020407
          %v8077 = vmul.f32 %v7907, 0.0051020407
          %v8078 = vmul.f32 %v7912, 0.0051020407
          %v8079 = vmul.f32 %v7917, 0.0051020407
          %v8080 = vmul.f32 %v7922, 0.0051020407
          %v8081 = vmul.f32 %v7927, 0.0051020407
          %v8082 = vmul.f32 %v7932, 0.0051020407
          %v8083 = vmul.f32 %v7937, 0.0051020407
          %v8084 = vmul.f32 %v7942, 0.0051020407
          %v8085 = vmul.f32 %v7947, 0.0051020407
          %v8086 = vmul.f32 %v7952, 0.0051020407
          %v8087 = vmul.f32 %v7957, 0.0051020407
          %v8088 = vmul.f32 %v7962, 0.0051020407
          %v8089 = vmul.f32 %v7967, 0.0051020407
          %v8090 = vmul.f32 %v7972, 0.0051020407
          %v8091 = vmul.f32 %v7977, 0.0051020407
          %v8092 = vmul.f32 %v7982, 0.0051020407
          %v8093 = vmul.f32 %v7987, 0.0051020407
          %v8094 = vmul.f32 %v7992, 0.0051020407
          %v8095 = vmul.f32 %v7997, 0.0051020407
          %v8096 = vmul.f32 %v8002, 0.0051020407
          %v8097 = vmul.f32 %v8007, 0.0051020407
          %v8098 = vmul.f32 %v8012, 0.0051020407
          %v8099 = vmul.f32 %v8017, 0.0051020407
          %v8100 = vmul.f32 %v8022, 0.0051020407
          %v8101 = vmul.f32 %v8027, 0.0051020407
          %v8102 = vmul.f32 %v8032, 0.0051020407
          %v8103 = vmul.f32 %v8037, 0.0051020407
          %8105 = vset.pattern.permute.xlu0 0
          %8106 = vperm.xlu0 %8105, %v8040
          %v8107 = vpop.permute.xlu0 %8106
          %8110 = vset.pattern.permute.xlu0 0
          %8111 = vperm.xlu0 %8110, %v8041
          %v8112 = vpop.permute.xlu0 %8111
          %8115 = vset.pattern.permute.xlu0 0
          %8116 = vperm.xlu0 %8115, %v8042
          %v8117 = vpop.permute.xlu0 %8116
          %8120 = vset.pattern.permute.xlu0 0
          %8121 = vperm.xlu0 %8120, %v8043
          %v8122 = vpop.permute.xlu0 %8121
          %8125 = vset.pattern.permute.xlu0 0
          %8126 = vperm.xlu0 %8125, %v8044
          %v8127 = vpop.permute.xlu0 %8126
          %8130 = vset.pattern.permute.xlu0 0
          %8131 = vperm.xlu0 %8130, %v8045
          %v8132 = vpop.permute.xlu0 %8131
          %8135 = vset.pattern.permute.xlu0 0
          %8136 = vperm.xlu0 %8135, %v8046
          %v8137 = vpop.permute.xlu0 %8136
          %8140 = vset.pattern.permute.xlu0 0
          %8141 = vperm.xlu0 %8140, %v8047
          %v8142 = vpop.permute.xlu0 %8141
          %8145 = vset.pattern.permute.xlu0 0
          %8146 = vperm.xlu0 %8145, %v8048
          %v8147 = vpop.permute.xlu0 %8146
          %8150 = vset.pattern.permute.xlu0 0
          %8151 = vperm.xlu0 %8150, %v8049
          %v8152 = vpop.permute.xlu0 %8151
          %8155 = vset.pattern.permute.xlu0 0
          %8156 = vperm.xlu0 %8155, %v8050
          %v8157 = vpop.permute.xlu0 %8156
          %8160 = vset.pattern.permute.xlu0 0
          %8161 = vperm.xlu0 %8160, %v8051
          %v8162 = vpop.permute.xlu0 %8161
          %8165 = vset.pattern.permute.xlu0 0
          %8166 = vperm.xlu0 %8165, %v8052
          %v8167 = vpop.permute.xlu0 %8166
          %8170 = vset.pattern.permute.xlu0 0
          %8171 = vperm.xlu0 %8170, %v8053
          %v8172 = vpop.permute.xlu0 %8171
          %8175 = vset.pattern.permute.xlu0 0
          %8176 = vperm.xlu0 %8175, %v8054
          %v8177 = vpop.permute.xlu0 %8176
          %8180 = vset.pattern.permute.xlu0 0
          %8181 = vperm.xlu0 %8180, %v8055
          %v8182 = vpop.permute.xlu0 %8181
          %8185 = vset.pattern.permute.xlu0 0
          %8186 = vperm.xlu0 %8185, %v8056
          %v8187 = vpop.permute.xlu0 %8186
          %8190 = vset.pattern.permute.xlu0 0
          %8191 = vperm.xlu0 %8190, %v8057
          %v8192 = vpop.permute.xlu0 %8191
          %8195 = vset.pattern.permute.xlu0 0
          %8196 = vperm.xlu0 %8195, %v8058
          %v8197 = vpop.permute.xlu0 %8196
          %8200 = vset.pattern.permute.xlu0 0
          %8201 = vperm.xlu0 %8200, %v8059
          %v8202 = vpop.permute.xlu0 %8201
          %8205 = vset.pattern.permute.xlu0 0
          %8206 = vperm.xlu0 %8205, %v8060
          %v8207 = vpop.permute.xlu0 %8206
          %8210 = vset.pattern.permute.xlu0 0
          %8211 = vperm.xlu0 %8210, %v8061
          %v8212 = vpop.permute.xlu0 %8211
          %8215 = vset.pattern.permute.xlu0 0
          %8216 = vperm.xlu0 %8215, %v8062
          %v8217 = vpop.permute.xlu0 %8216
          %8220 = vset.pattern.permute.xlu0 0
          %8221 = vperm.xlu0 %8220, %v8063
          %v8222 = vpop.permute.xlu0 %8221
          %8225 = vset.pattern.permute.xlu0 0
          %8226 = vperm.xlu0 %8225, %v8064
          %v8227 = vpop.permute.xlu0 %8226
          %8230 = vset.pattern.permute.xlu0 0
          %8231 = vperm.xlu0 %8230, %v8065
          %v8232 = vpop.permute.xlu0 %8231
          %8235 = vset.pattern.permute.xlu0 0
          %8236 = vperm.xlu0 %8235, %v8066
          %v8237 = vpop.permute.xlu0 %8236
          %8240 = vset.pattern.permute.xlu0 0
          %8241 = vperm.xlu0 %8240, %v8067
          %v8242 = vpop.permute.xlu0 %8241
          %8245 = vset.pattern.permute.xlu0 0
          %8246 = vperm.xlu0 %8245, %v8068
          %v8247 = vpop.permute.xlu0 %8246
          %8250 = vset.pattern.permute.xlu0 0
          %8251 = vperm.xlu0 %8250, %v8069
          %v8252 = vpop.permute.xlu0 %8251
          %8255 = vset.pattern.permute.xlu0 0
          %8256 = vperm.xlu0 %8255, %v8070
          %v8257 = vpop.permute.xlu0 %8256
          %8260 = vset.pattern.permute.xlu0 0
          %8261 = vperm.xlu0 %8260, %v8071
          %v8262 = vpop.permute.xlu0 %8261
          %8265 = vset.pattern.permute.xlu0 0
          %8266 = vperm.xlu0 %8265, %v8072
          %v8267 = vpop.permute.xlu0 %8266
          %8270 = vset.pattern.permute.xlu0 0
          %8271 = vperm.xlu0 %8270, %v8073
          %v8272 = vpop.permute.xlu0 %8271
          %8275 = vset.pattern.permute.xlu0 0
          %8276 = vperm.xlu0 %8275, %v8074
          %v8277 = vpop.permute.xlu0 %8276
          %8280 = vset.pattern.permute.xlu0 0
          %8281 = vperm.xlu0 %8280, %v8075
          %v8282 = vpop.permute.xlu0 %8281
          %8285 = vset.pattern.permute.xlu0 0
          %8286 = vperm.xlu0 %8285, %v8076
          %v8287 = vpop.permute.xlu0 %8286
          %8290 = vset.pattern.permute.xlu0 0
          %8291 = vperm.xlu0 %8290, %v8077
          %v8292 = vpop.permute.xlu0 %8291
          %8295 = vset.pattern.permute.xlu0 0
          %8296 = vperm.xlu0 %8295, %v8078
          %v8297 = vpop.permute.xlu0 %8296
          %8300 = vset.pattern.permute.xlu0 0
          %8301 = vperm.xlu0 %8300, %v8079
          %v8302 = vpop.permute.xlu0 %8301
          %8305 = vset.pattern.permute.xlu0 0
          %8306 = vperm.xlu0 %8305, %v8080
          %v8307 = vpop.permute.xlu0 %8306
          %8310 = vset.pattern.permute.xlu0 0
          %8311 = vperm.xlu0 %8310, %v8081
          %v8312 = vpop.permute.xlu0 %8311
          %8315 = vset.pattern.permute.xlu0 0
          %8316 = vperm.xlu0 %8315, %v8082
          %v8317 = vpop.permute.xlu0 %8316
          %8320 = vset.pattern.permute.xlu0 0
          %8321 = vperm.xlu0 %8320, %v8083
          %v8322 = vpop.permute.xlu0 %8321
          %8325 = vset.pattern.permute.xlu0 0
          %8326 = vperm.xlu0 %8325, %v8084
          %v8327 = vpop.permute.xlu0 %8326
          %8330 = vset.pattern.permute.xlu0 0
          %8331 = vperm.xlu0 %8330, %v8085
          %v8332 = vpop.permute.xlu0 %8331
          %8335 = vset.pattern.permute.xlu0 0
          %8336 = vperm.xlu0 %8335, %v8086
          %v8337 = vpop.permute.xlu0 %8336
          %8340 = vset.pattern.permute.xlu0 0
          %8341 = vperm.xlu0 %8340, %v8087
          %v8342 = vpop.permute.xlu0 %8341
          %8345 = vset.pattern.permute.xlu0 0
          %8346 = vperm.xlu0 %8345, %v8088
          %v8347 = vpop.permute.xlu0 %8346
          %8350 = vset.pattern.permute.xlu0 0
          %8351 = vperm.xlu0 %8350, %v8089
          %v8352 = vpop.permute.xlu0 %8351
          %8355 = vset.pattern.permute.xlu0 0
          %8356 = vperm.xlu0 %8355, %v8090
          %v8357 = vpop.permute.xlu0 %8356
          %8360 = vset.pattern.permute.xlu0 0
          %8361 = vperm.xlu0 %8360, %v8091
          %v8362 = vpop.permute.xlu0 %8361
          %8365 = vset.pattern.permute.xlu0 0
          %8366 = vperm.xlu0 %8365, %v8092
          %v8367 = vpop.permute.xlu0 %8366
          %8370 = vset.pattern.permute.xlu0 0
          %8371 = vperm.xlu0 %8370, %v8093
          %v8372 = vpop.permute.xlu0 %8371
          %8375 = vset.pattern.permute.xlu0 0
          %8376 = vperm.xlu0 %8375, %v8094
          %v8377 = vpop.permute.xlu0 %8376
          %8380 = vset.pattern.permute.xlu0 0
          %8381 = vperm.xlu0 %8380, %v8095
          %v8382 = vpop.permute.xlu0 %8381
          %8385 = vset.pattern.permute.xlu0 0
          %8386 = vperm.xlu0 %8385, %v8096
          %v8387 = vpop.permute.xlu0 %8386
          %8390 = vset.pattern.permute.xlu0 0
          %8391 = vperm.xlu0 %8390, %v8097
          %v8392 = vpop.permute.xlu0 %8391
          %8395 = vset.pattern.permute.xlu0 0
          %8396 = vperm.xlu0 %8395, %v8098
          %v8397 = vpop.permute.xlu0 %8396
          %8400 = vset.pattern.permute.xlu0 0
          %8401 = vperm.xlu0 %8400, %v8099
          %v8402 = vpop.permute.xlu0 %8401
          %8405 = vset.pattern.permute.xlu0 0
          %8406 = vperm.xlu0 %8405, %v8100
          %v8407 = vpop.permute.xlu0 %8406
          %8410 = vset.pattern.permute.xlu0 0
          %8411 = vperm.xlu0 %8410, %v8101
          %v8412 = vpop.permute.xlu0 %8411
          %8415 = vset.pattern.permute.xlu0 0
          %8416 = vperm.xlu0 %8415, %v8102
          %v8417 = vpop.permute.xlu0 %8416
          %8420 = vset.pattern.permute.xlu0 0
          %8421 = vperm.xlu0 %8420, %v8103
          %v8422 = vpop.permute.xlu0 %8421
          %v8424 = vsub.f32 %v7335, %v8107
          %v8425 = vsub.f32 %v7336, %v8107
          %v8426 = vsub.f32 %v7337, %v8112
          %v8427 = vsub.f32 %v7338, %v8112
          %v8428 = vsub.f32 %v7339, %v8117
          %v8429 = vsub.f32 %v7340, %v8117
          %v8430 = vsub.f32 %v7341, %v8122
          %v8431 = vsub.f32 %v7342, %v8122
          %v8432 = vsub.f32 %v7343, %v8127
          %v8433 = vsub.f32 %v7344, %v8127
          %v8434 = vsub.f32 %v7345, %v8132
          %v8435 = vsub.f32 %v7346, %v8132
          %v8436 = vsub.f32 %v7347, %v8137
          %v8437 = vsub.f32 %v7348, %v8137
          %v8438 = vsub.f32 %v7349, %v8142
          %v8439 = vsub.f32 %v7350, %v8142
          %v8440 = vsub.f32 %v7351, %v8147
          %v8441 = vsub.f32 %v7352, %v8147
          %v8442 = vsub.f32 %v7353, %v8152
          %v8443 = vsub.f32 %v7354, %v8152
          %v8444 = vsub.f32 %v7355, %v8157
          %v8445 = vsub.f32 %v7356, %v8157
          %v8446 = vsub.f32 %v7357, %v8162
          %v8447 = vsub.f32 %v7358, %v8162
          %v8448 = vsub.f32 %v7359, %v8167
          %v8449 = vsub.f32 %v7360, %v8167
          %v8450 = vsub.f32 %v7361, %v8172
          %v8451 = vsub.f32 %v7362, %v8172
          %v8452 = vsub.f32 %v7363, %v8177
          %v8453 = vsub.f32 %v7364, %v8177
          %v8454 = vsub.f32 %v7365, %v8182
          %v8455 = vsub.f32 %v7366, %v8182
          %v8456 = vsub.f32 %v7367, %v8187
          %v8457 = vsub.f32 %v7368, %v8187
          %v8458 = vsub.f32 %v7369, %v8192
          %v8459 = vsub.f32 %v7370, %v8192
          %v8460 = vsub.f32 %v7371, %v8197
          %v8461 = vsub.f32 %v7372, %v8197
          %v8462 = vsub.f32 %v7373, %v8202
          %v8463 = vsub.f32 %v7374, %v8202
          %v8464 = vsub.f32 %v7375, %v8207
          %v8465 = vsub.f32 %v7376, %v8207
          %v8466 = vsub.f32 %v7377, %v8212
          %v8467 = vsub.f32 %v7378, %v8212
          %v8468 = vsub.f32 %v7379, %v8217
          %v8469 = vsub.f32 %v7380, %v8217
          %v8470 = vsub.f32 %v7381, %v8222
          %v8471 = vsub.f32 %v7382, %v8222
          %v8472 = vsub.f32 %v7383, %v8227
          %v8473 = vsub.f32 %v7384, %v8227
          %v8474 = vsub.f32 %v7385, %v8232
          %v8475 = vsub.f32 %v7386, %v8232
          %v8476 = vsub.f32 %v7387, %v8237
          %v8477 = vsub.f32 %v7388, %v8237
          %v8478 = vsub.f32 %v7389, %v8242
          %v8479 = vsub.f32 %v7390, %v8242
          %v8480 = vsub.f32 %v7391, %v8247
          %v8481 = vsub.f32 %v7392, %v8247
          %v8482 = vsub.f32 %v7393, %v8252
          %v8483 = vsub.f32 %v7394, %v8252
          %v8484 = vsub.f32 %v7395, %v8257
          %v8485 = vsub.f32 %v7396, %v8257
          %v8486 = vsub.f32 %v7397, %v8262
          %v8487 = vsub.f32 %v7398, %v8262
          %v8488 = vsub.f32 %v7399, %v8267
          %v8489 = vsub.f32 %v7400, %v8267
          %v8490 = vsub.f32 %v7401, %v8272
          %v8491 = vsub.f32 %v7402, %v8272
          %v8492 = vsub.f32 %v7403, %v8277
          %v8493 = vsub.f32 %v7404, %v8277
          %v8494 = vsub.f32 %v7405, %v8282
          %v8495 = vsub.f32 %v7406, %v8282
          %v8496 = vsub.f32 %v7407, %v8287
          %v8497 = vsub.f32 %v7408, %v8287
          %v8498 = vsub.f32 %v7409, %v8292
          %v8499 = vsub.f32 %v7410, %v8292
          %v8500 = vsub.f32 %v7411, %v8297
          %v8501 = vsub.f32 %v7412, %v8297
          %v8502 = vsub.f32 %v7413, %v8302
          %v8503 = vsub.f32 %v7414, %v8302
          %v8504 = vsub.f32 %v7415, %v8307
          %v8505 = vsub.f32 %v7416, %v8307
          %v8506 = vsub.f32 %v7417, %v8312
          %v8507 = vsub.f32 %v7418, %v8312
          %v8508 = vsub.f32 %v7419, %v8317
          %v8509 = vsub.f32 %v7420, %v8317
          %v8510 = vsub.f32 %v7421, %v8322
          %v8511 = vsub.f32 %v7422, %v8322
          %v8512 = vsub.f32 %v7423, %v8327
          %v8513 = vsub.f32 %v7424, %v8327
          %v8514 = vsub.f32 %v7425, %v8332
          %v8515 = vsub.f32 %v7426, %v8332
          %v8516 = vsub.f32 %v7427, %v8337
          %v8517 = vsub.f32 %v7428, %v8337
          %v8518 = vsub.f32 %v7429, %v8342
          %v8519 = vsub.f32 %v7430, %v8342
          %v8520 = vsub.f32 %v7431, %v8347
          %v8521 = vsub.f32 %v7432, %v8347
          %v8522 = vsub.f32 %v7433, %v8352
          %v8523 = vsub.f32 %v7434, %v8352
          %v8524 = vsub.f32 %v7435, %v8357
          %v8525 = vsub.f32 %v7436, %v8357
          %v8526 = vsub.f32 %v7437, %v8362
          %v8527 = vsub.f32 %v7438, %v8362
          %v8528 = vsub.f32 %v7439, %v8367
          %v8529 = vsub.f32 %v7440, %v8367
          %v8530 = vsub.f32 %v7441, %v8372
          %v8531 = vsub.f32 %v7442, %v8372
          %v8532 = vsub.f32 %v7443, %v8377
          %v8533 = vsub.f32 %v7444, %v8377
          %v8534 = vsub.f32 %v7445, %v8382
          %v8535 = vsub.f32 %v7446, %v8382
          %v8536 = vsub.f32 %v7447, %v8387
          %v8537 = vsub.f32 %v7448, %v8387
          %v8538 = vsub.f32 %v7449, %v8392
          %v8539 = vsub.f32 %v7450, %v8392
          %v8540 = vsub.f32 %v7451, %v8397
          %v8541 = vsub.f32 %v7452, %v8397
          %v8542 = vsub.f32 %v7453, %v8402
          %v8543 = vsub.f32 %v7454, %v8402
          %v8544 = vsub.f32 %v7455, %v8407
          %v8545 = vsub.f32 %v7456, %v8407
          %v8546 = vsub.f32 %v7457, %v8412
          %v8547 = vsub.f32 %v7458, %v8412
          %v8548 = vsub.f32 %v7459, %v8417
          %v8549 = vsub.f32 %v7460, %v8417
          %v8550 = vsub.f32 %v7461, %v8422
          %v8551 = vsub.f32 %v7462, %v8422
          %v8552 = vmul.f32 %v8424, %v8424
          %v8553 = vmul.f32 %v8425, %v8425
          %v8554 = vmul.f32 %v8426, %v8426
          %v8555 = vmul.f32 %v8427, %v8427
          %v8556 = vmul.f32 %v8428, %v8428
          %v8557 = vmul.f32 %v8429, %v8429
          %v8558 = vmul.f32 %v8430, %v8430
          %v8559 = vmul.f32 %v8431, %v8431
          %v8560 = vmul.f32 %v8432, %v8432
          %v8561 = vmul.f32 %v8433, %v8433
          %v8562 = vmul.f32 %v8434, %v8434
          %v8563 = vmul.f32 %v8435, %v8435
          %v8564 = vmul.f32 %v8436, %v8436
          %v8565 = vmul.f32 %v8437, %v8437
          %v8566 = vmul.f32 %v8438, %v8438
          %v8567 = vmul.f32 %v8439, %v8439
          %v8568 = vmul.f32 %v8440, %v8440
          %v8569 = vmul.f32 %v8441, %v8441
          %v8570 = vmul.f32 %v8442, %v8442
          %v8571 = vmul.f32 %v8443, %v8443
          %v8572 = vmul.f32 %v8444, %v8444
          %v8573 = vmul.f32 %v8445, %v8445
          %v8574 = vmul.f32 %v8446, %v8446
          %v8575 = vmul.f32 %v8447, %v8447
          %v8576 = vmul.f32 %v8448, %v8448
          %v8577 = vmul.f32 %v8449, %v8449
          %v8578 = vmul.f32 %v8450, %v8450
          %v8579 = vmul.f32 %v8451, %v8451
          %v8580 = vmul.f32 %v8452, %v8452
          %v8581 = vmul.f32 %v8453, %v8453
          %v8582 = vmul.f32 %v8454, %v8454
          %v8583 = vmul.f32 %v8455, %v8455
          %v8584 = vmul.f32 %v8456, %v8456
          %v8585 = vmul.f32 %v8457, %v8457
          %v8586 = vmul.f32 %v8458, %v8458
          %v8587 = vmul.f32 %v8459, %v8459
          %v8588 = vmul.f32 %v8460, %v8460
          %v8589 = vmul.f32 %v8461, %v8461
          %v8590 = vmul.f32 %v8462, %v8462
          %v8591 = vmul.f32 %v8463, %v8463
          %v8592 = vmul.f32 %v8464, %v8464
          %v8593 = vmul.f32 %v8465, %v8465
          %v8594 = vmul.f32 %v8466, %v8466
          %v8595 = vmul.f32 %v8467, %v8467
          %v8596 = vmul.f32 %v8468, %v8468
          %v8597 = vmul.f32 %v8469, %v8469
          %v8598 = vmul.f32 %v8470, %v8470
          %v8599 = vmul.f32 %v8471, %v8471
          %v8600 = vmul.f32 %v8472, %v8472
          %v8601 = vmul.f32 %v8473, %v8473
          %v8602 = vmul.f32 %v8474, %v8474
          %v8603 = vmul.f32 %v8475, %v8475
          %v8604 = vmul.f32 %v8476, %v8476
          %v8605 = vmul.f32 %v8477, %v8477
          %v8606 = vmul.f32 %v8478, %v8478
          %v8607 = vmul.f32 %v8479, %v8479
          %v8608 = vmul.f32 %v8480, %v8480
          %v8609 = vmul.f32 %v8481, %v8481
          %v8610 = vmul.f32 %v8482, %v8482
          %v8611 = vmul.f32 %v8483, %v8483
          %v8612 = vmul.f32 %v8484, %v8484
          %v8613 = vmul.f32 %v8485, %v8485
          %v8614 = vmul.f32 %v8486, %v8486
          %v8615 = vmul.f32 %v8487, %v8487
          %v8616 = vmul.f32 %v8488, %v8488
          %v8617 = vmul.f32 %v8489, %v8489
          %v8618 = vmul.f32 %v8490, %v8490
          %v8619 = vmul.f32 %v8491, %v8491
          %v8620 = vmul.f32 %v8492, %v8492
          %v8621 = vmul.f32 %v8493, %v8493
          %v8622 = vmul.f32 %v8494, %v8494
          %v8623 = vmul.f32 %v8495, %v8495
          %v8624 = vmul.f32 %v8496, %v8496
          %v8625 = vmul.f32 %v8497, %v8497
          %v8626 = vmul.f32 %v8498, %v8498
          %v8627 = vmul.f32 %v8499, %v8499
          %v8628 = vmul.f32 %v8500, %v8500
          %v8629 = vmul.f32 %v8501, %v8501
          %v8630 = vmul.f32 %v8502, %v8502
          %v8631 = vmul.f32 %v8503, %v8503
          %v8632 = vmul.f32 %v8504, %v8504
          %v8633 = vmul.f32 %v8505, %v8505
          %v8634 = vmul.f32 %v8506, %v8506
          %v8635 = vmul.f32 %v8507, %v8507
          %v8636 = vmul.f32 %v8508, %v8508
          %v8637 = vmul.f32 %v8509, %v8509
          %v8638 = vmul.f32 %v8510, %v8510
          %v8639 = vmul.f32 %v8511, %v8511
          %v8640 = vmul.f32 %v8512, %v8512
          %v8641 = vmul.f32 %v8513, %v8513
          %v8642 = vmul.f32 %v8514, %v8514
          %v8643 = vmul.f32 %v8515, %v8515
          %v8644 = vmul.f32 %v8516, %v8516
          %v8645 = vmul.f32 %v8517, %v8517
          %v8646 = vmul.f32 %v8518, %v8518
          %v8647 = vmul.f32 %v8519, %v8519
          %v8648 = vmul.f32 %v8520, %v8520
          %v8649 = vmul.f32 %v8521, %v8521
          %v8650 = vmul.f32 %v8522, %v8522
          %v8651 = vmul.f32 %v8523, %v8523
          %v8652 = vmul.f32 %v8524, %v8524
          %v8653 = vmul.f32 %v8525, %v8525
          %v8654 = vmul.f32 %v8526, %v8526
          %v8655 = vmul.f32 %v8527, %v8527
          %v8656 = vmul.f32 %v8528, %v8528
          %v8657 = vmul.f32 %v8529, %v8529
          %v8658 = vmul.f32 %v8530, %v8530
          %v8659 = vmul.f32 %v8531, %v8531
          %v8660 = vmul.f32 %v8532, %v8532
          %v8661 = vmul.f32 %v8533, %v8533
          %v8662 = vmul.f32 %v8534, %v8534
          %v8663 = vmul.f32 %v8535, %v8535
          %v8664 = vmul.f32 %v8536, %v8536
          %v8665 = vmul.f32 %v8537, %v8537
          %v8666 = vmul.f32 %v8538, %v8538
          %v8667 = vmul.f32 %v8539, %v8539
          %v8668 = vmul.f32 %v8540, %v8540
          %v8669 = vmul.f32 %v8541, %v8541
          %v8670 = vmul.f32 %v8542, %v8542
          %v8671 = vmul.f32 %v8543, %v8543
          %v8672 = vmul.f32 %v8544, %v8544
          %v8673 = vmul.f32 %v8545, %v8545
          %v8674 = vmul.f32 %v8546, %v8546
          %v8675 = vmul.f32 %v8547, %v8547
          %v8676 = vmul.f32 %v8548, %v8548
          %v8677 = vmul.f32 %v8549, %v8549
          %v8678 = vmul.f32 %v8550, %v8550
          %v8679 = vmul.f32 %v8551, %v8551
          %v8681 = vsel %vm2198, %v8553, 0
          %v8684 = vsel %vm2198, %v8555, 0
          %v8687 = vsel %vm2198, %v8557, 0
          %v8690 = vsel %vm2198, %v8559, 0
          %v8693 = vsel %vm2198, %v8561, 0
          %v8696 = vsel %vm2198, %v8563, 0
          %v8699 = vsel %vm2198, %v8565, 0
          %v8702 = vsel %vm2198, %v8567, 0
          %v8705 = vsel %vm2198, %v8569, 0
          %v8708 = vsel %vm2198, %v8571, 0
          %v8711 = vsel %vm2198, %v8573, 0
          %v8714 = vsel %vm2198, %v8575, 0
          %v8717 = vsel %vm2198, %v8577, 0
          %v8720 = vsel %vm2198, %v8579, 0
          %v8723 = vsel %vm2198, %v8581, 0
          %v8726 = vsel %vm2198, %v8583, 0
          %v8729 = vsel %vm2198, %v8585, 0
          %v8732 = vsel %vm2198, %v8587, 0
          %v8735 = vsel %vm2198, %v8589, 0
          %v8738 = vsel %vm2198, %v8591, 0
          %v8741 = vsel %vm2198, %v8593, 0
          %v8744 = vsel %vm2198, %v8595, 0
          %v8747 = vsel %vm2198, %v8597, 0
          %v8750 = vsel %vm2198, %v8599, 0
          %v8753 = vsel %vm2198, %v8601, 0
          %v8756 = vsel %vm2198, %v8603, 0
          %v8759 = vsel %vm2198, %v8605, 0
          %v8762 = vsel %vm2198, %v8607, 0
          %v8765 = vsel %vm2198, %v8609, 0
          %v8768 = vsel %vm2198, %v8611, 0
          %v8771 = vsel %vm2198, %v8613, 0
          %v8774 = vsel %vm2198, %v8615, 0
          %v8777 = vsel %vm2198, %v8617, 0
          %v8780 = vsel %vm2198, %v8619, 0
          %v8783 = vsel %vm2198, %v8621, 0
          %v8786 = vsel %vm2198, %v8623, 0
          %v8789 = vsel %vm2198, %v8625, 0
          %v8792 = vsel %vm2198, %v8627, 0
          %v8795 = vsel %vm2198, %v8629, 0
          %v8798 = vsel %vm2198, %v8631, 0
          %v8801 = vsel %vm2198, %v8633, 0
          %v8804 = vsel %vm2198, %v8635, 0
          %v8807 = vsel %vm2198, %v8637, 0
          %v8810 = vsel %vm2198, %v8639, 0
          %v8813 = vsel %vm2198, %v8641, 0
          %v8816 = vsel %vm2198, %v8643, 0
          %v8819 = vsel %vm2198, %v8645, 0
          %v8822 = vsel %vm2198, %v8647, 0
          %v8825 = vsel %vm2198, %v8649, 0
          %v8828 = vsel %vm2198, %v8651, 0
          %v8831 = vsel %vm2198, %v8653, 0
          %v8834 = vsel %vm2198, %v8655, 0
          %v8837 = vsel %vm2198, %v8657, 0
          %v8840 = vsel %vm2198, %v8659, 0
          %v8843 = vsel %vm2198, %v8661, 0
          %v8846 = vsel %vm2198, %v8663, 0
          %v8849 = vsel %vm2198, %v8665, 0
          %v8852 = vsel %vm2198, %v8667, 0
          %v8855 = vsel %vm2198, %v8669, 0
          %v8858 = vsel %vm2198, %v8671, 0
          %v8861 = vsel %vm2198, %v8673, 0
          %v8864 = vsel %vm2198, %v8675, 0
          %v8867 = vsel %vm2198, %v8677, 0
          %v8870 = vsel %vm2198, %v8679, 0
          %8872 = vmatprep.subr.mxu0 0.0
          %8873 = vmatpush1.msra.mxu0 1.0
          %8874 = vmatprep.subr.mxu0 0.0
          %8875 = vmatpush1.msra.mxu0 1.0
          %8876 = vmatprep.subr.mxu0 0.0
          %8877 = vmatpush1.msra.mxu0 1.0
          %8878 = vmatprep.subr.mxu0 0.0
          %8879 = vmatpush1.msra.mxu0 1.0
          %8880 = vmatprep.subr.mxu0 0.0
          %8881 = vmatpush1.msra.mxu0 1.0
          %8882 = vmatprep.subr.mxu0 0.0
          %8883 = vmatpush1.msra.mxu0 1.0
          %8884 = vmatprep.subr.mxu0 0.0
          %8885 = vmatpush1.msra.mxu0 1.0
          %8886 = vmatprep.subr.mxu0 0.0
          %8887 = vmatpush1.msra.mxu0 1.0
          %8888 = vmatprep.subr.mxu0 0.0
          %8889 = vmatpush1.msra.mxu0 1.0
          %8890 = vmatprep.subr.mxu0 0.0
          %8891 = vmatpush1.msra.mxu0 1.0
          %8892 = vmatprep.subr.mxu0 0.0
          %8893 = vmatpush1.msra.mxu0 1.0
          %8894 = vmatprep.subr.mxu0 0.0
          %8895 = vmatpush1.msra.mxu0 1.0
          %8896 = vmatprep.subr.mxu0 0.0
          %8897 = vmatpush1.msra.mxu0 1.0
          %8898 = vmatprep.subr.mxu0 0.0
          %8899 = vmatpush1.msra.mxu0 1.0
          %8900 = vmatprep.subr.mxu0 0.0
          %8901 = vmatpush1.msra.mxu0 1.0
          %8902 = vmatprep.subr.mxu0 0.0
          %8903 = vmatpush1.msra.mxu0 1.0
          %8904 = vmatprep.subr.mxu0 0.0
          %8905 = vmatpush1.msra.mxu0 1.0
          %8906 = vmatprep.subr.mxu0 0.0
          %8907 = vmatpush1.msra.mxu0 1.0
          %8908 = vmatprep.subr.mxu0 0.0
          %8909 = vmatpush1.msra.mxu0 1.0
          %8910 = vmatprep.subr.mxu0 0.0
          %8911 = vmatpush1.msra.mxu0 1.0
          %8912 = vmatprep.subr.mxu0 0.0
          %8913 = vmatpush1.msra.mxu0 1.0
          %8914 = vmatprep.subr.mxu0 0.0
          %8915 = vmatpush1.msra.mxu0 1.0
          %8916 = vmatprep.subr.mxu0 0.0
          %8917 = vmatpush1.msra.mxu0 1.0
          %8918 = vmatprep.subr.mxu0 0.0
          %8919 = vmatpush1.msra.mxu0 1.0
          %8920 = vmatprep.subr.mxu0 0.0
          %8921 = vmatpush1.msra.mxu0 %v2393
          %8922 = vmatprep.subr.mxu0 0.0
          %8923 = vmatpush1.msra.mxu0 0.0
          %8924 = vmatprep.subr.mxu0 0.0
          %8925 = vmatpush1.msra.mxu0 0.0
          %8926 = vmatprep.subr.mxu0 0.0
          %8927 = vmatpush1.msra.mxu0 0.0
          %8928 = vmatprep.subr.mxu0 0.0
          %8929 = vmatpush1.msra.mxu0 0.0
          %8930 = vmatprep.subr.mxu0 0.0
          %8931 = vmatpush1.msra.mxu0 0.0
          %8932 = vmatprep.subr.mxu0 0.0
          %8933 = vmatpush1.msra.mxu0 0.0
          %8934 = vmatprep.subr.mxu0 0.0
          %8935 = vmatpush1.msra.mxu0 0.0
          %8936 = vmatprep.mubr.f32.mxu0 %v8681
          %8937 = vmatmul.mubr.f32.gmra.mrb[0].mxu0 %v8552
          %v8938 = vpop.f32.mrb[0].mxu0
          %v8939 = vadd.f32 0.0, %v8938
          %v8940 = vpop.f32.mrb[0].mxu0
          %8941 = vmatprep.mubr.f32.mxu0 %v8684
          %8942 = vmatmul.mubr.f32.gmra.mrb[0].mxu0 %v8554
          %v8943 = vpop.f32.mrb[0].mxu0
          %v8944 = vadd.f32 0.0, %v8943
          %v8945 = vpop.f32.mrb[0].mxu0
          %8946 = vmatprep.mubr.f32.mxu0 %v8687
          %8947 = vmatmul.mubr.f32.gmra.mrb[0].mxu0 %v8556
          %v8948 = vpop.f32.mrb[0].mxu0
          %v8949 = vadd.f32 0.0, %v8948
          %v8950 = vpop.f32.mrb[0].mxu0
          %8951 = vmatprep.mubr.f32.mxu0 %v8690
          %8952 = vmatmul.mubr.f32.gmra.mrb[0].mxu0 %v8558
          %v8953 = vpop.f32.mrb[0].mxu0
          %v8954 = vadd.f32 0.0, %v8953
          %v8955 = vpop.f32.mrb[0].mxu0
          %8956 = vmatprep.mubr.f32.mxu0 %v8693
          %8957 = vmatmul.mubr.f32.gmra.mrb[0].mxu0 %v8560
          %v8958 = vpop.f32.mrb[0].mxu0
          %v8959 = vadd.f32 0.0, %v8958
          %v8960 = vpop.f32.mrb[0].mxu0
          %8961 = vmatprep.mubr.f32.mxu0 %v8696
          %8962 = vmatmul.mubr.f32.gmra.mrb[0].mxu0 %v8562
          %v8963 = vpop.f32.mrb[0].mxu0
          %v8964 = vadd.f32 0.0, %v8963
          %v8965 = vpop.f32.mrb[0].mxu0
          %8966 = vmatprep.mubr.f32.mxu0 %v8699
          %8967 = vmatmul.mubr.f32.gmra.mrb[0].mxu0 %v8564
          %v8968 = vpop.f32.mrb[0].mxu0
          %v8969 = vadd.f32 0.0, %v8968
          %v8970 = vpop.f32.mrb[0].mxu0
          %8971 = vmatprep.mubr.f32.mxu0 %v8702
          %8972 = vmatmul.mubr.f32.gmra.mrb[0].mxu0 %v8566
          %v8973 = vpop.f32.mrb[0].mxu0
          %v8974 = vadd.f32 0.0, %v8973
          %v8975 = vpop.f32.mrb[0].mxu0
          %8976 = vmatprep.mubr.f32.mxu0 %v8705
          %8977 = vmatmul.mubr.f32.gmra.mrb[0].mxu0 %v8568
          %v8978 = vpop.f32.mrb[0].mxu0
          %v8979 = vadd.f32 0.0, %v8978
          %v8980 = vpop.f32.mrb[0].mxu0
          %8981 = vmatprep.mubr.f32.mxu0 %v8708
          %8982 = vmatmul.mubr.f32.gmra.mrb[0].mxu0 %v8570
          %v8983 = vpop.f32.mrb[0].mxu0
          %v8984 = vadd.f32 0.0, %v8983
          %v8985 = vpop.f32.mrb[0].mxu0
          %8986 = vmatprep.mubr.f32.mxu0 %v8711
          %8987 = vmatmul.mubr.f32.gmra.mrb[0].mxu0 %v8572
          %v8988 = vpop.f32.mrb[0].mxu0
          %v8989 = vadd.f32 0.0, %v8988
          %v8990 = vpop.f32.mrb[0].mxu0
          %8991 = vmatprep.mubr.f32.mxu0 %v8714
          %8992 = vmatmul.mubr.f32.gmra.mrb[0].mxu0 %v8574
          %v8993 = vpop.f32.mrb[0].mxu0
          %v8994 = vadd.f32 0.0, %v8993
          %v8995 = vpop.f32.mrb[0].mxu0
          %8996 = vmatprep.mubr.f32.mxu0 %v8717
          %8997 = vmatmul.mubr.f32.gmra.mrb[0].mxu0 %v8576
          %v8998 = vpop.f32.mrb[0].mxu0
          %v8999 = vadd.f32 0.0, %v8998
          %v9000 = vpop.f32.mrb[0].mxu0
          %9001 = vmatprep.mubr.f32.mxu0 %v8720
          %9002 = vmatmul.mubr.f32.gmra.mrb[0].mxu0 %v8578
          %v9003 = vpop.f32.mrb[0].mxu0
          %v9004 = vadd.f32 0.0, %v9003
          %v9005 = vpop.f32.mrb[0].mxu0
          %9006 = vmatprep.mubr.f32.mxu0 %v8723
          %9007 = vmatmul.mubr.f32.gmra.mrb[0].mxu0 %v8580
          %v9008 = vpop.f32.mrb[0].mxu0
          %v9009 = vadd.f32 0.0, %v9008
          %v9010 = vpop.f32.mrb[0].mxu0
          %9011 = vmatprep.mubr.f32.mxu0 %v8726
          %9012 = vmatmul.mubr.f32.gmra.mrb[0].mxu0 %v8582
          %v9013 = vpop.f32.mrb[0].mxu0
          %v9014 = vadd.f32 0.0, %v9013
          %v9015 = vpop.f32.mrb[0].mxu0
          %9016 = vmatprep.mubr.f32.mxu0 %v8729
          %9017 = vmatmul.mubr.f32.gmra.mrb[0].mxu0 %v8584
          %v9018 = vpop.f32.mrb[0].mxu0
          %v9019 = vadd.f32 0.0, %v9018
          %v9020 = vpop.f32.mrb[0].mxu0
          %9021 = vmatprep.mubr.f32.mxu0 %v8732
          %9022 = vmatmul.mubr.f32.gmra.mrb[0].mxu0 %v8586
          %v9023 = vpop.f32.mrb[0].mxu0
          %v9024 = vadd.f32 0.0, %v9023
          %v9025 = vpop.f32.mrb[0].mxu0
          %9026 = vmatprep.mubr.f32.mxu0 %v8735
          %9027 = vmatmul.mubr.f32.gmra.mrb[0].mxu0 %v8588
          %v9028 = vpop.f32.mrb[0].mxu0
          %v9029 = vadd.f32 0.0, %v9028
          %v9030 = vpop.f32.mrb[0].mxu0
          %9031 = vmatprep.mubr.f32.mxu0 %v8738
          %9032 = vmatmul.mubr.f32.gmra.mrb[0].mxu0 %v8590
          %v9033 = vpop.f32.mrb[0].mxu0
          %v9034 = vadd.f32 0.0, %v9033
          %v9035 = vpop.f32.mrb[0].mxu0
          %9036 = vmatprep.mubr.f32.mxu0 %v8741
          %9037 = vmatmul.mubr.f32.gmra.mrb[0].mxu0 %v8592
          %v9038 = vpop.f32.mrb[0].mxu0
          %v9039 = vadd.f32 0.0, %v9038
          %v9040 = vpop.f32.mrb[0].mxu0
          %9041 = vmatprep.mubr.f32.mxu0 %v8744
          %9042 = vmatmul.mubr.f32.gmra.mrb[0].mxu0 %v8594
          %v9043 = vpop.f32.mrb[0].mxu0
          %v9044 = vadd.f32 0.0, %v9043
          %v9045 = vpop.f32.mrb[0].mxu0
          %9046 = vmatprep.mubr.f32.mxu0 %v8747
          %9047 = vmatmul.mubr.f32.gmra.mrb[0].mxu0 %v8596
          %v9048 = vpop.f32.mrb[0].mxu0
          %v9049 = vadd.f32 0.0, %v9048
          %v9050 = vpop.f32.mrb[0].mxu0
          %9051 = vmatprep.mubr.f32.mxu0 %v8750
          %9052 = vmatmul.mubr.f32.gmra.mrb[0].mxu0 %v8598
          %v9053 = vpop.f32.mrb[0].mxu0
          %v9054 = vadd.f32 0.0, %v9053
          %v9055 = vpop.f32.mrb[0].mxu0
          %9056 = vmatprep.mubr.f32.mxu0 %v8753
          %9057 = vmatmul.mubr.f32.gmra.mrb[0].mxu0 %v8600
          %v9058 = vpop.f32.mrb[0].mxu0
          %v9059 = vadd.f32 0.0, %v9058
          %v9060 = vpop.f32.mrb[0].mxu0
          %9061 = vmatprep.mubr.f32.mxu0 %v8756
          %9062 = vmatmul.mubr.f32.gmra.mrb[0].mxu0 %v8602
          %v9063 = vpop.f32.mrb[0].mxu0
          %v9064 = vadd.f32 0.0, %v9063
          %v9065 = vpop.f32.mrb[0].mxu0
          %9066 = vmatprep.mubr.f32.mxu0 %v8759
          %9067 = vmatmul.mubr.f32.gmra.mrb[0].mxu0 %v8604
          %v9068 = vpop.f32.mrb[0].mxu0
          %v9069 = vadd.f32 0.0, %v9068
          %v9070 = vpop.f32.mrb[0].mxu0
          %9071 = vmatprep.mubr.f32.mxu0 %v8762
          %9072 = vmatmul.mubr.f32.gmra.mrb[0].mxu0 %v8606
          %v9073 = vpop.f32.mrb[0].mxu0
          %v9074 = vadd.f32 0.0, %v9073
          %v9075 = vpop.f32.mrb[0].mxu0
          %9076 = vmatprep.mubr.f32.mxu0 %v8765
          %9077 = vmatmul.mubr.f32.gmra.mrb[0].mxu0 %v8608
          %v9078 = vpop.f32.mrb[0].mxu0
          %v9079 = vadd.f32 0.0, %v9078
          %v9080 = vpop.f32.mrb[0].mxu0
          %9081 = vmatprep.mubr.f32.mxu0 %v8768
          %9082 = vmatmul.mubr.f32.gmra.mrb[0].mxu0 %v8610
          %v9083 = vpop.f32.mrb[0].mxu0
          %v9084 = vadd.f32 0.0, %v9083
          %v9085 = vpop.f32.mrb[0].mxu0
          %9086 = vmatprep.mubr.f32.mxu0 %v8771
          %9087 = vmatmul.mubr.f32.gmra.mrb[0].mxu0 %v8612
          %v9088 = vpop.f32.mrb[0].mxu0
          %v9089 = vadd.f32 0.0, %v9088
          %v9090 = vpop.f32.mrb[0].mxu0
          %9091 = vmatprep.mubr.f32.mxu0 %v8774
          %9092 = vmatmul.mubr.f32.gmra.mrb[0].mxu0 %v8614
          %v9093 = vpop.f32.mrb[0].mxu0
          %v9094 = vadd.f32 0.0, %v9093
          %v9095 = vpop.f32.mrb[0].mxu0
          %9096 = vmatprep.mubr.f32.mxu0 %v8777
          %9097 = vmatmul.mubr.f32.gmra.mrb[0].mxu0 %v8616
          %v9098 = vpop.f32.mrb[0].mxu0
          %v9099 = vadd.f32 0.0, %v9098
          %v9100 = vpop.f32.mrb[0].mxu0
          %9101 = vmatprep.mubr.f32.mxu0 %v8780
          %9102 = vmatmul.mubr.f32.gmra.mrb[0].mxu0 %v8618
          %v9103 = vpop.f32.mrb[0].mxu0
          %v9104 = vadd.f32 0.0, %v9103
          %v9105 = vpop.f32.mrb[0].mxu0
          %9106 = vmatprep.mubr.f32.mxu0 %v8783
          %9107 = vmatmul.mubr.f32.gmra.mrb[0].mxu0 %v8620
          %v9108 = vpop.f32.mrb[0].mxu0
          %v9109 = vadd.f32 0.0, %v9108
          %v9110 = vpop.f32.mrb[0].mxu0
          %9111 = vmatprep.mubr.f32.mxu0 %v8786
          %9112 = vmatmul.mubr.f32.gmra.mrb[0].mxu0 %v8622
          %v9113 = vpop.f32.mrb[0].mxu0
          %v9114 = vadd.f32 0.0, %v9113
          %v9115 = vpop.f32.mrb[0].mxu0
          %9116 = vmatprep.mubr.f32.mxu0 %v8789
          %9117 = vmatmul.mubr.f32.gmra.mrb[0].mxu0 %v8624
          %v9118 = vpop.f32.mrb[0].mxu0
          %v9119 = vadd.f32 0.0, %v9118
          %v9120 = vpop.f32.mrb[0].mxu0
          %9121 = vmatprep.mubr.f32.mxu0 %v8792
          %9122 = vmatmul.mubr.f32.gmra.mrb[0].mxu0 %v8626
          %v9123 = vpop.f32.mrb[0].mxu0
          %v9124 = vadd.f32 0.0, %v9123
          %v9125 = vpop.f32.mrb[0].mxu0
          %9126 = vmatprep.mubr.f32.mxu0 %v8795
          %9127 = vmatmul.mubr.f32.gmra.mrb[0].mxu0 %v8628
          %v9128 = vpop.f32.mrb[0].mxu0
          %v9129 = vadd.f32 0.0, %v9128
          %v9130 = vpop.f32.mrb[0].mxu0
          %9131 = vmatprep.mubr.f32.mxu0 %v8798
          %9132 = vmatmul.mubr.f32.gmra.mrb[0].mxu0 %v8630
          %v9133 = vpop.f32.mrb[0].mxu0
          %v9134 = vadd.f32 0.0, %v9133
          %v9135 = vpop.f32.mrb[0].mxu0
          %9136 = vmatprep.mubr.f32.mxu0 %v8801
          %9137 = vmatmul.mubr.f32.gmra.mrb[0].mxu0 %v8632
          %v9138 = vpop.f32.mrb[0].mxu0
          %v9139 = vadd.f32 0.0, %v9138
          %v9140 = vpop.f32.mrb[0].mxu0
          %9141 = vmatprep.mubr.f32.mxu0 %v8804
          %9142 = vmatmul.mubr.f32.gmra.mrb[0].mxu0 %v8634
          %v9143 = vpop.f32.mrb[0].mxu0
          %v9144 = vadd.f32 0.0, %v9143
          %v9145 = vpop.f32.mrb[0].mxu0
          %9146 = vmatprep.mubr.f32.mxu0 %v8807
          %9147 = vmatmul.mubr.f32.gmra.mrb[0].mxu0 %v8636
          %v9148 = vpop.f32.mrb[0].mxu0
          %v9149 = vadd.f32 0.0, %v9148
          %v9150 = vpop.f32.mrb[0].mxu0
          %9151 = vmatprep.mubr.f32.mxu0 %v8810
          %9152 = vmatmul.mubr.f32.gmra.mrb[0].mxu0 %v8638
          %v9153 = vpop.f32.mrb[0].mxu0
          %v9154 = vadd.f32 0.0, %v9153
          %v9155 = vpop.f32.mrb[0].mxu0
          %9156 = vmatprep.mubr.f32.mxu0 %v8813
          %9157 = vmatmul.mubr.f32.gmra.mrb[0].mxu0 %v8640
          %v9158 = vpop.f32.mrb[0].mxu0
          %v9159 = vadd.f32 0.0, %v9158
          %v9160 = vpop.f32.mrb[0].mxu0
          %9161 = vmatprep.mubr.f32.mxu0 %v8816
          %9162 = vmatmul.mubr.f32.gmra.mrb[0].mxu0 %v8642
          %v9163 = vpop.f32.mrb[0].mxu0
          %v9164 = vadd.f32 0.0, %v9163
          %v9165 = vpop.f32.mrb[0].mxu0
          %9166 = vmatprep.mubr.f32.mxu0 %v8819
          %9167 = vmatmul.mubr.f32.gmra.mrb[0].mxu0 %v8644
          %v9168 = vpop.f32.mrb[0].mxu0
          %v9169 = vadd.f32 0.0, %v9168
          %v9170 = vpop.f32.mrb[0].mxu0
          %9171 = vmatprep.mubr.f32.mxu0 %v8822
          %9172 = vmatmul.mubr.f32.gmra.mrb[0].mxu0 %v8646
          %v9173 = vpop.f32.mrb[0].mxu0
          %v9174 = vadd.f32 0.0, %v9173
          %v9175 = vpop.f32.mrb[0].mxu0
          %9176 = vmatprep.mubr.f32.mxu0 %v8825
          %9177 = vmatmul.mubr.f32.gmra.mrb[0].mxu0 %v8648
          %v9178 = vpop.f32.mrb[0].mxu0
          %v9179 = vadd.f32 0.0, %v9178
          %v9180 = vpop.f32.mrb[0].mxu0
          %9181 = vmatprep.mubr.f32.mxu0 %v8828
          %9182 = vmatmul.mubr.f32.gmra.mrb[0].mxu0 %v8650
          %v9183 = vpop.f32.mrb[0].mxu0
          %v9184 = vadd.f32 0.0, %v9183
          %v9185 = vpop.f32.mrb[0].mxu0
          %9186 = vmatprep.mubr.f32.mxu0 %v8831
          %9187 = vmatmul.mubr.f32.gmra.mrb[0].mxu0 %v8652
          %v9188 = vpop.f32.mrb[0].mxu0
          %v9189 = vadd.f32 0.0, %v9188
          %v9190 = vpop.f32.mrb[0].mxu0
          %9191 = vmatprep.mubr.f32.mxu0 %v8834
          %9192 = vmatmul.mubr.f32.gmra.mrb[0].mxu0 %v8654
          %v9193 = vpop.f32.mrb[0].mxu0
          %v9194 = vadd.f32 0.0, %v9193
          %v9195 = vpop.f32.mrb[0].mxu0
          %9196 = vmatprep.mubr.f32.mxu0 %v8837
          %9197 = vmatmul.mubr.f32.gmra.mrb[0].mxu0 %v8656
          %v9198 = vpop.f32.mrb[0].mxu0
          %v9199 = vadd.f32 0.0, %v9198
          %v9200 = vpop.f32.mrb[0].mxu0
          %9201 = vmatprep.mubr.f32.mxu0 %v8840
          %9202 = vmatmul.mubr.f32.gmra.mrb[0].mxu0 %v8658
          %v9203 = vpop.f32.mrb[0].mxu0
          %v9204 = vadd.f32 0.0, %v9203
          %v9205 = vpop.f32.mrb[0].mxu0
          %9206 = vmatprep.mubr.f32.mxu0 %v8843
          %9207 = vmatmul.mubr.f32.gmra.mrb[0].mxu0 %v8660
          %v9208 = vpop.f32.mrb[0].mxu0
          %v9209 = vadd.f32 0.0, %v9208
          %v9210 = vpop.f32.mrb[0].mxu0
          %9211 = vmatprep.mubr.f32.mxu0 %v8846
          %9212 = vmatmul.mubr.f32.gmra.mrb[0].mxu0 %v8662
          %v9213 = vpop.f32.mrb[0].mxu0
          %v9214 = vadd.f32 0.0, %v9213
          %v9215 = vpop.f32.mrb[0].mxu0
          %9216 = vmatprep.mubr.f32.mxu0 %v8849
          %9217 = vmatmul.mubr.f32.gmra.mrb[0].mxu0 %v8664
          %v9218 = vpop.f32.mrb[0].mxu0
          %v9219 = vadd.f32 0.0, %v9218
          %v9220 = vpop.f32.mrb[0].mxu0
          %9221 = vmatprep.mubr.f32.mxu0 %v8852
          %9222 = vmatmul.mubr.f32.gmra.mrb[0].mxu0 %v8666
          %v9223 = vpop.f32.mrb[0].mxu0
          %v9224 = vadd.f32 0.0, %v9223
          %v9225 = vpop.f32.mrb[0].mxu0
          %9226 = vmatprep.mubr.f32.mxu0 %v8855
          %9227 = vmatmul.mubr.f32.gmra.mrb[0].mxu0 %v8668
          %v9228 = vpop.f32.mrb[0].mxu0
          %v9229 = vadd.f32 0.0, %v9228
          %v9230 = vpop.f32.mrb[0].mxu0
          %9231 = vmatprep.mubr.f32.mxu0 %v8858
          %9232 = vmatmul.mubr.f32.gmra.mrb[0].mxu0 %v8670
          %v9233 = vpop.f32.mrb[0].mxu0
          %v9234 = vadd.f32 0.0, %v9233
          %v9235 = vpop.f32.mrb[0].mxu0
          %9236 = vmatprep.mubr.f32.mxu0 %v8861
          %9237 = vmatmul.mubr.f32.gmra.mrb[0].mxu0 %v8672
          %v9238 = vpop.f32.mrb[0].mxu0
          %v9239 = vadd.f32 0.0, %v9238
          %v9240 = vpop.f32.mrb[0].mxu0
          %9241 = vmatprep.mubr.f32.mxu0 %v8864
          %9242 = vmatmul.mubr.f32.gmra.mrb[0].mxu0 %v8674
          %v9243 = vpop.f32.mrb[0].mxu0
          %v9244 = vadd.f32 0.0, %v9243
          %v9245 = vpop.f32.mrb[0].mxu0
          %9246 = vmatprep.mubr.f32.mxu0 %v8867
          %9247 = vmatmul.mubr.f32.gmra.mrb[0].mxu0 %v8676
          %v9248 = vpop.f32.mrb[0].mxu0
          %v9249 = vadd.f32 0.0, %v9248
          %v9250 = vpop.f32.mrb[0].mxu0
          %9251 = vmatprep.mubr.f32.mxu0 %v8870
          %9252 = vmatmul.mubr.f32.gmra.mrb[0].mxu0 %v8678
          %v9253 = vpop.f32.mrb[0].mxu0
          %v9254 = vadd.f32 0.0, %v9253
          %v9255 = vpop.f32.mrb[0].mxu0
          %9256 = vdwg.mxu0
          %v9257 = vmul.f32 %v8939, 0.0051020407
          %v9258 = vmul.f32 %v8944, 0.0051020407
          %v9259 = vmul.f32 %v8949, 0.0051020407
          %v9260 = vmul.f32 %v8954, 0.0051020407
          %v9261 = vmul.f32 %v8959, 0.0051020407
          %v9262 = vmul.f32 %v8964, 0.0051020407
          %v9263 = vmul.f32 %v8969, 0.0051020407
          %v9264 = vmul.f32 %v8974, 0.0051020407
          %v9265 = vmul.f32 %v8979, 0.0051020407
          %v9266 = vmul.f32 %v8984, 0.0051020407
          %v9267 = vmul.f32 %v8989, 0.0051020407
          %v9268 = vmul.f32 %v8994, 0.0051020407
          %v9269 = vmul.f32 %v8999, 0.0051020407
          %v9270 = vmul.f32 %v9004, 0.0051020407
          %v9271 = vmul.f32 %v9009, 0.0051020407
          %v9272 = vmul.f32 %v9014, 0.0051020407
          %v9273 = vmul.f32 %v9019, 0.0051020407
          %v9274 = vmul.f32 %v9024, 0.0051020407
          %v9275 = vmul.f32 %v9029, 0.0051020407
          %v9276 = vmul.f32 %v9034, 0.0051020407
          %v9277 = vmul.f32 %v9039, 0.0051020407
          %v9278 = vmul.f32 %v9044, 0.0051020407
          %v9279 = vmul.f32 %v9049, 0.0051020407
          %v9280 = vmul.f32 %v9054, 0.0051020407
          %v9281 = vmul.f32 %v9059, 0.0051020407
          %v9282 = vmul.f32 %v9064, 0.0051020407
          %v9283 = vmul.f32 %v9069, 0.0051020407
          %v9284 = vmul.f32 %v9074, 0.0051020407
          %v9285 = vmul.f32 %v9079, 0.0051020407
          %v9286 = vmul.f32 %v9084, 0.0051020407
          %v9287 = vmul.f32 %v9089, 0.0051020407
          %v9288 = vmul.f32 %v9094, 0.0051020407
          %v9289 = vmul.f32 %v9099, 0.0051020407
          %v9290 = vmul.f32 %v9104, 0.0051020407
          %v9291 = vmul.f32 %v9109, 0.0051020407
          %v9292 = vmul.f32 %v9114, 0.0051020407
          %v9293 = vmul.f32 %v9119, 0.0051020407
          %v9294 = vmul.f32 %v9124, 0.0051020407
          %v9295 = vmul.f32 %v9129, 0.0051020407
          %v9296 = vmul.f32 %v9134, 0.0051020407
          %v9297 = vmul.f32 %v9139, 0.0051020407
          %v9298 = vmul.f32 %v9144, 0.0051020407
          %v9299 = vmul.f32 %v9149, 0.0051020407
          %v9300 = vmul.f32 %v9154, 0.0051020407
          %v9301 = vmul.f32 %v9159, 0.0051020407
          %v9302 = vmul.f32 %v9164, 0.0051020407
          %v9303 = vmul.f32 %v9169, 0.0051020407
          %v9304 = vmul.f32 %v9174, 0.0051020407
          %v9305 = vmul.f32 %v9179, 0.0051020407
          %v9306 = vmul.f32 %v9184, 0.0051020407
          %v9307 = vmul.f32 %v9189, 0.0051020407
          %v9308 = vmul.f32 %v9194, 0.0051020407
          %v9309 = vmul.f32 %v9199, 0.0051020407
          %v9310 = vmul.f32 %v9204, 0.0051020407
          %v9311 = vmul.f32 %v9209, 0.0051020407
          %v9312 = vmul.f32 %v9214, 0.0051020407
          %v9313 = vmul.f32 %v9219, 0.0051020407
          %v9314 = vmul.f32 %v9224, 0.0051020407
          %v9315 = vmul.f32 %v9229, 0.0051020407
          %v9316 = vmul.f32 %v9234, 0.0051020407
          %v9317 = vmul.f32 %v9239, 0.0051020407
          %v9318 = vmul.f32 %v9244, 0.0051020407
          %v9319 = vmul.f32 %v9249, 0.0051020407
          %v9320 = vmul.f32 %v9254, 0.0051020407
          %v9321 = vld [vmem:[%s6] sm:$0xff]
          %v9322 = vld [vmem:[%s6 + $0x8] sm:$0xff]
          %v9323 = vld [vmem:[%s6 + $0x10] sm:$0xff]
          %v9324 = vld [vmem:[%s6 + $0x18] sm:$0xff]
          %v9325 = vld [vmem:[%s6 + $0x20] sm:$0xff]
          %v9326 = vld [vmem:[%s6 + $0x28] sm:$0xff]
          %v9327 = vld [vmem:[%s6 + $0x30] sm:$0xff]
          %v9328 = vld [vmem:[%s6 + $0x38] sm:$0xff]
          %v9329 = vld [vmem:[%s6 + $0x40] sm:$0xff]
          %v9330 = vld [vmem:[%s6 + $0x48] sm:$0xff]
          %v9331 = vld [vmem:[%s6 + $0x50] sm:$0xff]
          %v9332 = vld [vmem:[%s6 + $0x58] sm:$0xff]
          %v9333 = vld [vmem:[%s6 + $0x60] sm:$0xff]
          %v9334 = vld [vmem:[%s6 + $0x68] sm:$0xff]
          %v9335 = vld [vmem:[%s6 + $0x70] sm:$0xff]
          %v9336 = vld [vmem:[%s6 + $0x78] sm:$0xff]
          %v9337 = vld [vmem:[%s6 + $0x80] sm:$0xff]
          %v9338 = vld [vmem:[%s6 + $0x88] sm:$0xff]
          %v9339 = vld [vmem:[%s6 + $0x90] sm:$0xff]
          %v9340 = vld [vmem:[%s6 + $0x98] sm:$0xff]
          %v9341 = vld [vmem:[%s6 + $0xa0] sm:$0xff]
          %v9342 = vld [vmem:[%s6 + $0xa8] sm:$0xff]
          %v9343 = vld [vmem:[%s6 + $0xb0] sm:$0xff]
          %v9344 = vld [vmem:[%s6 + $0xb8] sm:$0xff]
          %v9345 = vld [vmem:[%s6 + $0xc0] sm:$0xff]
          %v9346 = vld [vmem:[%s6 + $0xc8] sm:$0xff]
          %v9347 = vld [vmem:[%s6 + $0xd0] sm:$0xff]
          %v9348 = vld [vmem:[%s6 + $0xd8] sm:$0xff]
          %v9349 = vld [vmem:[%s6 + $0xe0] sm:$0xff]
          %v9350 = vld [vmem:[%s6 + $0xe8] sm:$0xff]
          %v9351 = vld [vmem:[%s6 + $0xf0] sm:$0xff]
          %v9352 = vld [vmem:[%s6 + $0xf8] sm:$0xff]
          %v9353 = vld [vmem:[%s6 + $0x100] sm:$0xff]
          %v9354 = vld [vmem:[%s6 + $0x108] sm:$0xff]
          %v9355 = vld [vmem:[%s6 + $0x110] sm:$0xff]
          %v9356 = vld [vmem:[%s6 + $0x118] sm:$0xff]
          %v9357 = vld [vmem:[%s6 + $0x120] sm:$0xff]
          %v9358 = vld [vmem:[%s6 + $0x128] sm:$0xff]
          %v9359 = vld [vmem:[%s6 + $0x130] sm:$0xff]
          %v9360 = vld [vmem:[%s6 + $0x138] sm:$0xff]
          %v9361 = vld [vmem:[%s6 + $0x140] sm:$0xff]
          %v9362 = vld [vmem:[%s6 + $0x148] sm:$0xff]
          %v9363 = vld [vmem:[%s6 + $0x150] sm:$0xff]
          %v9364 = vld [vmem:[%s6 + $0x158] sm:$0xff]
          %v9365 = vld [vmem:[%s6 + $0x160] sm:$0xff]
          %v9366 = vld [vmem:[%s6 + $0x168] sm:$0xff]
          %v9367 = vld [vmem:[%s6 + $0x170] sm:$0xff]
          %v9368 = vld [vmem:[%s6 + $0x178] sm:$0xff]
          %v9369 = vld [vmem:[%s6 + $0x180] sm:$0xff]
          %v9370 = vld [vmem:[%s6 + $0x188] sm:$0xff]
          %v9371 = vld [vmem:[%s6 + $0x190] sm:$0xff]
          %v9372 = vld [vmem:[%s6 + $0x198] sm:$0xff]
          %v9373 = vld [vmem:[%s6 + $0x1a0] sm:$0xff]
          %v9374 = vld [vmem:[%s6 + $0x1a8] sm:$0xff]
          %v9375 = vld [vmem:[%s6 + $0x1b0] sm:$0xff]
          %v9376 = vld [vmem:[%s6 + $0x1b8] sm:$0xff]
          %v9377 = vld [vmem:[%s6 + $0x1c0] sm:$0xff]
          %v9378 = vld [vmem:[%s6 + $0x1c8] sm:$0xff]
          %v9379 = vld [vmem:[%s6 + $0x1d0] sm:$0xff]
          %v9380 = vld [vmem:[%s6 + $0x1d8] sm:$0xff]
          %v9381 = vld [vmem:[%s6 + $0x1e0] sm:$0xff]
          %v9382 = vld [vmem:[%s6 + $0x1e8] sm:$0xff]
          %v9383 = vld [vmem:[%s6 + $0x1f0] sm:$0xff]
          %v9384 = vld [vmem:[%s6 + $0x1f8] sm:$0xff]
          %v9385 = vadd.f32 %v9257, 1e-05
          %v9386 = vadd.f32 %v9258, 1e-05
          %v9387 = vadd.f32 %v9259, 1e-05
          %v9388 = vadd.f32 %v9260, 1e-05
          %v9389 = vadd.f32 %v9261, 1e-05
          %v9390 = vadd.f32 %v9262, 1e-05
          %v9391 = vadd.f32 %v9263, 1e-05
          %v9392 = vadd.f32 %v9264, 1e-05
          %v9393 = vadd.f32 %v9265, 1e-05
          %v9394 = vadd.f32 %v9266, 1e-05
          %v9395 = vadd.f32 %v9267, 1e-05
          %v9396 = vadd.f32 %v9268, 1e-05
          %v9397 = vadd.f32 %v9269, 1e-05
          %v9398 = vadd.f32 %v9270, 1e-05
          %v9399 = vadd.f32 %v9271, 1e-05
          %v9400 = vadd.f32 %v9272, 1e-05
          %v9401 = vadd.f32 %v9273, 1e-05
          %v9402 = vadd.f32 %v9274, 1e-05
          %v9403 = vadd.f32 %v9275, 1e-05
          %v9404 = vadd.f32 %v9276, 1e-05
          %v9405 = vadd.f32 %v9277, 1e-05
          %v9406 = vadd.f32 %v9278, 1e-05
          %v9407 = vadd.f32 %v9279, 1e-05
          %v9408 = vadd.f32 %v9280, 1e-05
          %v9409 = vadd.f32 %v9281, 1e-05
          %v9410 = vadd.f32 %v9282, 1e-05
          %v9411 = vadd.f32 %v9283, 1e-05
          %v9412 = vadd.f32 %v9284, 1e-05
          %v9413 = vadd.f32 %v9285, 1e-05
          %v9414 = vadd.f32 %v9286, 1e-05
          %v9415 = vadd.f32 %v9287, 1e-05
          %v9416 = vadd.f32 %v9288, 1e-05
          %v9417 = vadd.f32 %v9289, 1e-05
          %v9418 = vadd.f32 %v9290, 1e-05
          %v9419 = vadd.f32 %v9291, 1e-05
          %v9420 = vadd.f32 %v9292, 1e-05
          %v9421 = vadd.f32 %v9293, 1e-05
          %v9422 = vadd.f32 %v9294, 1e-05
          %v9423 = vadd.f32 %v9295, 1e-05
          %v9424 = vadd.f32 %v9296, 1e-05
          %v9425 = vadd.f32 %v9297, 1e-05
          %v9426 = vadd.f32 %v9298, 1e-05
          %v9427 = vadd.f32 %v9299, 1e-05
          %v9428 = vadd.f32 %v9300, 1e-05
          %v9429 = vadd.f32 %v9301, 1e-05
          %v9430 = vadd.f32 %v9302, 1e-05
          %v9431 = vadd.f32 %v9303, 1e-05
          %v9432 = vadd.f32 %v9304, 1e-05
          %v9433 = vadd.f32 %v9305, 1e-05
          %v9434 = vadd.f32 %v9306, 1e-05
          %v9435 = vadd.f32 %v9307, 1e-05
          %v9436 = vadd.f32 %v9308, 1e-05
          %v9437 = vadd.f32 %v9309, 1e-05
          %v9438 = vadd.f32 %v9310, 1e-05
          %v9439 = vadd.f32 %v9311, 1e-05
          %v9440 = vadd.f32 %v9312, 1e-05
          %v9441 = vadd.f32 %v9313, 1e-05
          %v9442 = vadd.f32 %v9314, 1e-05
          %v9443 = vadd.f32 %v9315, 1e-05
          %v9444 = vadd.f32 %v9316, 1e-05
          %v9445 = vadd.f32 %v9317, 1e-05
          %v9446 = vadd.f32 %v9318, 1e-05
          %v9447 = vadd.f32 %v9319, 1e-05
          %v9448 = vadd.f32 %v9320, 1e-05
          %v9449 = vrsqrt.pop %v9385
          %v9450 = vrsqrt.pop %v9386
          %v9451 = vrsqrt.pop %v9387
          %v9452 = vrsqrt.pop %v9388
          %v9453 = vrsqrt.pop %v9389
          %v9454 = vrsqrt.pop %v9390
          %v9455 = vrsqrt.pop %v9391
          %v9456 = vrsqrt.pop %v9392
          %v9457 = vrsqrt.pop %v9393
          %v9458 = vrsqrt.pop %v9394
          %v9459 = vrsqrt.pop %v9395
          %v9460 = vrsqrt.pop %v9396
          %v9461 = vrsqrt.pop %v9397
          %v9462 = vrsqrt.pop %v9398
          %v9463 = vrsqrt.pop %v9399
          %v9464 = vrsqrt.pop %v9400
          %v9465 = vrsqrt.pop %v9401
          %v9466 = vrsqrt.pop %v9402
          %v9467 = vrsqrt.pop %v9403
          %v9468 = vrsqrt.pop %v9404
          %v9469 = vrsqrt.pop %v9405
          %v9470 = vrsqrt.pop %v9406
          %v9471 = vrsqrt.pop %v9407
          %v9472 = vrsqrt.pop %v9408
          %v9473 = vrsqrt.pop %v9409
          %v9474 = vrsqrt.pop %v9410
          %v9475 = vrsqrt.pop %v9411
          %v9476 = vrsqrt.pop %v9412
          %v9477 = vrsqrt.pop %v9413
          %v9478 = vrsqrt.pop %v9414
          %v9479 = vrsqrt.pop %v9415
          %v9480 = vrsqrt.pop %v9416
          %v9481 = vrsqrt.pop %v9417
          %v9482 = vrsqrt.pop %v9418
          %v9483 = vrsqrt.pop %v9419
          %v9484 = vrsqrt.pop %v9420
          %v9485 = vrsqrt.pop %v9421
          %v9486 = vrsqrt.pop %v9422
          %v9487 = vrsqrt.pop %v9423
          %v9488 = vrsqrt.pop %v9424
          %v9489 = vrsqrt.pop %v9425
          %v9490 = vrsqrt.pop %v9426
          %v9491 = vrsqrt.pop %v9427
          %v9492 = vrsqrt.pop %v9428
          %v9493 = vrsqrt.pop %v9429
          %v9494 = vrsqrt.pop %v9430
          %v9495 = vrsqrt.pop %v9431
          %v9496 = vrsqrt.pop %v9432
          %v9497 = vrsqrt.pop %v9433
          %v9498 = vrsqrt.pop %v9434
          %v9499 = vrsqrt.pop %v9435
          %v9500 = vrsqrt.pop %v9436
          %v9501 = vrsqrt.pop %v9437
          %v9502 = vrsqrt.pop %v9438
          %v9503 = vrsqrt.pop %v9439
          %v9504 = vrsqrt.pop %v9440
          %v9505 = vrsqrt.pop %v9441
          %v9506 = vrsqrt.pop %v9442
          %v9507 = vrsqrt.pop %v9443
          %v9508 = vrsqrt.pop %v9444
          %v9509 = vrsqrt.pop %v9445
          %v9510 = vrsqrt.pop %v9446
          %v9511 = vrsqrt.pop %v9447
          %v9512 = vrsqrt.pop %v9448
          %v9513 = vmul.f32 %v9321, %v9449
          %v9514 = vmul.f32 %v9322, %v9450
          %v9515 = vmul.f32 %v9323, %v9451
          %v9516 = vmul.f32 %v9324, %v9452
          %v9517 = vmul.f32 %v9325, %v9453
          %v9518 = vmul.f32 %v9326, %v9454
          %v9519 = vmul.f32 %v9327, %v9455
          %v9520 = vmul.f32 %v9328, %v9456
          %v9521 = vmul.f32 %v9329, %v9457
          %v9522 = vmul.f32 %v9330, %v9458
          %v9523 = vmul.f32 %v9331, %v9459
          %v9524 = vmul.f32 %v9332, %v9460
          %v9525 = vmul.f32 %v9333, %v9461
          %v9526 = vmul.f32 %v9334, %v9462
          %v9527 = vmul.f32 %v9335, %v9463
          %v9528 = vmul.f32 %v9336, %v9464
          %v9529 = vmul.f32 %v9337, %v9465
          %v9530 = vmul.f32 %v9338, %v9466
          %v9531 = vmul.f32 %v9339, %v9467
          %v9532 = vmul.f32 %v9340, %v9468
          %v9533 = vmul.f32 %v9341, %v9469
          %v9534 = vmul.f32 %v9342, %v9470
          %v9535 = vmul.f32 %v9343, %v9471
          %v9536 = vmul.f32 %v9344, %v9472
          %v9537 = vmul.f32 %v9345, %v9473
          %v9538 = vmul.f32 %v9346, %v9474
          %v9539 = vmul.f32 %v9347, %v9475
          %v9540 = vmul.f32 %v9348, %v9476
          %v9541 = vmul.f32 %v9349, %v9477
          %v9542 = vmul.f32 %v9350, %v9478
          %v9543 = vmul.f32 %v9351, %v9479
          %v9544 = vmul.f32 %v9352, %v9480
          %v9545 = vmul.f32 %v9353, %v9481
          %v9546 = vmul.f32 %v9354, %v9482
          %v9547 = vmul.f32 %v9355, %v9483
          %v9548 = vmul.f32 %v9356, %v9484
          %v9549 = vmul.f32 %v9357, %v9485
          %v9550 = vmul.f32 %v9358, %v9486
          %v9551 = vmul.f32 %v9359, %v9487
          %v9552 = vmul.f32 %v9360, %v9488
          %v9553 = vmul.f32 %v9361, %v9489
          %v9554 = vmul.f32 %v9362, %v9490
          %v9555 = vmul.f32 %v9363, %v9491
          %v9556 = vmul.f32 %v9364, %v9492
          %v9557 = vmul.f32 %v9365, %v9493
          %v9558 = vmul.f32 %v9366, %v9494
          %v9559 = vmul.f32 %v9367, %v9495
          %v9560 = vmul.f32 %v9368, %v9496
          %v9561 = vmul.f32 %v9369, %v9497
          %v9562 = vmul.f32 %v9370, %v9498
          %v9563 = vmul.f32 %v9371, %v9499
          %v9564 = vmul.f32 %v9372, %v9500
          %v9565 = vmul.f32 %v9373, %v9501
          %v9566 = vmul.f32 %v9374, %v9502
          %v9567 = vmul.f32 %v9375, %v9503
          %v9568 = vmul.f32 %v9376, %v9504
          %v9569 = vmul.f32 %v9377, %v9505
          %v9570 = vmul.f32 %v9378, %v9506
          %v9571 = vmul.f32 %v9379, %v9507
          %v9572 = vmul.f32 %v9380, %v9508
          %v9573 = vmul.f32 %v9381, %v9509
          %v9574 = vmul.f32 %v9382, %v9510
          %v9575 = vmul.f32 %v9383, %v9511
          %v9576 = vmul.f32 %v9384, %v9512
          %9578 = vset.pattern.permute.xlu0 0
          %9579 = vperm.xlu0 %9578, %v9513
          %v9580 = vpop.permute.xlu0 %9579
          %9583 = vset.pattern.permute.xlu0 0
          %9584 = vperm.xlu0 %9583, %v9514
          %v9585 = vpop.permute.xlu0 %9584
          %9588 = vset.pattern.permute.xlu0 0
          %9589 = vperm.xlu0 %9588, %v9515
          %v9590 = vpop.permute.xlu0 %9589
          %9593 = vset.pattern.permute.xlu0 0
          %9594 = vperm.xlu0 %9593, %v9516
          %v9595 = vpop.permute.xlu0 %9594
          %9598 = vset.pattern.permute.xlu0 0
          %9599 = vperm.xlu0 %9598, %v9517
          %v9600 = vpop.permute.xlu0 %9599
          %9603 = vset.pattern.permute.xlu0 0
          %9604 = vperm.xlu0 %9603, %v9518
          %v9605 = vpop.permute.xlu0 %9604
          %9608 = vset.pattern.permute.xlu0 0
          %9609 = vperm.xlu0 %9608, %v9519
          %v9610 = vpop.permute.xlu0 %9609
          %9613 = vset.pattern.permute.xlu0 0
          %9614 = vperm.xlu0 %9613, %v9520
          %v9615 = vpop.permute.xlu0 %9614
          %9618 = vset.pattern.permute.xlu0 0
          %9619 = vperm.xlu0 %9618, %v9521
          %v9620 = vpop.permute.xlu0 %9619
          %9623 = vset.pattern.permute.xlu0 0
          %9624 = vperm.xlu0 %9623, %v9522
          %v9625 = vpop.permute.xlu0 %9624
          %9628 = vset.pattern.permute.xlu0 0
          %9629 = vperm.xlu0 %9628, %v9523
          %v9630 = vpop.permute.xlu0 %9629
          %9633 = vset.pattern.permute.xlu0 0
          %9634 = vperm.xlu0 %9633, %v9524
          %v9635 = vpop.permute.xlu0 %9634
          %9638 = vset.pattern.permute.xlu0 0
          %9639 = vperm.xlu0 %9638, %v9525
          %v9640 = vpop.permute.xlu0 %9639
          %9643 = vset.pattern.permute.xlu0 0
          %9644 = vperm.xlu0 %9643, %v9526
          %v9645 = vpop.permute.xlu0 %9644
          %9648 = vset.pattern.permute.xlu0 0
          %9649 = vperm.xlu0 %9648, %v9527
          %v9650 = vpop.permute.xlu0 %9649
          %9653 = vset.pattern.permute.xlu0 0
          %9654 = vperm.xlu0 %9653, %v9528
          %v9655 = vpop.permute.xlu0 %9654
          %9658 = vset.pattern.permute.xlu0 0
          %9659 = vperm.xlu0 %9658, %v9529
          %v9660 = vpop.permute.xlu0 %9659
          %9663 = vset.pattern.permute.xlu0 0
          %9664 = vperm.xlu0 %9663, %v9530
          %v9665 = vpop.permute.xlu0 %9664
          %9668 = vset.pattern.permute.xlu0 0
          %9669 = vperm.xlu0 %9668, %v9531
          %v9670 = vpop.permute.xlu0 %9669
          %9673 = vset.pattern.permute.xlu0 0
          %9674 = vperm.xlu0 %9673, %v9532
          %v9675 = vpop.permute.xlu0 %9674
          %9678 = vset.pattern.permute.xlu0 0
          %9679 = vperm.xlu0 %9678, %v9533
          %v9680 = vpop.permute.xlu0 %9679
          %9683 = vset.pattern.permute.xlu0 0
          %9684 = vperm.xlu0 %9683, %v9534
          %v9685 = vpop.permute.xlu0 %9684
          %9688 = vset.pattern.permute.xlu0 0
          %9689 = vperm.xlu0 %9688, %v9535
          %v9690 = vpop.permute.xlu0 %9689
          %9693 = vset.pattern.permute.xlu0 0
          %9694 = vperm.xlu0 %9693, %v9536
          %v9695 = vpop.permute.xlu0 %9694
          %9698 = vset.pattern.permute.xlu0 0
          %9699 = vperm.xlu0 %9698, %v9537
          %v9700 = vpop.permute.xlu0 %9699
          %9703 = vset.pattern.permute.xlu0 0
          %9704 = vperm.xlu0 %9703, %v9538
          %v9705 = vpop.permute.xlu0 %9704
          %9708 = vset.pattern.permute.xlu0 0
          %9709 = vperm.xlu0 %9708, %v9539
          %v9710 = vpop.permute.xlu0 %9709
          %9713 = vset.pattern.permute.xlu0 0
          %9714 = vperm.xlu0 %9713, %v9540
          %v9715 = vpop.permute.xlu0 %9714
          %9718 = vset.pattern.permute.xlu0 0
          %9719 = vperm.xlu0 %9718, %v9541
          %v9720 = vpop.permute.xlu0 %9719
          %9723 = vset.pattern.permute.xlu0 0
          %9724 = vperm.xlu0 %9723, %v9542
          %v9725 = vpop.permute.xlu0 %9724
          %9728 = vset.pattern.permute.xlu0 0
          %9729 = vperm.xlu0 %9728, %v9543
          %v9730 = vpop.permute.xlu0 %9729
          %9733 = vset.pattern.permute.xlu0 0
          %9734 = vperm.xlu0 %9733, %v9544
          %v9735 = vpop.permute.xlu0 %9734
          %9738 = vset.pattern.permute.xlu0 0
          %9739 = vperm.xlu0 %9738, %v9545
          %v9740 = vpop.permute.xlu0 %9739
          %9743 = vset.pattern.permute.xlu0 0
          %9744 = vperm.xlu0 %9743, %v9546
          %v9745 = vpop.permute.xlu0 %9744
          %9748 = vset.pattern.permute.xlu0 0
          %9749 = vperm.xlu0 %9748, %v9547
          %v9750 = vpop.permute.xlu0 %9749
          %9753 = vset.pattern.permute.xlu0 0
          %9754 = vperm.xlu0 %9753, %v9548
          %v9755 = vpop.permute.xlu0 %9754
          %9758 = vset.pattern.permute.xlu0 0
          %9759 = vperm.xlu0 %9758, %v9549
          %v9760 = vpop.permute.xlu0 %9759
          %9763 = vset.pattern.permute.xlu0 0
          %9764 = vperm.xlu0 %9763, %v9550
          %v9765 = vpop.permute.xlu0 %9764
          %9768 = vset.pattern.permute.xlu0 0
          %9769 = vperm.xlu0 %9768, %v9551
          %v9770 = vpop.permute.xlu0 %9769
          %9773 = vset.pattern.permute.xlu0 0
          %9774 = vperm.xlu0 %9773, %v9552
          %v9775 = vpop.permute.xlu0 %9774
          %9778 = vset.pattern.permute.xlu0 0
          %9779 = vperm.xlu0 %9778, %v9553
          %v9780 = vpop.permute.xlu0 %9779
          %9783 = vset.pattern.permute.xlu0 0
          %9784 = vperm.xlu0 %9783, %v9554
          %v9785 = vpop.permute.xlu0 %9784
          %9788 = vset.pattern.permute.xlu0 0
          %9789 = vperm.xlu0 %9788, %v9555
          %v9790 = vpop.permute.xlu0 %9789
          %9793 = vset.pattern.permute.xlu0 0
          %9794 = vperm.xlu0 %9793, %v9556
          %v9795 = vpop.permute.xlu0 %9794
          %9798 = vset.pattern.permute.xlu0 0
          %9799 = vperm.xlu0 %9798, %v9557
          %v9800 = vpop.permute.xlu0 %9799
          %9803 = vset.pattern.permute.xlu0 0
          %9804 = vperm.xlu0 %9803, %v9558
          %v9805 = vpop.permute.xlu0 %9804
          %9808 = vset.pattern.permute.xlu0 0
          %9809 = vperm.xlu0 %9808, %v9559
          %v9810 = vpop.permute.xlu0 %9809
          %9813 = vset.pattern.permute.xlu0 0
          %9814 = vperm.xlu0 %9813, %v9560
          %v9815 = vpop.permute.xlu0 %9814
          %9818 = vset.pattern.permute.xlu0 0
          %9819 = vperm.xlu0 %9818, %v9561
          %v9820 = vpop.permute.xlu0 %9819
          %9823 = vset.pattern.permute.xlu0 0
          %9824 = vperm.xlu0 %9823, %v9562
          %v9825 = vpop.permute.xlu0 %9824
          %9828 = vset.pattern.permute.xlu0 0
          %9829 = vperm.xlu0 %9828, %v9563
          %v9830 = vpop.permute.xlu0 %9829
          %9833 = vset.pattern.permute.xlu0 0
          %9834 = vperm.xlu0 %9833, %v9564
          %v9835 = vpop.permute.xlu0 %9834
          %9838 = vset.pattern.permute.xlu0 0
          %9839 = vperm.xlu0 %9838, %v9565
          %v9840 = vpop.permute.xlu0 %9839
          %9843 = vset.pattern.permute.xlu0 0
          %9844 = vperm.xlu0 %9843, %v9566
          %v9845 = vpop.permute.xlu0 %9844
          %9848 = vset.pattern.permute.xlu0 0
          %9849 = vperm.xlu0 %9848, %v9567
          %v9850 = vpop.permute.xlu0 %9849
          %9853 = vset.pattern.permute.xlu0 0
          %9854 = vperm.xlu0 %9853, %v9568
          %v9855 = vpop.permute.xlu0 %9854
          %9858 = vset.pattern.permute.xlu0 0
          %9859 = vperm.xlu0 %9858, %v9569
          %v9860 = vpop.permute.xlu0 %9859
          %9863 = vset.pattern.permute.xlu0 0
          %9864 = vperm.xlu0 %9863, %v9570
          %v9865 = vpop.permute.xlu0 %9864
          %9868 = vset.pattern.permute.xlu0 0
          %9869 = vperm.xlu0 %9868, %v9571
          %v9870 = vpop.permute.xlu0 %9869
          %9873 = vset.pattern.permute.xlu0 0
          %9874 = vperm.xlu0 %9873, %v9572
          %v9875 = vpop.permute.xlu0 %9874
          %9878 = vset.pattern.permute.xlu0 0
          %9879 = vperm.xlu0 %9878, %v9573
          %v9880 = vpop.permute.xlu0 %9879
          %9883 = vset.pattern.permute.xlu0 0
          %9884 = vperm.xlu0 %9883, %v9574
          %v9885 = vpop.permute.xlu0 %9884
          %9888 = vset.pattern.permute.xlu0 0
          %9889 = vperm.xlu0 %9888, %v9575
          %v9890 = vpop.permute.xlu0 %9889
          %9893 = vset.pattern.permute.xlu0 0
          %9894 = vperm.xlu0 %9893, %v9576
          %v9895 = vpop.permute.xlu0 %9894
          %v9897 = vmul.f32 %v8424, %v9580
          %v9898 = vmul.f32 %v8425, %v9580
          %v9899 = vmul.f32 %v8426, %v9585
          %v9900 = vmul.f32 %v8427, %v9585
          %v9901 = vmul.f32 %v8428, %v9590
          %v9902 = vmul.f32 %v8429, %v9590
          %v9903 = vmul.f32 %v8430, %v9595
          %v9904 = vmul.f32 %v8431, %v9595
          %v9905 = vmul.f32 %v8432, %v9600
          %v9906 = vmul.f32 %v8433, %v9600
          %v9907 = vmul.f32 %v8434, %v9605
          %v9908 = vmul.f32 %v8435, %v9605
          %v9909 = vmul.f32 %v8436, %v9610
          %v9910 = vmul.f32 %v8437, %v9610
          %v9911 = vmul.f32 %v8438, %v9615
          %v9912 = vmul.f32 %v8439, %v9615
          %v9913 = vmul.f32 %v8440, %v9620
          %v9914 = vmul.f32 %v8441, %v9620
          %v9915 = vmul.f32 %v8442, %v9625
          %v9916 = vmul.f32 %v8443, %v9625
          %v9917 = vmul.f32 %v8444, %v9630
          %v9918 = vmul.f32 %v8445, %v9630
          %v9919 = vmul.f32 %v8446, %v9635
          %v9920 = vmul.f32 %v8447, %v9635
          %v9921 = vmul.f32 %v8448, %v9640
          %v9922 = vmul.f32 %v8449, %v9640
          %v9923 = vmul.f32 %v8450, %v9645
          %v9924 = vmul.f32 %v8451, %v9645
          %v9925 = vmul.f32 %v8452, %v9650
          %v9926 = vmul.f32 %v8453, %v9650
          %v9927 = vmul.f32 %v8454, %v9655
          %v9928 = vmul.f32 %v8455, %v9655
          %v9929 = vmul.f32 %v8456, %v9660
          %v9930 = vmul.f32 %v8457, %v9660
          %v9931 = vmul.f32 %v8458, %v9665
          %v9932 = vmul.f32 %v8459, %v9665
          %v9933 = vmul.f32 %v8460, %v9670
          %v9934 = vmul.f32 %v8461, %v9670
          %v9935 = vmul.f32 %v8462, %v9675
          %v9936 = vmul.f32 %v8463, %v9675
          %v9937 = vmul.f32 %v8464, %v9680
          %v9938 = vmul.f32 %v8465, %v9680
          %v9939 = vmul.f32 %v8466, %v9685
          %v9940 = vmul.f32 %v8467, %v9685
          %v9941 = vmul.f32 %v8468, %v9690
          %v9942 = vmul.f32 %v8469, %v9690
          %v9943 = vmul.f32 %v8470, %v9695
          %v9944 = vmul.f32 %v8471, %v9695
          %v9945 = vmul.f32 %v8472, %v9700
          %v9946 = vmul.f32 %v8473, %v9700
          %v9947 = vmul.f32 %v8474, %v9705
          %v9948 = vmul.f32 %v8475, %v9705
          %v9949 = vmul.f32 %v8476, %v9710
          %v9950 = vmul.f32 %v8477, %v9710
          %v9951 = vmul.f32 %v8478, %v9715
          %v9952 = vmul.f32 %v8479, %v9715
          %v9953 = vmul.f32 %v8480, %v9720
          %v9954 = vmul.f32 %v8481, %v9720
          %v9955 = vmul.f32 %v8482, %v9725
          %v9956 = vmul.f32 %v8483, %v9725
          %v9957 = vmul.f32 %v8484, %v9730
          %v9958 = vmul.f32 %v8485, %v9730
          %v9959 = vmul.f32 %v8486, %v9735
          %v9960 = vmul.f32 %v8487, %v9735
          %v9961 = vmul.f32 %v8488, %v9740
          %v9962 = vmul.f32 %v8489, %v9740
          %v9963 = vmul.f32 %v8490, %v9745
          %v9964 = vmul.f32 %v8491, %v9745
          %v9965 = vmul.f32 %v8492, %v9750
          %v9966 = vmul.f32 %v8493, %v9750
          %v9967 = vmul.f32 %v8494, %v9755
          %v9968 = vmul.f32 %v8495, %v9755
          %v9969 = vmul.f32 %v8496, %v9760
          %v9970 = vmul.f32 %v8497, %v9760
          %v9971 = vmul.f32 %v8498, %v9765
          %v9972 = vmul.f32 %v8499, %v9765
          %v9973 = vmul.f32 %v8500, %v9770
          %v9974 = vmul.f32 %v8501, %v9770
          %v9975 = vmul.f32 %v8502, %v9775
          %v9976 = vmul.f32 %v8503, %v9775
          %v9977 = vmul.f32 %v8504, %v9780
          %v9978 = vmul.f32 %v8505, %v9780
          %v9979 = vmul.f32 %v8506, %v9785
          %v9980 = vmul.f32 %v8507, %v9785
          %v9981 = vmul.f32 %v8508, %v9790
          %v9982 = vmul.f32 %v8509, %v9790
          %v9983 = vmul.f32 %v8510, %v9795
          %v9984 = vmul.f32 %v8511, %v9795
          %v9985 = vmul.f32 %v8512, %v9800
          %v9986 = vmul.f32 %v8513, %v9800
          %v9987 = vmul.f32 %v8514, %v9805
          %v9988 = vmul.f32 %v8515, %v9805
          %v9989 = vmul.f32 %v8516, %v9810
          %v9990 = vmul.f32 %v8517, %v9810
          %v9991 = vmul.f32 %v8518, %v9815
          %v9992 = vmul.f32 %v8519, %v9815
          %v9993 = vmul.f32 %v8520, %v9820
          %v9994 = vmul.f32 %v8521, %v9820
          %v9995 = vmul.f32 %v8522, %v9825
          %v9996 = vmul.f32 %v8523, %v9825
          %v9997 = vmul.f32 %v8524, %v9830
          %v9998 = vmul.f32 %v8525, %v9830
          %v9999 = vmul.f32 %v8526, %v9835
          %v10000 = vmul.f32 %v8527, %v9835
          %v10001 = vmul.f32 %v8528, %v9840
          %v10002 = vmul.f32 %v8529, %v9840
          %v10003 = vmul.f32 %v8530, %v9845
          %v10004 = vmul.f32 %v8531, %v9845
          %v10005 = vmul.f32 %v8532, %v9850
          %v10006 = vmul.f32 %v8533, %v9850
          %v10007 = vmul.f32 %v8534, %v9855
          %v10008 = vmul.f32 %v8535, %v9855
          %v10009 = vmul.f32 %v8536, %v9860
          %v10010 = vmul.f32 %v8537, %v9860
          %v10011 = vmul.f32 %v8538, %v9865
          %v10012 = vmul.f32 %v8539, %v9865
          %v10013 = vmul.f32 %v8540, %v9870
          %v10014 = vmul.f32 %v8541, %v9870
          %v10015 = vmul.f32 %v8542, %v9875
          %v10016 = vmul.f32 %v8543, %v9875
          %v10017 = vmul.f32 %v8544, %v9880
          %v10018 = vmul.f32 %v8545, %v9880
          %v10019 = vmul.f32 %v8546, %v9885
          %v10020 = vmul.f32 %v8547, %v9885
          %v10021 = vmul.f32 %v8548, %v9890
          %v10022 = vmul.f32 %v8549, %v9890
          %v10023 = vmul.f32 %v8550, %v9895
          %v10024 = vmul.f32 %v8551, %v9895
          %v10025 = vld [vmem:[%s7] sm:$0xff]
          %v10026 = vld [vmem:[%s7 + $0x8] sm:$0xff]
          %v10027 = vld [vmem:[%s7 + $0x10] sm:$0xff]
          %v10028 = vld [vmem:[%s7 + $0x18] sm:$0xff]
          %v10029 = vld [vmem:[%s7 + $0x20] sm:$0xff]
          %v10030 = vld [vmem:[%s7 + $0x28] sm:$0xff]
          %v10031 = vld [vmem:[%s7 + $0x30] sm:$0xff]
          %v10032 = vld [vmem:[%s7 + $0x38] sm:$0xff]
          %v10033 = vld [vmem:[%s7 + $0x40] sm:$0xff]
          %v10034 = vld [vmem:[%s7 + $0x48] sm:$0xff]
          %v10035 = vld [vmem:[%s7 + $0x50] sm:$0xff]
          %v10036 = vld [vmem:[%s7 + $0x58] sm:$0xff]
          %v10037 = vld [vmem:[%s7 + $0x60] sm:$0xff]
          %v10038 = vld [vmem:[%s7 + $0x68] sm:$0xff]
          %v10039 = vld [vmem:[%s7 + $0x70] sm:$0xff]
          %v10040 = vld [vmem:[%s7 + $0x78] sm:$0xff]
          %v10041 = vld [vmem:[%s7 + $0x80] sm:$0xff]
          %v10042 = vld [vmem:[%s7 + $0x88] sm:$0xff]
          %v10043 = vld [vmem:[%s7 + $0x90] sm:$0xff]
          %v10044 = vld [vmem:[%s7 + $0x98] sm:$0xff]
          %v10045 = vld [vmem:[%s7 + $0xa0] sm:$0xff]
          %v10046 = vld [vmem:[%s7 + $0xa8] sm:$0xff]
          %v10047 = vld [vmem:[%s7 + $0xb0] sm:$0xff]
          %v10048 = vld [vmem:[%s7 + $0xb8] sm:$0xff]
          %v10049 = vld [vmem:[%s7 + $0xc0] sm:$0xff]
          %v10050 = vld [vmem:[%s7 + $0xc8] sm:$0xff]
          %v10051 = vld [vmem:[%s7 + $0xd0] sm:$0xff]
          %v10052 = vld [vmem:[%s7 + $0xd8] sm:$0xff]
          %v10053 = vld [vmem:[%s7 + $0xe0] sm:$0xff]
          %v10054 = vld [vmem:[%s7 + $0xe8] sm:$0xff]
          %v10055 = vld [vmem:[%s7 + $0xf0] sm:$0xff]
          %v10056 = vld [vmem:[%s7 + $0xf8] sm:$0xff]
          %v10057 = vld [vmem:[%s7 + $0x100] sm:$0xff]
          %v10058 = vld [vmem:[%s7 + $0x108] sm:$0xff]
          %v10059 = vld [vmem:[%s7 + $0x110] sm:$0xff]
          %v10060 = vld [vmem:[%s7 + $0x118] sm:$0xff]
          %v10061 = vld [vmem:[%s7 + $0x120] sm:$0xff]
          %v10062 = vld [vmem:[%s7 + $0x128] sm:$0xff]
          %v10063 = vld [vmem:[%s7 + $0x130] sm:$0xff]
          %v10064 = vld [vmem:[%s7 + $0x138] sm:$0xff]
          %v10065 = vld [vmem:[%s7 + $0x140] sm:$0xff]
          %v10066 = vld [vmem:[%s7 + $0x148] sm:$0xff]
          %v10067 = vld [vmem:[%s7 + $0x150] sm:$0xff]
          %v10068 = vld [vmem:[%s7 + $0x158] sm:$0xff]
          %v10069 = vld [vmem:[%s7 + $0x160] sm:$0xff]
          %v10070 = vld [vmem:[%s7 + $0x168] sm:$0xff]
          %v10071 = vld [vmem:[%s7 + $0x170] sm:$0xff]
          %v10072 = vld [vmem:[%s7 + $0x178] sm:$0xff]
          %v10073 = vld [vmem:[%s7 + $0x180] sm:$0xff]
          %v10074 = vld [vmem:[%s7 + $0x188] sm:$0xff]
          %v10075 = vld [vmem:[%s7 + $0x190] sm:$0xff]
          %v10076 = vld [vmem:[%s7 + $0x198] sm:$0xff]
          %v10077 = vld [vmem:[%s7 + $0x1a0] sm:$0xff]
          %v10078 = vld [vmem:[%s7 + $0x1a8] sm:$0xff]
          %v10079 = vld [vmem:[%s7 + $0x1b0] sm:$0xff]
          %v10080 = vld [vmem:[%s7 + $0x1b8] sm:$0xff]
          %v10081 = vld [vmem:[%s7 + $0x1c0] sm:$0xff]
          %v10082 = vld [vmem:[%s7 + $0x1c8] sm:$0xff]
          %v10083 = vld [vmem:[%s7 + $0x1d0] sm:$0xff]
          %v10084 = vld [vmem:[%s7 + $0x1d8] sm:$0xff]
          %v10085 = vld [vmem:[%s7 + $0x1e0] sm:$0xff]
          %v10086 = vld [vmem:[%s7 + $0x1e8] sm:$0xff]
          %v10087 = vld [vmem:[%s7 + $0x1f0] sm:$0xff]
          %v10088 = vld [vmem:[%s7 + $0x1f8] sm:$0xff]
          %10090 = vset.pattern.permute.xlu0 0
          %10091 = vperm.xlu0 %10090, %v10025
          %v10092 = vpop.permute.xlu0 %10091
          %10095 = vset.pattern.permute.xlu0 0
          %10096 = vperm.xlu0 %10095, %v10026
          %v10097 = vpop.permute.xlu0 %10096
          %10100 = vset.pattern.permute.xlu0 0
          %10101 = vperm.xlu0 %10100, %v10027
          %v10102 = vpop.permute.xlu0 %10101
          %10105 = vset.pattern.permute.xlu0 0
          %10106 = vperm.xlu0 %10105, %v10028
          %v10107 = vpop.permute.xlu0 %10106
          %10110 = vset.pattern.permute.xlu0 0
          %10111 = vperm.xlu0 %10110, %v10029
          %v10112 = vpop.permute.xlu0 %10111
          %10115 = vset.pattern.permute.xlu0 0
          %10116 = vperm.xlu0 %10115, %v10030
          %v10117 = vpop.permute.xlu0 %10116
          %10120 = vset.pattern.permute.xlu0 0
          %10121 = vperm.xlu0 %10120, %v10031
          %v10122 = vpop.permute.xlu0 %10121
          %10125 = vset.pattern.permute.xlu0 0
          %10126 = vperm.xlu0 %10125, %v10032
          %v10127 = vpop.permute.xlu0 %10126
          %10130 = vset.pattern.permute.xlu0 0
          %10131 = vperm.xlu0 %10130, %v10033
          %v10132 = vpop.permute.xlu0 %10131
          %10135 = vset.pattern.permute.xlu0 0
          %10136 = vperm.xlu0 %10135, %v10034
          %v10137 = vpop.permute.xlu0 %10136
          %10140 = vset.pattern.permute.xlu0 0
          %10141 = vperm.xlu0 %10140, %v10035
          %v10142 = vpop.permute.xlu0 %10141
          %10145 = vset.pattern.permute.xlu0 0
          %10146 = vperm.xlu0 %10145, %v10036
          %v10147 = vpop.permute.xlu0 %10146
          %10150 = vset.pattern.permute.xlu0 0
          %10151 = vperm.xlu0 %10150, %v10037
          %v10152 = vpop.permute.xlu0 %10151
          %10155 = vset.pattern.permute.xlu0 0
          %10156 = vperm.xlu0 %10155, %v10038
          %v10157 = vpop.permute.xlu0 %10156
          %10160 = vset.pattern.permute.xlu0 0
          %10161 = vperm.xlu0 %10160, %v10039
          %v10162 = vpop.permute.xlu0 %10161
          %10165 = vset.pattern.permute.xlu0 0
          %10166 = vperm.xlu0 %10165, %v10040
          %v10167 = vpop.permute.xlu0 %10166
          %10170 = vset.pattern.permute.xlu0 0
          %10171 = vperm.xlu0 %10170, %v10041
          %v10172 = vpop.permute.xlu0 %10171
          %10175 = vset.pattern.permute.xlu0 0
          %10176 = vperm.xlu0 %10175, %v10042
          %v10177 = vpop.permute.xlu0 %10176
          %10180 = vset.pattern.permute.xlu0 0
          %10181 = vperm.xlu0 %10180, %v10043
          %v10182 = vpop.permute.xlu0 %10181
          %10185 = vset.pattern.permute.xlu0 0
          %10186 = vperm.xlu0 %10185, %v10044
          %v10187 = vpop.permute.xlu0 %10186
          %10190 = vset.pattern.permute.xlu0 0
          %10191 = vperm.xlu0 %10190, %v10045
          %v10192 = vpop.permute.xlu0 %10191
          %10195 = vset.pattern.permute.xlu0 0
          %10196 = vperm.xlu0 %10195, %v10046
          %v10197 = vpop.permute.xlu0 %10196
          %10200 = vset.pattern.permute.xlu0 0
          %10201 = vperm.xlu0 %10200, %v10047
          %v10202 = vpop.permute.xlu0 %10201
          %10205 = vset.pattern.permute.xlu0 0
          %10206 = vperm.xlu0 %10205, %v10048
          %v10207 = vpop.permute.xlu0 %10206
          %10210 = vset.pattern.permute.xlu0 0
          %10211 = vperm.xlu0 %10210, %v10049
          %v10212 = vpop.permute.xlu0 %10211
          %10215 = vset.pattern.permute.xlu0 0
          %10216 = vperm.xlu0 %10215, %v10050
          %v10217 = vpop.permute.xlu0 %10216
          %10220 = vset.pattern.permute.xlu0 0
          %10221 = vperm.xlu0 %10220, %v10051
          %v10222 = vpop.permute.xlu0 %10221
          %10225 = vset.pattern.permute.xlu0 0
          %10226 = vperm.xlu0 %10225, %v10052
          %v10227 = vpop.permute.xlu0 %10226
          %10230 = vset.pattern.permute.xlu0 0
          %10231 = vperm.xlu0 %10230, %v10053
          %v10232 = vpop.permute.xlu0 %10231
          %10235 = vset.pattern.permute.xlu0 0
          %10236 = vperm.xlu0 %10235, %v10054
          %v10237 = vpop.permute.xlu0 %10236
          %10240 = vset.pattern.permute.xlu0 0
          %10241 = vperm.xlu0 %10240, %v10055
          %v10242 = vpop.permute.xlu0 %10241
          %10245 = vset.pattern.permute.xlu0 0
          %10246 = vperm.xlu0 %10245, %v10056
          %v10247 = vpop.permute.xlu0 %10246
          %10250 = vset.pattern.permute.xlu0 0
          %10251 = vperm.xlu0 %10250, %v10057
          %v10252 = vpop.permute.xlu0 %10251
          %10255 = vset.pattern.permute.xlu0 0
          %10256 = vperm.xlu0 %10255, %v10058
          %v10257 = vpop.permute.xlu0 %10256
          %10260 = vset.pattern.permute.xlu0 0
          %10261 = vperm.xlu0 %10260, %v10059
          %v10262 = vpop.permute.xlu0 %10261
          %10265 = vset.pattern.permute.xlu0 0
          %10266 = vperm.xlu0 %10265, %v10060
          %v10267 = vpop.permute.xlu0 %10266
          %10270 = vset.pattern.permute.xlu0 0
          %10271 = vperm.xlu0 %10270, %v10061
          %v10272 = vpop.permute.xlu0 %10271
          %10275 = vset.pattern.permute.xlu0 0
          %10276 = vperm.xlu0 %10275, %v10062
          %v10277 = vpop.permute.xlu0 %10276
          %10280 = vset.pattern.permute.xlu0 0
          %10281 = vperm.xlu0 %10280, %v10063
          %v10282 = vpop.permute.xlu0 %10281
          %10285 = vset.pattern.permute.xlu0 0
          %10286 = vperm.xlu0 %10285, %v10064
          %v10287 = vpop.permute.xlu0 %10286
          %10290 = vset.pattern.permute.xlu0 0
          %10291 = vperm.xlu0 %10290, %v10065
          %v10292 = vpop.permute.xlu0 %10291
          %10295 = vset.pattern.permute.xlu0 0
          %10296 = vperm.xlu0 %10295, %v10066
          %v10297 = vpop.permute.xlu0 %10296
          %10300 = vset.pattern.permute.xlu0 0
          %10301 = vperm.xlu0 %10300, %v10067
          %v10302 = vpop.permute.xlu0 %10301
          %10305 = vset.pattern.permute.xlu0 0
          %10306 = vperm.xlu0 %10305, %v10068
          %v10307 = vpop.permute.xlu0 %10306
          %10310 = vset.pattern.permute.xlu0 0
          %10311 = vperm.xlu0 %10310, %v10069
          %v10312 = vpop.permute.xlu0 %10311
          %10315 = vset.pattern.permute.xlu0 0
          %10316 = vperm.xlu0 %10315, %v10070
          %v10317 = vpop.permute.xlu0 %10316
          %10320 = vset.pattern.permute.xlu0 0
          %10321 = vperm.xlu0 %10320, %v10071
          %v10322 = vpop.permute.xlu0 %10321
          %10325 = vset.pattern.permute.xlu0 0
          %10326 = vperm.xlu0 %10325, %v10072
          %v10327 = vpop.permute.xlu0 %10326
          %10330 = vset.pattern.permute.xlu0 0
          %10331 = vperm.xlu0 %10330, %v10073
          %v10332 = vpop.permute.xlu0 %10331
          %10335 = vset.pattern.permute.xlu0 0
          %10336 = vperm.xlu0 %10335, %v10074
          %v10337 = vpop.permute.xlu0 %10336
          %10340 = vset.pattern.permute.xlu0 0
          %10341 = vperm.xlu0 %10340, %v10075
          %v10342 = vpop.permute.xlu0 %10341
          %10345 = vset.pattern.permute.xlu0 0
          %10346 = vperm.xlu0 %10345, %v10076
          %v10347 = vpop.permute.xlu0 %10346
          %10350 = vset.pattern.permute.xlu0 0
          %10351 = vperm.xlu0 %10350, %v10077
          %v10352 = vpop.permute.xlu0 %10351
          %10355 = vset.pattern.permute.xlu0 0
          %10356 = vperm.xlu0 %10355, %v10078
          %v10357 = vpop.permute.xlu0 %10356
          %10360 = vset.pattern.permute.xlu0 0
          %10361 = vperm.xlu0 %10360, %v10079
          %v10362 = vpop.permute.xlu0 %10361
          %10365 = vset.pattern.permute.xlu0 0
          %10366 = vperm.xlu0 %10365, %v10080
          %v10367 = vpop.permute.xlu0 %10366
          %10370 = vset.pattern.permute.xlu0 0
          %10371 = vperm.xlu0 %10370, %v10081
          %v10372 = vpop.permute.xlu0 %10371
          %10375 = vset.pattern.permute.xlu0 0
          %10376 = vperm.xlu0 %10375, %v10082
          %v10377 = vpop.permute.xlu0 %10376
          %10380 = vset.pattern.permute.xlu0 0
          %10381 = vperm.xlu0 %10380, %v10083
          %v10382 = vpop.permute.xlu0 %10381
          %10385 = vset.pattern.permute.xlu0 0
          %10386 = vperm.xlu0 %10385, %v10084
          %v10387 = vpop.permute.xlu0 %10386
          %10390 = vset.pattern.permute.xlu0 0
          %10391 = vperm.xlu0 %10390, %v10085
          %v10392 = vpop.permute.xlu0 %10391
          %10395 = vset.pattern.permute.xlu0 0
          %10396 = vperm.xlu0 %10395, %v10086
          %v10397 = vpop.permute.xlu0 %10396
          %10400 = vset.pattern.permute.xlu0 0
          %10401 = vperm.xlu0 %10400, %v10087
          %v10402 = vpop.permute.xlu0 %10401
          %10405 = vset.pattern.permute.xlu0 0
          %10406 = vperm.xlu0 %10405, %v10088
          %v10407 = vpop.permute.xlu0 %10406
          %v10409 = vadd.f32 %v9897, %v10092
          %v10410 = vadd.f32 %v9898, %v10092
          %v10411 = vadd.f32 %v9899, %v10097
          %v10412 = vadd.f32 %v9900, %v10097
          %v10413 = vadd.f32 %v9901, %v10102
          %v10414 = vadd.f32 %v9902, %v10102
          %v10415 = vadd.f32 %v9903, %v10107
          %v10416 = vadd.f32 %v9904, %v10107
          %v10417 = vadd.f32 %v9905, %v10112
          %v10418 = vadd.f32 %v9906, %v10112
          %v10419 = vadd.f32 %v9907, %v10117
          %v10420 = vadd.f32 %v9908, %v10117
          %v10421 = vadd.f32 %v9909, %v10122
          %v10422 = vadd.f32 %v9910, %v10122
          %v10423 = vadd.f32 %v9911, %v10127
          %v10424 = vadd.f32 %v9912, %v10127
          %v10425 = vadd.f32 %v9913, %v10132
          %v10426 = vadd.f32 %v9914, %v10132
          %v10427 = vadd.f32 %v9915, %v10137
          %v10428 = vadd.f32 %v9916, %v10137
          %v10429 = vadd.f32 %v9917, %v10142
          %v10430 = vadd.f32 %v9918, %v10142
          %v10431 = vadd.f32 %v9919, %v10147
          %v10432 = vadd.f32 %v9920, %v10147
          %v10433 = vadd.f32 %v9921, %v10152
          %v10434 = vadd.f32 %v9922, %v10152
          %v10435 = vadd.f32 %v9923, %v10157
          %v10436 = vadd.f32 %v9924, %v10157
          %v10437 = vadd.f32 %v9925, %v10162
          %v10438 = vadd.f32 %v9926, %v10162
          %v10439 = vadd.f32 %v9927, %v10167
          %v10440 = vadd.f32 %v9928, %v10167
          %v10441 = vadd.f32 %v9929, %v10172
          %v10442 = vadd.f32 %v9930, %v10172
          %v10443 = vadd.f32 %v9931, %v10177
          %v10444 = vadd.f32 %v9932, %v10177
          %v10445 = vadd.f32 %v9933, %v10182
          %v10446 = vadd.f32 %v9934, %v10182
          %v10447 = vadd.f32 %v9935, %v10187
          %v10448 = vadd.f32 %v9936, %v10187
          %v10449 = vadd.f32 %v9937, %v10192
          %v10450 = vadd.f32 %v9938, %v10192
          %v10451 = vadd.f32 %v9939, %v10197
          %v10452 = vadd.f32 %v9940, %v10197
          %v10453 = vadd.f32 %v9941, %v10202
          %v10454 = vadd.f32 %v9942, %v10202
          %v10455 = vadd.f32 %v9943, %v10207
          %v10456 = vadd.f32 %v9944, %v10207
          %v10457 = vadd.f32 %v9945, %v10212
          %v10458 = vadd.f32 %v9946, %v10212
          %v10459 = vadd.f32 %v9947, %v10217
          %v10460 = vadd.f32 %v9948, %v10217
          %v10461 = vadd.f32 %v9949, %v10222
          %v10462 = vadd.f32 %v9950, %v10222
          %v10463 = vadd.f32 %v9951, %v10227
          %v10464 = vadd.f32 %v9952, %v10227
          %v10465 = vadd.f32 %v9953, %v10232
          %v10466 = vadd.f32 %v9954, %v10232
          %v10467 = vadd.f32 %v9955, %v10237
          %v10468 = vadd.f32 %v9956, %v10237
          %v10469 = vadd.f32 %v9957, %v10242
          %v10470 = vadd.f32 %v9958, %v10242
          %v10471 = vadd.f32 %v9959, %v10247
          %v10472 = vadd.f32 %v9960, %v10247
          %v10473 = vadd.f32 %v9961, %v10252
          %v10474 = vadd.f32 %v9962, %v10252
          %v10475 = vadd.f32 %v9963, %v10257
          %v10476 = vadd.f32 %v9964, %v10257
          %v10477 = vadd.f32 %v9965, %v10262
          %v10478 = vadd.f32 %v9966, %v10262
          %v10479 = vadd.f32 %v9967, %v10267
          %v10480 = vadd.f32 %v9968, %v10267
          %v10481 = vadd.f32 %v9969, %v10272
          %v10482 = vadd.f32 %v9970, %v10272
          %v10483 = vadd.f32 %v9971, %v10277
          %v10484 = vadd.f32 %v9972, %v10277
          %v10485 = vadd.f32 %v9973, %v10282
          %v10486 = vadd.f32 %v9974, %v10282
          %v10487 = vadd.f32 %v9975, %v10287
          %v10488 = vadd.f32 %v9976, %v10287
          %v10489 = vadd.f32 %v9977, %v10292
          %v10490 = vadd.f32 %v9978, %v10292
          %v10491 = vadd.f32 %v9979, %v10297
          %v10492 = vadd.f32 %v9980, %v10297
          %v10493 = vadd.f32 %v9981, %v10302
          %v10494 = vadd.f32 %v9982, %v10302
          %v10495 = vadd.f32 %v9983, %v10307
          %v10496 = vadd.f32 %v9984, %v10307
          %v10497 = vadd.f32 %v9985, %v10312
          %v10498 = vadd.f32 %v9986, %v10312
          %v10499 = vadd.f32 %v9987, %v10317
          %v10500 = vadd.f32 %v9988, %v10317
          %v10501 = vadd.f32 %v9989, %v10322
          %v10502 = vadd.f32 %v9990, %v10322
          %v10503 = vadd.f32 %v9991, %v10327
          %v10504 = vadd.f32 %v9992, %v10327
          %v10505 = vadd.f32 %v9993, %v10332
          %v10506 = vadd.f32 %v9994, %v10332
          %v10507 = vadd.f32 %v9995, %v10337
          %v10508 = vadd.f32 %v9996, %v10337
          %v10509 = vadd.f32 %v9997, %v10342
          %v10510 = vadd.f32 %v9998, %v10342
          %v10511 = vadd.f32 %v9999, %v10347
          %v10512 = vadd.f32 %v10000, %v10347
          %v10513 = vadd.f32 %v10001, %v10352
          %v10514 = vadd.f32 %v10002, %v10352
          %v10515 = vadd.f32 %v10003, %v10357
          %v10516 = vadd.f32 %v10004, %v10357
          %v10517 = vadd.f32 %v10005, %v10362
          %v10518 = vadd.f32 %v10006, %v10362
          %v10519 = vadd.f32 %v10007, %v10367
          %v10520 = vadd.f32 %v10008, %v10367
          %v10521 = vadd.f32 %v10009, %v10372
          %v10522 = vadd.f32 %v10010, %v10372
          %v10523 = vadd.f32 %v10011, %v10377
          %v10524 = vadd.f32 %v10012, %v10377
          %v10525 = vadd.f32 %v10013, %v10382
          %v10526 = vadd.f32 %v10014, %v10382
          %v10527 = vadd.f32 %v10015, %v10387
          %v10528 = vadd.f32 %v10016, %v10387
          %v10529 = vadd.f32 %v10017, %v10392
          %v10530 = vadd.f32 %v10018, %v10392
          %v10531 = vadd.f32 %v10019, %v10397
          %v10532 = vadd.f32 %v10020, %v10397
          %v10533 = vadd.f32 %v10021, %v10402
          %v10534 = vadd.f32 %v10022, %v10402
          %v10535 = vadd.f32 %v10023, %v10407
          %v10536 = vadd.f32 %v10024, %v10407
          %10537 = vst [vmem:[%s8] sm:$0xff] %v10409
          %10538 = vst.msk [vmem:[%s8 + $0x8] sm:$0xff] %vm2198, %v10410
          %10539 = vst [vmem:[%s8 + $0x10] sm:$0xff] %v10411
          %10540 = vst.msk [vmem:[%s8 + $0x18] sm:$0xff] %vm2198, %v10412
          %10541 = vst [vmem:[%s8 + $0x20] sm:$0xff] %v10413
          %10542 = vst.msk [vmem:[%s8 + $0x28] sm:$0xff] %vm2198, %v10414
          %10543 = vst [vmem:[%s8 + $0x30] sm:$0xff] %v10415
          %10544 = vst.msk [vmem:[%s8 + $0x38] sm:$0xff] %vm2198, %v10416
          %10545 = vst [vmem:[%s8 + $0x40] sm:$0xff] %v10417
          %10546 = vst.msk [vmem:[%s8 + $0x48] sm:$0xff] %vm2198, %v10418
          %10547 = vst [vmem:[%s8 + $0x50] sm:$0xff] %v10419
          %10548 = vst.msk [vmem:[%s8 + $0x58] sm:$0xff] %vm2198, %v10420
          %10549 = vst [vmem:[%s8 + $0x60] sm:$0xff] %v10421
          %10550 = vst.msk [vmem:[%s8 + $0x68] sm:$0xff] %vm2198, %v10422
          %10551 = vst [vmem:[%s8 + $0x70] sm:$0xff] %v10423
          %10552 = vst.msk [vmem:[%s8 + $0x78] sm:$0xff] %vm2198, %v10424
          %10553 = vst [vmem:[%s8 + $0x80] sm:$0xff] %v10425
          %10554 = vst.msk [vmem:[%s8 + $0x88] sm:$0xff] %vm2198, %v10426
          %10555 = vst [vmem:[%s8 + $0x90] sm:$0xff] %v10427
          %10556 = vst.msk [vmem:[%s8 + $0x98] sm:$0xff] %vm2198, %v10428
          %10557 = vst [vmem:[%s8 + $0xa0] sm:$0xff] %v10429
          %10558 = vst.msk [vmem:[%s8 + $0xa8] sm:$0xff] %vm2198, %v10430
          %10559 = vst [vmem:[%s8 + $0xb0] sm:$0xff] %v10431
          %10560 = vst.msk [vmem:[%s8 + $0xb8] sm:$0xff] %vm2198, %v10432
          %10561 = vst [vmem:[%s8 + $0xc0] sm:$0xff] %v10433
          %10562 = vst.msk [vmem:[%s8 + $0xc8] sm:$0xff] %vm2198, %v10434
          %10563 = vst [vmem:[%s8 + $0xd0] sm:$0xff] %v10435
          %10564 = vst.msk [vmem:[%s8 + $0xd8] sm:$0xff] %vm2198, %v10436
          %10565 = vst [vmem:[%s8 + $0xe0] sm:$0xff] %v10437
          %10566 = vst.msk [vmem:[%s8 + $0xe8] sm:$0xff] %vm2198, %v10438
          %10567 = vst [vmem:[%s8 + $0xf0] sm:$0xff] %v10439
          %10568 = vst.msk [vmem:[%s8 + $0xf8] sm:$0xff] %vm2198, %v10440
          %10569 = vst [vmem:[%s8 + $0x100] sm:$0xff] %v10441
          %10570 = vst.msk [vmem:[%s8 + $0x108] sm:$0xff] %vm2198, %v10442
          %10571 = vst [vmem:[%s8 + $0x110] sm:$0xff] %v10443
          %10572 = vst.msk [vmem:[%s8 + $0x118] sm:$0xff] %vm2198, %v10444
          %10573 = vst [vmem:[%s8 + $0x120] sm:$0xff] %v10445
          %10574 = vst.msk [vmem:[%s8 + $0x128] sm:$0xff] %vm2198, %v10446
          %10575 = vst [vmem:[%s8 + $0x130] sm:$0xff] %v10447
          %10576 = vst.msk [vmem:[%s8 + $0x138] sm:$0xff] %vm2198, %v10448
          %10577 = vst [vmem:[%s8 + $0x140] sm:$0xff] %v10449
          %10578 = vst.msk [vmem:[%s8 + $0x148] sm:$0xff] %vm2198, %v10450
          %10579 = vst [vmem:[%s8 + $0x150] sm:$0xff] %v10451
          %10580 = vst.msk [vmem:[%s8 + $0x158] sm:$0xff] %vm2198, %v10452
          %10581 = vst [vmem:[%s8 + $0x160] sm:$0xff] %v10453
          %10582 = vst.msk [vmem:[%s8 + $0x168] sm:$0xff] %vm2198, %v10454
          %10583 = vst [vmem:[%s8 + $0x170] sm:$0xff] %v10455
          %10584 = vst.msk [vmem:[%s8 + $0x178] sm:$0xff] %vm2198, %v10456
          %10585 = vst [vmem:[%s8 + $0x180] sm:$0xff] %v10457
          %10586 = vst.msk [vmem:[%s8 + $0x188] sm:$0xff] %vm2198, %v10458
          %10587 = vst [vmem:[%s8 + $0x190] sm:$0xff] %v10459
          %10588 = vst.msk [vmem:[%s8 + $0x198] sm:$0xff] %vm2198, %v10460
          %10589 = vst [vmem:[%s8 + $0x1a0] sm:$0xff] %v10461
          %10590 = vst.msk [vmem:[%s8 + $0x1a8] sm:$0xff] %vm2198, %v10462
          %10591 = vst [vmem:[%s8 + $0x1b0] sm:$0xff] %v10463
          %10592 = vst.msk [vmem:[%s8 + $0x1b8] sm:$0xff] %vm2198, %v10464
          %10593 = vst [vmem:[%s8 + $0x1c0] sm:$0xff] %v10465
          %10594 = vst.msk [vmem:[%s8 + $0x1c8] sm:$0xff] %vm2198, %v10466
          %10595 = vst [vmem:[%s8 + $0x1d0] sm:$0xff] %v10467
          %10596 = vst.msk [vmem:[%s8 + $0x1d8] sm:$0xff] %vm2198, %v10468
          %10597 = vst [vmem:[%s8 + $0x1e0] sm:$0xff] %v10469
          %10598 = vst.msk [vmem:[%s8 + $0x1e8] sm:$0xff] %vm2198, %v10470
          %10599 = vst [vmem:[%s8 + $0x1f0] sm:$0xff] %v10471
          %10600 = vst.msk [vmem:[%s8 + $0x1f8] sm:$0xff] %vm2198, %v10472
          %10601 = vst [vmem:[%s8 + $0x200] sm:$0xff] %v10473
          %10602 = vst.msk [vmem:[%s8 + $0x208] sm:$0xff] %vm2198, %v10474
          %10603 = vst [vmem:[%s8 + $0x210] sm:$0xff] %v10475
          %10604 = vst.msk [vmem:[%s8 + $0x218] sm:$0xff] %vm2198, %v10476
          %10605 = vst [vmem:[%s8 + $0x220] sm:$0xff] %v10477
          %10606 = vst.msk [vmem:[%s8 + $0x228] sm:$0xff] %vm2198, %v10478
          %10607 = vst [vmem:[%s8 + $0x230] sm:$0xff] %v10479
          %10608 = vst.msk [vmem:[%s8 + $0x238] sm:$0xff] %vm2198, %v10480
          %10609 = vst [vmem:[%s8 + $0x240] sm:$0xff] %v10481
          %10610 = vst.msk [vmem:[%s8 + $0x248] sm:$0xff] %vm2198, %v10482
          %10611 = vst [vmem:[%s8 + $0x250] sm:$0xff] %v10483
          %10612 = vst.msk [vmem:[%s8 + $0x258] sm:$0xff] %vm2198, %v10484
          %10613 = vst [vmem:[%s8 + $0x260] sm:$0xff] %v10485
          %10614 = vst.msk [vmem:[%s8 + $0x268] sm:$0xff] %vm2198, %v10486
          %10615 = vst [vmem:[%s8 + $0x270] sm:$0xff] %v10487
          %10616 = vst.msk [vmem:[%s8 + $0x278] sm:$0xff] %vm2198, %v10488
          %10617 = vst [vmem:[%s8 + $0x280] sm:$0xff] %v10489
          %10618 = vst.msk [vmem:[%s8 + $0x288] sm:$0xff] %vm2198, %v10490
          %10619 = vst [vmem:[%s8 + $0x290] sm:$0xff] %v10491
          %10620 = vst.msk [vmem:[%s8 + $0x298] sm:$0xff] %vm2198, %v10492
          %10621 = vst [vmem:[%s8 + $0x2a0] sm:$0xff] %v10493
          %10622 = vst.msk [vmem:[%s8 + $0x2a8] sm:$0xff] %vm2198, %v10494
          %10623 = vst [vmem:[%s8 + $0x2b0] sm:$0xff] %v10495
          %10624 = vst.msk [vmem:[%s8 + $0x2b8] sm:$0xff] %vm2198, %v10496
          %10625 = vst [vmem:[%s8 + $0x2c0] sm:$0xff] %v10497
          %10626 = vst.msk [vmem:[%s8 + $0x2c8] sm:$0xff] %vm2198, %v10498
          %10627 = vst [vmem:[%s8 + $0x2d0] sm:$0xff] %v10499
          %10628 = vst.msk [vmem:[%s8 + $0x2d8] sm:$0xff] %vm2198, %v10500
          %10629 = vst [vmem:[%s8 + $0x2e0] sm:$0xff] %v10501
          %10630 = vst.msk [vmem:[%s8 + $0x2e8] sm:$0xff] %vm2198, %v10502
          %10631 = vst [vmem:[%s8 + $0x2f0] sm:$0xff] %v10503
          %10632 = vst.msk [vmem:[%s8 + $0x2f8] sm:$0xff] %vm2198, %v10504
          %10633 = vst [vmem:[%s8 + $0x300] sm:$0xff] %v10505
          %10634 = vst.msk [vmem:[%s8 + $0x308] sm:$0xff] %vm2198, %v10506
          %10635 = vst [vmem:[%s8 + $0x310] sm:$0xff] %v10507
          %10636 = vst.msk [vmem:[%s8 + $0x318] sm:$0xff] %vm2198, %v10508
          %10637 = vst [vmem:[%s8 + $0x320] sm:$0xff] %v10509
          %10638 = vst.msk [vmem:[%s8 + $0x328] sm:$0xff] %vm2198, %v10510
          %10639 = vst [vmem:[%s8 + $0x330] sm:$0xff] %v10511
          %10640 = vst.msk [vmem:[%s8 + $0x338] sm:$0xff] %vm2198, %v10512
          %10641 = vst [vmem:[%s8 + $0x340] sm:$0xff] %v10513
          %10642 = vst.msk [vmem:[%s8 + $0x348] sm:$0xff] %vm2198, %v10514
          %10643 = vst [vmem:[%s8 + $0x350] sm:$0xff] %v10515
          %10644 = vst.msk [vmem:[%s8 + $0x358] sm:$0xff] %vm2198, %v10516
          %10645 = vst [vmem:[%s8 + $0x360] sm:$0xff] %v10517
          %10646 = vst.msk [vmem:[%s8 + $0x368] sm:$0xff] %vm2198, %v10518
          %10647 = vst [vmem:[%s8 + $0x370] sm:$0xff] %v10519
          %10648 = vst.msk [vmem:[%s8 + $0x378] sm:$0xff] %vm2198, %v10520
          %10649 = vst [vmem:[%s8 + $0x380] sm:$0xff] %v10521
          %10650 = vst.msk [vmem:[%s8 + $0x388] sm:$0xff] %vm2198, %v10522
          %10651 = vst [vmem:[%s8 + $0x390] sm:$0xff] %v10523
          %10652 = vst.msk [vmem:[%s8 + $0x398] sm:$0xff] %vm2198, %v10524
          %10653 = vst [vmem:[%s8 + $0x3a0] sm:$0xff] %v10525
          %10654 = vst.msk [vmem:[%s8 + $0x3a8] sm:$0xff] %vm2198, %v10526
          %10655 = vst [vmem:[%s8 + $0x3b0] sm:$0xff] %v10527
          %10656 = vst.msk [vmem:[%s8 + $0x3b8] sm:$0xff] %vm2198, %v10528
          %10657 = vst [vmem:[%s8 + $0x3c0] sm:$0xff] %v10529
          %10658 = vst.msk [vmem:[%s8 + $0x3c8] sm:$0xff] %vm2198, %v10530
          %10659 = vst [vmem:[%s8 + $0x3d0] sm:$0xff] %v10531
          %10660 = vst.msk [vmem:[%s8 + $0x3d8] sm:$0xff] %vm2198, %v10532
          %10661 = vst [vmem:[%s8 + $0x3e0] sm:$0xff] %v10533
          %10662 = vst.msk [vmem:[%s8 + $0x3e8] sm:$0xff] %vm2198, %v10534
          %10663 = vst [vmem:[%s8 + $0x3f0] sm:$0xff] %v10535
          %10664 = vst.msk [vmem:[%s8 + $0x3f8] sm:$0xff] %vm2198, %v10536
        $region83: #{fused_block.1} parent=70 // pred_fallthru
          _
        // Predicated region
        $region84: #{fused_block.1} parent=70 // pred_check
          %p10665 = pneg %p225
        $region85: #{fused_block.1} parent=70 // pred_check_branch
          %10667 = sbr.rel (%p10665) target = $region87
        $region86: #{fused_block.1} parent=70 // pred_region
          _
        $region87: #{fused_block.1} parent=70 // pred_fallthru
          _
        // Predicated region
        $region88: #{fused_block.1} parent=70 // pred_check
          %p10668 = pneg %p225
        $region89: #{fused_block.1} parent=70 // pred_check_branch
          %10670 = sbr.rel (%p10668) target = $region91
        $region90: #{fused_block.1} parent=70 // pred_region
          _
        $region91: #{fused_block.1} parent=70 // pred_fallthru
          _
      $region71: #{fused_block.1} parent=5 // pred_fallthru
        _
      %p10671 = scmp.le.s32.totalorder 2, %s14
      // Predicated region
      $region92: #{fused_block.1} parent=5 // pred_check
        %p10672 = pneg %p10671
      $region93: #{fused_block.1} parent=5 // pred_check_branch
        %10674 = sbr.rel (%p10672) target = $region95
      $region94: #{fused_block.1} parent=5 // pred_region
        %s10675 = ssub.s32 %s14, 2
      $region95: #{fused_block.1} parent=5 // pred_fallthru
        _
    $region6: #{fused_block.1} parent=1 // loop_footer
      %s18 = sadd.s32 1, %s14
    $region7: #{fused_block.1} parent=1 // loop_footer_branch
      %13 = sbr.rel target = $region3
    $region8: #{fused_block.1} parent=1 // loop_exit
      _

</llo_original>
